<compile_context>
chip_gen: v6e
topology: v6e:2x2x1
jax: 0.10.0
libtpu: 0.0.40
codegen_flags: <defaults>
</compile_context>

<pallas_src>
import math

import jax
import jax.numpy as jnp
from jax.experimental import pallas as pl
from jax.experimental.pallas import tpu as pltpu

# Hyper-parameters fixed by the PyTorch module.
INPUT_SIZE = 256
HIDDEN = 32       # H
NUM_CLASS = 7     # C
NUM_LAYERS = 2


# --------------------------------------------------------------------------
# Host-side weight packing
# --------------------------------------------------------------------------
def _interleave_gates(m_f, m_b, h):
    """Per-direction gate blocks [i|f|g|o] -> gate-major / direction-minor lanes
    [i_f i_b | f_f f_b | g_f g_b | o_f o_b]."""
    cols = []
    for g in range(4):
        cols.append(m_f[:, g * h:(g + 1) * h])
        cols.append(m_b[:, g * h:(g + 1) * h])
    return jnp.concatenate(cols, axis=1)


def _align8(n):
    return (n + 7) // 8 * 8


def _gru_blob_layout(din0, din1, c):
    """Row offsets of each GRU tensor inside the packed (rows, 3C) blob."""
    off = {}
    r = 0

    def take(name, rows):
        nonlocal r
        off[name] = (r, r + rows)
        r += rows

    take("wi0", din0); r = _align8(r)
    take("wh0", c);    r = _align8(r)
    take("bi0", 1); take("bh0", 1); r = _align8(r)
    take("wi1", din1); r = _align8(r)
    take("wh1", c);    r = _align8(r)
    take("bi1", 1); take("bh1", 1); r = _align8(r)
    return off, r


def pack_params(raw):
    """Pack the raw per-direction / per-gate weights into 4 lane-dense blobs."""
    H, C = HIDDEN, NUM_CLASS
    packed = {}

    # LSTM: one blob per layer:  rows [0:Din) Wi, [Din:Din+2H) block-diag Wh,
    # row Din+2H the folded bias; lanes are gate-interleaved (8H = 256).
    for l in range(NUM_LAYERS):
        lp = raw["lstm"][l]
        wi = _interleave_gates(lp["wi_f"], lp["wi_b"], H)                 # (Din, 8H)
        wh = jnp.concatenate(
            [_interleave_gates(lp["wh_f"], jnp.zeros_like(lp["wh_f"]), H),
             _interleave_gates(jnp.zeros_like(lp["wh_b"]), lp["wh_b"], H)],
            axis=0)                                                        # (2H, 8H)
        b = _interleave_gates(lp["b_f"], lp["b_b"], H)                    # (1, 8H)
        packed[f"lstm{l}"] = jnp.concatenate([wi, wh, b], axis=0)

    # GRU: one blob for both layers (lanes = 3C, PyTorch gate order r|z|n).
    layout, rows = _gru_blob_layout(2 * H, C, C)
    blob = jnp.zeros((rows, 3 * C), jnp.float32)
    for l in range(NUM_LAYERS):
        gp = raw["gru"][l]
        blob = blob.at[slice(*layout[f"wi{l}"]), :].set(gp["wi"])
        blob = blob.at[slice(*layout[f"wh{l}"]), :].set(gp["wh"])
        blob = blob.at[slice(*layout[f"bi{l}"]), :].set(gp["bi"])
        blob = blob.at[slice(*layout[f"bh{l}"]), :].set(gp["bh"])
    packed["gru"] = blob

    # FC: rows 0:C = W (in, out), row C = bias.
    packed["fc"] = jnp.concatenate([raw["fc"]["w"], raw["fc"]["b"]], axis=0)
    return packed


# --------------------------------------------------------------------------
# Fused kernel
# --------------------------------------------------------------------------
def _make_kernel(B, T, H, C, d_in0, gru_layout):

    def lstm_layer(x, blob_ref, din):
        """Bidirectional LSTM layer; x: (B, T, din) value -> (B, T, 2H) value."""
        wi = blob_ref[0:din, :]                          # (din, 8H)
        wh = blob_ref[din:din + 2 * H, :]                # (2H, 8H) block-diag
        b = blob_ref[din + 2 * H:din + 2 * H + 1, :]     # (1, 8H)

        # Hoisted input projection: one lane-dense 256-wide matmul per layer.
        gx = (jnp.dot(x.reshape(B * T, din), wi,
                      preferred_element_type=jnp.float32) + b
              ).reshape(B, T, 8 * H)

        # fwd lanes take the gate-input at time t, bwd lanes at time T-1-t.
        lane = jax.lax.broadcasted_iota(jnp.int32, (B, 8 * H), 1)
        fwd_lane = (lane % (2 * H)) < H

        h = jnp.zeros((B, 2 * H), jnp.float32)           # [h_fwd | h_bwd]
        c = jnp.zeros((B, 2 * H), jnp.float32)
        hs_fwd, hs_bwd = [], []
        for t in range(T):                               # static unroll (T small)
            gx_t = jnp.where(fwd_lane, gx[:, t, :], gx[:, T - 1 - t, :])
            gates = gx_t + jnp.dot(h, wh, preferred_element_type=jnp.float32)
            i_and_f = jax.nn.sigmoid(gates[:, 0:4 * H])  # [i_f i_b | f_f f_b]
            g = jnp.tanh(gates[:, 4 * H:6 * H])          # [g_f g_b]
            o = jax.nn.sigmoid(gates[:, 6 * H:8 * H])    # [o_f o_b]
            c = i_and_f[:, 2 * H:4 * H] * c + i_and_f[:, 0:2 * H] * g
            h = o * jnp.tanh(c)
            hs_fwd.append(h[:, 0:H])                     # output time t
            hs_bwd.append(h[:, H:2 * H])                 # output time T-1-t
        out_f = jnp.stack(hs_fwd, axis=1)                # (B, T, H)
        out_b = jnp.stack(hs_bwd[::-1], axis=1)          # reorder to output time
        return jnp.concatenate([out_f, out_b], axis=-1)  # (B, T, 2H)

    def gru_layer(x, blob_ref, layer, din):
        """Unidirectional GRU layer (gate order r|z|n); x: (B, T, din) value."""
        lo = gru_layout
        wi = blob_ref[slice(*lo[f"wi{layer}"]), :]       # (din, 3C)
        wh = blob_ref[slice(*lo[f"wh{layer}"]), :]       # (C, 3C)
        bi = blob_ref[slice(*lo[f"bi{layer}"]), :]       # (1, 3C)
        bh = blob_ref[slice(*lo[f"bh{layer}"]), :]       # (1, 3C)

        gi = (jnp.dot(x.reshape(B * T, din), wi,
                      preferred_element_type=jnp.float32) + bi
              ).reshape(B, T, 3 * C)

        h = jnp.zeros((B, C), jnp.float32)
        outs = []
        for t in range(T):                               # static unroll
            gi_t = gi[:, t, :]
            gh = jnp.dot(h, wh, preferred_element_type=jnp.float32) + bh
            rz = jax.nn.sigmoid(gi_t[:, 0:2 * C] + gh[:, 0:2 * C])
            r = rz[:, 0:C]
            z = rz[:, C:2 * C]
            n = jnp.tanh(gi_t[:, 2 * C:3 * C] + r * gh[:, 2 * C:3 * C])
            h = (1.0 - z) * n + z * h
            outs.append(h)
        return jnp.stack(outs, axis=1)                   # (B, T, C)

    def fc_softmax_time(x, blob_ref):
        """Linear(C, C) + softmax over the TIME axis (nn.Softmax(1))."""
        w = blob_ref[0:C, :]
        b = blob_ref[C:C + 1, :]
        y = (jnp.dot(x.reshape(B * T, C), w,
                     preferred_element_type=jnp.float32) + b).reshape(B, T, C)
        m = jnp.max(y, axis=1, keepdims=True)
        e = jnp.exp(y - m)
        s = jnp.sum(e, axis=1, keepdims=True)
        return e * pl.reciprocal(s, approx=True)

    def kernel(x_ref, lstm0_ref, lstm1_hbm, gru_hbm, fc_hbm, out_ref,
               lstm1_vmem, gru_vmem, fc_vmem, sem):
        # Kick off DMA of the later-stage weights; they land while LSTM-0 runs.
        cp1 = pltpu.make_async_copy(lstm1_hbm, lstm1_vmem, sem.at[0])
        cp2 = pltpu.make_async_copy(gru_hbm, gru_vmem, sem.at[1])
        cp3 = pltpu.make_async_copy(fc_hbm, fc_vmem, sem.at[2])
        cp1.start(); cp2.start(); cp3.start()

        a = lstm_layer(x_ref[...], lstm0_ref, d_in0)     # LSTM layer 0
        cp1.wait()
        a = lstm_layer(a, lstm1_vmem, 2 * H)             # LSTM layer 1
        cp2.wait()
        a = gru_layer(a, gru_vmem, 0, 2 * H)             # GRU layer 0
        a = gru_layer(a, gru_vmem, 1, C)                 # GRU layer 1
        cp3.wait()
        out_ref[...] = fc_softmax_time(a, fc_vmem)       # Linear + time-softmax

    return kernel


def seq_model_forward(x, packed):
    B, T, D = x.shape
    H, C = HIDDEN, NUM_CLASS
    gru_layout, _ = _gru_blob_layout(2 * H, C, C)
    kernel = _make_kernel(B, T, H, C, D, gru_layout)

    vmem = pl.BlockSpec(memory_space=pltpu.MemorySpace.VMEM)
    hbm = pl.BlockSpec(memory_space=pl.ANY)
    return pl.pallas_call(
        kernel,
        out_shape=jax.ShapeDtypeStruct((B, T, C), jnp.float32),
        in_specs=[vmem, vmem, hbm, hbm, hbm],
        out_specs=vmem,
        scratch_shapes=[
            pltpu.VMEM(packed["lstm1"].shape, jnp.float32),
            pltpu.VMEM(packed["gru"].shape, jnp.float32),
            pltpu.VMEM(packed["fc"].shape, jnp.float32),
            pltpu.SemaphoreType.DMA((3,)),
        ],
    )(x, packed["lstm0"], packed["lstm1"], packed["gru"], packed["fc"])


# --------------------------------------------------------------------------
# Deterministic parameter init (PyTorch default init stats) + JAX reference
# --------------------------------------------------------------------------
def _uniform(key, shape, bound):
    return jax.random.uniform(key, shape, jnp.float32, minval=-bound, maxval=bound)


def init_raw_params(key):
    H, C = HIDDEN, NUM_CLASS
    k_lstm = 1.0 / math.sqrt(H)
    k_gru = 1.0 / math.sqrt(C)
    raw = {"lstm": [], "gru": [], "fc": {}}

    d_in = INPUT_SIZE
    for _layer in range(NUM_LAYERS):
        lp = {}
        for d in ("f", "b"):
            key, k1, k2, k3, k4 = jax.random.split(key, 5)
            lp[f"wi_{d}"] = _uniform(k1, (d_in, 4 * H), k_lstm)      # i|f|g|o
            lp[f"wh_{d}"] = _uniform(k2, (H, 4 * H), k_lstm)
            # b_ih and b_hh sampled separately (PyTorch init stats), then folded.
            lp[f"b_{d}"] = (_uniform(k3, (1, 4 * H), k_lstm)
                            + _uniform(k4, (1, 4 * H), k_lstm))
        raw["lstm"].append(lp)
        d_in = 2 * H

    d_in = 2 * H
    for _layer in range(NUM_LAYERS):
        key, k1, k2, k3, k4 = jax.random.split(key, 5)
        raw["gru"].append({
            "wi": _uniform(k1, (d_in, 3 * C), k_gru),                # r|z|n
            "wh": _uniform(k2, (C, 3 * C), k_gru),
            "bi": _uniform(k3, (1, 3 * C), k_gru),
            "bh": _uniform(k4, (1, 3 * C), k_gru),
        })
        d_in = C

    key, k1, k2 = jax.random.split(key, 3)
    raw["fc"] = {"w": _uniform(k1, (C, C), 1.0 / math.sqrt(C)),
                 "b": _uniform(k2, (1, C), 1.0 / math.sqrt(C))}
    return raw


def seq_model_reference(x, raw):
    """Pure-JAX forward, mirrors the PyTorch module (for validation)."""
    H, C = HIDDEN, NUM_CLASS
    B, T, _ = x.shape
    hp = jax.lax.Precision.HIGHEST

    def lstm_dir(xs, wi, wh, b, reverse):
        h = jnp.zeros((B, H), jnp.float32)
        c = jnp.zeros((B, H), jnp.float32)
        outs = [None] * T
        order = range(T - 1, -1, -1) if reverse else range(T)
        for t in order:
            g = jnp.dot(xs[:, t, :], wi, precision=hp) + jnp.dot(h, wh, precision=hp) + b
            i = jax.nn.sigmoid(g[:, 0:H])
            f = jax.nn.sigmoid(g[:, H:2 * H])
            gg = jnp.tanh(g[:, 2 * H:3 * H])
            o = jax.nn.sigmoid(g[:, 3 * H:4 * H])
            c = f * c + i * gg
            h = o * jnp.tanh(c)
            outs[t] = h
        return jnp.stack(outs, axis=1)

    a = x
    for lp in raw["lstm"]:
        fwd = lstm_dir(a, lp["wi_f"], lp["wh_f"], lp["b_f"], False)
        bwd = lstm_dir(a, lp["wi_b"], lp["wh_b"], lp["b_b"], True)
        a = jnp.concatenate([fwd, bwd], axis=-1)

    for gp in raw["gru"]:
        h = jnp.zeros((B, C), jnp.float32)
        outs = []
        for t in range(T):
            gi = jnp.dot(a[:, t, :], gp["wi"], precision=hp) + gp["bi"]
            gh = jnp.dot(h, gp["wh"], precision=hp) + gp["bh"]
            r = jax.nn.sigmoid(gi[:, 0:C] + gh[:, 0:C])
            z = jax.nn.sigmoid(gi[:, C:2 * C] + gh[:, C:2 * C])
            n = jnp.tanh(gi[:, 2 * C:] + r * gh[:, 2 * C:])
            h = (1.0 - z) * n + z * h
            outs.append(h)
        a = jnp.stack(outs, axis=1)

    y = (jnp.dot(a.reshape(B * T, C), raw["fc"]["w"], precision=hp)
         ).reshape(B, T, C) + raw["fc"]["b"]
    return jax.nn.softmax(y, axis=1)          # nn.Softmax(1): over the time axis


# --------------------------------------------------------------------------
if __name__ == "__main__":
    B, T = 2, 8
    x = jax.random.normal(jax.random.PRNGKey(0), (B, T, INPUT_SIZE), jnp.float32)
    raw = init_raw_params(jax.random.PRNGKey(42))
    packed = pack_params(raw)

    fwd = jax.jit(seq_model_forward)
    out = jax.block_until_ready(fwd(x, packed))

    assert out.shape == (B, T, NUM_CLASS), out.shape
    assert bool(jnp.all(jnp.isfinite(out)))
    # nn.Softmax(1) normalizes over the time axis -> time sums ~= 1.
    assert bool(jnp.allclose(jnp.sum(out, axis=1), 1.0, atol=5e-3))

    # Validate the packed-weight kernel against the plain-JAX reference.
    ref = jax.block_until_ready(jax.jit(seq_model_reference)(x, raw))
    max_err = float(jnp.max(jnp.abs(out - ref)))
    assert max_err < 2e-2, f"max |kernel - reference| = {max_err}"

    print("KERNEL_OK")
</pallas_src>

<mosaic_0001>
module attributes {stable_mosaic.version = 11 : i64} {
  func.func @kernel(%arg0: memref<2x8x256xf32, #tpu.memory_space<vmem>>, %arg1: memref<321x256xf32, #tpu.memory_space<vmem>>, %arg2: memref<129x256xf32, #tpu.memory_space<any>>, %arg3: memref<104x21xf32, #tpu.memory_space<any>>, %arg4: memref<8x7xf32, #tpu.memory_space<any>>, %arg5: memref<2x8x7xf32, #tpu.memory_space<vmem>>, %arg6: memref<129x256xf32, #tpu.memory_space<vmem>>, %arg7: memref<104x21xf32, #tpu.memory_space<vmem>>, %arg8: memref<8x7xf32, #tpu.memory_space<vmem>>, %arg9: memref<3x!tpu.dma_semaphore, #tpu.memory_space<semaphore_mem>>) attributes {dimension_semantics = [], scalar_prefetch = 0 : i64, scratch_operands = 4 : i64, tpu.core_type = #tpu.core_type<tc>} {
    %c0_i32 = arith.constant 0 : i32
    %0 = tpu.memref_slice %arg9[%c0_i32] : memref<3x!tpu.dma_semaphore, #tpu.memory_space<semaphore_mem>> -> memref<1x!tpu.dma_semaphore, #tpu.memory_space<semaphore_mem>>
    %1 = tpu.memref_squeeze %0 : memref<1x!tpu.dma_semaphore, #tpu.memory_space<semaphore_mem>> -> memref<!tpu.dma_semaphore, #tpu.memory_space<semaphore_mem>>
    tpu.enqueue_dma source(%arg2 : memref<129x256xf32, #tpu.memory_space<any>>) target(%arg6 : memref<129x256xf32, #tpu.memory_space<vmem>>) target_semaphore(%1 : memref<!tpu.dma_semaphore, #tpu.memory_space<semaphore_mem>>)
    %c1_i32 = arith.constant 1 : i32
    %2 = tpu.memref_slice %arg9[%c1_i32] : memref<3x!tpu.dma_semaphore, #tpu.memory_space<semaphore_mem>> -> memref<1x!tpu.dma_semaphore, #tpu.memory_space<semaphore_mem>>
    %3 = tpu.memref_squeeze %2 : memref<1x!tpu.dma_semaphore, #tpu.memory_space<semaphore_mem>> -> memref<!tpu.dma_semaphore, #tpu.memory_space<semaphore_mem>>
    tpu.enqueue_dma source(%arg3 : memref<104x21xf32, #tpu.memory_space<any>>) target(%arg7 : memref<104x21xf32, #tpu.memory_space<vmem>>) target_semaphore(%3 : memref<!tpu.dma_semaphore, #tpu.memory_space<semaphore_mem>>)
    %c2_i32 = arith.constant 2 : i32
    %4 = tpu.memref_slice %arg9[%c2_i32] : memref<3x!tpu.dma_semaphore, #tpu.memory_space<semaphore_mem>> -> memref<1x!tpu.dma_semaphore, #tpu.memory_space<semaphore_mem>>
    %5 = tpu.memref_squeeze %4 : memref<1x!tpu.dma_semaphore, #tpu.memory_space<semaphore_mem>> -> memref<!tpu.dma_semaphore, #tpu.memory_space<semaphore_mem>>
    tpu.enqueue_dma source(%arg4 : memref<8x7xf32, #tpu.memory_space<any>>) target(%arg8 : memref<8x7xf32, #tpu.memory_space<vmem>>) target_semaphore(%5 : memref<!tpu.dma_semaphore, #tpu.memory_space<semaphore_mem>>)
    %c0 = arith.constant 0 : index
    %c0_0 = arith.constant 0 : index
    %c0_1 = arith.constant 0 : index
    %6 = vector.load %arg0[%c0, %c0_0, %c0_1] : memref<2x8x256xf32, #tpu.memory_space<vmem>>, vector<2x8x256xf32>
    %c0_2 = arith.constant 0 : index
    %c0_3 = arith.constant 0 : index
    %7 = vector.load %arg1[%c0_2, %c0_3] : memref<321x256xf32, #tpu.memory_space<vmem>>, vector<256x256xf32>
    %c256 = arith.constant 256 : index
    %c0_4 = arith.constant 0 : index
    %8 = vector.load %arg1[%c256, %c0_4] : memref<321x256xf32, #tpu.memory_space<vmem>>, vector<64x256xf32>
    %c320 = arith.constant 320 : index
    %c0_5 = arith.constant 0 : index
    %9 = vector.load %arg1[%c320, %c0_5] : memref<321x256xf32, #tpu.memory_space<vmem>>, vector<1x256xf32>
    %10 = vector.shape_cast %6 : vector<2x8x256xf32> to vector<16x256xf32>
    %cst = arith.constant dense<0.000000e+00> : vector<16x256xf32>
    %11 = tpu.matmul %10, %7, %cst {dimension_numbers = #tpu.dot_dimension_numbers<[1], [0], [0], [1], [0, 0, 1, 1], [], []>} : vector<16x256xf32>, vector<256x256xf32>, vector<16x256xf32> -> vector<16x256xf32>
    %12 = vector.broadcast %9 : vector<1x256xf32> to vector<16x256xf32>
    %13 = arith.addf %11, %12 : vector<16x256xf32>
    %14 = vector.shape_cast %13 : vector<16x256xf32> to vector<2x8x256xf32>
    %15 = tpu.iota {dimensions = array<i32: 1>} : vector<2x256xi32>
    %c64_i32 = arith.constant 64 : i32
    %c0_i32_6 = arith.constant 0 : i32
    %16 = arith.cmpi eq, %c64_i32, %c0_i32_6 : i32
    %c1_i32_7 = arith.constant 1 : i32
    %17 = arith.select %16, %c1_i32_7, %c64_i32 : i32
    %18 = vector.broadcast %17 : i32 to vector<2x256xi32>
    %19 = arith.remsi %15, %18 : vector<2x256xi32>
    %c0_i32_8 = arith.constant 0 : i32
    %20 = vector.broadcast %c0_i32_8 : i32 to vector<2x256xi32>
    %21 = arith.cmpi ne, %19, %20 : vector<2x256xi32>
    %c0_i32_9 = arith.constant 0 : i32
    %22 = vector.broadcast %c0_i32_9 : i32 to vector<2x256xi32>
    %23 = arith.cmpi slt, %19, %22 : vector<2x256xi32>
    %c0_i32_10 = arith.constant 0 : i32
    %24 = arith.cmpi slt, %17, %c0_i32_10 : i32
    %25 = vector.broadcast %24 : i1 to vector<2x256xi1>
    %26 = vector.broadcast %25 : vector<2x256xi1> to vector<2x256xi1>
    %27 = arith.xori %23, %26 : vector<2x256xi1>
    %28 = arith.andi %27, %21 : vector<2x256xi1>
    %29 = vector.broadcast %17 : i32 to vector<2x256xi32>
    %30 = arith.addi %19, %29 : vector<2x256xi32>
    %31 = arith.select %28, %30, %19 : vector<2x256xi1>, vector<2x256xi32>
    %c32_i32 = arith.constant 32 : i32
    %32 = vector.broadcast %c32_i32 : i32 to vector<2x256xi32>
    %33 = arith.cmpi slt, %31, %32 : vector<2x256xi32>
    %cst_11 = arith.constant 0.000000e+00 : f32
    %34 = vector.broadcast %cst_11 : f32 to vector<2x64xf32>
    %cst_12 = arith.constant 0.000000e+00 : f32
    %35 = vector.broadcast %cst_12 : f32 to vector<2x64xf32>
    %36 = vector.extract_strided_slice %14 {offsets = [0, 0, 0], sizes = [2, 1, 256], strides = [1, 1, 1]} : vector<2x8x256xf32> to vector<2x1x256xf32>
    %37 = vector.shape_cast %36 : vector<2x1x256xf32> to vector<2x256xf32>
    %38 = vector.extract_strided_slice %14 {offsets = [0, 7, 0], sizes = [2, 1, 256], strides = [1, 1, 1]} : vector<2x8x256xf32> to vector<2x1x256xf32>
    %39 = vector.shape_cast %38 : vector<2x1x256xf32> to vector<2x256xf32>
    %40 = arith.select %33, %37, %39 : vector<2x256xi1>, vector<2x256xf32>
    %cst_13 = arith.constant dense<0.000000e+00> : vector<2x256xf32>
    %41 = tpu.matmul %34, %8, %cst_13 {dimension_numbers = #tpu.dot_dimension_numbers<[1], [0], [0], [1], [0, 0, 1, 1], [], []>} : vector<2x64xf32>, vector<64x256xf32>, vector<2x256xf32> -> vector<2x256xf32>
    %42 = arith.addf %40, %41 : vector<2x256xf32>
    %43 = vector.extract_strided_slice %42 {offsets = [0, 0], sizes = [2, 128], strides = [1, 1]} : vector<2x256xf32> to vector<2x128xf32>
    %44 = arith.negf %43 : vector<2x128xf32>
    %45 = math.exp %44 : vector<2x128xf32>
    %cst_14 = arith.constant 1.000000e+00 : f32
    %46 = vector.broadcast %cst_14 : f32 to vector<2x128xf32>
    %47 = arith.addf %46, %45 : vector<2x128xf32>
    %48 = arith.divf %46, %47 : vector<2x128xf32>
    %49 = vector.extract_strided_slice %42 {offsets = [0, 128], sizes = [2, 64], strides = [1, 1]} : vector<2x256xf32> to vector<2x64xf32>
    %50 = math.tanh %49 : vector<2x64xf32>
    %51 = vector.extract_strided_slice %42 {offsets = [0, 192], sizes = [2, 64], strides = [1, 1]} : vector<2x256xf32> to vector<2x64xf32>
    %52 = arith.negf %51 : vector<2x64xf32>
    %53 = math.exp %52 : vector<2x64xf32>
    %cst_15 = arith.constant 1.000000e+00 : f32
    %54 = vector.broadcast %cst_15 : f32 to vector<2x64xf32>
    %55 = arith.addf %54, %53 : vector<2x64xf32>
    %56 = arith.divf %54, %55 : vector<2x64xf32>
    %57 = vector.extract_strided_slice %48 {offsets = [0, 64], sizes = [2, 64], strides = [1, 1]} : vector<2x128xf32> to vector<2x64xf32>
    %58 = arith.mulf %57, %35 : vector<2x64xf32>
    %59 = vector.extract_strided_slice %48 {offsets = [0, 0], sizes = [2, 64], strides = [1, 1]} : vector<2x128xf32> to vector<2x64xf32>
    %60 = arith.mulf %59, %50 : vector<2x64xf32>
    %61 = arith.addf %58, %60 : vector<2x64xf32>
    %62 = math.tanh %61 : vector<2x64xf32>
    %63 = arith.mulf %56, %62 : vector<2x64xf32>
    %64 = vector.extract_strided_slice %63 {offsets = [0, 0], sizes = [2, 32], strides = [1, 1]} : vector<2x64xf32> to vector<2x32xf32>
    %65 = vector.extract_strided_slice %63 {offsets = [0, 32], sizes = [2, 32], strides = [1, 1]} : vector<2x64xf32> to vector<2x32xf32>
    %66 = vector.extract_strided_slice %14 {offsets = [0, 1, 0], sizes = [2, 1, 256], strides = [1, 1, 1]} : vector<2x8x256xf32> to vector<2x1x256xf32>
    %67 = vector.shape_cast %66 : vector<2x1x256xf32> to vector<2x256xf32>
    %68 = vector.extract_strided_slice %14 {offsets = [0, 6, 0], sizes = [2, 1, 256], strides = [1, 1, 1]} : vector<2x8x256xf32> to vector<2x1x256xf32>
    %69 = vector.shape_cast %68 : vector<2x1x256xf32> to vector<2x256xf32>
    %70 = arith.select %33, %67, %69 : vector<2x256xi1>, vector<2x256xf32>
    %cst_16 = arith.constant dense<0.000000e+00> : vector<2x256xf32>
    %71 = tpu.matmul %63, %8, %cst_16 {dimension_numbers = #tpu.dot_dimension_numbers<[1], [0], [0], [1], [0, 0, 1, 1], [], []>} : vector<2x64xf32>, vector<64x256xf32>, vector<2x256xf32> -> vector<2x256xf32>
    %72 = arith.addf %70, %71 : vector<2x256xf32>
    %73 = vector.extract_strided_slice %72 {offsets = [0, 0], sizes = [2, 128], strides = [1, 1]} : vector<2x256xf32> to vector<2x128xf32>
    %74 = arith.negf %73 : vector<2x128xf32>
    %75 = math.exp %74 : vector<2x128xf32>
    %cst_17 = arith.constant 1.000000e+00 : f32
    %76 = vector.broadcast %cst_17 : f32 to vector<2x128xf32>
    %77 = arith.addf %76, %75 : vector<2x128xf32>
    %78 = arith.divf %76, %77 : vector<2x128xf32>
    %79 = vector.extract_strided_slice %72 {offsets = [0, 128], sizes = [2, 64], strides = [1, 1]} : vector<2x256xf32> to vector<2x64xf32>
    %80 = math.tanh %79 : vector<2x64xf32>
    %81 = vector.extract_strided_slice %72 {offsets = [0, 192], sizes = [2, 64], strides = [1, 1]} : vector<2x256xf32> to vector<2x64xf32>
    %82 = arith.negf %81 : vector<2x64xf32>
    %83 = math.exp %82 : vector<2x64xf32>
    %cst_18 = arith.constant 1.000000e+00 : f32
    %84 = vector.broadcast %cst_18 : f32 to vector<2x64xf32>
    %85 = arith.addf %84, %83 : vector<2x64xf32>
    %86 = arith.divf %84, %85 : vector<2x64xf32>
    %87 = vector.extract_strided_slice %78 {offsets = [0, 64], sizes = [2, 64], strides = [1, 1]} : vector<2x128xf32> to vector<2x64xf32>
    %88 = arith.mulf %87, %61 : vector<2x64xf32>
    %89 = vector.extract_strided_slice %78 {offsets = [0, 0], sizes = [2, 64], strides = [1, 1]} : vector<2x128xf32> to vector<2x64xf32>
    %90 = arith.mulf %89, %80 : vector<2x64xf32>
    %91 = arith.addf %88, %90 : vector<2x64xf32>
    %92 = math.tanh %91 : vector<2x64xf32>
    %93 = arith.mulf %86, %92 : vector<2x64xf32>
    %94 = vector.extract_strided_slice %93 {offsets = [0, 0], sizes = [2, 32], strides = [1, 1]} : vector<2x64xf32> to vector<2x32xf32>
    %95 = vector.extract_strided_slice %93 {offsets = [0, 32], sizes = [2, 32], strides = [1, 1]} : vector<2x64xf32> to vector<2x32xf32>
    %96 = vector.extract_strided_slice %14 {offsets = [0, 2, 0], sizes = [2, 1, 256], strides = [1, 1, 1]} : vector<2x8x256xf32> to vector<2x1x256xf32>
    %97 = vector.shape_cast %96 : vector<2x1x256xf32> to vector<2x256xf32>
    %98 = vector.extract_strided_slice %14 {offsets = [0, 5, 0], sizes = [2, 1, 256], strides = [1, 1, 1]} : vector<2x8x256xf32> to vector<2x1x256xf32>
    %99 = vector.shape_cast %98 : vector<2x1x256xf32> to vector<2x256xf32>
    %100 = arith.select %33, %97, %99 : vector<2x256xi1>, vector<2x256xf32>
    %cst_19 = arith.constant dense<0.000000e+00> : vector<2x256xf32>
    %101 = tpu.matmul %93, %8, %cst_19 {dimension_numbers = #tpu.dot_dimension_numbers<[1], [0], [0], [1], [0, 0, 1, 1], [], []>} : vector<2x64xf32>, vector<64x256xf32>, vector<2x256xf32> -> vector<2x256xf32>
    %102 = arith.addf %100, %101 : vector<2x256xf32>
    %103 = vector.extract_strided_slice %102 {offsets = [0, 0], sizes = [2, 128], strides = [1, 1]} : vector<2x256xf32> to vector<2x128xf32>
    %104 = arith.negf %103 : vector<2x128xf32>
    %105 = math.exp %104 : vector<2x128xf32>
    %cst_20 = arith.constant 1.000000e+00 : f32
    %106 = vector.broadcast %cst_20 : f32 to vector<2x128xf32>
    %107 = arith.addf %106, %105 : vector<2x128xf32>
    %108 = arith.divf %106, %107 : vector<2x128xf32>
    %109 = vector.extract_strided_slice %102 {offsets = [0, 128], sizes = [2, 64], strides = [1, 1]} : vector<2x256xf32> to vector<2x64xf32>
    %110 = math.tanh %109 : vector<2x64xf32>
    %111 = vector.extract_strided_slice %102 {offsets = [0, 192], sizes = [2, 64], strides = [1, 1]} : vector<2x256xf32> to vector<2x64xf32>
    %112 = arith.negf %111 : vector<2x64xf32>
    %113 = math.exp %112 : vector<2x64xf32>
    %cst_21 = arith.constant 1.000000e+00 : f32
    %114 = vector.broadcast %cst_21 : f32 to vector<2x64xf32>
    %115 = arith.addf %114, %113 : vector<2x64xf32>
    %116 = arith.divf %114, %115 : vector<2x64xf32>
    %117 = vector.extract_strided_slice %108 {offsets = [0, 64], sizes = [2, 64], strides = [1, 1]} : vector<2x128xf32> to vector<2x64xf32>
    %118 = arith.mulf %117, %91 : vector<2x64xf32>
    %119 = vector.extract_strided_slice %108 {offsets = [0, 0], sizes = [2, 64], strides = [1, 1]} : vector<2x128xf32> to vector<2x64xf32>
    %120 = arith.mulf %119, %110 : vector<2x64xf32>
    %121 = arith.addf %118, %120 : vector<2x64xf32>
    %122 = math.tanh %121 : vector<2x64xf32>
    %123 = arith.mulf %116, %122 : vector<2x64xf32>
    %124 = vector.extract_strided_slice %123 {offsets = [0, 0], sizes = [2, 32], strides = [1, 1]} : vector<2x64xf32> to vector<2x32xf32>
    %125 = vector.extract_strided_slice %123 {offsets = [0, 32], sizes = [2, 32], strides = [1, 1]} : vector<2x64xf32> to vector<2x32xf32>
    %126 = vector.extract_strided_slice %14 {offsets = [0, 3, 0], sizes = [2, 1, 256], strides = [1, 1, 1]} : vector<2x8x256xf32> to vector<2x1x256xf32>
    %127 = vector.shape_cast %126 : vector<2x1x256xf32> to vector<2x256xf32>
    %128 = vector.extract_strided_slice %14 {offsets = [0, 4, 0], sizes = [2, 1, 256], strides = [1, 1, 1]} : vector<2x8x256xf32> to vector<2x1x256xf32>
    %129 = vector.shape_cast %128 : vector<2x1x256xf32> to vector<2x256xf32>
    %130 = arith.select %33, %127, %129 : vector<2x256xi1>, vector<2x256xf32>
    %cst_22 = arith.constant dense<0.000000e+00> : vector<2x256xf32>
    %131 = tpu.matmul %123, %8, %cst_22 {dimension_numbers = #tpu.dot_dimension_numbers<[1], [0], [0], [1], [0, 0, 1, 1], [], []>} : vector<2x64xf32>, vector<64x256xf32>, vector<2x256xf32> -> vector<2x256xf32>
    %132 = arith.addf %130, %131 : vector<2x256xf32>
    %133 = vector.extract_strided_slice %132 {offsets = [0, 0], sizes = [2, 128], strides = [1, 1]} : vector<2x256xf32> to vector<2x128xf32>
    %134 = arith.negf %133 : vector<2x128xf32>
    %135 = math.exp %134 : vector<2x128xf32>
    %cst_23 = arith.constant 1.000000e+00 : f32
    %136 = vector.broadcast %cst_23 : f32 to vector<2x128xf32>
    %137 = arith.addf %136, %135 : vector<2x128xf32>
    %138 = arith.divf %136, %137 : vector<2x128xf32>
    %139 = vector.extract_strided_slice %132 {offsets = [0, 128], sizes = [2, 64], strides = [1, 1]} : vector<2x256xf32> to vector<2x64xf32>
    %140 = math.tanh %139 : vector<2x64xf32>
    %141 = vector.extract_strided_slice %132 {offsets = [0, 192], sizes = [2, 64], strides = [1, 1]} : vector<2x256xf32> to vector<2x64xf32>
    %142 = arith.negf %141 : vector<2x64xf32>
    %143 = math.exp %142 : vector<2x64xf32>
    %cst_24 = arith.constant 1.000000e+00 : f32
    %144 = vector.broadcast %cst_24 : f32 to vector<2x64xf32>
    %145 = arith.addf %144, %143 : vector<2x64xf32>
    %146 = arith.divf %144, %145 : vector<2x64xf32>
    %147 = vector.extract_strided_slice %138 {offsets = [0, 64], sizes = [2, 64], strides = [1, 1]} : vector<2x128xf32> to vector<2x64xf32>
    %148 = arith.mulf %147, %121 : vector<2x64xf32>
    %149 = vector.extract_strided_slice %138 {offsets = [0, 0], sizes = [2, 64], strides = [1, 1]} : vector<2x128xf32> to vector<2x64xf32>
    %150 = arith.mulf %149, %140 : vector<2x64xf32>
    %151 = arith.addf %148, %150 : vector<2x64xf32>
    %152 = math.tanh %151 : vector<2x64xf32>
    %153 = arith.mulf %146, %152 : vector<2x64xf32>
    %154 = vector.extract_strided_slice %153 {offsets = [0, 0], sizes = [2, 32], strides = [1, 1]} : vector<2x64xf32> to vector<2x32xf32>
    %155 = vector.extract_strided_slice %153 {offsets = [0, 32], sizes = [2, 32], strides = [1, 1]} : vector<2x64xf32> to vector<2x32xf32>
    %156 = vector.extract_strided_slice %14 {offsets = [0, 4, 0], sizes = [2, 1, 256], strides = [1, 1, 1]} : vector<2x8x256xf32> to vector<2x1x256xf32>
    %157 = vector.shape_cast %156 : vector<2x1x256xf32> to vector<2x256xf32>
    %158 = vector.extract_strided_slice %14 {offsets = [0, 3, 0], sizes = [2, 1, 256], strides = [1, 1, 1]} : vector<2x8x256xf32> to vector<2x1x256xf32>
    %159 = vector.shape_cast %158 : vector<2x1x256xf32> to vector<2x256xf32>
    %160 = arith.select %33, %157, %159 : vector<2x256xi1>, vector<2x256xf32>
    %cst_25 = arith.constant dense<0.000000e+00> : vector<2x256xf32>
    %161 = tpu.matmul %153, %8, %cst_25 {dimension_numbers = #tpu.dot_dimension_numbers<[1], [0], [0], [1], [0, 0, 1, 1], [], []>} : vector<2x64xf32>, vector<64x256xf32>, vector<2x256xf32> -> vector<2x256xf32>
    %162 = arith.addf %160, %161 : vector<2x256xf32>
    %163 = vector.extract_strided_slice %162 {offsets = [0, 0], sizes = [2, 128], strides = [1, 1]} : vector<2x256xf32> to vector<2x128xf32>
    %164 = arith.negf %163 : vector<2x128xf32>
    %165 = math.exp %164 : vector<2x128xf32>
    %cst_26 = arith.constant 1.000000e+00 : f32
    %166 = vector.broadcast %cst_26 : f32 to vector<2x128xf32>
    %167 = arith.addf %166, %165 : vector<2x128xf32>
    %168 = arith.divf %166, %167 : vector<2x128xf32>
    %169 = vector.extract_strided_slice %162 {offsets = [0, 128], sizes = [2, 64], strides = [1, 1]} : vector<2x256xf32> to vector<2x64xf32>
    %170 = math.tanh %169 : vector<2x64xf32>
    %171 = vector.extract_strided_slice %162 {offsets = [0, 192], sizes = [2, 64], strides = [1, 1]} : vector<2x256xf32> to vector<2x64xf32>
    %172 = arith.negf %171 : vector<2x64xf32>
    %173 = math.exp %172 : vector<2x64xf32>
    %cst_27 = arith.constant 1.000000e+00 : f32
    %174 = vector.broadcast %cst_27 : f32 to vector<2x64xf32>
    %175 = arith.addf %174, %173 : vector<2x64xf32>
    %176 = arith.divf %174, %175 : vector<2x64xf32>
    %177 = vector.extract_strided_slice %168 {offsets = [0, 64], sizes = [2, 64], strides = [1, 1]} : vector<2x128xf32> to vector<2x64xf32>
    %178 = arith.mulf %177, %151 : vector<2x64xf32>
    %179 = vector.extract_strided_slice %168 {offsets = [0, 0], sizes = [2, 64], strides = [1, 1]} : vector<2x128xf32> to vector<2x64xf32>
    %180 = arith.mulf %179, %170 : vector<2x64xf32>
    %181 = arith.addf %178, %180 : vector<2x64xf32>
    %182 = math.tanh %181 : vector<2x64xf32>
    %183 = arith.mulf %176, %182 : vector<2x64xf32>
    %184 = vector.extract_strided_slice %183 {offsets = [0, 0], sizes = [2, 32], strides = [1, 1]} : vector<2x64xf32> to vector<2x32xf32>
    %185 = vector.extract_strided_slice %183 {offsets = [0, 32], sizes = [2, 32], strides = [1, 1]} : vector<2x64xf32> to vector<2x32xf32>
    %186 = vector.extract_strided_slice %14 {offsets = [0, 5, 0], sizes = [2, 1, 256], strides = [1, 1, 1]} : vector<2x8x256xf32> to vector<2x1x256xf32>
    %187 = vector.shape_cast %186 : vector<2x1x256xf32> to vector<2x256xf32>
    %188 = vector.extract_strided_slice %14 {offsets = [0, 2, 0], sizes = [2, 1, 256], strides = [1, 1, 1]} : vector<2x8x256xf32> to vector<2x1x256xf32>
    %189 = vector.shape_cast %188 : vector<2x1x256xf32> to vector<2x256xf32>
    %190 = arith.select %33, %187, %189 : vector<2x256xi1>, vector<2x256xf32>
    %cst_28 = arith.constant dense<0.000000e+00> : vector<2x256xf32>
    %191 = tpu.matmul %183, %8, %cst_28 {dimension_numbers = #tpu.dot_dimension_numbers<[1], [0], [0], [1], [0, 0, 1, 1], [], []>} : vector<2x64xf32>, vector<64x256xf32>, vector<2x256xf32> -> vector<2x256xf32>
    %192 = arith.addf %190, %191 : vector<2x256xf32>
    %193 = vector.extract_strided_slice %192 {offsets = [0, 0], sizes = [2, 128], strides = [1, 1]} : vector<2x256xf32> to vector<2x128xf32>
    %194 = arith.negf %193 : vector<2x128xf32>
    %195 = math.exp %194 : vector<2x128xf32>
    %cst_29 = arith.constant 1.000000e+00 : f32
    %196 = vector.broadcast %cst_29 : f32 to vector<2x128xf32>
    %197 = arith.addf %196, %195 : vector<2x128xf32>
    %198 = arith.divf %196, %197 : vector<2x128xf32>
    %199 = vector.extract_strided_slice %192 {offsets = [0, 128], sizes = [2, 64], strides = [1, 1]} : vector<2x256xf32> to vector<2x64xf32>
    %200 = math.tanh %199 : vector<2x64xf32>
    %201 = vector.extract_strided_slice %192 {offsets = [0, 192], sizes = [2, 64], strides = [1, 1]} : vector<2x256xf32> to vector<2x64xf32>
    %202 = arith.negf %201 : vector<2x64xf32>
    %203 = math.exp %202 : vector<2x64xf32>
    %cst_30 = arith.constant 1.000000e+00 : f32
    %204 = vector.broadcast %cst_30 : f32 to vector<2x64xf32>
    %205 = arith.addf %204, %203 : vector<2x64xf32>
    %206 = arith.divf %204, %205 : vector<2x64xf32>
    %207 = vector.extract_strided_slice %198 {offsets = [0, 64], sizes = [2, 64], strides = [1, 1]} : vector<2x128xf32> to vector<2x64xf32>
    %208 = arith.mulf %207, %181 : vector<2x64xf32>
    %209 = vector.extract_strided_slice %198 {offsets = [0, 0], sizes = [2, 64], strides = [1, 1]} : vector<2x128xf32> to vector<2x64xf32>
    %210 = arith.mulf %209, %200 : vector<2x64xf32>
    %211 = arith.addf %208, %210 : vector<2x64xf32>
    %212 = math.tanh %211 : vector<2x64xf32>
    %213 = arith.mulf %206, %212 : vector<2x64xf32>
    %214 = vector.extract_strided_slice %213 {offsets = [0, 0], sizes = [2, 32], strides = [1, 1]} : vector<2x64xf32> to vector<2x32xf32>
    %215 = vector.extract_strided_slice %213 {offsets = [0, 32], sizes = [2, 32], strides = [1, 1]} : vector<2x64xf32> to vector<2x32xf32>
    %216 = vector.extract_strided_slice %14 {offsets = [0, 6, 0], sizes = [2, 1, 256], strides = [1, 1, 1]} : vector<2x8x256xf32> to vector<2x1x256xf32>
    %217 = vector.shape_cast %216 : vector<2x1x256xf32> to vector<2x256xf32>
    %218 = vector.extract_strided_slice %14 {offsets = [0, 1, 0], sizes = [2, 1, 256], strides = [1, 1, 1]} : vector<2x8x256xf32> to vector<2x1x256xf32>
    %219 = vector.shape_cast %218 : vector<2x1x256xf32> to vector<2x256xf32>
    %220 = arith.select %33, %217, %219 : vector<2x256xi1>, vector<2x256xf32>
    %cst_31 = arith.constant dense<0.000000e+00> : vector<2x256xf32>
    %221 = tpu.matmul %213, %8, %cst_31 {dimension_numbers = #tpu.dot_dimension_numbers<[1], [0], [0], [1], [0, 0, 1, 1], [], []>} : vector<2x64xf32>, vector<64x256xf32>, vector<2x256xf32> -> vector<2x256xf32>
    %222 = arith.addf %220, %221 : vector<2x256xf32>
    %223 = vector.extract_strided_slice %222 {offsets = [0, 0], sizes = [2, 128], strides = [1, 1]} : vector<2x256xf32> to vector<2x128xf32>
    %224 = arith.negf %223 : vector<2x128xf32>
    %225 = math.exp %224 : vector<2x128xf32>
    %cst_32 = arith.constant 1.000000e+00 : f32
    %226 = vector.broadcast %cst_32 : f32 to vector<2x128xf32>
    %227 = arith.addf %226, %225 : vector<2x128xf32>
    %228 = arith.divf %226, %227 : vector<2x128xf32>
    %229 = vector.extract_strided_slice %222 {offsets = [0, 128], sizes = [2, 64], strides = [1, 1]} : vector<2x256xf32> to vector<2x64xf32>
    %230 = math.tanh %229 : vector<2x64xf32>
    %231 = vector.extract_strided_slice %222 {offsets = [0, 192], sizes = [2, 64], strides = [1, 1]} : vector<2x256xf32> to vector<2x64xf32>
    %232 = arith.negf %231 : vector<2x64xf32>
    %233 = math.exp %232 : vector<2x64xf32>
    %cst_33 = arith.constant 1.000000e+00 : f32
    %234 = vector.broadcast %cst_33 : f32 to vector<2x64xf32>
    %235 = arith.addf %234, %233 : vector<2x64xf32>
    %236 = arith.divf %234, %235 : vector<2x64xf32>
    %237 = vector.extract_strided_slice %228 {offsets = [0, 64], sizes = [2, 64], strides = [1, 1]} : vector<2x128xf32> to vector<2x64xf32>
    %238 = arith.mulf %237, %211 : vector<2x64xf32>
    %239 = vector.extract_strided_slice %228 {offsets = [0, 0], sizes = [2, 64], strides = [1, 1]} : vector<2x128xf32> to vector<2x64xf32>
    %240 = arith.mulf %239, %230 : vector<2x64xf32>
    %241 = arith.addf %238, %240 : vector<2x64xf32>
    %242 = math.tanh %241 : vector<2x64xf32>
    %243 = arith.mulf %236, %242 : vector<2x64xf32>
    %244 = vector.extract_strided_slice %243 {offsets = [0, 0], sizes = [2, 32], strides = [1, 1]} : vector<2x64xf32> to vector<2x32xf32>
    %245 = vector.extract_strided_slice %243 {offsets = [0, 32], sizes = [2, 32], strides = [1, 1]} : vector<2x64xf32> to vector<2x32xf32>
    %246 = vector.extract_strided_slice %14 {offsets = [0, 7, 0], sizes = [2, 1, 256], strides = [1, 1, 1]} : vector<2x8x256xf32> to vector<2x1x256xf32>
    %247 = vector.shape_cast %246 : vector<2x1x256xf32> to vector<2x256xf32>
    %248 = vector.extract_strided_slice %14 {offsets = [0, 0, 0], sizes = [2, 1, 256], strides = [1, 1, 1]} : vector<2x8x256xf32> to vector<2x1x256xf32>
    %249 = vector.shape_cast %248 : vector<2x1x256xf32> to vector<2x256xf32>
    %250 = arith.select %33, %247, %249 : vector<2x256xi1>, vector<2x256xf32>
    %cst_34 = arith.constant dense<0.000000e+00> : vector<2x256xf32>
    %251 = tpu.matmul %243, %8, %cst_34 {dimension_numbers = #tpu.dot_dimension_numbers<[1], [0], [0], [1], [0, 0, 1, 1], [], []>} : vector<2x64xf32>, vector<64x256xf32>, vector<2x256xf32> -> vector<2x256xf32>
    %252 = arith.addf %250, %251 : vector<2x256xf32>
    %253 = vector.extract_strided_slice %252 {offsets = [0, 0], sizes = [2, 128], strides = [1, 1]} : vector<2x256xf32> to vector<2x128xf32>
    %254 = arith.negf %253 : vector<2x128xf32>
    %255 = math.exp %254 : vector<2x128xf32>
    %cst_35 = arith.constant 1.000000e+00 : f32
    %256 = vector.broadcast %cst_35 : f32 to vector<2x128xf32>
    %257 = arith.addf %256, %255 : vector<2x128xf32>
    %258 = arith.divf %256, %257 : vector<2x128xf32>
    %259 = vector.extract_strided_slice %252 {offsets = [0, 128], sizes = [2, 64], strides = [1, 1]} : vector<2x256xf32> to vector<2x64xf32>
    %260 = math.tanh %259 : vector<2x64xf32>
    %261 = vector.extract_strided_slice %252 {offsets = [0, 192], sizes = [2, 64], strides = [1, 1]} : vector<2x256xf32> to vector<2x64xf32>
    %262 = arith.negf %261 : vector<2x64xf32>
    %263 = math.exp %262 : vector<2x64xf32>
    %cst_36 = arith.constant 1.000000e+00 : f32
    %264 = vector.broadcast %cst_36 : f32 to vector<2x64xf32>
    %265 = arith.addf %264, %263 : vector<2x64xf32>
    %266 = arith.divf %264, %265 : vector<2x64xf32>
    %267 = vector.extract_strided_slice %258 {offsets = [0, 64], sizes = [2, 64], strides = [1, 1]} : vector<2x128xf32> to vector<2x64xf32>
    %268 = arith.mulf %267, %241 : vector<2x64xf32>
    %269 = vector.extract_strided_slice %258 {offsets = [0, 0], sizes = [2, 64], strides = [1, 1]} : vector<2x128xf32> to vector<2x64xf32>
    %270 = arith.mulf %269, %260 : vector<2x64xf32>
    %271 = arith.addf %268, %270 : vector<2x64xf32>
    %272 = math.tanh %271 : vector<2x64xf32>
    %273 = arith.mulf %266, %272 : vector<2x64xf32>
    %274 = vector.extract_strided_slice %273 {offsets = [0, 0], sizes = [2, 32], strides = [1, 1]} : vector<2x64xf32> to vector<2x32xf32>
    %275 = vector.extract_strided_slice %273 {offsets = [0, 32], sizes = [2, 32], strides = [1, 1]} : vector<2x64xf32> to vector<2x32xf32>
    %276 = vector.shape_cast %64 : vector<2x32xf32> to vector<2x1x32xf32>
    %277 = vector.shape_cast %94 : vector<2x32xf32> to vector<2x1x32xf32>
    %278 = vector.shape_cast %124 : vector<2x32xf32> to vector<2x1x32xf32>
    %279 = vector.shape_cast %154 : vector<2x32xf32> to vector<2x1x32xf32>
    %280 = vector.shape_cast %184 : vector<2x32xf32> to vector<2x1x32xf32>
    %281 = vector.shape_cast %214 : vector<2x32xf32> to vector<2x1x32xf32>
    %282 = vector.shape_cast %244 : vector<2x32xf32> to vector<2x1x32xf32>
    %283 = vector.shape_cast %274 : vector<2x32xf32> to vector<2x1x32xf32>
    %284 = tpu.concatenate %276, %277, %278, %279, %280, %281, %282, %283 in 1 : vector<2x1x32xf32>, vector<2x1x32xf32>, vector<2x1x32xf32>, vector<2x1x32xf32>, vector<2x1x32xf32>, vector<2x1x32xf32>, vector<2x1x32xf32>, vector<2x1x32xf32> -> vector<2x8x32xf32>
    %285 = vector.shape_cast %275 : vector<2x32xf32> to vector<2x1x32xf32>
    %286 = vector.shape_cast %245 : vector<2x32xf32> to vector<2x1x32xf32>
    %287 = vector.shape_cast %215 : vector<2x32xf32> to vector<2x1x32xf32>
    %288 = vector.shape_cast %185 : vector<2x32xf32> to vector<2x1x32xf32>
    %289 = vector.shape_cast %155 : vector<2x32xf32> to vector<2x1x32xf32>
    %290 = vector.shape_cast %125 : vector<2x32xf32> to vector<2x1x32xf32>
    %291 = vector.shape_cast %95 : vector<2x32xf32> to vector<2x1x32xf32>
    %292 = vector.shape_cast %65 : vector<2x32xf32> to vector<2x1x32xf32>
    %293 = tpu.concatenate %285, %286, %287, %288, %289, %290, %291, %292 in 1 : vector<2x1x32xf32>, vector<2x1x32xf32>, vector<2x1x32xf32>, vector<2x1x32xf32>, vector<2x1x32xf32>, vector<2x1x32xf32>, vector<2x1x32xf32>, vector<2x1x32xf32> -> vector<2x8x32xf32>
    %294 = tpu.concatenate %284, %293 in 2 : vector<2x8x32xf32>, vector<2x8x32xf32> -> vector<2x8x64xf32>
    %c0_i32_37 = arith.constant 0 : i32
    %295 = tpu.memref_slice %arg9[%c0_i32_37] : memref<3x!tpu.dma_semaphore, #tpu.memory_space<semaphore_mem>> -> memref<1x!tpu.dma_semaphore, #tpu.memory_space<semaphore_mem>>
    %296 = tpu.memref_squeeze %295 : memref<1x!tpu.dma_semaphore, #tpu.memory_space<semaphore_mem>> -> memref<!tpu.dma_semaphore, #tpu.memory_space<semaphore_mem>>
    tpu.wait_dma2 semaphore(%296 : memref<!tpu.dma_semaphore, #tpu.memory_space<semaphore_mem>>) src(%arg2 : memref<129x256xf32, #tpu.memory_space<any>>) dst(%arg6 : memref<129x256xf32, #tpu.memory_space<vmem>>)
    %c0_38 = arith.constant 0 : index
    %c0_39 = arith.constant 0 : index
    %297 = vector.load %arg6[%c0_38, %c0_39] : memref<129x256xf32, #tpu.memory_space<vmem>>, vector<64x256xf32>
    %c64 = arith.constant 64 : index
    %c0_40 = arith.constant 0 : index
    %298 = vector.load %arg6[%c64, %c0_40] : memref<129x256xf32, #tpu.memory_space<vmem>>, vector<64x256xf32>
    %c128 = arith.constant 128 : index
    %c0_41 = arith.constant 0 : index
    %299 = vector.load %arg6[%c128, %c0_41] : memref<129x256xf32, #tpu.memory_space<vmem>>, vector<1x256xf32>
    %300 = vector.shape_cast %294 : vector<2x8x64xf32> to vector<16x64xf32>
    %cst_42 = arith.constant dense<0.000000e+00> : vector<16x256xf32>
    %301 = tpu.matmul %300, %297, %cst_42 {dimension_numbers = #tpu.dot_dimension_numbers<[1], [0], [0], [1], [0, 0, 1, 1], [], []>} : vector<16x64xf32>, vector<64x256xf32>, vector<16x256xf32> -> vector<16x256xf32>
    %302 = vector.broadcast %299 : vector<1x256xf32> to vector<16x256xf32>
    %303 = arith.addf %301, %302 : vector<16x256xf32>
    %304 = vector.shape_cast %303 : vector<16x256xf32> to vector<2x8x256xf32>
    %305 = tpu.iota {dimensions = array<i32: 1>} : vector<2x256xi32>
    %c64_i32_43 = arith.constant 64 : i32
    %c0_i32_44 = arith.constant 0 : i32
    %306 = arith.cmpi eq, %c64_i32_43, %c0_i32_44 : i32
    %c1_i32_45 = arith.constant 1 : i32
    %307 = arith.select %306, %c1_i32_45, %c64_i32_43 : i32
    %308 = vector.broadcast %307 : i32 to vector<2x256xi32>
    %309 = arith.remsi %305, %308 : vector<2x256xi32>
    %c0_i32_46 = arith.constant 0 : i32
    %310 = vector.broadcast %c0_i32_46 : i32 to vector<2x256xi32>
    %311 = arith.cmpi ne, %309, %310 : vector<2x256xi32>
    %c0_i32_47 = arith.constant 0 : i32
    %312 = vector.broadcast %c0_i32_47 : i32 to vector<2x256xi32>
    %313 = arith.cmpi slt, %309, %312 : vector<2x256xi32>
    %c0_i32_48 = arith.constant 0 : i32
    %314 = arith.cmpi slt, %307, %c0_i32_48 : i32
    %315 = vector.broadcast %314 : i1 to vector<2x256xi1>
    %316 = vector.broadcast %315 : vector<2x256xi1> to vector<2x256xi1>
    %317 = arith.xori %313, %316 : vector<2x256xi1>
    %318 = arith.andi %317, %311 : vector<2x256xi1>
    %319 = vector.broadcast %307 : i32 to vector<2x256xi32>
    %320 = arith.addi %309, %319 : vector<2x256xi32>
    %321 = arith.select %318, %320, %309 : vector<2x256xi1>, vector<2x256xi32>
    %c32_i32_49 = arith.constant 32 : i32
    %322 = vector.broadcast %c32_i32_49 : i32 to vector<2x256xi32>
    %323 = arith.cmpi slt, %321, %322 : vector<2x256xi32>
    %cst_50 = arith.constant 0.000000e+00 : f32
    %324 = vector.broadcast %cst_50 : f32 to vector<2x64xf32>
    %cst_51 = arith.constant 0.000000e+00 : f32
    %325 = vector.broadcast %cst_51 : f32 to vector<2x64xf32>
    %326 = vector.extract_strided_slice %304 {offsets = [0, 0, 0], sizes = [2, 1, 256], strides = [1, 1, 1]} : vector<2x8x256xf32> to vector<2x1x256xf32>
    %327 = vector.shape_cast %326 : vector<2x1x256xf32> to vector<2x256xf32>
    %328 = vector.extract_strided_slice %304 {offsets = [0, 7, 0], sizes = [2, 1, 256], strides = [1, 1, 1]} : vector<2x8x256xf32> to vector<2x1x256xf32>
    %329 = vector.shape_cast %328 : vector<2x1x256xf32> to vector<2x256xf32>
    %330 = arith.select %323, %327, %329 : vector<2x256xi1>, vector<2x256xf32>
    %cst_52 = arith.constant dense<0.000000e+00> : vector<2x256xf32>
    %331 = tpu.matmul %324, %298, %cst_52 {dimension_numbers = #tpu.dot_dimension_numbers<[1], [0], [0], [1], [0, 0, 1, 1], [], []>} : vector<2x64xf32>, vector<64x256xf32>, vector<2x256xf32> -> vector<2x256xf32>
    %332 = arith.addf %330, %331 : vector<2x256xf32>
    %333 = vector.extract_strided_slice %332 {offsets = [0, 0], sizes = [2, 128], strides = [1, 1]} : vector<2x256xf32> to vector<2x128xf32>
    %334 = arith.negf %333 : vector<2x128xf32>
    %335 = math.exp %334 : vector<2x128xf32>
    %cst_53 = arith.constant 1.000000e+00 : f32
    %336 = vector.broadcast %cst_53 : f32 to vector<2x128xf32>
    %337 = arith.addf %336, %335 : vector<2x128xf32>
    %338 = arith.divf %336, %337 : vector<2x128xf32>
    %339 = vector.extract_strided_slice %332 {offsets = [0, 128], sizes = [2, 64], strides = [1, 1]} : vector<2x256xf32> to vector<2x64xf32>
    %340 = math.tanh %339 : vector<2x64xf32>
    %341 = vector.extract_strided_slice %332 {offsets = [0, 192], sizes = [2, 64], strides = [1, 1]} : vector<2x256xf32> to vector<2x64xf32>
    %342 = arith.negf %341 : vector<2x64xf32>
    %343 = math.exp %342 : vector<2x64xf32>
    %cst_54 = arith.constant 1.000000e+00 : f32
    %344 = vector.broadcast %cst_54 : f32 to vector<2x64xf32>
    %345 = arith.addf %344, %343 : vector<2x64xf32>
    %346 = arith.divf %344, %345 : vector<2x64xf32>
    %347 = vector.extract_strided_slice %338 {offsets = [0, 64], sizes = [2, 64], strides = [1, 1]} : vector<2x128xf32> to vector<2x64xf32>
    %348 = arith.mulf %347, %325 : vector<2x64xf32>
    %349 = vector.extract_strided_slice %338 {offsets = [0, 0], sizes = [2, 64], strides = [1, 1]} : vector<2x128xf32> to vector<2x64xf32>
    %350 = arith.mulf %349, %340 : vector<2x64xf32>
    %351 = arith.addf %348, %350 : vector<2x64xf32>
    %352 = math.tanh %351 : vector<2x64xf32>
    %353 = arith.mulf %346, %352 : vector<2x64xf32>
    %354 = vector.extract_strided_slice %353 {offsets = [0, 0], sizes = [2, 32], strides = [1, 1]} : vector<2x64xf32> to vector<2x32xf32>
    %355 = vector.extract_strided_slice %353 {offsets = [0, 32], sizes = [2, 32], strides = [1, 1]} : vector<2x64xf32> to vector<2x32xf32>
    %356 = vector.extract_strided_slice %304 {offsets = [0, 1, 0], sizes = [2, 1, 256], strides = [1, 1, 1]} : vector<2x8x256xf32> to vector<2x1x256xf32>
    %357 = vector.shape_cast %356 : vector<2x1x256xf32> to vector<2x256xf32>
    %358 = vector.extract_strided_slice %304 {offsets = [0, 6, 0], sizes = [2, 1, 256], strides = [1, 1, 1]} : vector<2x8x256xf32> to vector<2x1x256xf32>
    %359 = vector.shape_cast %358 : vector<2x1x256xf32> to vector<2x256xf32>
    %360 = arith.select %323, %357, %359 : vector<2x256xi1>, vector<2x256xf32>
    %cst_55 = arith.constant dense<0.000000e+00> : vector<2x256xf32>
    %361 = tpu.matmul %353, %298, %cst_55 {dimension_numbers = #tpu.dot_dimension_numbers<[1], [0], [0], [1], [0, 0, 1, 1], [], []>} : vector<2x64xf32>, vector<64x256xf32>, vector<2x256xf32> -> vector<2x256xf32>
    %362 = arith.addf %360, %361 : vector<2x256xf32>
    %363 = vector.extract_strided_slice %362 {offsets = [0, 0], sizes = [2, 128], strides = [1, 1]} : vector<2x256xf32> to vector<2x128xf32>
    %364 = arith.negf %363 : vector<2x128xf32>
    %365 = math.exp %364 : vector<2x128xf32>
    %cst_56 = arith.constant 1.000000e+00 : f32
    %366 = vector.broadcast %cst_56 : f32 to vector<2x128xf32>
    %367 = arith.addf %366, %365 : vector<2x128xf32>
    %368 = arith.divf %366, %367 : vector<2x128xf32>
    %369 = vector.extract_strided_slice %362 {offsets = [0, 128], sizes = [2, 64], strides = [1, 1]} : vector<2x256xf32> to vector<2x64xf32>
    %370 = math.tanh %369 : vector<2x64xf32>
    %371 = vector.extract_strided_slice %362 {offsets = [0, 192], sizes = [2, 64], strides = [1, 1]} : vector<2x256xf32> to vector<2x64xf32>
    %372 = arith.negf %371 : vector<2x64xf32>
    %373 = math.exp %372 : vector<2x64xf32>
    %cst_57 = arith.constant 1.000000e+00 : f32
    %374 = vector.broadcast %cst_57 : f32 to vector<2x64xf32>
    %375 = arith.addf %374, %373 : vector<2x64xf32>
    %376 = arith.divf %374, %375 : vector<2x64xf32>
    %377 = vector.extract_strided_slice %368 {offsets = [0, 64], sizes = [2, 64], strides = [1, 1]} : vector<2x128xf32> to vector<2x64xf32>
    %378 = arith.mulf %377, %351 : vector<2x64xf32>
    %379 = vector.extract_strided_slice %368 {offsets = [0, 0], sizes = [2, 64], strides = [1, 1]} : vector<2x128xf32> to vector<2x64xf32>
    %380 = arith.mulf %379, %370 : vector<2x64xf32>
    %381 = arith.addf %378, %380 : vector<2x64xf32>
    %382 = math.tanh %381 : vector<2x64xf32>
    %383 = arith.mulf %376, %382 : vector<2x64xf32>
    %384 = vector.extract_strided_slice %383 {offsets = [0, 0], sizes = [2, 32], strides = [1, 1]} : vector<2x64xf32> to vector<2x32xf32>
    %385 = vector.extract_strided_slice %383 {offsets = [0, 32], sizes = [2, 32], strides = [1, 1]} : vector<2x64xf32> to vector<2x32xf32>
    %386 = vector.extract_strided_slice %304 {offsets = [0, 2, 0], sizes = [2, 1, 256], strides = [1, 1, 1]} : vector<2x8x256xf32> to vector<2x1x256xf32>
    %387 = vector.shape_cast %386 : vector<2x1x256xf32> to vector<2x256xf32>
    %388 = vector.extract_strided_slice %304 {offsets = [0, 5, 0], sizes = [2, 1, 256], strides = [1, 1, 1]} : vector<2x8x256xf32> to vector<2x1x256xf32>
    %389 = vector.shape_cast %388 : vector<2x1x256xf32> to vector<2x256xf32>
    %390 = arith.select %323, %387, %389 : vector<2x256xi1>, vector<2x256xf32>
    %cst_58 = arith.constant dense<0.000000e+00> : vector<2x256xf32>
    %391 = tpu.matmul %383, %298, %cst_58 {dimension_numbers = #tpu.dot_dimension_numbers<[1], [0], [0], [1], [0, 0, 1, 1], [], []>} : vector<2x64xf32>, vector<64x256xf32>, vector<2x256xf32> -> vector<2x256xf32>
    %392 = arith.addf %390, %391 : vector<2x256xf32>
    %393 = vector.extract_strided_slice %392 {offsets = [0, 0], sizes = [2, 128], strides = [1, 1]} : vector<2x256xf32> to vector<2x128xf32>
    %394 = arith.negf %393 : vector<2x128xf32>
    %395 = math.exp %394 : vector<2x128xf32>
    %cst_59 = arith.constant 1.000000e+00 : f32
    %396 = vector.broadcast %cst_59 : f32 to vector<2x128xf32>
    %397 = arith.addf %396, %395 : vector<2x128xf32>
    %398 = arith.divf %396, %397 : vector<2x128xf32>
    %399 = vector.extract_strided_slice %392 {offsets = [0, 128], sizes = [2, 64], strides = [1, 1]} : vector<2x256xf32> to vector<2x64xf32>
    %400 = math.tanh %399 : vector<2x64xf32>
    %401 = vector.extract_strided_slice %392 {offsets = [0, 192], sizes = [2, 64], strides = [1, 1]} : vector<2x256xf32> to vector<2x64xf32>
    %402 = arith.negf %401 : vector<2x64xf32>
    %403 = math.exp %402 : vector<2x64xf32>
    %cst_60 = arith.constant 1.000000e+00 : f32
    %404 = vector.broadcast %cst_60 : f32 to vector<2x64xf32>
    %405 = arith.addf %404, %403 : vector<2x64xf32>
    %406 = arith.divf %404, %405 : vector<2x64xf32>
    %407 = vector.extract_strided_slice %398 {offsets = [0, 64], sizes = [2, 64], strides = [1, 1]} : vector<2x128xf32> to vector<2x64xf32>
    %408 = arith.mulf %407, %381 : vector<2x64xf32>
    %409 = vector.extract_strided_slice %398 {offsets = [0, 0], sizes = [2, 64], strides = [1, 1]} : vector<2x128xf32> to vector<2x64xf32>
    %410 = arith.mulf %409, %400 : vector<2x64xf32>
    %411 = arith.addf %408, %410 : vector<2x64xf32>
    %412 = math.tanh %411 : vector<2x64xf32>
    %413 = arith.mulf %406, %412 : vector<2x64xf32>
    %414 = vector.extract_strided_slice %413 {offsets = [0, 0], sizes = [2, 32], strides = [1, 1]} : vector<2x64xf32> to vector<2x32xf32>
    %415 = vector.extract_strided_slice %413 {offsets = [0, 32], sizes = [2, 32], strides = [1, 1]} : vector<2x64xf32> to vector<2x32xf32>
    %416 = vector.extract_strided_slice %304 {offsets = [0, 3, 0], sizes = [2, 1, 256], strides = [1, 1, 1]} : vector<2x8x256xf32> to vector<2x1x256xf32>
    %417 = vector.shape_cast %416 : vector<2x1x256xf32> to vector<2x256xf32>
    %418 = vector.extract_strided_slice %304 {offsets = [0, 4, 0], sizes = [2, 1, 256], strides = [1, 1, 1]} : vector<2x8x256xf32> to vector<2x1x256xf32>
    %419 = vector.shape_cast %418 : vector<2x1x256xf32> to vector<2x256xf32>
    %420 = arith.select %323, %417, %419 : vector<2x256xi1>, vector<2x256xf32>
    %cst_61 = arith.constant dense<0.000000e+00> : vector<2x256xf32>
    %421 = tpu.matmul %413, %298, %cst_61 {dimension_numbers = #tpu.dot_dimension_numbers<[1], [0], [0], [1], [0, 0, 1, 1], [], []>} : vector<2x64xf32>, vector<64x256xf32>, vector<2x256xf32> -> vector<2x256xf32>
    %422 = arith.addf %420, %421 : vector<2x256xf32>
    %423 = vector.extract_strided_slice %422 {offsets = [0, 0], sizes = [2, 128], strides = [1, 1]} : vector<2x256xf32> to vector<2x128xf32>
    %424 = arith.negf %423 : vector<2x128xf32>
    %425 = math.exp %424 : vector<2x128xf32>
    %cst_62 = arith.constant 1.000000e+00 : f32
    %426 = vector.broadcast %cst_62 : f32 to vector<2x128xf32>
    %427 = arith.addf %426, %425 : vector<2x128xf32>
    %428 = arith.divf %426, %427 : vector<2x128xf32>
    %429 = vector.extract_strided_slice %422 {offsets = [0, 128], sizes = [2, 64], strides = [1, 1]} : vector<2x256xf32> to vector<2x64xf32>
    %430 = math.tanh %429 : vector<2x64xf32>
    %431 = vector.extract_strided_slice %422 {offsets = [0, 192], sizes = [2, 64], strides = [1, 1]} : vector<2x256xf32> to vector<2x64xf32>
    %432 = arith.negf %431 : vector<2x64xf32>
    %433 = math.exp %432 : vector<2x64xf32>
    %cst_63 = arith.constant 1.000000e+00 : f32
    %434 = vector.broadcast %cst_63 : f32 to vector<2x64xf32>
    %435 = arith.addf %434, %433 : vector<2x64xf32>
    %436 = arith.divf %434, %435 : vector<2x64xf32>
    %437 = vector.extract_strided_slice %428 {offsets = [0, 64], sizes = [2, 64], strides = [1, 1]} : vector<2x128xf32> to vector<2x64xf32>
    %438 = arith.mulf %437, %411 : vector<2x64xf32>
    %439 = vector.extract_strided_slice %428 {offsets = [0, 0], sizes = [2, 64], strides = [1, 1]} : vector<2x128xf32> to vector<2x64xf32>
    %440 = arith.mulf %439, %430 : vector<2x64xf32>
    %441 = arith.addf %438, %440 : vector<2x64xf32>
    %442 = math.tanh %441 : vector<2x64xf32>
    %443 = arith.mulf %436, %442 : vector<2x64xf32>
    %444 = vector.extract_strided_slice %443 {offsets = [0, 0], sizes = [2, 32], strides = [1, 1]} : vector<2x64xf32> to vector<2x32xf32>
    %445 = vector.extract_strided_slice %443 {offsets = [0, 32], sizes = [2, 32], strides = [1, 1]} : vector<2x64xf32> to vector<2x32xf32>
    %446 = vector.extract_strided_slice %304 {offsets = [0, 4, 0], sizes = [2, 1, 256], strides = [1, 1, 1]} : vector<2x8x256xf32> to vector<2x1x256xf32>
    %447 = vector.shape_cast %446 : vector<2x1x256xf32> to vector<2x256xf32>
    %448 = vector.extract_strided_slice %304 {offsets = [0, 3, 0], sizes = [2, 1, 256], strides = [1, 1, 1]} : vector<2x8x256xf32> to vector<2x1x256xf32>
    %449 = vector.shape_cast %448 : vector<2x1x256xf32> to vector<2x256xf32>
    %450 = arith.select %323, %447, %449 : vector<2x256xi1>, vector<2x256xf32>
    %cst_64 = arith.constant dense<0.000000e+00> : vector<2x256xf32>
    %451 = tpu.matmul %443, %298, %cst_64 {dimension_numbers = #tpu.dot_dimension_numbers<[1], [0], [0], [1], [0, 0, 1, 1], [], []>} : vector<2x64xf32>, vector<64x256xf32>, vector<2x256xf32> -> vector<2x256xf32>
    %452 = arith.addf %450, %451 : vector<2x256xf32>
    %453 = vector.extract_strided_slice %452 {offsets = [0, 0], sizes = [2, 128], strides = [1, 1]} : vector<2x256xf32> to vector<2x128xf32>
    %454 = arith.negf %453 : vector<2x128xf32>
    %455 = math.exp %454 : vector<2x128xf32>
    %cst_65 = arith.constant 1.000000e+00 : f32
    %456 = vector.broadcast %cst_65 : f32 to vector<2x128xf32>
    %457 = arith.addf %456, %455 : vector<2x128xf32>
    %458 = arith.divf %456, %457 : vector<2x128xf32>
    %459 = vector.extract_strided_slice %452 {offsets = [0, 128], sizes = [2, 64], strides = [1, 1]} : vector<2x256xf32> to vector<2x64xf32>
    %460 = math.tanh %459 : vector<2x64xf32>
    %461 = vector.extract_strided_slice %452 {offsets = [0, 192], sizes = [2, 64], strides = [1, 1]} : vector<2x256xf32> to vector<2x64xf32>
    %462 = arith.negf %461 : vector<2x64xf32>
    %463 = math.exp %462 : vector<2x64xf32>
    %cst_66 = arith.constant 1.000000e+00 : f32
    %464 = vector.broadcast %cst_66 : f32 to vector<2x64xf32>
    %465 = arith.addf %464, %463 : vector<2x64xf32>
    %466 = arith.divf %464, %465 : vector<2x64xf32>
    %467 = vector.extract_strided_slice %458 {offsets = [0, 64], sizes = [2, 64], strides = [1, 1]} : vector<2x128xf32> to vector<2x64xf32>
    %468 = arith.mulf %467, %441 : vector<2x64xf32>
    %469 = vector.extract_strided_slice %458 {offsets = [0, 0], sizes = [2, 64], strides = [1, 1]} : vector<2x128xf32> to vector<2x64xf32>
    %470 = arith.mulf %469, %460 : vector<2x64xf32>
    %471 = arith.addf %468, %470 : vector<2x64xf32>
    %472 = math.tanh %471 : vector<2x64xf32>
    %473 = arith.mulf %466, %472 : vector<2x64xf32>
    %474 = vector.extract_strided_slice %473 {offsets = [0, 0], sizes = [2, 32], strides = [1, 1]} : vector<2x64xf32> to vector<2x32xf32>
    %475 = vector.extract_strided_slice %473 {offsets = [0, 32], sizes = [2, 32], strides = [1, 1]} : vector<2x64xf32> to vector<2x32xf32>
    %476 = vector.extract_strided_slice %304 {offsets = [0, 5, 0], sizes = [2, 1, 256], strides = [1, 1, 1]} : vector<2x8x256xf32> to vector<2x1x256xf32>
    %477 = vector.shape_cast %476 : vector<2x1x256xf32> to vector<2x256xf32>
    %478 = vector.extract_strided_slice %304 {offsets = [0, 2, 0], sizes = [2, 1, 256], strides = [1, 1, 1]} : vector<2x8x256xf32> to vector<2x1x256xf32>
    %479 = vector.shape_cast %478 : vector<2x1x256xf32> to vector<2x256xf32>
    %480 = arith.select %323, %477, %479 : vector<2x256xi1>, vector<2x256xf32>
    %cst_67 = arith.constant dense<0.000000e+00> : vector<2x256xf32>
    %481 = tpu.matmul %473, %298, %cst_67 {dimension_numbers = #tpu.dot_dimension_numbers<[1], [0], [0], [1], [0, 0, 1, 1], [], []>} : vector<2x64xf32>, vector<64x256xf32>, vector<2x256xf32> -> vector<2x256xf32>
    %482 = arith.addf %480, %481 : vector<2x256xf32>
    %483 = vector.extract_strided_slice %482 {offsets = [0, 0], sizes = [2, 128], strides = [1, 1]} : vector<2x256xf32> to vector<2x128xf32>
    %484 = arith.negf %483 : vector<2x128xf32>
    %485 = math.exp %484 : vector<2x128xf32>
    %cst_68 = arith.constant 1.000000e+00 : f32
    %486 = vector.broadcast %cst_68 : f32 to vector<2x128xf32>
    %487 = arith.addf %486, %485 : vector<2x128xf32>
    %488 = arith.divf %486, %487 : vector<2x128xf32>
    %489 = vector.extract_strided_slice %482 {offsets = [0, 128], sizes = [2, 64], strides = [1, 1]} : vector<2x256xf32> to vector<2x64xf32>
    %490 = math.tanh %489 : vector<2x64xf32>
    %491 = vector.extract_strided_slice %482 {offsets = [0, 192], sizes = [2, 64], strides = [1, 1]} : vector<2x256xf32> to vector<2x64xf32>
    %492 = arith.negf %491 : vector<2x64xf32>
    %493 = math.exp %492 : vector<2x64xf32>
    %cst_69 = arith.constant 1.000000e+00 : f32
    %494 = vector.broadcast %cst_69 : f32 to vector<2x64xf32>
    %495 = arith.addf %494, %493 : vector<2x64xf32>
    %496 = arith.divf %494, %495 : vector<2x64xf32>
    %497 = vector.extract_strided_slice %488 {offsets = [0, 64], sizes = [2, 64], strides = [1, 1]} : vector<2x128xf32> to vector<2x64xf32>
    %498 = arith.mulf %497, %471 : vector<2x64xf32>
    %499 = vector.extract_strided_slice %488 {offsets = [0, 0], sizes = [2, 64], strides = [1, 1]} : vector<2x128xf32> to vector<2x64xf32>
    %500 = arith.mulf %499, %490 : vector<2x64xf32>
    %501 = arith.addf %498, %500 : vector<2x64xf32>
    %502 = math.tanh %501 : vector<2x64xf32>
    %503 = arith.mulf %496, %502 : vector<2x64xf32>
    %504 = vector.extract_strided_slice %503 {offsets = [0, 0], sizes = [2, 32], strides = [1, 1]} : vector<2x64xf32> to vector<2x32xf32>
    %505 = vector.extract_strided_slice %503 {offsets = [0, 32], sizes = [2, 32], strides = [1, 1]} : vector<2x64xf32> to vector<2x32xf32>
    %506 = vector.extract_strided_slice %304 {offsets = [0, 6, 0], sizes = [2, 1, 256], strides = [1, 1, 1]} : vector<2x8x256xf32> to vector<2x1x256xf32>
    %507 = vector.shape_cast %506 : vector<2x1x256xf32> to vector<2x256xf32>
    %508 = vector.extract_strided_slice %304 {offsets = [0, 1, 0], sizes = [2, 1, 256], strides = [1, 1, 1]} : vector<2x8x256xf32> to vector<2x1x256xf32>
    %509 = vector.shape_cast %508 : vector<2x1x256xf32> to vector<2x256xf32>
    %510 = arith.select %323, %507, %509 : vector<2x256xi1>, vector<2x256xf32>
    %cst_70 = arith.constant dense<0.000000e+00> : vector<2x256xf32>
    %511 = tpu.matmul %503, %298, %cst_70 {dimension_numbers = #tpu.dot_dimension_numbers<[1], [0], [0], [1], [0, 0, 1, 1], [], []>} : vector<2x64xf32>, vector<64x256xf32>, vector<2x256xf32> -> vector<2x256xf32>
    %512 = arith.addf %510, %511 : vector<2x256xf32>
    %513 = vector.extract_strided_slice %512 {offsets = [0, 0], sizes = [2, 128], strides = [1, 1]} : vector<2x256xf32> to vector<2x128xf32>
    %514 = arith.negf %513 : vector<2x128xf32>
    %515 = math.exp %514 : vector<2x128xf32>
    %cst_71 = arith.constant 1.000000e+00 : f32
    %516 = vector.broadcast %cst_71 : f32 to vector<2x128xf32>
    %517 = arith.addf %516, %515 : vector<2x128xf32>
    %518 = arith.divf %516, %517 : vector<2x128xf32>
    %519 = vector.extract_strided_slice %512 {offsets = [0, 128], sizes = [2, 64], strides = [1, 1]} : vector<2x256xf32> to vector<2x64xf32>
    %520 = math.tanh %519 : vector<2x64xf32>
    %521 = vector.extract_strided_slice %512 {offsets = [0, 192], sizes = [2, 64], strides = [1, 1]} : vector<2x256xf32> to vector<2x64xf32>
    %522 = arith.negf %521 : vector<2x64xf32>
    %523 = math.exp %522 : vector<2x64xf32>
    %cst_72 = arith.constant 1.000000e+00 : f32
    %524 = vector.broadcast %cst_72 : f32 to vector<2x64xf32>
    %525 = arith.addf %524, %523 : vector<2x64xf32>
    %526 = arith.divf %524, %525 : vector<2x64xf32>
    %527 = vector.extract_strided_slice %518 {offsets = [0, 64], sizes = [2, 64], strides = [1, 1]} : vector<2x128xf32> to vector<2x64xf32>
    %528 = arith.mulf %527, %501 : vector<2x64xf32>
    %529 = vector.extract_strided_slice %518 {offsets = [0, 0], sizes = [2, 64], strides = [1, 1]} : vector<2x128xf32> to vector<2x64xf32>
    %530 = arith.mulf %529, %520 : vector<2x64xf32>
    %531 = arith.addf %528, %530 : vector<2x64xf32>
    %532 = math.tanh %531 : vector<2x64xf32>
    %533 = arith.mulf %526, %532 : vector<2x64xf32>
    %534 = vector.extract_strided_slice %533 {offsets = [0, 0], sizes = [2, 32], strides = [1, 1]} : vector<2x64xf32> to vector<2x32xf32>
    %535 = vector.extract_strided_slice %533 {offsets = [0, 32], sizes = [2, 32], strides = [1, 1]} : vector<2x64xf32> to vector<2x32xf32>
    %536 = vector.extract_strided_slice %304 {offsets = [0, 7, 0], sizes = [2, 1, 256], strides = [1, 1, 1]} : vector<2x8x256xf32> to vector<2x1x256xf32>
    %537 = vector.shape_cast %536 : vector<2x1x256xf32> to vector<2x256xf32>
    %538 = vector.extract_strided_slice %304 {offsets = [0, 0, 0], sizes = [2, 1, 256], strides = [1, 1, 1]} : vector<2x8x256xf32> to vector<2x1x256xf32>
    %539 = vector.shape_cast %538 : vector<2x1x256xf32> to vector<2x256xf32>
    %540 = arith.select %323, %537, %539 : vector<2x256xi1>, vector<2x256xf32>
    %cst_73 = arith.constant dense<0.000000e+00> : vector<2x256xf32>
    %541 = tpu.matmul %533, %298, %cst_73 {dimension_numbers = #tpu.dot_dimension_numbers<[1], [0], [0], [1], [0, 0, 1, 1], [], []>} : vector<2x64xf32>, vector<64x256xf32>, vector<2x256xf32> -> vector<2x256xf32>
    %542 = arith.addf %540, %541 : vector<2x256xf32>
    %543 = vector.extract_strided_slice %542 {offsets = [0, 0], sizes = [2, 128], strides = [1, 1]} : vector<2x256xf32> to vector<2x128xf32>
    %544 = arith.negf %543 : vector<2x128xf32>
    %545 = math.exp %544 : vector<2x128xf32>
    %cst_74 = arith.constant 1.000000e+00 : f32
    %546 = vector.broadcast %cst_74 : f32 to vector<2x128xf32>
    %547 = arith.addf %546, %545 : vector<2x128xf32>
    %548 = arith.divf %546, %547 : vector<2x128xf32>
    %549 = vector.extract_strided_slice %542 {offsets = [0, 128], sizes = [2, 64], strides = [1, 1]} : vector<2x256xf32> to vector<2x64xf32>
    %550 = math.tanh %549 : vector<2x64xf32>
    %551 = vector.extract_strided_slice %542 {offsets = [0, 192], sizes = [2, 64], strides = [1, 1]} : vector<2x256xf32> to vector<2x64xf32>
    %552 = arith.negf %551 : vector<2x64xf32>
    %553 = math.exp %552 : vector<2x64xf32>
    %cst_75 = arith.constant 1.000000e+00 : f32
    %554 = vector.broadcast %cst_75 : f32 to vector<2x64xf32>
    %555 = arith.addf %554, %553 : vector<2x64xf32>
    %556 = arith.divf %554, %555 : vector<2x64xf32>
    %557 = vector.extract_strided_slice %548 {offsets = [0, 64], sizes = [2, 64], strides = [1, 1]} : vector<2x128xf32> to vector<2x64xf32>
    %558 = arith.mulf %557, %531 : vector<2x64xf32>
    %559 = vector.extract_strided_slice %548 {offsets = [0, 0], sizes = [2, 64], strides = [1, 1]} : vector<2x128xf32> to vector<2x64xf32>
    %560 = arith.mulf %559, %550 : vector<2x64xf32>
    %561 = arith.addf %558, %560 : vector<2x64xf32>
    %562 = math.tanh %561 : vector<2x64xf32>
    %563 = arith.mulf %556, %562 : vector<2x64xf32>
    %564 = vector.extract_strided_slice %563 {offsets = [0, 0], sizes = [2, 32], strides = [1, 1]} : vector<2x64xf32> to vector<2x32xf32>
    %565 = vector.extract_strided_slice %563 {offsets = [0, 32], sizes = [2, 32], strides = [1, 1]} : vector<2x64xf32> to vector<2x32xf32>
    %566 = vector.shape_cast %354 : vector<2x32xf32> to vector<2x1x32xf32>
    %567 = vector.shape_cast %384 : vector<2x32xf32> to vector<2x1x32xf32>
    %568 = vector.shape_cast %414 : vector<2x32xf32> to vector<2x1x32xf32>
    %569 = vector.shape_cast %444 : vector<2x32xf32> to vector<2x1x32xf32>
    %570 = vector.shape_cast %474 : vector<2x32xf32> to vector<2x1x32xf32>
    %571 = vector.shape_cast %504 : vector<2x32xf32> to vector<2x1x32xf32>
    %572 = vector.shape_cast %534 : vector<2x32xf32> to vector<2x1x32xf32>
    %573 = vector.shape_cast %564 : vector<2x32xf32> to vector<2x1x32xf32>
    %574 = tpu.concatenate %566, %567, %568, %569, %570, %571, %572, %573 in 1 : vector<2x1x32xf32>, vector<2x1x32xf32>, vector<2x1x32xf32>, vector<2x1x32xf32>, vector<2x1x32xf32>, vector<2x1x32xf32>, vector<2x1x32xf32>, vector<2x1x32xf32> -> vector<2x8x32xf32>
    %575 = vector.shape_cast %565 : vector<2x32xf32> to vector<2x1x32xf32>
    %576 = vector.shape_cast %535 : vector<2x32xf32> to vector<2x1x32xf32>
    %577 = vector.shape_cast %505 : vector<2x32xf32> to vector<2x1x32xf32>
    %578 = vector.shape_cast %475 : vector<2x32xf32> to vector<2x1x32xf32>
    %579 = vector.shape_cast %445 : vector<2x32xf32> to vector<2x1x32xf32>
    %580 = vector.shape_cast %415 : vector<2x32xf32> to vector<2x1x32xf32>
    %581 = vector.shape_cast %385 : vector<2x32xf32> to vector<2x1x32xf32>
    %582 = vector.shape_cast %355 : vector<2x32xf32> to vector<2x1x32xf32>
    %583 = tpu.concatenate %575, %576, %577, %578, %579, %580, %581, %582 in 1 : vector<2x1x32xf32>, vector<2x1x32xf32>, vector<2x1x32xf32>, vector<2x1x32xf32>, vector<2x1x32xf32>, vector<2x1x32xf32>, vector<2x1x32xf32>, vector<2x1x32xf32> -> vector<2x8x32xf32>
    %584 = tpu.concatenate %574, %583 in 2 : vector<2x8x32xf32>, vector<2x8x32xf32> -> vector<2x8x64xf32>
    %c1_i32_76 = arith.constant 1 : i32
    %585 = tpu.memref_slice %arg9[%c1_i32_76] : memref<3x!tpu.dma_semaphore, #tpu.memory_space<semaphore_mem>> -> memref<1x!tpu.dma_semaphore, #tpu.memory_space<semaphore_mem>>
    %586 = tpu.memref_squeeze %585 : memref<1x!tpu.dma_semaphore, #tpu.memory_space<semaphore_mem>> -> memref<!tpu.dma_semaphore, #tpu.memory_space<semaphore_mem>>
    tpu.wait_dma2 semaphore(%586 : memref<!tpu.dma_semaphore, #tpu.memory_space<semaphore_mem>>) src(%arg3 : memref<104x21xf32, #tpu.memory_space<any>>) dst(%arg7 : memref<104x21xf32, #tpu.memory_space<vmem>>)
    %c0_77 = arith.constant 0 : index
    %c0_78 = arith.constant 0 : index
    %587 = vector.load %arg7[%c0_77, %c0_78] : memref<104x21xf32, #tpu.memory_space<vmem>>, vector<64x21xf32>
    %c64_79 = arith.constant 64 : index
    %c0_80 = arith.constant 0 : index
    %588 = vector.load %arg7[%c64_79, %c0_80] : memref<104x21xf32, #tpu.memory_space<vmem>>, vector<7x21xf32>
    %c72 = arith.constant 72 : index
    %c0_81 = arith.constant 0 : index
    %589 = vector.load %arg7[%c72, %c0_81] : memref<104x21xf32, #tpu.memory_space<vmem>>, vector<1x21xf32>
    %c73 = arith.constant 73 : index
    %c0_82 = arith.constant 0 : index
    %590 = vector.load %arg7[%c73, %c0_82] : memref<104x21xf32, #tpu.memory_space<vmem>>, vector<1x21xf32>
    %591 = vector.shape_cast %584 : vector<2x8x64xf32> to vector<16x64xf32>
    %cst_83 = arith.constant dense<0.000000e+00> : vector<16x21xf32>
    %592 = tpu.matmul %591, %587, %cst_83 {dimension_numbers = #tpu.dot_dimension_numbers<[1], [0], [0], [1], [0, 0, 1, 1], [], []>} : vector<16x64xf32>, vector<64x21xf32>, vector<16x21xf32> -> vector<16x21xf32>
    %593 = vector.broadcast %589 : vector<1x21xf32> to vector<16x21xf32>
    %594 = arith.addf %592, %593 : vector<16x21xf32>
    %595 = vector.shape_cast %594 : vector<16x21xf32> to vector<2x8x21xf32>
    %cst_84 = arith.constant 0.000000e+00 : f32
    %596 = vector.broadcast %cst_84 : f32 to vector<2x7xf32>
    %597 = vector.extract_strided_slice %595 {offsets = [0, 0, 0], sizes = [2, 1, 21], strides = [1, 1, 1]} : vector<2x8x21xf32> to vector<2x1x21xf32>
    %598 = vector.shape_cast %597 : vector<2x1x21xf32> to vector<2x21xf32>
    %cst_85 = arith.constant dense<0.000000e+00> : vector<2x21xf32>
    %599 = tpu.matmul %596, %588, %cst_85 {dimension_numbers = #tpu.dot_dimension_numbers<[1], [0], [0], [1], [0, 0, 1, 1], [], []>} : vector<2x7xf32>, vector<7x21xf32>, vector<2x21xf32> -> vector<2x21xf32>
    %600 = vector.broadcast %590 : vector<1x21xf32> to vector<2x21xf32>
    %601 = arith.addf %599, %600 : vector<2x21xf32>
    %602 = vector.extract_strided_slice %598 {offsets = [0, 0], sizes = [2, 14], strides = [1, 1]} : vector<2x21xf32> to vector<2x14xf32>
    %603 = vector.extract_strided_slice %601 {offsets = [0, 0], sizes = [2, 14], strides = [1, 1]} : vector<2x21xf32> to vector<2x14xf32>
    %604 = arith.addf %602, %603 : vector<2x14xf32>
    %605 = arith.negf %604 : vector<2x14xf32>
    %606 = math.exp %605 : vector<2x14xf32>
    %cst_86 = arith.constant 1.000000e+00 : f32
    %607 = vector.broadcast %cst_86 : f32 to vector<2x14xf32>
    %608 = arith.addf %607, %606 : vector<2x14xf32>
    %609 = arith.divf %607, %608 : vector<2x14xf32>
    %610 = vector.extract_strided_slice %609 {offsets = [0, 0], sizes = [2, 7], strides = [1, 1]} : vector<2x14xf32> to vector<2x7xf32>
    %611 = vector.extract_strided_slice %609 {offsets = [0, 7], sizes = [2, 7], strides = [1, 1]} : vector<2x14xf32> to vector<2x7xf32>
    %612 = vector.extract_strided_slice %598 {offsets = [0, 14], sizes = [2, 7], strides = [1, 1]} : vector<2x21xf32> to vector<2x7xf32>
    %613 = vector.extract_strided_slice %601 {offsets = [0, 14], sizes = [2, 7], strides = [1, 1]} : vector<2x21xf32> to vector<2x7xf32>
    %614 = arith.mulf %610, %613 : vector<2x7xf32>
    %615 = arith.addf %612, %614 : vector<2x7xf32>
    %616 = math.tanh %615 : vector<2x7xf32>
    %cst_87 = arith.constant 1.000000e+00 : f32
    %617 = vector.broadcast %cst_87 : f32 to vector<2x7xf32>
    %618 = arith.subf %617, %611 : vector<2x7xf32>
    %619 = arith.mulf %618, %616 : vector<2x7xf32>
    %620 = arith.mulf %611, %596 : vector<2x7xf32>
    %621 = arith.addf %619, %620 : vector<2x7xf32>
    %622 = vector.extract_strided_slice %595 {offsets = [0, 1, 0], sizes = [2, 1, 21], strides = [1, 1, 1]} : vector<2x8x21xf32> to vector<2x1x21xf32>
    %623 = vector.shape_cast %622 : vector<2x1x21xf32> to vector<2x21xf32>
    %cst_88 = arith.constant dense<0.000000e+00> : vector<2x21xf32>
    %624 = tpu.matmul %621, %588, %cst_88 {dimension_numbers = #tpu.dot_dimension_numbers<[1], [0], [0], [1], [0, 0, 1, 1], [], []>} : vector<2x7xf32>, vector<7x21xf32>, vector<2x21xf32> -> vector<2x21xf32>
    %625 = vector.broadcast %590 : vector<1x21xf32> to vector<2x21xf32>
    %626 = arith.addf %624, %625 : vector<2x21xf32>
    %627 = vector.extract_strided_slice %623 {offsets = [0, 0], sizes = [2, 14], strides = [1, 1]} : vector<2x21xf32> to vector<2x14xf32>
    %628 = vector.extract_strided_slice %626 {offsets = [0, 0], sizes = [2, 14], strides = [1, 1]} : vector<2x21xf32> to vector<2x14xf32>
    %629 = arith.addf %627, %628 : vector<2x14xf32>
    %630 = arith.negf %629 : vector<2x14xf32>
    %631 = math.exp %630 : vector<2x14xf32>
    %cst_89 = arith.constant 1.000000e+00 : f32
    %632 = vector.broadcast %cst_89 : f32 to vector<2x14xf32>
    %633 = arith.addf %632, %631 : vector<2x14xf32>
    %634 = arith.divf %632, %633 : vector<2x14xf32>
    %635 = vector.extract_strided_slice %634 {offsets = [0, 0], sizes = [2, 7], strides = [1, 1]} : vector<2x14xf32> to vector<2x7xf32>
    %636 = vector.extract_strided_slice %634 {offsets = [0, 7], sizes = [2, 7], strides = [1, 1]} : vector<2x14xf32> to vector<2x7xf32>
    %637 = vector.extract_strided_slice %623 {offsets = [0, 14], sizes = [2, 7], strides = [1, 1]} : vector<2x21xf32> to vector<2x7xf32>
    %638 = vector.extract_strided_slice %626 {offsets = [0, 14], sizes = [2, 7], strides = [1, 1]} : vector<2x21xf32> to vector<2x7xf32>
    %639 = arith.mulf %635, %638 : vector<2x7xf32>
    %640 = arith.addf %637, %639 : vector<2x7xf32>
    %641 = math.tanh %640 : vector<2x7xf32>
    %cst_90 = arith.constant 1.000000e+00 : f32
    %642 = vector.broadcast %cst_90 : f32 to vector<2x7xf32>
    %643 = arith.subf %642, %636 : vector<2x7xf32>
    %644 = arith.mulf %643, %641 : vector<2x7xf32>
    %645 = arith.mulf %636, %621 : vector<2x7xf32>
    %646 = arith.addf %644, %645 : vector<2x7xf32>
    %647 = vector.extract_strided_slice %595 {offsets = [0, 2, 0], sizes = [2, 1, 21], strides = [1, 1, 1]} : vector<2x8x21xf32> to vector<2x1x21xf32>
    %648 = vector.shape_cast %647 : vector<2x1x21xf32> to vector<2x21xf32>
    %cst_91 = arith.constant dense<0.000000e+00> : vector<2x21xf32>
    %649 = tpu.matmul %646, %588, %cst_91 {dimension_numbers = #tpu.dot_dimension_numbers<[1], [0], [0], [1], [0, 0, 1, 1], [], []>} : vector<2x7xf32>, vector<7x21xf32>, vector<2x21xf32> -> vector<2x21xf32>
    %650 = vector.broadcast %590 : vector<1x21xf32> to vector<2x21xf32>
    %651 = arith.addf %649, %650 : vector<2x21xf32>
    %652 = vector.extract_strided_slice %648 {offsets = [0, 0], sizes = [2, 14], strides = [1, 1]} : vector<2x21xf32> to vector<2x14xf32>
    %653 = vector.extract_strided_slice %651 {offsets = [0, 0], sizes = [2, 14], strides = [1, 1]} : vector<2x21xf32> to vector<2x14xf32>
    %654 = arith.addf %652, %653 : vector<2x14xf32>
    %655 = arith.negf %654 : vector<2x14xf32>
    %656 = math.exp %655 : vector<2x14xf32>
    %cst_92 = arith.constant 1.000000e+00 : f32
    %657 = vector.broadcast %cst_92 : f32 to vector<2x14xf32>
    %658 = arith.addf %657, %656 : vector<2x14xf32>
    %659 = arith.divf %657, %658 : vector<2x14xf32>
    %660 = vector.extract_strided_slice %659 {offsets = [0, 0], sizes = [2, 7], strides = [1, 1]} : vector<2x14xf32> to vector<2x7xf32>
    %661 = vector.extract_strided_slice %659 {offsets = [0, 7], sizes = [2, 7], strides = [1, 1]} : vector<2x14xf32> to vector<2x7xf32>
    %662 = vector.extract_strided_slice %648 {offsets = [0, 14], sizes = [2, 7], strides = [1, 1]} : vector<2x21xf32> to vector<2x7xf32>
    %663 = vector.extract_strided_slice %651 {offsets = [0, 14], sizes = [2, 7], strides = [1, 1]} : vector<2x21xf32> to vector<2x7xf32>
    %664 = arith.mulf %660, %663 : vector<2x7xf32>
    %665 = arith.addf %662, %664 : vector<2x7xf32>
    %666 = math.tanh %665 : vector<2x7xf32>
    %cst_93 = arith.constant 1.000000e+00 : f32
    %667 = vector.broadcast %cst_93 : f32 to vector<2x7xf32>
    %668 = arith.subf %667, %661 : vector<2x7xf32>
    %669 = arith.mulf %668, %666 : vector<2x7xf32>
    %670 = arith.mulf %661, %646 : vector<2x7xf32>
    %671 = arith.addf %669, %670 : vector<2x7xf32>
    %672 = vector.extract_strided_slice %595 {offsets = [0, 3, 0], sizes = [2, 1, 21], strides = [1, 1, 1]} : vector<2x8x21xf32> to vector<2x1x21xf32>
    %673 = vector.shape_cast %672 : vector<2x1x21xf32> to vector<2x21xf32>
    %cst_94 = arith.constant dense<0.000000e+00> : vector<2x21xf32>
    %674 = tpu.matmul %671, %588, %cst_94 {dimension_numbers = #tpu.dot_dimension_numbers<[1], [0], [0], [1], [0, 0, 1, 1], [], []>} : vector<2x7xf32>, vector<7x21xf32>, vector<2x21xf32> -> vector<2x21xf32>
    %675 = vector.broadcast %590 : vector<1x21xf32> to vector<2x21xf32>
    %676 = arith.addf %674, %675 : vector<2x21xf32>
    %677 = vector.extract_strided_slice %673 {offsets = [0, 0], sizes = [2, 14], strides = [1, 1]} : vector<2x21xf32> to vector<2x14xf32>
    %678 = vector.extract_strided_slice %676 {offsets = [0, 0], sizes = [2, 14], strides = [1, 1]} : vector<2x21xf32> to vector<2x14xf32>
    %679 = arith.addf %677, %678 : vector<2x14xf32>
    %680 = arith.negf %679 : vector<2x14xf32>
    %681 = math.exp %680 : vector<2x14xf32>
    %cst_95 = arith.constant 1.000000e+00 : f32
    %682 = vector.broadcast %cst_95 : f32 to vector<2x14xf32>
    %683 = arith.addf %682, %681 : vector<2x14xf32>
    %684 = arith.divf %682, %683 : vector<2x14xf32>
    %685 = vector.extract_strided_slice %684 {offsets = [0, 0], sizes = [2, 7], strides = [1, 1]} : vector<2x14xf32> to vector<2x7xf32>
    %686 = vector.extract_strided_slice %684 {offsets = [0, 7], sizes = [2, 7], strides = [1, 1]} : vector<2x14xf32> to vector<2x7xf32>
    %687 = vector.extract_strided_slice %673 {offsets = [0, 14], sizes = [2, 7], strides = [1, 1]} : vector<2x21xf32> to vector<2x7xf32>
    %688 = vector.extract_strided_slice %676 {offsets = [0, 14], sizes = [2, 7], strides = [1, 1]} : vector<2x21xf32> to vector<2x7xf32>
    %689 = arith.mulf %685, %688 : vector<2x7xf32>
    %690 = arith.addf %687, %689 : vector<2x7xf32>
    %691 = math.tanh %690 : vector<2x7xf32>
    %cst_96 = arith.constant 1.000000e+00 : f32
    %692 = vector.broadcast %cst_96 : f32 to vector<2x7xf32>
    %693 = arith.subf %692, %686 : vector<2x7xf32>
    %694 = arith.mulf %693, %691 : vector<2x7xf32>
    %695 = arith.mulf %686, %671 : vector<2x7xf32>
    %696 = arith.addf %694, %695 : vector<2x7xf32>
    %697 = vector.extract_strided_slice %595 {offsets = [0, 4, 0], sizes = [2, 1, 21], strides = [1, 1, 1]} : vector<2x8x21xf32> to vector<2x1x21xf32>
    %698 = vector.shape_cast %697 : vector<2x1x21xf32> to vector<2x21xf32>
    %cst_97 = arith.constant dense<0.000000e+00> : vector<2x21xf32>
    %699 = tpu.matmul %696, %588, %cst_97 {dimension_numbers = #tpu.dot_dimension_numbers<[1], [0], [0], [1], [0, 0, 1, 1], [], []>} : vector<2x7xf32>, vector<7x21xf32>, vector<2x21xf32> -> vector<2x21xf32>
    %700 = vector.broadcast %590 : vector<1x21xf32> to vector<2x21xf32>
    %701 = arith.addf %699, %700 : vector<2x21xf32>
    %702 = vector.extract_strided_slice %698 {offsets = [0, 0], sizes = [2, 14], strides = [1, 1]} : vector<2x21xf32> to vector<2x14xf32>
    %703 = vector.extract_strided_slice %701 {offsets = [0, 0], sizes = [2, 14], strides = [1, 1]} : vector<2x21xf32> to vector<2x14xf32>
    %704 = arith.addf %702, %703 : vector<2x14xf32>
    %705 = arith.negf %704 : vector<2x14xf32>
    %706 = math.exp %705 : vector<2x14xf32>
    %cst_98 = arith.constant 1.000000e+00 : f32
    %707 = vector.broadcast %cst_98 : f32 to vector<2x14xf32>
    %708 = arith.addf %707, %706 : vector<2x14xf32>
    %709 = arith.divf %707, %708 : vector<2x14xf32>
    %710 = vector.extract_strided_slice %709 {offsets = [0, 0], sizes = [2, 7], strides = [1, 1]} : vector<2x14xf32> to vector<2x7xf32>
    %711 = vector.extract_strided_slice %709 {offsets = [0, 7], sizes = [2, 7], strides = [1, 1]} : vector<2x14xf32> to vector<2x7xf32>
    %712 = vector.extract_strided_slice %698 {offsets = [0, 14], sizes = [2, 7], strides = [1, 1]} : vector<2x21xf32> to vector<2x7xf32>
    %713 = vector.extract_strided_slice %701 {offsets = [0, 14], sizes = [2, 7], strides = [1, 1]} : vector<2x21xf32> to vector<2x7xf32>
    %714 = arith.mulf %710, %713 : vector<2x7xf32>
    %715 = arith.addf %712, %714 : vector<2x7xf32>
    %716 = math.tanh %715 : vector<2x7xf32>
    %cst_99 = arith.constant 1.000000e+00 : f32
    %717 = vector.broadcast %cst_99 : f32 to vector<2x7xf32>
    %718 = arith.subf %717, %711 : vector<2x7xf32>
    %719 = arith.mulf %718, %716 : vector<2x7xf32>
    %720 = arith.mulf %711, %696 : vector<2x7xf32>
    %721 = arith.addf %719, %720 : vector<2x7xf32>
    %722 = vector.extract_strided_slice %595 {offsets = [0, 5, 0], sizes = [2, 1, 21], strides = [1, 1, 1]} : vector<2x8x21xf32> to vector<2x1x21xf32>
    %723 = vector.shape_cast %722 : vector<2x1x21xf32> to vector<2x21xf32>
    %cst_100 = arith.constant dense<0.000000e+00> : vector<2x21xf32>
    %724 = tpu.matmul %721, %588, %cst_100 {dimension_numbers = #tpu.dot_dimension_numbers<[1], [0], [0], [1], [0, 0, 1, 1], [], []>} : vector<2x7xf32>, vector<7x21xf32>, vector<2x21xf32> -> vector<2x21xf32>
    %725 = vector.broadcast %590 : vector<1x21xf32> to vector<2x21xf32>
    %726 = arith.addf %724, %725 : vector<2x21xf32>
    %727 = vector.extract_strided_slice %723 {offsets = [0, 0], sizes = [2, 14], strides = [1, 1]} : vector<2x21xf32> to vector<2x14xf32>
    %728 = vector.extract_strided_slice %726 {offsets = [0, 0], sizes = [2, 14], strides = [1, 1]} : vector<2x21xf32> to vector<2x14xf32>
    %729 = arith.addf %727, %728 : vector<2x14xf32>
    %730 = arith.negf %729 : vector<2x14xf32>
    %731 = math.exp %730 : vector<2x14xf32>
    %cst_101 = arith.constant 1.000000e+00 : f32
    %732 = vector.broadcast %cst_101 : f32 to vector<2x14xf32>
    %733 = arith.addf %732, %731 : vector<2x14xf32>
    %734 = arith.divf %732, %733 : vector<2x14xf32>
    %735 = vector.extract_strided_slice %734 {offsets = [0, 0], sizes = [2, 7], strides = [1, 1]} : vector<2x14xf32> to vector<2x7xf32>
    %736 = vector.extract_strided_slice %734 {offsets = [0, 7], sizes = [2, 7], strides = [1, 1]} : vector<2x14xf32> to vector<2x7xf32>
    %737 = vector.extract_strided_slice %723 {offsets = [0, 14], sizes = [2, 7], strides = [1, 1]} : vector<2x21xf32> to vector<2x7xf32>
    %738 = vector.extract_strided_slice %726 {offsets = [0, 14], sizes = [2, 7], strides = [1, 1]} : vector<2x21xf32> to vector<2x7xf32>
    %739 = arith.mulf %735, %738 : vector<2x7xf32>
    %740 = arith.addf %737, %739 : vector<2x7xf32>
    %741 = math.tanh %740 : vector<2x7xf32>
    %cst_102 = arith.constant 1.000000e+00 : f32
    %742 = vector.broadcast %cst_102 : f32 to vector<2x7xf32>
    %743 = arith.subf %742, %736 : vector<2x7xf32>
    %744 = arith.mulf %743, %741 : vector<2x7xf32>
    %745 = arith.mulf %736, %721 : vector<2x7xf32>
    %746 = arith.addf %744, %745 : vector<2x7xf32>
    %747 = vector.extract_strided_slice %595 {offsets = [0, 6, 0], sizes = [2, 1, 21], strides = [1, 1, 1]} : vector<2x8x21xf32> to vector<2x1x21xf32>
    %748 = vector.shape_cast %747 : vector<2x1x21xf32> to vector<2x21xf32>
    %cst_103 = arith.constant dense<0.000000e+00> : vector<2x21xf32>
    %749 = tpu.matmul %746, %588, %cst_103 {dimension_numbers = #tpu.dot_dimension_numbers<[1], [0], [0], [1], [0, 0, 1, 1], [], []>} : vector<2x7xf32>, vector<7x21xf32>, vector<2x21xf32> -> vector<2x21xf32>
    %750 = vector.broadcast %590 : vector<1x21xf32> to vector<2x21xf32>
    %751 = arith.addf %749, %750 : vector<2x21xf32>
    %752 = vector.extract_strided_slice %748 {offsets = [0, 0], sizes = [2, 14], strides = [1, 1]} : vector<2x21xf32> to vector<2x14xf32>
    %753 = vector.extract_strided_slice %751 {offsets = [0, 0], sizes = [2, 14], strides = [1, 1]} : vector<2x21xf32> to vector<2x14xf32>
    %754 = arith.addf %752, %753 : vector<2x14xf32>
    %755 = arith.negf %754 : vector<2x14xf32>
    %756 = math.exp %755 : vector<2x14xf32>
    %cst_104 = arith.constant 1.000000e+00 : f32
    %757 = vector.broadcast %cst_104 : f32 to vector<2x14xf32>
    %758 = arith.addf %757, %756 : vector<2x14xf32>
    %759 = arith.divf %757, %758 : vector<2x14xf32>
    %760 = vector.extract_strided_slice %759 {offsets = [0, 0], sizes = [2, 7], strides = [1, 1]} : vector<2x14xf32> to vector<2x7xf32>
    %761 = vector.extract_strided_slice %759 {offsets = [0, 7], sizes = [2, 7], strides = [1, 1]} : vector<2x14xf32> to vector<2x7xf32>
    %762 = vector.extract_strided_slice %748 {offsets = [0, 14], sizes = [2, 7], strides = [1, 1]} : vector<2x21xf32> to vector<2x7xf32>
    %763 = vector.extract_strided_slice %751 {offsets = [0, 14], sizes = [2, 7], strides = [1, 1]} : vector<2x21xf32> to vector<2x7xf32>
    %764 = arith.mulf %760, %763 : vector<2x7xf32>
    %765 = arith.addf %762, %764 : vector<2x7xf32>
    %766 = math.tanh %765 : vector<2x7xf32>
    %cst_105 = arith.constant 1.000000e+00 : f32
    %767 = vector.broadcast %cst_105 : f32 to vector<2x7xf32>
    %768 = arith.subf %767, %761 : vector<2x7xf32>
    %769 = arith.mulf %768, %766 : vector<2x7xf32>
    %770 = arith.mulf %761, %746 : vector<2x7xf32>
    %771 = arith.addf %769, %770 : vector<2x7xf32>
    %772 = vector.extract_strided_slice %595 {offsets = [0, 7, 0], sizes = [2, 1, 21], strides = [1, 1, 1]} : vector<2x8x21xf32> to vector<2x1x21xf32>
    %773 = vector.shape_cast %772 : vector<2x1x21xf32> to vector<2x21xf32>
    %cst_106 = arith.constant dense<0.000000e+00> : vector<2x21xf32>
    %774 = tpu.matmul %771, %588, %cst_106 {dimension_numbers = #tpu.dot_dimension_numbers<[1], [0], [0], [1], [0, 0, 1, 1], [], []>} : vector<2x7xf32>, vector<7x21xf32>, vector<2x21xf32> -> vector<2x21xf32>
    %775 = vector.broadcast %590 : vector<1x21xf32> to vector<2x21xf32>
    %776 = arith.addf %774, %775 : vector<2x21xf32>
    %777 = vector.extract_strided_slice %773 {offsets = [0, 0], sizes = [2, 14], strides = [1, 1]} : vector<2x21xf32> to vector<2x14xf32>
    %778 = vector.extract_strided_slice %776 {offsets = [0, 0], sizes = [2, 14], strides = [1, 1]} : vector<2x21xf32> to vector<2x14xf32>
    %779 = arith.addf %777, %778 : vector<2x14xf32>
    %780 = arith.negf %779 : vector<2x14xf32>
    %781 = math.exp %780 : vector<2x14xf32>
    %cst_107 = arith.constant 1.000000e+00 : f32
    %782 = vector.broadcast %cst_107 : f32 to vector<2x14xf32>
    %783 = arith.addf %782, %781 : vector<2x14xf32>
    %784 = arith.divf %782, %783 : vector<2x14xf32>
    %785 = vector.extract_strided_slice %784 {offsets = [0, 0], sizes = [2, 7], strides = [1, 1]} : vector<2x14xf32> to vector<2x7xf32>
    %786 = vector.extract_strided_slice %784 {offsets = [0, 7], sizes = [2, 7], strides = [1, 1]} : vector<2x14xf32> to vector<2x7xf32>
    %787 = vector.extract_strided_slice %773 {offsets = [0, 14], sizes = [2, 7], strides = [1, 1]} : vector<2x21xf32> to vector<2x7xf32>
    %788 = vector.extract_strided_slice %776 {offsets = [0, 14], sizes = [2, 7], strides = [1, 1]} : vector<2x21xf32> to vector<2x7xf32>
    %789 = arith.mulf %785, %788 : vector<2x7xf32>
    %790 = arith.addf %787, %789 : vector<2x7xf32>
    %791 = math.tanh %790 : vector<2x7xf32>
    %cst_108 = arith.constant 1.000000e+00 : f32
    %792 = vector.broadcast %cst_108 : f32 to vector<2x7xf32>
    %793 = arith.subf %792, %786 : vector<2x7xf32>
    %794 = arith.mulf %793, %791 : vector<2x7xf32>
    %795 = arith.mulf %786, %771 : vector<2x7xf32>
    %796 = arith.addf %794, %795 : vector<2x7xf32>
    %797 = vector.shape_cast %621 : vector<2x7xf32> to vector<2x1x7xf32>
    %798 = vector.shape_cast %646 : vector<2x7xf32> to vector<2x1x7xf32>
    %799 = vector.shape_cast %671 : vector<2x7xf32> to vector<2x1x7xf32>
    %800 = vector.shape_cast %696 : vector<2x7xf32> to vector<2x1x7xf32>
    %801 = vector.shape_cast %721 : vector<2x7xf32> to vector<2x1x7xf32>
    %802 = vector.shape_cast %746 : vector<2x7xf32> to vector<2x1x7xf32>
    %803 = vector.shape_cast %771 : vector<2x7xf32> to vector<2x1x7xf32>
    %804 = vector.shape_cast %796 : vector<2x7xf32> to vector<2x1x7xf32>
    %805 = tpu.concatenate %797, %798, %799, %800, %801, %802, %803, %804 in 1 : vector<2x1x7xf32>, vector<2x1x7xf32>, vector<2x1x7xf32>, vector<2x1x7xf32>, vector<2x1x7xf32>, vector<2x1x7xf32>, vector<2x1x7xf32>, vector<2x1x7xf32> -> vector<2x8x7xf32>
    %c80 = arith.constant 80 : index
    %c0_109 = arith.constant 0 : index
    %806 = vector.load %arg7[%c80, %c0_109] : memref<104x21xf32, #tpu.memory_space<vmem>>, vector<7x21xf32>
    %c88 = arith.constant 88 : index
    %c0_110 = arith.constant 0 : index
    %807 = vector.load %arg7[%c88, %c0_110] : memref<104x21xf32, #tpu.memory_space<vmem>>, vector<7x21xf32>
    %c96 = arith.constant 96 : index
    %c0_111 = arith.constant 0 : index
    %808 = vector.load %arg7[%c96, %c0_111] : memref<104x21xf32, #tpu.memory_space<vmem>>, vector<1x21xf32>
    %c97 = arith.constant 97 : index
    %c0_112 = arith.constant 0 : index
    %809 = vector.load %arg7[%c97, %c0_112] : memref<104x21xf32, #tpu.memory_space<vmem>>, vector<1x21xf32>
    %810 = vector.shape_cast %805 : vector<2x8x7xf32> to vector<16x7xf32>
    %cst_113 = arith.constant dense<0.000000e+00> : vector<16x21xf32>
    %811 = tpu.matmul %810, %806, %cst_113 {dimension_numbers = #tpu.dot_dimension_numbers<[1], [0], [0], [1], [0, 0, 1, 1], [], []>} : vector<16x7xf32>, vector<7x21xf32>, vector<16x21xf32> -> vector<16x21xf32>
    %812 = vector.broadcast %808 : vector<1x21xf32> to vector<16x21xf32>
    %813 = arith.addf %811, %812 : vector<16x21xf32>
    %814 = vector.shape_cast %813 : vector<16x21xf32> to vector<2x8x21xf32>
    %cst_114 = arith.constant 0.000000e+00 : f32
    %815 = vector.broadcast %cst_114 : f32 to vector<2x7xf32>
    %816 = vector.extract_strided_slice %814 {offsets = [0, 0, 0], sizes = [2, 1, 21], strides = [1, 1, 1]} : vector<2x8x21xf32> to vector<2x1x21xf32>
    %817 = vector.shape_cast %816 : vector<2x1x21xf32> to vector<2x21xf32>
    %cst_115 = arith.constant dense<0.000000e+00> : vector<2x21xf32>
    %818 = tpu.matmul %815, %807, %cst_115 {dimension_numbers = #tpu.dot_dimension_numbers<[1], [0], [0], [1], [0, 0, 1, 1], [], []>} : vector<2x7xf32>, vector<7x21xf32>, vector<2x21xf32> -> vector<2x21xf32>
    %819 = vector.broadcast %809 : vector<1x21xf32> to vector<2x21xf32>
    %820 = arith.addf %818, %819 : vector<2x21xf32>
    %821 = vector.extract_strided_slice %817 {offsets = [0, 0], sizes = [2, 14], strides = [1, 1]} : vector<2x21xf32> to vector<2x14xf32>
    %822 = vector.extract_strided_slice %820 {offsets = [0, 0], sizes = [2, 14], strides = [1, 1]} : vector<2x21xf32> to vector<2x14xf32>
    %823 = arith.addf %821, %822 : vector<2x14xf32>
    %824 = arith.negf %823 : vector<2x14xf32>
    %825 = math.exp %824 : vector<2x14xf32>
    %cst_116 = arith.constant 1.000000e+00 : f32
    %826 = vector.broadcast %cst_116 : f32 to vector<2x14xf32>
    %827 = arith.addf %826, %825 : vector<2x14xf32>
    %828 = arith.divf %826, %827 : vector<2x14xf32>
    %829 = vector.extract_strided_slice %828 {offsets = [0, 0], sizes = [2, 7], strides = [1, 1]} : vector<2x14xf32> to vector<2x7xf32>
    %830 = vector.extract_strided_slice %828 {offsets = [0, 7], sizes = [2, 7], strides = [1, 1]} : vector<2x14xf32> to vector<2x7xf32>
    %831 = vector.extract_strided_slice %817 {offsets = [0, 14], sizes = [2, 7], strides = [1, 1]} : vector<2x21xf32> to vector<2x7xf32>
    %832 = vector.extract_strided_slice %820 {offsets = [0, 14], sizes = [2, 7], strides = [1, 1]} : vector<2x21xf32> to vector<2x7xf32>
    %833 = arith.mulf %829, %832 : vector<2x7xf32>
    %834 = arith.addf %831, %833 : vector<2x7xf32>
    %835 = math.tanh %834 : vector<2x7xf32>
    %cst_117 = arith.constant 1.000000e+00 : f32
    %836 = vector.broadcast %cst_117 : f32 to vector<2x7xf32>
    %837 = arith.subf %836, %830 : vector<2x7xf32>
    %838 = arith.mulf %837, %835 : vector<2x7xf32>
    %839 = arith.mulf %830, %815 : vector<2x7xf32>
    %840 = arith.addf %838, %839 : vector<2x7xf32>
    %841 = vector.extract_strided_slice %814 {offsets = [0, 1, 0], sizes = [2, 1, 21], strides = [1, 1, 1]} : vector<2x8x21xf32> to vector<2x1x21xf32>
    %842 = vector.shape_cast %841 : vector<2x1x21xf32> to vector<2x21xf32>
    %cst_118 = arith.constant dense<0.000000e+00> : vector<2x21xf32>
    %843 = tpu.matmul %840, %807, %cst_118 {dimension_numbers = #tpu.dot_dimension_numbers<[1], [0], [0], [1], [0, 0, 1, 1], [], []>} : vector<2x7xf32>, vector<7x21xf32>, vector<2x21xf32> -> vector<2x21xf32>
    %844 = vector.broadcast %809 : vector<1x21xf32> to vector<2x21xf32>
    %845 = arith.addf %843, %844 : vector<2x21xf32>
    %846 = vector.extract_strided_slice %842 {offsets = [0, 0], sizes = [2, 14], strides = [1, 1]} : vector<2x21xf32> to vector<2x14xf32>
    %847 = vector.extract_strided_slice %845 {offsets = [0, 0], sizes = [2, 14], strides = [1, 1]} : vector<2x21xf32> to vector<2x14xf32>
    %848 = arith.addf %846, %847 : vector<2x14xf32>
    %849 = arith.negf %848 : vector<2x14xf32>
    %850 = math.exp %849 : vector<2x14xf32>
    %cst_119 = arith.constant 1.000000e+00 : f32
    %851 = vector.broadcast %cst_119 : f32 to vector<2x14xf32>
    %852 = arith.addf %851, %850 : vector<2x14xf32>
    %853 = arith.divf %851, %852 : vector<2x14xf32>
    %854 = vector.extract_strided_slice %853 {offsets = [0, 0], sizes = [2, 7], strides = [1, 1]} : vector<2x14xf32> to vector<2x7xf32>
    %855 = vector.extract_strided_slice %853 {offsets = [0, 7], sizes = [2, 7], strides = [1, 1]} : vector<2x14xf32> to vector<2x7xf32>
    %856 = vector.extract_strided_slice %842 {offsets = [0, 14], sizes = [2, 7], strides = [1, 1]} : vector<2x21xf32> to vector<2x7xf32>
    %857 = vector.extract_strided_slice %845 {offsets = [0, 14], sizes = [2, 7], strides = [1, 1]} : vector<2x21xf32> to vector<2x7xf32>
    %858 = arith.mulf %854, %857 : vector<2x7xf32>
    %859 = arith.addf %856, %858 : vector<2x7xf32>
    %860 = math.tanh %859 : vector<2x7xf32>
    %cst_120 = arith.constant 1.000000e+00 : f32
    %861 = vector.broadcast %cst_120 : f32 to vector<2x7xf32>
    %862 = arith.subf %861, %855 : vector<2x7xf32>
    %863 = arith.mulf %862, %860 : vector<2x7xf32>
    %864 = arith.mulf %855, %840 : vector<2x7xf32>
    %865 = arith.addf %863, %864 : vector<2x7xf32>
    %866 = vector.extract_strided_slice %814 {offsets = [0, 2, 0], sizes = [2, 1, 21], strides = [1, 1, 1]} : vector<2x8x21xf32> to vector<2x1x21xf32>
    %867 = vector.shape_cast %866 : vector<2x1x21xf32> to vector<2x21xf32>
    %cst_121 = arith.constant dense<0.000000e+00> : vector<2x21xf32>
    %868 = tpu.matmul %865, %807, %cst_121 {dimension_numbers = #tpu.dot_dimension_numbers<[1], [0], [0], [1], [0, 0, 1, 1], [], []>} : vector<2x7xf32>, vector<7x21xf32>, vector<2x21xf32> -> vector<2x21xf32>
    %869 = vector.broadcast %809 : vector<1x21xf32> to vector<2x21xf32>
    %870 = arith.addf %868, %869 : vector<2x21xf32>
    %871 = vector.extract_strided_slice %867 {offsets = [0, 0], sizes = [2, 14], strides = [1, 1]} : vector<2x21xf32> to vector<2x14xf32>
    %872 = vector.extract_strided_slice %870 {offsets = [0, 0], sizes = [2, 14], strides = [1, 1]} : vector<2x21xf32> to vector<2x14xf32>
    %873 = arith.addf %871, %872 : vector<2x14xf32>
    %874 = arith.negf %873 : vector<2x14xf32>
    %875 = math.exp %874 : vector<2x14xf32>
    %cst_122 = arith.constant 1.000000e+00 : f32
    %876 = vector.broadcast %cst_122 : f32 to vector<2x14xf32>
    %877 = arith.addf %876, %875 : vector<2x14xf32>
    %878 = arith.divf %876, %877 : vector<2x14xf32>
    %879 = vector.extract_strided_slice %878 {offsets = [0, 0], sizes = [2, 7], strides = [1, 1]} : vector<2x14xf32> to vector<2x7xf32>
    %880 = vector.extract_strided_slice %878 {offsets = [0, 7], sizes = [2, 7], strides = [1, 1]} : vector<2x14xf32> to vector<2x7xf32>
    %881 = vector.extract_strided_slice %867 {offsets = [0, 14], sizes = [2, 7], strides = [1, 1]} : vector<2x21xf32> to vector<2x7xf32>
    %882 = vector.extract_strided_slice %870 {offsets = [0, 14], sizes = [2, 7], strides = [1, 1]} : vector<2x21xf32> to vector<2x7xf32>
    %883 = arith.mulf %879, %882 : vector<2x7xf32>
    %884 = arith.addf %881, %883 : vector<2x7xf32>
    %885 = math.tanh %884 : vector<2x7xf32>
    %cst_123 = arith.constant 1.000000e+00 : f32
    %886 = vector.broadcast %cst_123 : f32 to vector<2x7xf32>
    %887 = arith.subf %886, %880 : vector<2x7xf32>
    %888 = arith.mulf %887, %885 : vector<2x7xf32>
    %889 = arith.mulf %880, %865 : vector<2x7xf32>
    %890 = arith.addf %888, %889 : vector<2x7xf32>
    %891 = vector.extract_strided_slice %814 {offsets = [0, 3, 0], sizes = [2, 1, 21], strides = [1, 1, 1]} : vector<2x8x21xf32> to vector<2x1x21xf32>
    %892 = vector.shape_cast %891 : vector<2x1x21xf32> to vector<2x21xf32>
    %cst_124 = arith.constant dense<0.000000e+00> : vector<2x21xf32>
    %893 = tpu.matmul %890, %807, %cst_124 {dimension_numbers = #tpu.dot_dimension_numbers<[1], [0], [0], [1], [0, 0, 1, 1], [], []>} : vector<2x7xf32>, vector<7x21xf32>, vector<2x21xf32> -> vector<2x21xf32>
    %894 = vector.broadcast %809 : vector<1x21xf32> to vector<2x21xf32>
    %895 = arith.addf %893, %894 : vector<2x21xf32>
    %896 = vector.extract_strided_slice %892 {offsets = [0, 0], sizes = [2, 14], strides = [1, 1]} : vector<2x21xf32> to vector<2x14xf32>
    %897 = vector.extract_strided_slice %895 {offsets = [0, 0], sizes = [2, 14], strides = [1, 1]} : vector<2x21xf32> to vector<2x14xf32>
    %898 = arith.addf %896, %897 : vector<2x14xf32>
    %899 = arith.negf %898 : vector<2x14xf32>
    %900 = math.exp %899 : vector<2x14xf32>
    %cst_125 = arith.constant 1.000000e+00 : f32
    %901 = vector.broadcast %cst_125 : f32 to vector<2x14xf32>
    %902 = arith.addf %901, %900 : vector<2x14xf32>
    %903 = arith.divf %901, %902 : vector<2x14xf32>
    %904 = vector.extract_strided_slice %903 {offsets = [0, 0], sizes = [2, 7], strides = [1, 1]} : vector<2x14xf32> to vector<2x7xf32>
    %905 = vector.extract_strided_slice %903 {offsets = [0, 7], sizes = [2, 7], strides = [1, 1]} : vector<2x14xf32> to vector<2x7xf32>
    %906 = vector.extract_strided_slice %892 {offsets = [0, 14], sizes = [2, 7], strides = [1, 1]} : vector<2x21xf32> to vector<2x7xf32>
    %907 = vector.extract_strided_slice %895 {offsets = [0, 14], sizes = [2, 7], strides = [1, 1]} : vector<2x21xf32> to vector<2x7xf32>
    %908 = arith.mulf %904, %907 : vector<2x7xf32>
    %909 = arith.addf %906, %908 : vector<2x7xf32>
    %910 = math.tanh %909 : vector<2x7xf32>
    %cst_126 = arith.constant 1.000000e+00 : f32
    %911 = vector.broadcast %cst_126 : f32 to vector<2x7xf32>
    %912 = arith.subf %911, %905 : vector<2x7xf32>
    %913 = arith.mulf %912, %910 : vector<2x7xf32>
    %914 = arith.mulf %905, %890 : vector<2x7xf32>
    %915 = arith.addf %913, %914 : vector<2x7xf32>
    %916 = vector.extract_strided_slice %814 {offsets = [0, 4, 0], sizes = [2, 1, 21], strides = [1, 1, 1]} : vector<2x8x21xf32> to vector<2x1x21xf32>
    %917 = vector.shape_cast %916 : vector<2x1x21xf32> to vector<2x21xf32>
    %cst_127 = arith.constant dense<0.000000e+00> : vector<2x21xf32>
    %918 = tpu.matmul %915, %807, %cst_127 {dimension_numbers = #tpu.dot_dimension_numbers<[1], [0], [0], [1], [0, 0, 1, 1], [], []>} : vector<2x7xf32>, vector<7x21xf32>, vector<2x21xf32> -> vector<2x21xf32>
    %919 = vector.broadcast %809 : vector<1x21xf32> to vector<2x21xf32>
    %920 = arith.addf %918, %919 : vector<2x21xf32>
    %921 = vector.extract_strided_slice %917 {offsets = [0, 0], sizes = [2, 14], strides = [1, 1]} : vector<2x21xf32> to vector<2x14xf32>
    %922 = vector.extract_strided_slice %920 {offsets = [0, 0], sizes = [2, 14], strides = [1, 1]} : vector<2x21xf32> to vector<2x14xf32>
    %923 = arith.addf %921, %922 : vector<2x14xf32>
    %924 = arith.negf %923 : vector<2x14xf32>
    %925 = math.exp %924 : vector<2x14xf32>
    %cst_128 = arith.constant 1.000000e+00 : f32
    %926 = vector.broadcast %cst_128 : f32 to vector<2x14xf32>
    %927 = arith.addf %926, %925 : vector<2x14xf32>
    %928 = arith.divf %926, %927 : vector<2x14xf32>
    %929 = vector.extract_strided_slice %928 {offsets = [0, 0], sizes = [2, 7], strides = [1, 1]} : vector<2x14xf32> to vector<2x7xf32>
    %930 = vector.extract_strided_slice %928 {offsets = [0, 7], sizes = [2, 7], strides = [1, 1]} : vector<2x14xf32> to vector<2x7xf32>
    %931 = vector.extract_strided_slice %917 {offsets = [0, 14], sizes = [2, 7], strides = [1, 1]} : vector<2x21xf32> to vector<2x7xf32>
    %932 = vector.extract_strided_slice %920 {offsets = [0, 14], sizes = [2, 7], strides = [1, 1]} : vector<2x21xf32> to vector<2x7xf32>
    %933 = arith.mulf %929, %932 : vector<2x7xf32>
    %934 = arith.addf %931, %933 : vector<2x7xf32>
    %935 = math.tanh %934 : vector<2x7xf32>
    %cst_129 = arith.constant 1.000000e+00 : f32
    %936 = vector.broadcast %cst_129 : f32 to vector<2x7xf32>
    %937 = arith.subf %936, %930 : vector<2x7xf32>
    %938 = arith.mulf %937, %935 : vector<2x7xf32>
    %939 = arith.mulf %930, %915 : vector<2x7xf32>
    %940 = arith.addf %938, %939 : vector<2x7xf32>
    %941 = vector.extract_strided_slice %814 {offsets = [0, 5, 0], sizes = [2, 1, 21], strides = [1, 1, 1]} : vector<2x8x21xf32> to vector<2x1x21xf32>
    %942 = vector.shape_cast %941 : vector<2x1x21xf32> to vector<2x21xf32>
    %cst_130 = arith.constant dense<0.000000e+00> : vector<2x21xf32>
    %943 = tpu.matmul %940, %807, %cst_130 {dimension_numbers = #tpu.dot_dimension_numbers<[1], [0], [0], [1], [0, 0, 1, 1], [], []>} : vector<2x7xf32>, vector<7x21xf32>, vector<2x21xf32> -> vector<2x21xf32>
    %944 = vector.broadcast %809 : vector<1x21xf32> to vector<2x21xf32>
    %945 = arith.addf %943, %944 : vector<2x21xf32>
    %946 = vector.extract_strided_slice %942 {offsets = [0, 0], sizes = [2, 14], strides = [1, 1]} : vector<2x21xf32> to vector<2x14xf32>
    %947 = vector.extract_strided_slice %945 {offsets = [0, 0], sizes = [2, 14], strides = [1, 1]} : vector<2x21xf32> to vector<2x14xf32>
    %948 = arith.addf %946, %947 : vector<2x14xf32>
    %949 = arith.negf %948 : vector<2x14xf32>
    %950 = math.exp %949 : vector<2x14xf32>
    %cst_131 = arith.constant 1.000000e+00 : f32
    %951 = vector.broadcast %cst_131 : f32 to vector<2x14xf32>
    %952 = arith.addf %951, %950 : vector<2x14xf32>
    %953 = arith.divf %951, %952 : vector<2x14xf32>
    %954 = vector.extract_strided_slice %953 {offsets = [0, 0], sizes = [2, 7], strides = [1, 1]} : vector<2x14xf32> to vector<2x7xf32>
    %955 = vector.extract_strided_slice %953 {offsets = [0, 7], sizes = [2, 7], strides = [1, 1]} : vector<2x14xf32> to vector<2x7xf32>
    %956 = vector.extract_strided_slice %942 {offsets = [0, 14], sizes = [2, 7], strides = [1, 1]} : vector<2x21xf32> to vector<2x7xf32>
    %957 = vector.extract_strided_slice %945 {offsets = [0, 14], sizes = [2, 7], strides = [1, 1]} : vector<2x21xf32> to vector<2x7xf32>
    %958 = arith.mulf %954, %957 : vector<2x7xf32>
    %959 = arith.addf %956, %958 : vector<2x7xf32>
    %960 = math.tanh %959 : vector<2x7xf32>
    %cst_132 = arith.constant 1.000000e+00 : f32
    %961 = vector.broadcast %cst_132 : f32 to vector<2x7xf32>
    %962 = arith.subf %961, %955 : vector<2x7xf32>
    %963 = arith.mulf %962, %960 : vector<2x7xf32>
    %964 = arith.mulf %955, %940 : vector<2x7xf32>
    %965 = arith.addf %963, %964 : vector<2x7xf32>
    %966 = vector.extract_strided_slice %814 {offsets = [0, 6, 0], sizes = [2, 1, 21], strides = [1, 1, 1]} : vector<2x8x21xf32> to vector<2x1x21xf32>
    %967 = vector.shape_cast %966 : vector<2x1x21xf32> to vector<2x21xf32>
    %cst_133 = arith.constant dense<0.000000e+00> : vector<2x21xf32>
    %968 = tpu.matmul %965, %807, %cst_133 {dimension_numbers = #tpu.dot_dimension_numbers<[1], [0], [0], [1], [0, 0, 1, 1], [], []>} : vector<2x7xf32>, vector<7x21xf32>, vector<2x21xf32> -> vector<2x21xf32>
    %969 = vector.broadcast %809 : vector<1x21xf32> to vector<2x21xf32>
    %970 = arith.addf %968, %969 : vector<2x21xf32>
    %971 = vector.extract_strided_slice %967 {offsets = [0, 0], sizes = [2, 14], strides = [1, 1]} : vector<2x21xf32> to vector<2x14xf32>
    %972 = vector.extract_strided_slice %970 {offsets = [0, 0], sizes = [2, 14], strides = [1, 1]} : vector<2x21xf32> to vector<2x14xf32>
    %973 = arith.addf %971, %972 : vector<2x14xf32>
    %974 = arith.negf %973 : vector<2x14xf32>
    %975 = math.exp %974 : vector<2x14xf32>
    %cst_134 = arith.constant 1.000000e+00 : f32
    %976 = vector.broadcast %cst_134 : f32 to vector<2x14xf32>
    %977 = arith.addf %976, %975 : vector<2x14xf32>
    %978 = arith.divf %976, %977 : vector<2x14xf32>
    %979 = vector.extract_strided_slice %978 {offsets = [0, 0], sizes = [2, 7], strides = [1, 1]} : vector<2x14xf32> to vector<2x7xf32>
    %980 = vector.extract_strided_slice %978 {offsets = [0, 7], sizes = [2, 7], strides = [1, 1]} : vector<2x14xf32> to vector<2x7xf32>
    %981 = vector.extract_strided_slice %967 {offsets = [0, 14], sizes = [2, 7], strides = [1, 1]} : vector<2x21xf32> to vector<2x7xf32>
    %982 = vector.extract_strided_slice %970 {offsets = [0, 14], sizes = [2, 7], strides = [1, 1]} : vector<2x21xf32> to vector<2x7xf32>
    %983 = arith.mulf %979, %982 : vector<2x7xf32>
    %984 = arith.addf %981, %983 : vector<2x7xf32>
    %985 = math.tanh %984 : vector<2x7xf32>
    %cst_135 = arith.constant 1.000000e+00 : f32
    %986 = vector.broadcast %cst_135 : f32 to vector<2x7xf32>
    %987 = arith.subf %986, %980 : vector<2x7xf32>
    %988 = arith.mulf %987, %985 : vector<2x7xf32>
    %989 = arith.mulf %980, %965 : vector<2x7xf32>
    %990 = arith.addf %988, %989 : vector<2x7xf32>
    %991 = vector.extract_strided_slice %814 {offsets = [0, 7, 0], sizes = [2, 1, 21], strides = [1, 1, 1]} : vector<2x8x21xf32> to vector<2x1x21xf32>
    %992 = vector.shape_cast %991 : vector<2x1x21xf32> to vector<2x21xf32>
    %cst_136 = arith.constant dense<0.000000e+00> : vector<2x21xf32>
    %993 = tpu.matmul %990, %807, %cst_136 {dimension_numbers = #tpu.dot_dimension_numbers<[1], [0], [0], [1], [0, 0, 1, 1], [], []>} : vector<2x7xf32>, vector<7x21xf32>, vector<2x21xf32> -> vector<2x21xf32>
    %994 = vector.broadcast %809 : vector<1x21xf32> to vector<2x21xf32>
    %995 = arith.addf %993, %994 : vector<2x21xf32>
    %996 = vector.extract_strided_slice %992 {offsets = [0, 0], sizes = [2, 14], strides = [1, 1]} : vector<2x21xf32> to vector<2x14xf32>
    %997 = vector.extract_strided_slice %995 {offsets = [0, 0], sizes = [2, 14], strides = [1, 1]} : vector<2x21xf32> to vector<2x14xf32>
    %998 = arith.addf %996, %997 : vector<2x14xf32>
    %999 = arith.negf %998 : vector<2x14xf32>
    %1000 = math.exp %999 : vector<2x14xf32>
    %cst_137 = arith.constant 1.000000e+00 : f32
    %1001 = vector.broadcast %cst_137 : f32 to vector<2x14xf32>
    %1002 = arith.addf %1001, %1000 : vector<2x14xf32>
    %1003 = arith.divf %1001, %1002 : vector<2x14xf32>
    %1004 = vector.extract_strided_slice %1003 {offsets = [0, 0], sizes = [2, 7], strides = [1, 1]} : vector<2x14xf32> to vector<2x7xf32>
    %1005 = vector.extract_strided_slice %1003 {offsets = [0, 7], sizes = [2, 7], strides = [1, 1]} : vector<2x14xf32> to vector<2x7xf32>
    %1006 = vector.extract_strided_slice %992 {offsets = [0, 14], sizes = [2, 7], strides = [1, 1]} : vector<2x21xf32> to vector<2x7xf32>
    %1007 = vector.extract_strided_slice %995 {offsets = [0, 14], sizes = [2, 7], strides = [1, 1]} : vector<2x21xf32> to vector<2x7xf32>
    %1008 = arith.mulf %1004, %1007 : vector<2x7xf32>
    %1009 = arith.addf %1006, %1008 : vector<2x7xf32>
    %1010 = math.tanh %1009 : vector<2x7xf32>
    %cst_138 = arith.constant 1.000000e+00 : f32
    %1011 = vector.broadcast %cst_138 : f32 to vector<2x7xf32>
    %1012 = arith.subf %1011, %1005 : vector<2x7xf32>
    %1013 = arith.mulf %1012, %1010 : vector<2x7xf32>
    %1014 = arith.mulf %1005, %990 : vector<2x7xf32>
    %1015 = arith.addf %1013, %1014 : vector<2x7xf32>
    %1016 = vector.shape_cast %840 : vector<2x7xf32> to vector<2x1x7xf32>
    %1017 = vector.shape_cast %865 : vector<2x7xf32> to vector<2x1x7xf32>
    %1018 = vector.shape_cast %890 : vector<2x7xf32> to vector<2x1x7xf32>
    %1019 = vector.shape_cast %915 : vector<2x7xf32> to vector<2x1x7xf32>
    %1020 = vector.shape_cast %940 : vector<2x7xf32> to vector<2x1x7xf32>
    %1021 = vector.shape_cast %965 : vector<2x7xf32> to vector<2x1x7xf32>
    %1022 = vector.shape_cast %990 : vector<2x7xf32> to vector<2x1x7xf32>
    %1023 = vector.shape_cast %1015 : vector<2x7xf32> to vector<2x1x7xf32>
    %1024 = tpu.concatenate %1016, %1017, %1018, %1019, %1020, %1021, %1022, %1023 in 1 : vector<2x1x7xf32>, vector<2x1x7xf32>, vector<2x1x7xf32>, vector<2x1x7xf32>, vector<2x1x7xf32>, vector<2x1x7xf32>, vector<2x1x7xf32>, vector<2x1x7xf32> -> vector<2x8x7xf32>
    %c2_i32_139 = arith.constant 2 : i32
    %1025 = tpu.memref_slice %arg9[%c2_i32_139] : memref<3x!tpu.dma_semaphore, #tpu.memory_space<semaphore_mem>> -> memref<1x!tpu.dma_semaphore, #tpu.memory_space<semaphore_mem>>
    %1026 = tpu.memref_squeeze %1025 : memref<1x!tpu.dma_semaphore, #tpu.memory_space<semaphore_mem>> -> memref<!tpu.dma_semaphore, #tpu.memory_space<semaphore_mem>>
    tpu.wait_dma2 semaphore(%1026 : memref<!tpu.dma_semaphore, #tpu.memory_space<semaphore_mem>>) src(%arg4 : memref<8x7xf32, #tpu.memory_space<any>>) dst(%arg8 : memref<8x7xf32, #tpu.memory_space<vmem>>)
    %c0_140 = arith.constant 0 : index
    %c0_141 = arith.constant 0 : index
    %1027 = vector.load %arg8[%c0_140, %c0_141] : memref<8x7xf32, #tpu.memory_space<vmem>>, vector<7x7xf32>
    %c7 = arith.constant 7 : index
    %c0_142 = arith.constant 0 : index
    %1028 = vector.load %arg8[%c7, %c0_142] : memref<8x7xf32, #tpu.memory_space<vmem>>, vector<1x7xf32>
    %1029 = vector.shape_cast %1024 : vector<2x8x7xf32> to vector<16x7xf32>
    %cst_143 = arith.constant dense<0.000000e+00> : vector<16x7xf32>
    %1030 = tpu.matmul %1029, %1027, %cst_143 {dimension_numbers = #tpu.dot_dimension_numbers<[1], [0], [0], [1], [0, 0, 1, 1], [], []>} : vector<16x7xf32>, vector<7x7xf32>, vector<16x7xf32> -> vector<16x7xf32>
    %1031 = vector.broadcast %1028 : vector<1x7xf32> to vector<16x7xf32>
    %1032 = arith.addf %1030, %1031 : vector<16x7xf32>
    %1033 = vector.shape_cast %1032 : vector<16x7xf32> to vector<2x8x7xf32>
    %cst_144 = arith.constant dense<0xFF800000> : vector<2x7xf32>
    %1034 = vector.multi_reduction <maximumf>, %1033, %cst_144 [1] : vector<2x8x7xf32> to vector<2x7xf32>
    %1035 = vector.shape_cast %1034 : vector<2x7xf32> to vector<2x1x7xf32>
    %1036 = vector.broadcast %1035 : vector<2x1x7xf32> to vector<2x8x7xf32>
    %1037 = arith.subf %1033, %1036 : vector<2x8x7xf32>
    %1038 = math.exp %1037 : vector<2x8x7xf32>
    %cst_145 = arith.constant dense<0.000000e+00> : vector<2x7xf32>
    %1039 = vector.multi_reduction <add>, %1038, %cst_145 [1] : vector<2x8x7xf32> to vector<2x7xf32>
    %1040 = vector.shape_cast %1039 : vector<2x7xf32> to vector<2x1x7xf32>
    %1041 = tpu.reciprocal %1040 {approx = true} : vector<2x1x7xf32> -> vector<2x1x7xf32>
    %1042 = vector.broadcast %1041 : vector<2x1x7xf32> to vector<2x8x7xf32>
    %1043 = arith.mulf %1038, %1042 : vector<2x8x7xf32>
    %c0_146 = arith.constant 0 : index
    %c0_147 = arith.constant 0 : index
    %c0_148 = arith.constant 0 : index
    %1044 = vector.load %arg5[%c0_146, %c0_147, %c0_148] : memref<2x8x7xf32, #tpu.memory_space<vmem>>, vector<2x8x7xf32>
    tpu.vector_store %arg5[%c0_146, %c0_147, %c0_148], %1043 {strides = array<i32>} : memref<2x8x7xf32, #tpu.memory_space<vmem>>, vector<2x8x7xf32>,
    return
  }
}

</mosaic_0001>

<llo_original>
// kernel: seq_model_forward.1
$region0: #{seq_model_forward.1}
  #allocation0 [shape = 'u32[]', space=smem, size = 0x4, offset = 0x4, fixed_abs, tag = 'smem constant byte address 0x4 - core index']
  #allocation1 [shape = 'u32[144,128]{1,0:T(1,128)}', space=vmem, size = 0x12000, scoped, tag = 'internal scratch']
  #allocation2 [shape = 'f32[129,256]{1,0:T(8,128)}', space=vmem, size = 0x22000, scoped, tag = 'scratch operand']
  #allocation3 [shape = 'f32[104,21]{1,0:T(8,128)}', space=vmem, size = 0xd000, scoped, tag = 'scratch operand']
  #allocation4 [shape = 'f32[8,7]{1,0:T(8,128)}', space=vmem, size = 0x1000, scoped, tag = 'scratch operand']
  #allocation5 [shape = 's32[3]{0}', space=sflag, size = 0xc, scoped, tag = 'scratch operand']
  #allocation8 [shape = 's32[]', space=sflag, size = 0x4, offset = 0, fixed_abs, tag = 'sflag constant byte address 0x0 - dummy sync flag']
  #allocation9 [shape = 's32[]', space=sflag, size = 0x4, offset = 0, fixed_abs, tag = 'sflag constant byte address 0x0 - dummy sync flag']
  #allocation10 [shape = 'u32[]', space=smem, size = 0x4, offset = 0x44, fixed_abs, tag = 'smem constant byte address 0x44 - assertion arg 0']
  #allocation11 [shape = 'u32[]', space=smem, size = 0x4, offset = 0x48, fixed_abs, tag = 'smem constant byte address 0x48 - assertion arg 1']
  #allocation12 [shape = 's32[]', space=sflag, size = 0x4, offset = 0, fixed_abs, tag = 'sflag constant byte address 0x0 - dummy sync flag']
  #allocation13 [shape = 's32[]', space=sflag, size = 0x4, offset = 0, fixed_abs, tag = 'sflag constant byte address 0x0 - dummy sync flag']
  %s0 = inlined_call_operand.vmem [shape: f32[2,8,256], index: 0, kind: input, shape index: {}]
  %s1 = inlined_call_operand.hbm [shape: f32[321,256], index: 1, kind: input, shape index: {}]
  %s2 = inlined_call_operand.hbm [shape: f32[129,256], index: 2, kind: input, shape index: {}]
  %s3 = inlined_call_operand.vmem [shape: f32[104,21], index: 3, kind: input, shape index: {}]
  %s4 = inlined_call_operand.vmem [shape: f32[8,7], index: 4, kind: input, shape index: {}]
  %s5 = inlined_call_operand.vmem [shape: f32[2,8,7], index: 5, kind: output, shape index: {}]
  %s6 = sld [smem:[#allocation0]]
  $region94: #{seq_model_forward.1} parent=0
    _
  %s8 = ssub.s32 1, %s6
  %s9 = scalar_select 0, %s8, %s6
  $region1: #{seq_model_forward.1} parent=0
    #allocation6 [shape = 'u8[335872]{0}', space=vmem, size = 0x52000, scoped, tag = 'input window, operand 1, single buffered']
    #allocation7 [shape = 's32[1]{0}', space=sflag, size = 0x4, scoped, tag = 'scoped memory for seq_model_forward.1']
    %10 = vsyncpa [#allocation7], 0
    // Predicated region
    $region2: #{seq_model_forward.1} parent=1 // pred_check
      _
    $region3: #{seq_model_forward.1} parent=1 // pred_check_branch
      %12 = sbr.rel (0) target = $region5
    $region4: #{seq_model_forward.1} parent=1 // pred_region
      _
    $region5: #{seq_model_forward.1} parent=1 // pred_fallthru
      _
    // Predicated region
    $region6: #{seq_model_forward.1} parent=1 // pred_check
      _
    $region7: #{seq_model_forward.1} parent=1 // pred_check_branch
      %14 = sbr.rel (0) target = $region9
    $region8: #{seq_model_forward.1} parent=1 // pred_region
      %s16 = ssub.s32 10496, 10496
      %17 = vsyncadd [#allocation7], %s16
      %s18 = sshll.u32 [#allocation6], 4
      %s19 = int_to_ptr.vmem [resolvable:$true] %s18
      %24 = dma.hbm_to_vmem [thread:$0]  %s1, 10496, %s19, [#allocation7], 256, 256, 16
    $region9: #{seq_model_forward.1} parent=1 // pred_fallthru
      _
    // Predicated region
    $region10: #{seq_model_forward.1} parent=1 // pred_check
      _
    $region11: #{seq_model_forward.1} parent=1 // pred_check_branch
      %26 = sbr.rel (0) target = $region13
    $region12: #{seq_model_forward.1} parent=1 // pred_region
      %27 = dma.done [#allocation7], 10496
    $region13: #{seq_model_forward.1} parent=1 // pred_fallthru
      _
    // Predicated region
    $region14: #{seq_model_forward.1} parent=1 // pred_check
      _
    $region15: #{seq_model_forward.1} parent=1 // pred_check_branch
      %29 = sbr.rel target = $region17
    $region16: #{seq_model_forward.1} parent=1 // pred_region
      %30 = sst [smem:[#allocation10]] [#allocation9]
      %31 = sst [smem:[#allocation11]] [#allocation8]
    $region17: #{seq_model_forward.1} parent=1 // pred_fallthru
      _
    %33 = shalt.err (0)
    %s35 = sshll.u32 [#allocation2], 4
    %s36 = int_to_ptr.vmem [resolvable:$true] %s35
    %38 = dma.hbm_to_vmem [thread:$0]  %s2, 4352, %s36, [#allocation5]
    %s39 = scalar_lea.sflag [#allocation5], 1
    %p41 = scmp.lt.u32.totalorder 104, 8
    %p42 = pneg %p41
    // Predicated region
    $region18: #{seq_model_forward.1} parent=1 // pred_check
      _
    $region19: #{seq_model_forward.1} parent=1 // pred_check_branch
      %44 = sbr.rel (%p41) target = $region21
    $region20: #{seq_model_forward.1} parent=1 // pred_region
      %s60 = sand.u32 104, 7
      %p61 = scmp.eq.s32.totalorder %s60, 0
      // Predicated region
      $region33: #{seq_model_forward.1} parent=20 // pred_check
        %p62 = pneg %p61
      $region34: #{seq_model_forward.1} parent=20 // pred_check_branch
        %64 = sbr.rel (%p62) target = $region36
      $region35: #{seq_model_forward.1} parent=20 // pred_region
        loop: start=0, step=1, limit=1
        $region37: #{seq_model_forward.1} parent=35 // loop_pre_header
          _
        $region38: #{seq_model_forward.1} parent=35 // loop_header
          %s66 = sphi 0, %s70
          %p67 = scmp.ge.s32.totalorder %s66, 1
          %s71 = sphi %s3, %s3
          %s72 = sphi [#allocation3], [#allocation3]
        $region39: #{seq_model_forward.1} parent=35 // loop_header_branch
          %69 = sbr.rel (%p67) target = $region43
        $region40: #{seq_model_forward.1} parent=35 // loop_body
          %v73 = vld [vmem:[%s71] sm:$0xff]
          %74 = vst [vmem:[%s72] sm:$0xff] %v73
          %v75 = vld [vmem:[%s71 + $0x8] sm:$0xff]
          %76 = vst [vmem:[%s72 + $0x8] sm:$0xff] %v75
          %v77 = vld [vmem:[%s71 + $0x10] sm:$0xff]
          %78 = vst [vmem:[%s72 + $0x10] sm:$0xff] %v77
          %v79 = vld [vmem:[%s71 + $0x18] sm:$0xff]
          %80 = vst [vmem:[%s72 + $0x18] sm:$0xff] %v79
          %v81 = vld [vmem:[%s71 + $0x20] sm:$0xff]
          %82 = vst [vmem:[%s72 + $0x20] sm:$0xff] %v81
          %v83 = vld [vmem:[%s71 + $0x28] sm:$0xff]
          %84 = vst [vmem:[%s72 + $0x28] sm:$0xff] %v83
          %v85 = vld [vmem:[%s71 + $0x30] sm:$0xff]
          %86 = vst [vmem:[%s72 + $0x30] sm:$0xff] %v85
          %v87 = vld [vmem:[%s71 + $0x38] sm:$0xff]
          %88 = vst [vmem:[%s72 + $0x38] sm:$0xff] %v87
          %v89 = vld [vmem:[%s71 + $0x40] sm:$0xff]
          %90 = vst [vmem:[%s72 + $0x40] sm:$0xff] %v89
          %v91 = vld [vmem:[%s71 + $0x48] sm:$0xff]
          %92 = vst [vmem:[%s72 + $0x48] sm:$0xff] %v91
          %v93 = vld [vmem:[%s71 + $0x50] sm:$0xff]
          %94 = vst [vmem:[%s72 + $0x50] sm:$0xff] %v93
          %v95 = vld [vmem:[%s71 + $0x58] sm:$0xff]
          %96 = vst [vmem:[%s72 + $0x58] sm:$0xff] %v95
          %v97 = vld [vmem:[%s71 + $0x60] sm:$0xff]
          %98 = vst [vmem:[%s72 + $0x60] sm:$0xff] %v97
        $region41: #{seq_model_forward.1} parent=35 // loop_footer
          %s70 = sadd.s32 1, %s66
        $region42: #{seq_model_forward.1} parent=35 // loop_footer_branch
          %65 = sbr.rel target = $region38
        $region43: #{seq_model_forward.1} parent=35 // loop_exit
          _
      $region36: #{seq_model_forward.1} parent=20 // pred_fallthru
        _
      %p99 = pneg %p61
      // Predicated region
      $region44: #{seq_model_forward.1} parent=20 // pred_check
        _
      $region45: #{seq_model_forward.1} parent=20 // pred_check_branch
        %101 = sbr.rel (%p61) target = $region47
      $region46: #{seq_model_forward.1} parent=20 // pred_region
        %s102 = sand.u32 104, 7
      $region47: #{seq_model_forward.1} parent=20 // pred_fallthru
        _
    $region21: #{seq_model_forward.1} parent=1 // pred_fallthru
      _
    // Predicated region
    $region22: #{seq_model_forward.1} parent=1 // pred_check
      %p45 = pneg %p41
    $region23: #{seq_model_forward.1} parent=1 // pred_check_branch
      %47 = sbr.rel (%p45) target = $region25
    $region24: #{seq_model_forward.1} parent=1 // pred_region
      %s48 = sshll.u32 1, 104
      %s49 = ssub.s32 %s48, 1
      loop: start=0, step=1, limit=1
      $region26: #{seq_model_forward.1} parent=24 // loop_pre_header
        _
      $region27: #{seq_model_forward.1} parent=24 // loop_header
        %s51 = sphi 0, %s55
        %p52 = scmp.ge.s32.totalorder %s51, 1
        %s56 = sphi %s3, %s3
        %s57 = sphi [#allocation3], [#allocation3]
      $region28: #{seq_model_forward.1} parent=24 // loop_header_branch
        %54 = sbr.rel (%p52) target = $region32
      $region29: #{seq_model_forward.1} parent=24 // loop_body
        %v58 = vld [vmem:[%s56] sm:%s49]
        %59 = vst [vmem:[%s57] sm:%s49] %v58
      $region30: #{seq_model_forward.1} parent=24 // loop_footer
        %s55 = sadd.s32 1, %s51
      $region31: #{seq_model_forward.1} parent=24 // loop_footer_branch
        %50 = sbr.rel target = $region27
      $region32: #{seq_model_forward.1} parent=24 // loop_exit
        _
    $region25: #{seq_model_forward.1} parent=1 // pred_fallthru
      _
    // Predicated region
    $region48: #{seq_model_forward.1} parent=1 // pred_check
      _
    $region49: #{seq_model_forward.1} parent=1 // pred_check_branch
      %105 = sbr.rel (0) target = $region51
    $region50: #{seq_model_forward.1} parent=1 // pred_region
      %106 = vsyncadd %s39, 1664
    $region51: #{seq_model_forward.1} parent=1 // pred_fallthru
      _
    %s107 = scalar_lea.sflag [#allocation5], 2
    %p109 = scmp.lt.u32.totalorder 8, 8
    %p110 = pneg %p109
    // Predicated region
    $region52: #{seq_model_forward.1} parent=1 // pred_check
      _
    $region53: #{seq_model_forward.1} parent=1 // pred_check_branch
      %112 = sbr.rel (%p109) target = $region55
    $region54: #{seq_model_forward.1} parent=1 // pred_region
      %s128 = sand.u32 8, 7
      %p129 = scmp.eq.s32.totalorder %s128, 0
      // Predicated region
      $region67: #{seq_model_forward.1} parent=54 // pred_check
        %p130 = pneg %p129
      $region68: #{seq_model_forward.1} parent=54 // pred_check_branch
        %132 = sbr.rel (%p130) target = $region70
      $region69: #{seq_model_forward.1} parent=54 // pred_region
        loop: start=0, step=1, limit=1
        $region71: #{seq_model_forward.1} parent=69 // loop_pre_header
          _
        $region72: #{seq_model_forward.1} parent=69 // loop_header
          %s134 = sphi 0, %s138
          %p135 = scmp.ge.s32.totalorder %s134, 1
          %s139 = sphi %s4, %s4
          %s140 = sphi [#allocation4], [#allocation4]
        $region73: #{seq_model_forward.1} parent=69 // loop_header_branch
          %137 = sbr.rel (%p135) target = $region77
        $region74: #{seq_model_forward.1} parent=69 // loop_body
          %v141 = vld [vmem:[%s139] sm:$0xff]
          %142 = vst [vmem:[%s140] sm:$0xff] %v141
        $region75: #{seq_model_forward.1} parent=69 // loop_footer
          %s138 = sadd.s32 1, %s134
        $region76: #{seq_model_forward.1} parent=69 // loop_footer_branch
          %133 = sbr.rel target = $region72
        $region77: #{seq_model_forward.1} parent=69 // loop_exit
          _
      $region70: #{seq_model_forward.1} parent=54 // pred_fallthru
        _
      %p143 = pneg %p129
      // Predicated region
      $region78: #{seq_model_forward.1} parent=54 // pred_check
        _
      $region79: #{seq_model_forward.1} parent=54 // pred_check_branch
        %145 = sbr.rel (%p129) target = $region81
      $region80: #{seq_model_forward.1} parent=54 // pred_region
        %s146 = sand.u32 8, 7
      $region81: #{seq_model_forward.1} parent=54 // pred_fallthru
        _
    $region55: #{seq_model_forward.1} parent=1 // pred_fallthru
      _
    // Predicated region
    $region56: #{seq_model_forward.1} parent=1 // pred_check
      %p113 = pneg %p109
    $region57: #{seq_model_forward.1} parent=1 // pred_check_branch
      %115 = sbr.rel (%p113) target = $region59
    $region58: #{seq_model_forward.1} parent=1 // pred_region
      %s116 = sshll.u32 1, 8
      %s117 = ssub.s32 %s116, 1
      loop: start=0, step=1, limit=1
      $region60: #{seq_model_forward.1} parent=58 // loop_pre_header
        _
      $region61: #{seq_model_forward.1} parent=58 // loop_header
        %s119 = sphi 0, %s123
        %p120 = scmp.ge.s32.totalorder %s119, 1
        %s124 = sphi %s4, %s4
        %s125 = sphi [#allocation4], [#allocation4]
      $region62: #{seq_model_forward.1} parent=58 // loop_header_branch
        %122 = sbr.rel (%p120) target = $region66
      $region63: #{seq_model_forward.1} parent=58 // loop_body
        %v126 = vld [vmem:[%s124] sm:%s117]
        %127 = vst [vmem:[%s125] sm:%s117] %v126
      $region64: #{seq_model_forward.1} parent=58 // loop_footer
        %s123 = sadd.s32 1, %s119
      $region65: #{seq_model_forward.1} parent=58 // loop_footer_branch
        %118 = sbr.rel target = $region61
      $region66: #{seq_model_forward.1} parent=58 // loop_exit
        _
    $region59: #{seq_model_forward.1} parent=1 // pred_fallthru
      _
    // Predicated region
    $region82: #{seq_model_forward.1} parent=1 // pred_check
      _
    $region83: #{seq_model_forward.1} parent=1 // pred_check_branch
      %149 = sbr.rel (0) target = $region85
    $region84: #{seq_model_forward.1} parent=1 // pred_region
      %150 = vsyncadd %s107, 128
    $region85: #{seq_model_forward.1} parent=1 // pred_fallthru
      _
    %v151 = vld [vmem:[%s0] sm:$0xff]
    %v152 = vld [vmem:[%s0 + $0x8] sm:$0xff]
    %v153 = vld [vmem:[%s0 + $0x10] sm:$0xff]
    %v154 = vld [vmem:[%s0 + $0x18] sm:$0xff]
    %v155 = vld [vmem:[#allocation6] sm:$0xff]
    %v156 = vld [vmem:[#allocation6 + $0x8] sm:$0xff]
    %v157 = vld [vmem:[#allocation6 + $0x10] sm:$0xff]
    %v158 = vld [vmem:[#allocation6 + $0x18] sm:$0xff]
    %v159 = vld [vmem:[#allocation6 + $0x20] sm:$0xff]
    %v160 = vld [vmem:[#allocation6 + $0x28] sm:$0xff]
    %v161 = vld [vmem:[#allocation6 + $0x30] sm:$0xff]
    %v162 = vld [vmem:[#allocation6 + $0x38] sm:$0xff]
    %v163 = vld [vmem:[#allocation6 + $0x40] sm:$0xff]
    %v164 = vld [vmem:[#allocation6 + $0x48] sm:$0xff]
    %v165 = vld [vmem:[#allocation6 + $0x50] sm:$0xff]
    %v166 = vld [vmem:[#allocation6 + $0x58] sm:$0xff]
    %v167 = vld [vmem:[#allocation6 + $0x60] sm:$0xff]
    %v168 = vld [vmem:[#allocation6 + $0x68] sm:$0xff]
    %v169 = vld [vmem:[#allocation6 + $0x70] sm:$0xff]
    %v170 = vld [vmem:[#allocation6 + $0x78] sm:$0xff]
    %v171 = vld [vmem:[#allocation6 + $0x80] sm:$0xff]
    %v172 = vld [vmem:[#allocation6 + $0x88] sm:$0xff]
    %v173 = vld [vmem:[#allocation6 + $0x90] sm:$0xff]
    %v174 = vld [vmem:[#allocation6 + $0x98] sm:$0xff]
    %v175 = vld [vmem:[#allocation6 + $0xa0] sm:$0xff]
    %v176 = vld [vmem:[#allocation6 + $0xa8] sm:$0xff]
    %v177 = vld [vmem:[#allocation6 + $0xb0] sm:$0xff]
    %v178 = vld [vmem:[#allocation6 + $0xb8] sm:$0xff]
    %v179 = vld [vmem:[#allocation6 + $0xc0] sm:$0xff]
    %v180 = vld [vmem:[#allocation6 + $0xc8] sm:$0xff]
    %v181 = vld [vmem:[#allocation6 + $0xd0] sm:$0xff]
    %v182 = vld [vmem:[#allocation6 + $0xd8] sm:$0xff]
    %v183 = vld [vmem:[#allocation6 + $0xe0] sm:$0xff]
    %v184 = vld [vmem:[#allocation6 + $0xe8] sm:$0xff]
    %v185 = vld [vmem:[#allocation6 + $0xf0] sm:$0xff]
    %v186 = vld [vmem:[#allocation6 + $0xf8] sm:$0xff]
    %v187 = vld [vmem:[#allocation6 + $0x100] sm:$0xff]
    %v188 = vld [vmem:[#allocation6 + $0x108] sm:$0xff]
    %v189 = vld [vmem:[#allocation6 + $0x110] sm:$0xff]
    %v190 = vld [vmem:[#allocation6 + $0x118] sm:$0xff]
    %v191 = vld [vmem:[#allocation6 + $0x120] sm:$0xff]
    %v192 = vld [vmem:[#allocation6 + $0x128] sm:$0xff]
    %v193 = vld [vmem:[#allocation6 + $0x130] sm:$0xff]
    %v194 = vld [vmem:[#allocation6 + $0x138] sm:$0xff]
    %v195 = vld [vmem:[#allocation6 + $0x140] sm:$0xff]
    %v196 = vld [vmem:[#allocation6 + $0x148] sm:$0xff]
    %v197 = vld [vmem:[#allocation6 + $0x150] sm:$0xff]
    %v198 = vld [vmem:[#allocation6 + $0x158] sm:$0xff]
    %v199 = vld [vmem:[#allocation6 + $0x160] sm:$0xff]
    %v200 = vld [vmem:[#allocation6 + $0x168] sm:$0xff]
    %v201 = vld [vmem:[#allocation6 + $0x170] sm:$0xff]
    %v202 = vld [vmem:[#allocation6 + $0x178] sm:$0xff]
    %v203 = vld [vmem:[#allocation6 + $0x180] sm:$0xff]
    %v204 = vld [vmem:[#allocation6 + $0x188] sm:$0xff]
    %v205 = vld [vmem:[#allocation6 + $0x190] sm:$0xff]
    %v206 = vld [vmem:[#allocation6 + $0x198] sm:$0xff]
    %v207 = vld [vmem:[#allocation6 + $0x1a0] sm:$0xff]
    %v208 = vld [vmem:[#allocation6 + $0x1a8] sm:$0xff]
    %v209 = vld [vmem:[#allocation6 + $0x1b0] sm:$0xff]
    %v210 = vld [vmem:[#allocation6 + $0x1b8] sm:$0xff]
    %v211 = vld [vmem:[#allocation6 + $0x1c0] sm:$0xff]
    %v212 = vld [vmem:[#allocation6 + $0x1c8] sm:$0xff]
    %v213 = vld [vmem:[#allocation6 + $0x1d0] sm:$0xff]
    %v214 = vld [vmem:[#allocation6 + $0x1d8] sm:$0xff]
    %v215 = vld [vmem:[#allocation6 + $0x1e0] sm:$0xff]
    %v216 = vld [vmem:[#allocation6 + $0x1e8] sm:$0xff]
    %v217 = vld [vmem:[#allocation6 + $0x1f0] sm:$0xff]
    %v218 = vld [vmem:[#allocation6 + $0x1f8] sm:$0xff]
    %v219 = vld [vmem:[#allocation6 + $0x200] sm:$0xff]
    %v220 = vld [vmem:[#allocation6 + $0x208] sm:$0xff]
    %v221 = vld [vmem:[#allocation6 + $0x210] sm:$0xff]
    %v222 = vld [vmem:[#allocation6 + $0x218] sm:$0xff]
    %v223 = vld [vmem:[#allocation6 + $0x220] sm:$0xff]
    %v224 = vld [vmem:[#allocation6 + $0x228] sm:$0xff]
    %v225 = vld [vmem:[#allocation6 + $0x230] sm:$0xff]
    %v226 = vld [vmem:[#allocation6 + $0x238] sm:$0xff]
    %v227 = vld [vmem:[#allocation6 + $0x240] sm:$0xff]
    %v228 = vld [vmem:[#allocation6 + $0x248] sm:$0xff]
    %v229 = vld [vmem:[#allocation6 + $0x250] sm:$0xff]
    %v230 = vld [vmem:[#allocation6 + $0x258] sm:$0xff]
    %v231 = vld [vmem:[#allocation6 + $0x260] sm:$0xff]
    %v232 = vld [vmem:[#allocation6 + $0x268] sm:$0xff]
    %v233 = vld [vmem:[#allocation6 + $0x270] sm:$0xff]
    %v234 = vld [vmem:[#allocation6 + $0x278] sm:$0xff]
    %s235 = scalar_lea.vmem [#allocation6], 640
    %v236 = vld [vmem:[%s235] ss:$8 sm:$0x3]
    %v238 = vlaneseq
    %v239 = vshrl.u32 %v238, 7
    %v240 = vsub.s32 0, %v239
    %v241 = vrot.slane %v236, %v240
    %v242 = vlaneseq
    %v243 = vshrl.u32 %v242, 7
    %v244 = vsub.s32 1, %v243
    %v245 = vrot.slane %v236, %v244
    %248 = vmatprep.subr.mxu0 %v186
    %249 = vmatpush1.msra.mxu0 %v185
    %250 = vmatprep.subr.mxu0 %v184
    %251 = vmatpush1.msra.mxu0 %v183
    %252 = vmatprep.subr.mxu0 %v182
    %253 = vmatpush1.msra.mxu0 %v181
    %254 = vmatprep.subr.mxu0 %v180
    %255 = vmatpush1.msra.mxu0 %v179
    %256 = vmatprep.subr.mxu0 %v178
    %257 = vmatpush1.msra.mxu0 %v177
    %258 = vmatprep.subr.mxu0 %v176
    %259 = vmatpush1.msra.mxu0 %v175
    %260 = vmatprep.subr.mxu0 %v174
    %261 = vmatpush1.msra.mxu0 %v173
    %262 = vmatprep.subr.mxu0 %v172
    %263 = vmatpush1.msra.mxu0 %v171
    %264 = vmatprep.subr.mxu0 %v170
    %265 = vmatpush1.msra.mxu0 %v169
    %266 = vmatprep.subr.mxu0 %v168
    %267 = vmatpush1.msra.mxu0 %v167
    %268 = vmatprep.subr.mxu0 %v166
    %269 = vmatpush1.msra.mxu0 %v165
    %270 = vmatprep.subr.mxu0 %v164
    %271 = vmatpush1.msra.mxu0 %v163
    %272 = vmatprep.subr.mxu0 %v162
    %273 = vmatpush1.msra.mxu0 %v161
    %274 = vmatprep.subr.mxu0 %v160
    %275 = vmatpush1.msra.mxu0 %v159
    %276 = vmatprep.subr.mxu0 %v158
    %277 = vmatpush1.msra.mxu0 %v157
    %278 = vmatprep.subr.mxu0 %v156
    %279 = vmatpush1.msra.mxu0 %v155
    %280 = vmatprep.subr.mxu0 %v218
    %281 = vmatpush2.msra.mxu0 %v217
    %282 = vmatprep.subr.mxu0 %v216
    %283 = vmatpush2.msra.mxu0 %v215
    %284 = vmatprep.subr.mxu0 %v214
    %285 = vmatpush2.msra.mxu0 %v213
    %286 = vmatprep.subr.mxu0 %v212
    %287 = vmatpush2.msra.mxu0 %v211
    %288 = vmatprep.subr.mxu0 %v210
    %289 = vmatpush2.msra.mxu0 %v209
    %290 = vmatprep.subr.mxu0 %v208
    %291 = vmatpush2.msra.mxu0 %v207
    %292 = vmatprep.subr.mxu0 %v206
    %293 = vmatpush2.msra.mxu0 %v205
    %294 = vmatprep.subr.mxu0 %v204
    %295 = vmatpush2.msra.mxu0 %v203
    %296 = vmatprep.subr.mxu0 %v202
    %297 = vmatpush2.msra.mxu0 %v201
    %298 = vmatprep.subr.mxu0 %v200
    %299 = vmatpush2.msra.mxu0 %v199
    %300 = vmatprep.subr.mxu0 %v198
    %301 = vmatpush2.msra.mxu0 %v197
    %302 = vmatprep.subr.mxu0 %v196
    %303 = vmatpush2.msra.mxu0 %v195
    %304 = vmatprep.subr.mxu0 %v194
    %305 = vmatpush2.msra.mxu0 %v193
    %306 = vmatprep.subr.mxu0 %v192
    %307 = vmatpush2.msra.mxu0 %v191
    %308 = vmatprep.subr.mxu0 %v190
    %309 = vmatpush2.msra.mxu0 %v189
    %310 = vmatprep.subr.mxu0 %v188
    %311 = vmatpush2.msra.mxu0 %v187
    %312 = vmatprep.mubr.f32.mxu0 %v152
    %313 = vmatmul.mubr.f32.gmra.mxu0 %v151
    %v314 = vpop.f32.mrf.mxu0
    %v315 = vadd.f32 %v241, %v314
    %v316 = vpop.f32.mrf.mxu0
    %v317 = vadd.f32 %v245, %v316
    %318 = vmatprep.mubr.f32.mxu0 %v154
    %319 = vmatmul.mubr.f32.gmra.mxu0 %v153
    %v320 = vpop.f32.mrf.mxu0
    %v321 = vadd.f32 %v241, %v320
    %v322 = vpop.f32.mrf.mxu0
    %v323 = vadd.f32 %v245, %v322
    %324 = vdwg.mxu0
    %v325 = vlaneseq
    %v326 = vand.u32 %v325, 127
    %v327 = vadd.s32 %v326, 128
    %vm328 = vcmp.lt.s32.totalorder %v326, 0
    %v329 = vsub.s32 0, %v326
    %v330 = vsel %vm328, %v329, %v326
    %v331 = vshrl.u32 %v330, 6
    %v332 = vand.u32 %v330, 63
    %v333 = vsub.s32 0, %v332
    %v334 = vsel %vm328, %v333, %v332
    %vm335 = vcmp.lt.s32.totalorder %v327, 0
    %v336 = vsub.s32 0, %v327
    %v337 = vsel %vm335, %v336, %v327
    %v338 = vshrl.u32 %v337, 6
    %v339 = vand.u32 %v337, 63
    %v340 = vsub.s32 0, %v339
    %v341 = vsel %vm335, %v340, %v339
    %vm342 = vcmp.ne.s32.totalorder %v334, 0
    %vm343 = vcmp.ne.s32.totalorder %v341, 0
    %vm344 = vcmp.lt.s32.totalorder %v334, 0
    %vm345 = vcmp.lt.s32.totalorder %v341, 0
    %vm346 = vmand %vm344, %vm342
    %vm347 = vmand %vm345, %vm343
    %v348 = vadd.s32 %v334, 64
    %v349 = vadd.s32 %v341, 64
    %v350 = vsel %vm346, %v348, %v334
    %v351 = vsel %vm347, %v349, %v341
    %vm352 = vcmp.lt.s32.totalorder %v350, 32
    %vm353 = vcmp.lt.s32.totalorder %v351, 32
    %v358 = vrot.slane %v321, 7
    %vm359 = vcmask 1041409
    %v360 = vsel %vm359, %v358, %v315
    %v361 = vrot.slane %v323, 7
    %v362 = vsel %vm359, %v361, %v317
    %v365 = vrot.slane %v315, 7
    %v366 = vrot.slane %v321, 6
    %v367 = vsel %vm359, %v366, %v365
    %v368 = vrot.slane %v317, 7
    %v369 = vrot.slane %v323, 6
    %v370 = vsel %vm359, %v369, %v368
    %v373 = vsel %vm352, %v360, %v367
    %v374 = vsel %vm353, %v362, %v370
    %vm375 = vcmask 523264
    %v377 = vsel %vm375, 0.0, 0
    %379 = vmatprep.subr.mxu0 0.0
    %380 = vmatpush1.msra.mxu0 0.0
    %381 = vmatprep.subr.mxu0 0.0
    %382 = vmatpush1.msra.mxu0 0.0
    %383 = vmatprep.subr.mxu0 0.0
    %384 = vmatpush1.msra.mxu0 0.0
    %385 = vmatprep.subr.mxu0 0.0
    %386 = vmatpush1.msra.mxu0 0.0
    %387 = vmatprep.subr.mxu0 0.0
    %388 = vmatpush1.msra.mxu0 0.0
    %389 = vmatprep.subr.mxu0 0.0
    %390 = vmatpush1.msra.mxu0 0.0
    %391 = vmatprep.subr.mxu0 0.0
    %392 = vmatpush1.msra.mxu0 0.0
    %393 = vmatprep.subr.mxu0 0.0
    %394 = vmatpush1.msra.mxu0 0.0
    %395 = vmatprep.subr.mxu0 %v234
    %396 = vmatpush1.msra.mxu0 %v233
    %397 = vmatprep.subr.mxu0 %v232
    %398 = vmatpush1.msra.mxu0 %v231
    %399 = vmatprep.subr.mxu0 %v230
    %400 = vmatpush1.msra.mxu0 %v229
    %401 = vmatprep.subr.mxu0 %v228
    %402 = vmatpush1.msra.mxu0 %v227
    %403 = vmatprep.subr.mxu0 %v226
    %404 = vmatpush1.msra.mxu0 %v225
    %405 = vmatprep.subr.mxu0 %v224
    %406 = vmatpush1.msra.mxu0 %v223
    %407 = vmatprep.subr.mxu0 %v222
    %408 = vmatpush1.msra.mxu0 %v221
    %409 = vmatprep.subr.mxu0 %v220
    %410 = vmatpush1.msra.mxu0 %v219
    %411 = vmatprep.subr.mxu0 0.0
    %412 = vmatpush2.msra.mxu0 0.0
    %413 = vmatprep.subr.mxu0 0.0
    %414 = vmatpush2.msra.mxu0 0.0
    %415 = vmatprep.subr.mxu0 0.0
    %416 = vmatpush2.msra.mxu0 0.0
    %417 = vmatprep.subr.mxu0 0.0
    %418 = vmatpush2.msra.mxu0 0.0
    %419 = vmatprep.subr.mxu0 0.0
    %420 = vmatpush2.msra.mxu0 0.0
    %421 = vmatprep.subr.mxu0 0.0
    %422 = vmatpush2.msra.mxu0 0.0
    %423 = vmatprep.subr.mxu0 0.0
    %424 = vmatpush2.msra.mxu0 0.0
    %425 = vmatprep.subr.mxu0 0.0
    %426 = vmatpush2.msra.mxu0 0.0
    %427 = vmatprep.subr.mxu0 0.0
    %428 = vmatpush2.msra.mxu0 0.0
    %429 = vmatprep.subr.mxu0 0.0
    %430 = vmatpush2.msra.mxu0 0.0
    %431 = vmatprep.subr.mxu0 0.0
    %432 = vmatpush2.msra.mxu0 0.0
    %433 = vmatprep.subr.mxu0 0.0
    %434 = vmatpush2.msra.mxu0 0.0
    %435 = vmatprep.subr.mxu0 0.0
    %436 = vmatpush2.msra.mxu0 0.0
    %437 = vmatprep.subr.mxu0 0.0
    %438 = vmatpush2.msra.mxu0 0.0
    %439 = vmatprep.subr.mxu0 0.0
    %440 = vmatpush2.msra.mxu0 0.0
    %441 = vmatprep.subr.mxu0 0.0
    %442 = vmatpush2.msra.mxu0 0.0
    %443 = vmatprep.mubr.f32.mxu0 0.0
    %444 = vmatmul.mubr.f32.gmra.mxu0 %v377
    %v445 = vpop.f32.mrf.mxu0
    %v446 = vadd.f32 0.0, %v445
    %v447 = vpop.f32.mrf.mxu0
    %v448 = vadd.f32 0.0, %v447
    %449 = vdwg.mxu0
    %v450 = vadd.f32 %v373, %v446
    %v451 = vadd.f32 %v374, %v448
    %v452 = vxor.u32 %v450, 2147483648
    %v453 = vmul.f32 %v452, 1.442695
    %v454 = vpow.pop %v453
    %v455 = vadd.f32 %v454, 1.0
    %v456 = vrcp.pop %v455
    %v457 = vmul.f32 1.0, %v456
    %v458 = vtanh.pop %v451
    %v459 = vxor.u32 %v451, 2147483648
    %v460 = vmul.f32 %v459, 1.442695
    %v461 = vpow.pop %v460
    %v462 = vadd.f32 %v461, 1.0
    %v463 = vrcp.pop %v462
    %v464 = vmul.f32 1.0, %v463
    %v465 = vmul.f32 %v457, 0.0
    %v466 = vmul.f32 %v457, %v458
    %468 = vrot.lane.b32.xlu0 %v466, 64
    %v469 = vpop.permute.xlu0 %468
    %v471 = vadd.f32 %v465, %v469
    %v472 = vtanh.pop %v471
    %v473 = vmul.f32 %v464, %v472
    %v474 = vrot.slane %v315, 1
    %v475 = vsel %vm359, %v321, %v474
    %v476 = vrot.slane %v317, 1
    %v477 = vsel %vm359, %v323, %v476
    %v480 = vrot.slane %v315, 6
    %v481 = vrot.slane %v321, 5
    %v482 = vsel %vm359, %v481, %v480
    %v483 = vrot.slane %v317, 6
    %v484 = vrot.slane %v323, 5
    %v485 = vsel %vm359, %v484, %v483
    %v488 = vsel %vm352, %v475, %v482
    %v489 = vsel %vm353, %v477, %v485
    %491 = vrot.lane.b32.xlu0 %v473, 64
    %v492 = vpop.permute.xlu0 %491
    %v493 = vsel %vm375, %v492, 0
    %495 = vmatprep.subr.mxu0 0.0
    %496 = vmatpush1.msra.mxu0 0.0
    %497 = vmatprep.subr.mxu0 0.0
    %498 = vmatpush1.msra.mxu0 0.0
    %499 = vmatprep.subr.mxu0 0.0
    %500 = vmatpush1.msra.mxu0 0.0
    %501 = vmatprep.subr.mxu0 0.0
    %502 = vmatpush1.msra.mxu0 0.0
    %503 = vmatprep.subr.mxu0 0.0
    %504 = vmatpush1.msra.mxu0 0.0
    %505 = vmatprep.subr.mxu0 0.0
    %506 = vmatpush1.msra.mxu0 0.0
    %507 = vmatprep.subr.mxu0 0.0
    %508 = vmatpush1.msra.mxu0 0.0
    %509 = vmatprep.subr.mxu0 0.0
    %510 = vmatpush1.msra.mxu0 0.0
    %511 = vmatprep.subr.mxu0 %v234
    %512 = vmatpush1.msra.mxu0 %v233
    %513 = vmatprep.subr.mxu0 %v232
    %514 = vmatpush1.msra.mxu0 %v231
    %515 = vmatprep.subr.mxu0 %v230
    %516 = vmatpush1.msra.mxu0 %v229
    %517 = vmatprep.subr.mxu0 %v228
    %518 = vmatpush1.msra.mxu0 %v227
    %519 = vmatprep.subr.mxu0 %v226
    %520 = vmatpush1.msra.mxu0 %v225
    %521 = vmatprep.subr.mxu0 %v224
    %522 = vmatpush1.msra.mxu0 %v223
    %523 = vmatprep.subr.mxu0 %v222
    %524 = vmatpush1.msra.mxu0 %v221
    %525 = vmatprep.subr.mxu0 %v220
    %526 = vmatpush1.msra.mxu0 %v219
    %527 = vmatprep.subr.mxu0 0.0
    %528 = vmatpush2.msra.mxu0 0.0
    %529 = vmatprep.subr.mxu0 0.0
    %530 = vmatpush2.msra.mxu0 0.0
    %531 = vmatprep.subr.mxu0 0.0
    %532 = vmatpush2.msra.mxu0 0.0
    %533 = vmatprep.subr.mxu0 0.0
    %534 = vmatpush2.msra.mxu0 0.0
    %535 = vmatprep.subr.mxu0 0.0
    %536 = vmatpush2.msra.mxu0 0.0
    %537 = vmatprep.subr.mxu0 0.0
    %538 = vmatpush2.msra.mxu0 0.0
    %539 = vmatprep.subr.mxu0 0.0
    %540 = vmatpush2.msra.mxu0 0.0
    %541 = vmatprep.subr.mxu0 0.0
    %542 = vmatpush2.msra.mxu0 0.0
    %543 = vmatprep.subr.mxu0 0.0
    %544 = vmatpush2.msra.mxu0 0.0
    %545 = vmatprep.subr.mxu0 0.0
    %546 = vmatpush2.msra.mxu0 0.0
    %547 = vmatprep.subr.mxu0 0.0
    %548 = vmatpush2.msra.mxu0 0.0
    %549 = vmatprep.subr.mxu0 0.0
    %550 = vmatpush2.msra.mxu0 0.0
    %551 = vmatprep.subr.mxu0 0.0
    %552 = vmatpush2.msra.mxu0 0.0
    %553 = vmatprep.subr.mxu0 0.0
    %554 = vmatpush2.msra.mxu0 0.0
    %555 = vmatprep.subr.mxu0 0.0
    %556 = vmatpush2.msra.mxu0 0.0
    %557 = vmatprep.subr.mxu0 0.0
    %558 = vmatpush2.msra.mxu0 0.0
    %559 = vmatprep.mubr.f32.mxu0 0.0
    %560 = vmatmul.mubr.f32.gmra.mxu0 %v493
    %v561 = vpop.f32.mrf.mxu0
    %v562 = vadd.f32 0.0, %v561
    %v563 = vpop.f32.mrf.mxu0
    %v564 = vadd.f32 0.0, %v563
    %565 = vdwg.mxu0
    %v566 = vadd.f32 %v488, %v562
    %v567 = vadd.f32 %v489, %v564
    %v568 = vxor.u32 %v566, 2147483648
    %v569 = vmul.f32 %v568, 1.442695
    %v570 = vpow.pop %v569
    %v571 = vadd.f32 %v570, 1.0
    %v572 = vrcp.pop %v571
    %v573 = vmul.f32 1.0, %v572
    %v574 = vtanh.pop %v567
    %v575 = vxor.u32 %v567, 2147483648
    %v576 = vmul.f32 %v575, 1.442695
    %v577 = vpow.pop %v576
    %v578 = vadd.f32 %v577, 1.0
    %v579 = vrcp.pop %v578
    %v580 = vmul.f32 1.0, %v579
    %v581 = vmul.f32 %v573, %v471
    %v582 = vmul.f32 %v573, %v574
    %584 = vrot.lane.b32.xlu0 %v582, 64
    %v585 = vpop.permute.xlu0 %584
    %v587 = vadd.f32 %v581, %v585
    %v588 = vtanh.pop %v587
    %v589 = vmul.f32 %v580, %v588
    %v590 = vrot.slane %v315, 2
    %v591 = vrot.slane %v321, 1
    %v592 = vsel %vm359, %v591, %v590
    %v593 = vrot.slane %v317, 2
    %v594 = vrot.slane %v323, 1
    %v595 = vsel %vm359, %v594, %v593
    %v598 = vrot.slane %v315, 5
    %v599 = vrot.slane %v321, 4
    %v600 = vsel %vm359, %v599, %v598
    %v601 = vrot.slane %v317, 5
    %v602 = vrot.slane %v323, 4
    %v603 = vsel %vm359, %v602, %v601
    %v606 = vsel %vm352, %v592, %v600
    %v607 = vsel %vm353, %v595, %v603
    %609 = vrot.lane.b32.xlu0 %v589, 64
    %v610 = vpop.permute.xlu0 %609
    %v611 = vsel %vm375, %v610, 0
    %613 = vmatprep.subr.mxu0 0.0
    %614 = vmatpush1.msra.mxu0 0.0
    %615 = vmatprep.subr.mxu0 0.0
    %616 = vmatpush1.msra.mxu0 0.0
    %617 = vmatprep.subr.mxu0 0.0
    %618 = vmatpush1.msra.mxu0 0.0
    %619 = vmatprep.subr.mxu0 0.0
    %620 = vmatpush1.msra.mxu0 0.0
    %621 = vmatprep.subr.mxu0 0.0
    %622 = vmatpush1.msra.mxu0 0.0
    %623 = vmatprep.subr.mxu0 0.0
    %624 = vmatpush1.msra.mxu0 0.0
    %625 = vmatprep.subr.mxu0 0.0
    %626 = vmatpush1.msra.mxu0 0.0
    %627 = vmatprep.subr.mxu0 0.0
    %628 = vmatpush1.msra.mxu0 0.0
    %629 = vmatprep.subr.mxu0 %v234
    %630 = vmatpush1.msra.mxu0 %v233
    %631 = vmatprep.subr.mxu0 %v232
    %632 = vmatpush1.msra.mxu0 %v231
    %633 = vmatprep.subr.mxu0 %v230
    %634 = vmatpush1.msra.mxu0 %v229
    %635 = vmatprep.subr.mxu0 %v228
    %636 = vmatpush1.msra.mxu0 %v227
    %637 = vmatprep.subr.mxu0 %v226
    %638 = vmatpush1.msra.mxu0 %v225
    %639 = vmatprep.subr.mxu0 %v224
    %640 = vmatpush1.msra.mxu0 %v223
    %641 = vmatprep.subr.mxu0 %v222
    %642 = vmatpush1.msra.mxu0 %v221
    %643 = vmatprep.subr.mxu0 %v220
    %644 = vmatpush1.msra.mxu0 %v219
    %645 = vmatprep.subr.mxu0 0.0
    %646 = vmatpush2.msra.mxu0 0.0
    %647 = vmatprep.subr.mxu0 0.0
    %648 = vmatpush2.msra.mxu0 0.0
    %649 = vmatprep.subr.mxu0 0.0
    %650 = vmatpush2.msra.mxu0 0.0
    %651 = vmatprep.subr.mxu0 0.0
    %652 = vmatpush2.msra.mxu0 0.0
    %653 = vmatprep.subr.mxu0 0.0
    %654 = vmatpush2.msra.mxu0 0.0
    %655 = vmatprep.subr.mxu0 0.0
    %656 = vmatpush2.msra.mxu0 0.0
    %657 = vmatprep.subr.mxu0 0.0
    %658 = vmatpush2.msra.mxu0 0.0
    %659 = vmatprep.subr.mxu0 0.0
    %660 = vmatpush2.msra.mxu0 0.0
    %661 = vmatprep.subr.mxu0 0.0
    %662 = vmatpush2.msra.mxu0 0.0
    %663 = vmatprep.subr.mxu0 0.0
    %664 = vmatpush2.msra.mxu0 0.0
    %665 = vmatprep.subr.mxu0 0.0
    %666 = vmatpush2.msra.mxu0 0.0
    %667 = vmatprep.subr.mxu0 0.0
    %668 = vmatpush2.msra.mxu0 0.0
    %669 = vmatprep.subr.mxu0 0.0
    %670 = vmatpush2.msra.mxu0 0.0
    %671 = vmatprep.subr.mxu0 0.0
    %672 = vmatpush2.msra.mxu0 0.0
    %673 = vmatprep.subr.mxu0 0.0
    %674 = vmatpush2.msra.mxu0 0.0
    %675 = vmatprep.subr.mxu0 0.0
    %676 = vmatpush2.msra.mxu0 0.0
    %677 = vmatprep.mubr.f32.mxu0 0.0
    %678 = vmatmul.mubr.f32.gmra.mxu0 %v611
    %v679 = vpop.f32.mrf.mxu0
    %v680 = vadd.f32 0.0, %v679
    %v681 = vpop.f32.mrf.mxu0
    %v682 = vadd.f32 0.0, %v681
    %683 = vdwg.mxu0
    %v684 = vadd.f32 %v606, %v680
    %v685 = vadd.f32 %v607, %v682
    %v686 = vxor.u32 %v684, 2147483648
    %v687 = vmul.f32 %v686, 1.442695
    %v688 = vpow.pop %v687
    %v689 = vadd.f32 %v688, 1.0
    %v690 = vrcp.pop %v689
    %v691 = vmul.f32 1.0, %v690
    %v692 = vtanh.pop %v685
    %v693 = vxor.u32 %v685, 2147483648
    %v694 = vmul.f32 %v693, 1.442695
    %v695 = vpow.pop %v694
    %v696 = vadd.f32 %v695, 1.0
    %v697 = vrcp.pop %v696
    %v698 = vmul.f32 1.0, %v697
    %v699 = vmul.f32 %v691, %v587
    %v700 = vmul.f32 %v691, %v692
    %702 = vrot.lane.b32.xlu0 %v700, 64
    %v703 = vpop.permute.xlu0 %702
    %v705 = vadd.f32 %v699, %v703
    %v706 = vtanh.pop %v705
    %v707 = vmul.f32 %v698, %v706
    %v708 = vrot.slane %v315, 3
    %v709 = vrot.slane %v321, 2
    %v710 = vsel %vm359, %v709, %v708
    %v711 = vrot.slane %v317, 3
    %v712 = vrot.slane %v323, 2
    %v713 = vsel %vm359, %v712, %v711
    %v716 = vrot.slane %v315, 4
    %v717 = vrot.slane %v321, 3
    %v718 = vsel %vm359, %v717, %v716
    %v719 = vrot.slane %v317, 4
    %v720 = vrot.slane %v323, 3
    %v721 = vsel %vm359, %v720, %v719
    %v724 = vsel %vm352, %v710, %v718
    %v725 = vsel %vm353, %v713, %v721
    %727 = vrot.lane.b32.xlu0 %v707, 64
    %v728 = vpop.permute.xlu0 %727
    %v729 = vsel %vm375, %v728, 0
    %731 = vmatprep.subr.mxu0 0.0
    %732 = vmatpush1.msra.mxu0 0.0
    %733 = vmatprep.subr.mxu0 0.0
    %734 = vmatpush1.msra.mxu0 0.0
    %735 = vmatprep.subr.mxu0 0.0
    %736 = vmatpush1.msra.mxu0 0.0
    %737 = vmatprep.subr.mxu0 0.0
    %738 = vmatpush1.msra.mxu0 0.0
    %739 = vmatprep.subr.mxu0 0.0
    %740 = vmatpush1.msra.mxu0 0.0
    %741 = vmatprep.subr.mxu0 0.0
    %742 = vmatpush1.msra.mxu0 0.0
    %743 = vmatprep.subr.mxu0 0.0
    %744 = vmatpush1.msra.mxu0 0.0
    %745 = vmatprep.subr.mxu0 0.0
    %746 = vmatpush1.msra.mxu0 0.0
    %747 = vmatprep.subr.mxu0 %v234
    %748 = vmatpush1.msra.mxu0 %v233
    %749 = vmatprep.subr.mxu0 %v232
    %750 = vmatpush1.msra.mxu0 %v231
    %751 = vmatprep.subr.mxu0 %v230
    %752 = vmatpush1.msra.mxu0 %v229
    %753 = vmatprep.subr.mxu0 %v228
    %754 = vmatpush1.msra.mxu0 %v227
    %755 = vmatprep.subr.mxu0 %v226
    %756 = vmatpush1.msra.mxu0 %v225
    %757 = vmatprep.subr.mxu0 %v224
    %758 = vmatpush1.msra.mxu0 %v223
    %759 = vmatprep.subr.mxu0 %v222
    %760 = vmatpush1.msra.mxu0 %v221
    %761 = vmatprep.subr.mxu0 %v220
    %762 = vmatpush1.msra.mxu0 %v219
    %763 = vmatprep.subr.mxu0 0.0
    %764 = vmatpush2.msra.mxu0 0.0
    %765 = vmatprep.subr.mxu0 0.0
    %766 = vmatpush2.msra.mxu0 0.0
    %767 = vmatprep.subr.mxu0 0.0
    %768 = vmatpush2.msra.mxu0 0.0
    %769 = vmatprep.subr.mxu0 0.0
    %770 = vmatpush2.msra.mxu0 0.0
    %771 = vmatprep.subr.mxu0 0.0
    %772 = vmatpush2.msra.mxu0 0.0
    %773 = vmatprep.subr.mxu0 0.0
    %774 = vmatpush2.msra.mxu0 0.0
    %775 = vmatprep.subr.mxu0 0.0
    %776 = vmatpush2.msra.mxu0 0.0
    %777 = vmatprep.subr.mxu0 0.0
    %778 = vmatpush2.msra.mxu0 0.0
    %779 = vmatprep.subr.mxu0 0.0
    %780 = vmatpush2.msra.mxu0 0.0
    %781 = vmatprep.subr.mxu0 0.0
    %782 = vmatpush2.msra.mxu0 0.0
    %783 = vmatprep.subr.mxu0 0.0
    %784 = vmatpush2.msra.mxu0 0.0
    %785 = vmatprep.subr.mxu0 0.0
    %786 = vmatpush2.msra.mxu0 0.0
    %787 = vmatprep.subr.mxu0 0.0
    %788 = vmatpush2.msra.mxu0 0.0
    %789 = vmatprep.subr.mxu0 0.0
    %790 = vmatpush2.msra.mxu0 0.0
    %791 = vmatprep.subr.mxu0 0.0
    %792 = vmatpush2.msra.mxu0 0.0
    %793 = vmatprep.subr.mxu0 0.0
    %794 = vmatpush2.msra.mxu0 0.0
    %795 = vmatprep.mubr.f32.mxu0 0.0
    %796 = vmatmul.mubr.f32.gmra.mxu0 %v729
    %v797 = vpop.f32.mrf.mxu0
    %v798 = vadd.f32 0.0, %v797
    %v799 = vpop.f32.mrf.mxu0
    %v800 = vadd.f32 0.0, %v799
    %801 = vdwg.mxu0
    %v802 = vadd.f32 %v724, %v798
    %v803 = vadd.f32 %v725, %v800
    %v804 = vxor.u32 %v802, 2147483648
    %v805 = vmul.f32 %v804, 1.442695
    %v806 = vpow.pop %v805
    %v807 = vadd.f32 %v806, 1.0
    %v808 = vrcp.pop %v807
    %v809 = vmul.f32 1.0, %v808
    %v810 = vtanh.pop %v803
    %v811 = vxor.u32 %v803, 2147483648
    %v812 = vmul.f32 %v811, 1.442695
    %v813 = vpow.pop %v812
    %v814 = vadd.f32 %v813, 1.0
    %v815 = vrcp.pop %v814
    %v816 = vmul.f32 1.0, %v815
    %v817 = vmul.f32 %v809, %v705
    %v818 = vmul.f32 %v809, %v810
    %820 = vrot.lane.b32.xlu0 %v818, 64
    %v821 = vpop.permute.xlu0 %820
    %v823 = vadd.f32 %v817, %v821
    %v824 = vtanh.pop %v823
    %v825 = vmul.f32 %v816, %v824
    %v826 = vsel %vm352, %v718, %v710
    %v827 = vsel %vm353, %v721, %v713
    %829 = vrot.lane.b32.xlu0 %v825, 64
    %v830 = vpop.permute.xlu0 %829
    %v831 = vsel %vm375, %v830, 0
    %833 = vmatprep.subr.mxu0 0.0
    %834 = vmatpush1.msra.mxu0 0.0
    %835 = vmatprep.subr.mxu0 0.0
    %836 = vmatpush1.msra.mxu0 0.0
    %837 = vmatprep.subr.mxu0 0.0
    %838 = vmatpush1.msra.mxu0 0.0
    %839 = vmatprep.subr.mxu0 0.0
    %840 = vmatpush1.msra.mxu0 0.0
    %841 = vmatprep.subr.mxu0 0.0
    %842 = vmatpush1.msra.mxu0 0.0
    %843 = vmatprep.subr.mxu0 0.0
    %844 = vmatpush1.msra.mxu0 0.0
    %845 = vmatprep.subr.mxu0 0.0
    %846 = vmatpush1.msra.mxu0 0.0
    %847 = vmatprep.subr.mxu0 0.0
    %848 = vmatpush1.msra.mxu0 0.0
    %849 = vmatprep.subr.mxu0 %v234
    %850 = vmatpush1.msra.mxu0 %v233
    %851 = vmatprep.subr.mxu0 %v232
    %852 = vmatpush1.msra.mxu0 %v231
    %853 = vmatprep.subr.mxu0 %v230
    %854 = vmatpush1.msra.mxu0 %v229
    %855 = vmatprep.subr.mxu0 %v228
    %856 = vmatpush1.msra.mxu0 %v227
    %857 = vmatprep.subr.mxu0 %v226
    %858 = vmatpush1.msra.mxu0 %v225
    %859 = vmatprep.subr.mxu0 %v224
    %860 = vmatpush1.msra.mxu0 %v223
    %861 = vmatprep.subr.mxu0 %v222
    %862 = vmatpush1.msra.mxu0 %v221
    %863 = vmatprep.subr.mxu0 %v220
    %864 = vmatpush1.msra.mxu0 %v219
    %865 = vmatprep.subr.mxu0 0.0
    %866 = vmatpush2.msra.mxu0 0.0
    %867 = vmatprep.subr.mxu0 0.0
    %868 = vmatpush2.msra.mxu0 0.0
    %869 = vmatprep.subr.mxu0 0.0
    %870 = vmatpush2.msra.mxu0 0.0
    %871 = vmatprep.subr.mxu0 0.0
    %872 = vmatpush2.msra.mxu0 0.0
    %873 = vmatprep.subr.mxu0 0.0
    %874 = vmatpush2.msra.mxu0 0.0
    %875 = vmatprep.subr.mxu0 0.0
    %876 = vmatpush2.msra.mxu0 0.0
    %877 = vmatprep.subr.mxu0 0.0
    %878 = vmatpush2.msra.mxu0 0.0
    %879 = vmatprep.subr.mxu0 0.0
    %880 = vmatpush2.msra.mxu0 0.0
    %881 = vmatprep.subr.mxu0 0.0
    %882 = vmatpush2.msra.mxu0 0.0
    %883 = vmatprep.subr.mxu0 0.0
    %884 = vmatpush2.msra.mxu0 0.0
    %885 = vmatprep.subr.mxu0 0.0
    %886 = vmatpush2.msra.mxu0 0.0
    %887 = vmatprep.subr.mxu0 0.0
    %888 = vmatpush2.msra.mxu0 0.0
    %889 = vmatprep.subr.mxu0 0.0
    %890 = vmatpush2.msra.mxu0 0.0
    %891 = vmatprep.subr.mxu0 0.0
    %892 = vmatpush2.msra.mxu0 0.0
    %893 = vmatprep.subr.mxu0 0.0
    %894 = vmatpush2.msra.mxu0 0.0
    %895 = vmatprep.subr.mxu0 0.0
    %896 = vmatpush2.msra.mxu0 0.0
    %897 = vmatprep.mubr.f32.mxu0 0.0
    %898 = vmatmul.mubr.f32.gmra.mxu0 %v831
    %v899 = vpop.f32.mrf.mxu0
    %v900 = vadd.f32 0.0, %v899
    %v901 = vpop.f32.mrf.mxu0
    %v902 = vadd.f32 0.0, %v901
    %903 = vdwg.mxu0
    %v904 = vadd.f32 %v826, %v900
    %v905 = vadd.f32 %v827, %v902
    %v906 = vxor.u32 %v904, 2147483648
    %v907 = vmul.f32 %v906, 1.442695
    %v908 = vpow.pop %v907
    %v909 = vadd.f32 %v908, 1.0
    %v910 = vrcp.pop %v909
    %v911 = vmul.f32 1.0, %v910
    %v912 = vtanh.pop %v905
    %v913 = vxor.u32 %v905, 2147483648
    %v914 = vmul.f32 %v913, 1.442695
    %v915 = vpow.pop %v914
    %v916 = vadd.f32 %v915, 1.0
    %v917 = vrcp.pop %v916
    %v918 = vmul.f32 1.0, %v917
    %v919 = vmul.f32 %v911, %v823
    %v920 = vmul.f32 %v911, %v912
    %922 = vrot.lane.b32.xlu0 %v920, 64
    %v923 = vpop.permute.xlu0 %922
    %v925 = vadd.f32 %v919, %v923
    %v926 = vtanh.pop %v925
    %v927 = vmul.f32 %v918, %v926
    %v928 = vsel %vm352, %v600, %v592
    %v929 = vsel %vm353, %v603, %v595
    %931 = vrot.lane.b32.xlu0 %v927, 64
    %v932 = vpop.permute.xlu0 %931
    %v933 = vsel %vm375, %v932, 0
    %935 = vmatprep.subr.mxu0 0.0
    %936 = vmatpush1.msra.mxu0 0.0
    %937 = vmatprep.subr.mxu0 0.0
    %938 = vmatpush1.msra.mxu0 0.0
    %939 = vmatprep.subr.mxu0 0.0
    %940 = vmatpush1.msra.mxu0 0.0
    %941 = vmatprep.subr.mxu0 0.0
    %942 = vmatpush1.msra.mxu0 0.0
    %943 = vmatprep.subr.mxu0 0.0
    %944 = vmatpush1.msra.mxu0 0.0
    %945 = vmatprep.subr.mxu0 0.0
    %946 = vmatpush1.msra.mxu0 0.0
    %947 = vmatprep.subr.mxu0 0.0
    %948 = vmatpush1.msra.mxu0 0.0
    %949 = vmatprep.subr.mxu0 0.0
    %950 = vmatpush1.msra.mxu0 0.0
    %951 = vmatprep.subr.mxu0 %v234
    %952 = vmatpush1.msra.mxu0 %v233
    %953 = vmatprep.subr.mxu0 %v232
    %954 = vmatpush1.msra.mxu0 %v231
    %955 = vmatprep.subr.mxu0 %v230
    %956 = vmatpush1.msra.mxu0 %v229
    %957 = vmatprep.subr.mxu0 %v228
    %958 = vmatpush1.msra.mxu0 %v227
    %959 = vmatprep.subr.mxu0 %v226
    %960 = vmatpush1.msra.mxu0 %v225
    %961 = vmatprep.subr.mxu0 %v224
    %962 = vmatpush1.msra.mxu0 %v223
    %963 = vmatprep.subr.mxu0 %v222
    %964 = vmatpush1.msra.mxu0 %v221
    %965 = vmatprep.subr.mxu0 %v220
    %966 = vmatpush1.msra.mxu0 %v219
    %967 = vmatprep.subr.mxu0 0.0
    %968 = vmatpush2.msra.mxu0 0.0
    %969 = vmatprep.subr.mxu0 0.0
    %970 = vmatpush2.msra.mxu0 0.0
    %971 = vmatprep.subr.mxu0 0.0
    %972 = vmatpush2.msra.mxu0 0.0
    %973 = vmatprep.subr.mxu0 0.0
    %974 = vmatpush2.msra.mxu0 0.0
    %975 = vmatprep.subr.mxu0 0.0
    %976 = vmatpush2.msra.mxu0 0.0
    %977 = vmatprep.subr.mxu0 0.0
    %978 = vmatpush2.msra.mxu0 0.0
    %979 = vmatprep.subr.mxu0 0.0
    %980 = vmatpush2.msra.mxu0 0.0
    %981 = vmatprep.subr.mxu0 0.0
    %982 = vmatpush2.msra.mxu0 0.0
    %983 = vmatprep.subr.mxu0 0.0
    %984 = vmatpush2.msra.mxu0 0.0
    %985 = vmatprep.subr.mxu0 0.0
    %986 = vmatpush2.msra.mxu0 0.0
    %987 = vmatprep.subr.mxu0 0.0
    %988 = vmatpush2.msra.mxu0 0.0
    %989 = vmatprep.subr.mxu0 0.0
    %990 = vmatpush2.msra.mxu0 0.0
    %991 = vmatprep.subr.mxu0 0.0
    %992 = vmatpush2.msra.mxu0 0.0
    %993 = vmatprep.subr.mxu0 0.0
    %994 = vmatpush2.msra.mxu0 0.0
    %995 = vmatprep.subr.mxu0 0.0
    %996 = vmatpush2.msra.mxu0 0.0
    %997 = vmatprep.subr.mxu0 0.0
    %998 = vmatpush2.msra.mxu0 0.0
    %999 = vmatprep.mubr.f32.mxu0 0.0
    %1000 = vmatmul.mubr.f32.gmra.mxu0 %v933
    %v1001 = vpop.f32.mrf.mxu0
    %v1002 = vadd.f32 0.0, %v1001
    %v1003 = vpop.f32.mrf.mxu0
    %v1004 = vadd.f32 0.0, %v1003
    %1005 = vdwg.mxu0
    %v1006 = vadd.f32 %v928, %v1002
    %v1007 = vadd.f32 %v929, %v1004
    %v1008 = vxor.u32 %v1006, 2147483648
    %v1009 = vmul.f32 %v1008, 1.442695
    %v1010 = vpow.pop %v1009
    %v1011 = vadd.f32 %v1010, 1.0
    %v1012 = vrcp.pop %v1011
    %v1013 = vmul.f32 1.0, %v1012
    %v1014 = vtanh.pop %v1007
    %v1015 = vxor.u32 %v1007, 2147483648
    %v1016 = vmul.f32 %v1015, 1.442695
    %v1017 = vpow.pop %v1016
    %v1018 = vadd.f32 %v1017, 1.0
    %v1019 = vrcp.pop %v1018
    %v1020 = vmul.f32 1.0, %v1019
    %v1021 = vmul.f32 %v1013, %v925
    %v1022 = vmul.f32 %v1013, %v1014
    %1024 = vrot.lane.b32.xlu0 %v1022, 64
    %v1025 = vpop.permute.xlu0 %1024
    %v1027 = vadd.f32 %v1021, %v1025
    %v1028 = vtanh.pop %v1027
    %v1029 = vmul.f32 %v1020, %v1028
    %v1030 = vsel %vm352, %v482, %v475
    %v1031 = vsel %vm353, %v485, %v477
    %1033 = vrot.lane.b32.xlu0 %v1029, 64
    %v1034 = vpop.permute.xlu0 %1033
    %v1035 = vsel %vm375, %v1034, 0
    %1037 = vmatprep.subr.mxu0 0.0
    %1038 = vmatpush1.msra.mxu0 0.0
    %1039 = vmatprep.subr.mxu0 0.0
    %1040 = vmatpush1.msra.mxu0 0.0
    %1041 = vmatprep.subr.mxu0 0.0
    %1042 = vmatpush1.msra.mxu0 0.0
    %1043 = vmatprep.subr.mxu0 0.0
    %1044 = vmatpush1.msra.mxu0 0.0
    %1045 = vmatprep.subr.mxu0 0.0
    %1046 = vmatpush1.msra.mxu0 0.0
    %1047 = vmatprep.subr.mxu0 0.0
    %1048 = vmatpush1.msra.mxu0 0.0
    %1049 = vmatprep.subr.mxu0 0.0
    %1050 = vmatpush1.msra.mxu0 0.0
    %1051 = vmatprep.subr.mxu0 0.0
    %1052 = vmatpush1.msra.mxu0 0.0
    %1053 = vmatprep.subr.mxu0 %v234
    %1054 = vmatpush1.msra.mxu0 %v233
    %1055 = vmatprep.subr.mxu0 %v232
    %1056 = vmatpush1.msra.mxu0 %v231
    %1057 = vmatprep.subr.mxu0 %v230
    %1058 = vmatpush1.msra.mxu0 %v229
    %1059 = vmatprep.subr.mxu0 %v228
    %1060 = vmatpush1.msra.mxu0 %v227
    %1061 = vmatprep.subr.mxu0 %v226
    %1062 = vmatpush1.msra.mxu0 %v225
    %1063 = vmatprep.subr.mxu0 %v224
    %1064 = vmatpush1.msra.mxu0 %v223
    %1065 = vmatprep.subr.mxu0 %v222
    %1066 = vmatpush1.msra.mxu0 %v221
    %1067 = vmatprep.subr.mxu0 %v220
    %1068 = vmatpush1.msra.mxu0 %v219
    %1069 = vmatprep.subr.mxu0 0.0
    %1070 = vmatpush2.msra.mxu0 0.0
    %1071 = vmatprep.subr.mxu0 0.0
    %1072 = vmatpush2.msra.mxu0 0.0
    %1073 = vmatprep.subr.mxu0 0.0
    %1074 = vmatpush2.msra.mxu0 0.0
    %1075 = vmatprep.subr.mxu0 0.0
    %1076 = vmatpush2.msra.mxu0 0.0
    %1077 = vmatprep.subr.mxu0 0.0
    %1078 = vmatpush2.msra.mxu0 0.0
    %1079 = vmatprep.subr.mxu0 0.0
    %1080 = vmatpush2.msra.mxu0 0.0
    %1081 = vmatprep.subr.mxu0 0.0
    %1082 = vmatpush2.msra.mxu0 0.0
    %1083 = vmatprep.subr.mxu0 0.0
    %1084 = vmatpush2.msra.mxu0 0.0
    %1085 = vmatprep.subr.mxu0 0.0
    %1086 = vmatpush2.msra.mxu0 0.0
    %1087 = vmatprep.subr.mxu0 0.0
    %1088 = vmatpush2.msra.mxu0 0.0
    %1089 = vmatprep.subr.mxu0 0.0
    %1090 = vmatpush2.msra.mxu0 0.0
    %1091 = vmatprep.subr.mxu0 0.0
    %1092 = vmatpush2.msra.mxu0 0.0
    %1093 = vmatprep.subr.mxu0 0.0
    %1094 = vmatpush2.msra.mxu0 0.0
    %1095 = vmatprep.subr.mxu0 0.0
    %1096 = vmatpush2.msra.mxu0 0.0
    %1097 = vmatprep.subr.mxu0 0.0
    %1098 = vmatpush2.msra.mxu0 0.0
    %1099 = vmatprep.subr.mxu0 0.0
    %1100 = vmatpush2.msra.mxu0 0.0
    %1101 = vmatprep.mubr.f32.mxu0 0.0
    %1102 = vmatmul.mubr.f32.gmra.mxu0 %v1035
    %v1103 = vpop.f32.mrf.mxu0
    %v1104 = vadd.f32 0.0, %v1103
    %v1105 = vpop.f32.mrf.mxu0
    %v1106 = vadd.f32 0.0, %v1105
    %1107 = vdwg.mxu0
    %v1108 = vadd.f32 %v1030, %v1104
    %v1109 = vadd.f32 %v1031, %v1106
    %v1110 = vxor.u32 %v1108, 2147483648
    %v1111 = vmul.f32 %v1110, 1.442695
    %v1112 = vpow.pop %v1111
    %v1113 = vadd.f32 %v1112, 1.0
    %v1114 = vrcp.pop %v1113
    %v1115 = vmul.f32 1.0, %v1114
    %v1116 = vtanh.pop %v1109
    %v1117 = vxor.u32 %v1109, 2147483648
    %v1118 = vmul.f32 %v1117, 1.442695
    %v1119 = vpow.pop %v1118
    %v1120 = vadd.f32 %v1119, 1.0
    %v1121 = vrcp.pop %v1120
    %v1122 = vmul.f32 1.0, %v1121
    %v1123 = vmul.f32 %v1115, %v1027
    %v1124 = vmul.f32 %v1115, %v1116
    %1126 = vrot.lane.b32.xlu0 %v1124, 64
    %v1127 = vpop.permute.xlu0 %1126
    %v1129 = vadd.f32 %v1123, %v1127
    %v1130 = vtanh.pop %v1129
    %v1131 = vmul.f32 %v1122, %v1130
    %v1132 = vsel %vm352, %v367, %v360
    %v1133 = vsel %vm353, %v370, %v362
    %1135 = vrot.lane.b32.xlu0 %v1131, 64
    %v1136 = vpop.permute.xlu0 %1135
    %v1137 = vsel %vm375, %v1136, 0
    %1139 = vmatprep.subr.mxu0 0.0
    %1140 = vmatpush1.msra.mxu0 0.0
    %1141 = vmatprep.subr.mxu0 0.0
    %1142 = vmatpush1.msra.mxu0 0.0
    %1143 = vmatprep.subr.mxu0 0.0
    %1144 = vmatpush1.msra.mxu0 0.0
    %1145 = vmatprep.subr.mxu0 0.0
    %1146 = vmatpush1.msra.mxu0 0.0
    %1147 = vmatprep.subr.mxu0 0.0
    %1148 = vmatpush1.msra.mxu0 0.0
    %1149 = vmatprep.subr.mxu0 0.0
    %1150 = vmatpush1.msra.mxu0 0.0
    %1151 = vmatprep.subr.mxu0 0.0
    %1152 = vmatpush1.msra.mxu0 0.0
    %1153 = vmatprep.subr.mxu0 0.0
    %1154 = vmatpush1.msra.mxu0 0.0
    %1155 = vmatprep.subr.mxu0 %v234
    %1156 = vmatpush1.msra.mxu0 %v233
    %1157 = vmatprep.subr.mxu0 %v232
    %1158 = vmatpush1.msra.mxu0 %v231
    %1159 = vmatprep.subr.mxu0 %v230
    %1160 = vmatpush1.msra.mxu0 %v229
    %1161 = vmatprep.subr.mxu0 %v228
    %1162 = vmatpush1.msra.mxu0 %v227
    %1163 = vmatprep.subr.mxu0 %v226
    %1164 = vmatpush1.msra.mxu0 %v225
    %1165 = vmatprep.subr.mxu0 %v224
    %1166 = vmatpush1.msra.mxu0 %v223
    %1167 = vmatprep.subr.mxu0 %v222
    %1168 = vmatpush1.msra.mxu0 %v221
    %1169 = vmatprep.subr.mxu0 %v220
    %1170 = vmatpush1.msra.mxu0 %v219
    %1171 = vmatprep.subr.mxu0 0.0
    %1172 = vmatpush2.msra.mxu0 0.0
    %1173 = vmatprep.subr.mxu0 0.0
    %1174 = vmatpush2.msra.mxu0 0.0
    %1175 = vmatprep.subr.mxu0 0.0
    %1176 = vmatpush2.msra.mxu0 0.0
    %1177 = vmatprep.subr.mxu0 0.0
    %1178 = vmatpush2.msra.mxu0 0.0
    %1179 = vmatprep.subr.mxu0 0.0
    %1180 = vmatpush2.msra.mxu0 0.0
    %1181 = vmatprep.subr.mxu0 0.0
    %1182 = vmatpush2.msra.mxu0 0.0
    %1183 = vmatprep.subr.mxu0 0.0
    %1184 = vmatpush2.msra.mxu0 0.0
    %1185 = vmatprep.subr.mxu0 0.0
    %1186 = vmatpush2.msra.mxu0 0.0
    %1187 = vmatprep.subr.mxu0 0.0
    %1188 = vmatpush2.msra.mxu0 0.0
    %1189 = vmatprep.subr.mxu0 0.0
    %1190 = vmatpush2.msra.mxu0 0.0
    %1191 = vmatprep.subr.mxu0 0.0
    %1192 = vmatpush2.msra.mxu0 0.0
    %1193 = vmatprep.subr.mxu0 0.0
    %1194 = vmatpush2.msra.mxu0 0.0
    %1195 = vmatprep.subr.mxu0 0.0
    %1196 = vmatpush2.msra.mxu0 0.0
    %1197 = vmatprep.subr.mxu0 0.0
    %1198 = vmatpush2.msra.mxu0 0.0
    %1199 = vmatprep.subr.mxu0 0.0
    %1200 = vmatpush2.msra.mxu0 0.0
    %1201 = vmatprep.subr.mxu0 0.0
    %1202 = vmatpush2.msra.mxu0 0.0
    %1203 = vmatprep.mubr.f32.mxu0 0.0
    %1204 = vmatmul.mubr.f32.gmra.mxu0 %v1137
    %v1205 = vpop.f32.mrf.mxu0
    %v1206 = vadd.f32 0.0, %v1205
    %v1207 = vpop.f32.mrf.mxu0
    %v1208 = vadd.f32 0.0, %v1207
    %1209 = vdwg.mxu0
    %v1210 = vadd.f32 %v1132, %v1206
    %v1211 = vadd.f32 %v1133, %v1208
    %v1212 = vxor.u32 %v1210, 2147483648
    %v1213 = vmul.f32 %v1212, 1.442695
    %v1214 = vpow.pop %v1213
    %v1215 = vadd.f32 %v1214, 1.0
    %v1216 = vrcp.pop %v1215
    %v1217 = vmul.f32 1.0, %v1216
    %v1218 = vtanh.pop %v1211
    %v1219 = vxor.u32 %v1211, 2147483648
    %v1220 = vmul.f32 %v1219, 1.442695
    %v1221 = vpow.pop %v1220
    %v1222 = vadd.f32 %v1221, 1.0
    %v1223 = vrcp.pop %v1222
    %v1224 = vmul.f32 1.0, %v1223
    %v1225 = vmul.f32 %v1217, %v1129
    %v1226 = vmul.f32 %v1217, %v1218
    %1228 = vrot.lane.b32.xlu0 %v1226, 64
    %v1229 = vpop.permute.xlu0 %1228
    %v1231 = vadd.f32 %v1225, %v1229
    %v1232 = vtanh.pop %v1231
    %v1233 = vmul.f32 %v1224, %v1232
    %v1235 = vunpack.c.l.s4 1966171168
    %v1236 = vunpack.c.0.s8 %v1235
    %v1237 = vlaneseq
    %v1238 = vshrl.u32 %v1237, 7
    %v1239 = vsub.s32 %v1236, %v1238
    %v1240 = vrot.slane %v473, %v1239
    %v1241 = vcombine.high %v1240, %v1240
    %v1243 = vunpack.c.l.s4 1966171168
    %v1244 = vunpack.c.0.s8 %v1243
    %v1245 = vlaneseq
    %v1246 = vshrl.u32 %v1245, 7
    %v1247 = vsub.s32 %v1244, %v1246
    %v1248 = vrot.slane %v1240, %v1247
    %v1250 = vunpack.c.l.s4 1966171168
    %v1251 = vunpack.c.0.s8 %v1250
    %v1252 = vlaneseq
    %v1253 = vshrl.u32 %v1252, 7
    %v1254 = vsub.s32 %v1251, %v1253
    %v1255 = vrot.slane %v1241, %v1254
    %v1259 = vunpack.c.l.s4 1966171168
    %v1260 = vunpack.c.0.s8 %v1259
    %v1261 = vlaneseq
    %v1262 = vshrl.u32 %v1261, 7
    %v1263 = vsub.s32 %v1260, %v1262
    %v1264 = vrot.slane %v589, %v1263
    %v1265 = vcombine.high %v1264, %v1264
    %v1267 = vunpack.c.l.s4 1966171168
    %v1268 = vunpack.c.0.s8 %v1267
    %v1269 = vlaneseq
    %v1270 = vshrl.u32 %v1269, 7
    %v1271 = vsub.s32 %v1268, %v1270
    %v1272 = vrot.slane %v1264, %v1271
    %v1274 = vunpack.c.l.s4 1966171168
    %v1275 = vunpack.c.0.s8 %v1274
    %v1276 = vlaneseq
    %v1277 = vshrl.u32 %v1276, 7
    %v1278 = vsub.s32 %v1275, %v1277
    %v1279 = vrot.slane %v1265, %v1278
    %v1281 = vunpack.c.l.s4 1966171168
    %v1282 = vunpack.c.0.s8 %v1281
    %v1283 = vlaneseq
    %v1284 = vshrl.u32 %v1283, 7
    %v1285 = vsub.s32 %v1282, %v1284
    %v1286 = vrot.slane %v707, %v1285
    %v1287 = vcombine.high %v1286, %v1286
    %v1289 = vunpack.c.l.s4 1966171168
    %v1290 = vunpack.c.0.s8 %v1289
    %v1291 = vlaneseq
    %v1292 = vshrl.u32 %v1291, 7
    %v1293 = vsub.s32 %v1290, %v1292
    %v1294 = vrot.slane %v1286, %v1293
    %v1296 = vunpack.c.l.s4 1966171168
    %v1297 = vunpack.c.0.s8 %v1296
    %v1298 = vlaneseq
    %v1299 = vshrl.u32 %v1298, 7
    %v1300 = vsub.s32 %v1297, %v1299
    %v1301 = vrot.slane %v1287, %v1300
    %v1303 = vunpack.c.l.s4 1966171168
    %v1304 = vunpack.c.0.s8 %v1303
    %v1305 = vlaneseq
    %v1306 = vshrl.u32 %v1305, 7
    %v1307 = vsub.s32 %v1304, %v1306
    %v1308 = vrot.slane %v825, %v1307
    %v1309 = vcombine.high %v1308, %v1308
    %v1311 = vunpack.c.l.s4 1966171168
    %v1312 = vunpack.c.0.s8 %v1311
    %v1313 = vlaneseq
    %v1314 = vshrl.u32 %v1313, 7
    %v1315 = vsub.s32 %v1312, %v1314
    %v1316 = vrot.slane %v1308, %v1315
    %v1318 = vunpack.c.l.s4 1966171168
    %v1319 = vunpack.c.0.s8 %v1318
    %v1320 = vlaneseq
    %v1321 = vshrl.u32 %v1320, 7
    %v1322 = vsub.s32 %v1319, %v1321
    %v1323 = vrot.slane %v1309, %v1322
    %v1325 = vunpack.c.l.s4 1966171168
    %v1326 = vunpack.c.0.s8 %v1325
    %v1327 = vlaneseq
    %v1328 = vshrl.u32 %v1327, 7
    %v1329 = vsub.s32 %v1326, %v1328
    %v1330 = vrot.slane %v927, %v1329
    %v1331 = vcombine.high %v1330, %v1330
    %v1333 = vunpack.c.l.s4 1966171168
    %v1334 = vunpack.c.0.s8 %v1333
    %v1335 = vlaneseq
    %v1336 = vshrl.u32 %v1335, 7
    %v1337 = vsub.s32 %v1334, %v1336
    %v1338 = vrot.slane %v1330, %v1337
    %v1340 = vunpack.c.l.s4 1966171168
    %v1341 = vunpack.c.0.s8 %v1340
    %v1342 = vlaneseq
    %v1343 = vshrl.u32 %v1342, 7
    %v1344 = vsub.s32 %v1341, %v1343
    %v1345 = vrot.slane %v1331, %v1344
    %v1347 = vunpack.c.l.s4 1966171168
    %v1348 = vunpack.c.0.s8 %v1347
    %v1349 = vlaneseq
    %v1350 = vshrl.u32 %v1349, 7
    %v1351 = vsub.s32 %v1348, %v1350
    %v1352 = vrot.slane %v1029, %v1351
    %v1353 = vcombine.high %v1352, %v1352
    %v1355 = vunpack.c.l.s4 1966171168
    %v1356 = vunpack.c.0.s8 %v1355
    %v1357 = vlaneseq
    %v1358 = vshrl.u32 %v1357, 7
    %v1359 = vsub.s32 %v1356, %v1358
    %v1360 = vrot.slane %v1352, %v1359
    %v1362 = vunpack.c.l.s4 1966171168
    %v1363 = vunpack.c.0.s8 %v1362
    %v1364 = vlaneseq
    %v1365 = vshrl.u32 %v1364, 7
    %v1366 = vsub.s32 %v1363, %v1365
    %v1367 = vrot.slane %v1353, %v1366
    %v1369 = vunpack.c.l.s4 1966171168
    %v1370 = vunpack.c.0.s8 %v1369
    %v1371 = vlaneseq
    %v1372 = vshrl.u32 %v1371, 7
    %v1373 = vsub.s32 %v1370, %v1372
    %v1374 = vrot.slane %v1131, %v1373
    %v1375 = vcombine.high %v1374, %v1374
    %v1377 = vunpack.c.l.s4 1966171168
    %v1378 = vunpack.c.0.s8 %v1377
    %v1379 = vlaneseq
    %v1380 = vshrl.u32 %v1379, 7
    %v1381 = vsub.s32 %v1378, %v1380
    %v1382 = vrot.slane %v1374, %v1381
    %v1384 = vunpack.c.l.s4 1966171168
    %v1385 = vunpack.c.0.s8 %v1384
    %v1386 = vlaneseq
    %v1387 = vshrl.u32 %v1386, 7
    %v1388 = vsub.s32 %v1385, %v1387
    %v1389 = vrot.slane %v1375, %v1388
    %v1392 = vunpack.c.l.s4 1966171168
    %v1393 = vunpack.c.0.s8 %v1392
    %v1394 = vlaneseq
    %v1395 = vshrl.u32 %v1394, 7
    %v1396 = vsub.s32 %v1393, %v1395
    %v1397 = vrot.slane %v1233, %v1396
    %v1398 = vcombine.high %v1397, %v1397
    %v1400 = vunpack.c.l.s4 1966171168
    %v1401 = vunpack.c.0.s8 %v1400
    %v1402 = vlaneseq
    %v1403 = vshrl.u32 %v1402, 7
    %v1404 = vsub.s32 %v1401, %v1403
    %v1405 = vrot.slane %v1397, %v1404
    %v1407 = vunpack.c.l.s4 1966171168
    %v1408 = vunpack.c.0.s8 %v1407
    %v1409 = vlaneseq
    %v1410 = vshrl.u32 %v1409, 7
    %v1411 = vsub.s32 %v1408, %v1410
    %v1412 = vrot.slane %v1398, %v1411
    %v1413 = vlaneseq
    %v1414 = vshrl.u32 %v1413, 7
    %v1415 = vsub.s32 0, %v1414
    %v1416 = vrot.slane %v1272, %v1415
    %v1417 = vlaneseq
    %v1418 = vshrl.u32 %v1417, 7
    %v1419 = vsub.s32 0, %v1418
    %v1420 = vrot.slane %v1279, %v1419
    %v1423 = vlaneseq
    %v1424 = vshrl.u32 %v1423, 7
    %v1425 = vsub.s32 0, %v1424
    %v1426 = vrot.slane %v1294, %v1425
    %v1427 = vlaneseq
    %v1428 = vshrl.u32 %v1427, 7
    %v1429 = vsub.s32 0, %v1428
    %v1430 = vrot.slane %v1301, %v1429
    %v1433 = vlaneseq
    %v1434 = vshrl.u32 %v1433, 7
    %v1435 = vsub.s32 0, %v1434
    %v1436 = vrot.slane %v1316, %v1435
    %v1437 = vlaneseq
    %v1438 = vshrl.u32 %v1437, 7
    %v1439 = vsub.s32 0, %v1438
    %v1440 = vrot.slane %v1323, %v1439
    %v1443 = vlaneseq
    %v1444 = vshrl.u32 %v1443, 7
    %v1445 = vsub.s32 0, %v1444
    %v1446 = vrot.slane %v1338, %v1445
    %v1447 = vlaneseq
    %v1448 = vshrl.u32 %v1447, 7
    %v1449 = vsub.s32 0, %v1448
    %v1450 = vrot.slane %v1345, %v1449
    %v1453 = vlaneseq
    %v1454 = vshrl.u32 %v1453, 7
    %v1455 = vsub.s32 0, %v1454
    %v1456 = vrot.slane %v1360, %v1455
    %v1457 = vlaneseq
    %v1458 = vshrl.u32 %v1457, 7
    %v1459 = vsub.s32 0, %v1458
    %v1460 = vrot.slane %v1367, %v1459
    %v1463 = vlaneseq
    %v1464 = vshrl.u32 %v1463, 7
    %v1465 = vsub.s32 0, %v1464
    %v1466 = vrot.slane %v1382, %v1465
    %v1467 = vlaneseq
    %v1468 = vshrl.u32 %v1467, 7
    %v1469 = vsub.s32 0, %v1468
    %v1470 = vrot.slane %v1389, %v1469
    %v1473 = vlaneseq
    %v1474 = vshrl.u32 %v1473, 7
    %v1475 = vsub.s32 0, %v1474
    %v1476 = vrot.slane %v1405, %v1475
    %v1477 = vlaneseq
    %v1478 = vshrl.u32 %v1477, 7
    %v1479 = vsub.s32 0, %v1478
    %v1480 = vrot.slane %v1412, %v1479
    %vm1483 = vcmask 1040384
    %v1484 = vsel %vm1483, %v1248, %v1416
    %v1485 = vsel %vm1483, %v1255, %v1420
    %vm1486 = vcmask 1041408
    %v1487 = vsel %vm1486, %v1484, %v1426
    %v1488 = vsel %vm1486, %v1485, %v1430
    %vm1489 = vcmask 1042432
    %v1490 = vsel %vm1489, %v1487, %v1436
    %v1491 = vsel %vm1489, %v1488, %v1440
    %vm1492 = vcmask 1043456
    %v1493 = vsel %vm1492, %v1490, %v1446
    %v1494 = vsel %vm1492, %v1491, %v1450
    %vm1495 = vcmask 1044480
    %v1496 = vsel %vm1495, %v1493, %v1456
    %v1497 = vsel %vm1495, %v1494, %v1460
    %vm1498 = vcmask 1045504
    %v1499 = vsel %vm1498, %v1496, %v1466
    %v1500 = vsel %vm1498, %v1497, %v1470
    %vm1501 = vcmask 1046528
    %v1502 = vsel %vm1501, %v1499, %v1476
    %v1503 = vsel %vm1501, %v1500, %v1480
    %v1506 = vlaneseq
    %v1507 = vshrl.u32 %v1506, 7
    %v1508 = vsub.s32 0, %v1507
    %v1509 = vrot.slane %v1248, %v1508
    %v1510 = vlaneseq
    %v1511 = vshrl.u32 %v1510, 7
    %v1512 = vsub.s32 0, %v1511
    %v1513 = vrot.slane %v1255, %v1512
    %v1516 = vsel %vm1483, %v1405, %v1466
    %v1517 = vsel %vm1483, %v1412, %v1470
    %v1518 = vsel %vm1486, %v1516, %v1456
    %v1519 = vsel %vm1486, %v1517, %v1460
    %v1520 = vsel %vm1489, %v1518, %v1446
    %v1521 = vsel %vm1489, %v1519, %v1450
    %v1522 = vsel %vm1492, %v1520, %v1436
    %v1523 = vsel %vm1492, %v1521, %v1440
    %v1524 = vsel %vm1495, %v1522, %v1426
    %v1525 = vsel %vm1495, %v1523, %v1430
    %v1526 = vsel %vm1498, %v1524, %v1416
    %v1527 = vsel %vm1498, %v1525, %v1420
    %v1528 = vsel %vm1501, %v1526, %v1509
    %v1529 = vsel %vm1501, %v1527, %v1513
    %1532 = vrot.lane.b32.xlu0 %v1502, 64
    %v1533 = vpop.permute.xlu0 %1532
    %1534 = vrot.lane.b32.xlu0 %v1503, 64
    %v1535 = vpop.permute.xlu0 %1534
    %1540 = vrot.lane.b32.xlu0 %v1528, 64
    %v1541 = vpop.permute.xlu0 %1540
    %1542 = vrot.lane.b32.xlu0 %v1529, 64
    %v1543 = vpop.permute.xlu0 %1542
    %vm1546 = vcmask 261120
    %v1547 = vsel %vm1546, %v1533, %v1541
    %v1548 = vsel %vm1546, %v1535, %v1543
    %s1549 = smul.u32 8, 17
    %s1550 = smul.u32 %s1549, 2
    %s1551 = sshll.u32 %s1550, 4
    %1552 = dma.done [#allocation5], %s1551
    %v1553 = vld [vmem:[#allocation2] sm:$0xff]
    %v1554 = vld [vmem:[#allocation2 + $0x8] sm:$0xff]
    %v1555 = vld [vmem:[#allocation2 + $0x10] sm:$0xff]
    %v1556 = vld [vmem:[#allocation2 + $0x18] sm:$0xff]
    %v1557 = vld [vmem:[#allocation2 + $0x20] sm:$0xff]
    %v1558 = vld [vmem:[#allocation2 + $0x28] sm:$0xff]
    %v1559 = vld [vmem:[#allocation2 + $0x30] sm:$0xff]
    %v1560 = vld [vmem:[#allocation2 + $0x38] sm:$0xff]
    %v1561 = vld [vmem:[#allocation2 + $0x40] sm:$0xff]
    %v1562 = vld [vmem:[#allocation2 + $0x48] sm:$0xff]
    %v1563 = vld [vmem:[#allocation2 + $0x50] sm:$0xff]
    %v1564 = vld [vmem:[#allocation2 + $0x58] sm:$0xff]
    %v1565 = vld [vmem:[#allocation2 + $0x60] sm:$0xff]
    %v1566 = vld [vmem:[#allocation2 + $0x68] sm:$0xff]
    %v1567 = vld [vmem:[#allocation2 + $0x70] sm:$0xff]
    %v1568 = vld [vmem:[#allocation2 + $0x78] sm:$0xff]
    %v1569 = vld [vmem:[#allocation2 + $0x80] sm:$0xff]
    %v1570 = vld [vmem:[#allocation2 + $0x88] sm:$0xff]
    %v1571 = vld [vmem:[#allocation2 + $0x90] sm:$0xff]
    %v1572 = vld [vmem:[#allocation2 + $0x98] sm:$0xff]
    %v1573 = vld [vmem:[#allocation2 + $0xa0] sm:$0xff]
    %v1574 = vld [vmem:[#allocation2 + $0xa8] sm:$0xff]
    %v1575 = vld [vmem:[#allocation2 + $0xb0] sm:$0xff]
    %v1576 = vld [vmem:[#allocation2 + $0xb8] sm:$0xff]
    %v1577 = vld [vmem:[#allocation2 + $0xc0] sm:$0xff]
    %v1578 = vld [vmem:[#allocation2 + $0xc8] sm:$0xff]
    %v1579 = vld [vmem:[#allocation2 + $0xd0] sm:$0xff]
    %v1580 = vld [vmem:[#allocation2 + $0xd8] sm:$0xff]
    %v1581 = vld [vmem:[#allocation2 + $0xe0] sm:$0xff]
    %v1582 = vld [vmem:[#allocation2 + $0xe8] sm:$0xff]
    %v1583 = vld [vmem:[#allocation2 + $0xf0] sm:$0xff]
    %v1584 = vld [vmem:[#allocation2 + $0xf8] sm:$0xff]
    %s1585 = scalar_lea.vmem [#allocation2], 256
    %v1586 = vld [vmem:[%s1585] ss:$8 sm:$0x3]
    %v1588 = vlaneseq
    %v1589 = vshrl.u32 %v1588, 7
    %v1590 = vsub.s32 0, %v1589
    %v1591 = vrot.slane %v1586, %v1590
    %v1592 = vlaneseq
    %v1593 = vshrl.u32 %v1592, 7
    %v1594 = vsub.s32 1, %v1593
    %v1595 = vrot.slane %v1586, %v1594
    %v1599 = vsel %vm375, %v1547, 0
    %v1602 = vsel %vm375, %v1548, 0
    %1604 = vmatprep.subr.mxu0 0.0
    %1605 = vmatpush1.msra.mxu0 0.0
    %1606 = vmatprep.subr.mxu0 0.0
    %1607 = vmatpush1.msra.mxu0 0.0
    %1608 = vmatprep.subr.mxu0 0.0
    %1609 = vmatpush1.msra.mxu0 0.0
    %1610 = vmatprep.subr.mxu0 0.0
    %1611 = vmatpush1.msra.mxu0 0.0
    %1612 = vmatprep.subr.mxu0 0.0
    %1613 = vmatpush1.msra.mxu0 0.0
    %1614 = vmatprep.subr.mxu0 0.0
    %1615 = vmatpush1.msra.mxu0 0.0
    %1616 = vmatprep.subr.mxu0 0.0
    %1617 = vmatpush1.msra.mxu0 0.0
    %1618 = vmatprep.subr.mxu0 0.0
    %1619 = vmatpush1.msra.mxu0 0.0
    %1620 = vmatprep.subr.mxu0 %v1568
    %1621 = vmatpush1.msra.mxu0 %v1567
    %1622 = vmatprep.subr.mxu0 %v1566
    %1623 = vmatpush1.msra.mxu0 %v1565
    %1624 = vmatprep.subr.mxu0 %v1564
    %1625 = vmatpush1.msra.mxu0 %v1563
    %1626 = vmatprep.subr.mxu0 %v1562
    %1627 = vmatpush1.msra.mxu0 %v1561
    %1628 = vmatprep.subr.mxu0 %v1560
    %1629 = vmatpush1.msra.mxu0 %v1559
    %1630 = vmatprep.subr.mxu0 %v1558
    %1631 = vmatpush1.msra.mxu0 %v1557
    %1632 = vmatprep.subr.mxu0 %v1556
    %1633 = vmatpush1.msra.mxu0 %v1555
    %1634 = vmatprep.subr.mxu0 %v1554
    %1635 = vmatpush1.msra.mxu0 %v1553
    %1636 = vmatprep.subr.mxu0 0.0
    %1637 = vmatpush2.msra.mxu0 0.0
    %1638 = vmatprep.subr.mxu0 0.0
    %1639 = vmatpush2.msra.mxu0 0.0
    %1640 = vmatprep.subr.mxu0 0.0
    %1641 = vmatpush2.msra.mxu0 0.0
    %1642 = vmatprep.subr.mxu0 0.0
    %1643 = vmatpush2.msra.mxu0 0.0
    %1644 = vmatprep.subr.mxu0 0.0
    %1645 = vmatpush2.msra.mxu0 0.0
    %1646 = vmatprep.subr.mxu0 0.0
    %1647 = vmatpush2.msra.mxu0 0.0
    %1648 = vmatprep.subr.mxu0 0.0
    %1649 = vmatpush2.msra.mxu0 0.0
    %1650 = vmatprep.subr.mxu0 0.0
    %1651 = vmatpush2.msra.mxu0 0.0
    %1652 = vmatprep.subr.mxu0 0.0
    %1653 = vmatpush2.msra.mxu0 0.0
    %1654 = vmatprep.subr.mxu0 0.0
    %1655 = vmatpush2.msra.mxu0 0.0
    %1656 = vmatprep.subr.mxu0 0.0
    %1657 = vmatpush2.msra.mxu0 0.0
    %1658 = vmatprep.subr.mxu0 0.0
    %1659 = vmatpush2.msra.mxu0 0.0
    %1660 = vmatprep.subr.mxu0 0.0
    %1661 = vmatpush2.msra.mxu0 0.0
    %1662 = vmatprep.subr.mxu0 0.0
    %1663 = vmatpush2.msra.mxu0 0.0
    %1664 = vmatprep.subr.mxu0 0.0
    %1665 = vmatpush2.msra.mxu0 0.0
    %1666 = vmatprep.subr.mxu0 0.0
    %1667 = vmatpush2.msra.mxu0 0.0
    %1668 = vmatprep.mubr.f32.mxu0 0.0
    %1669 = vmatmul.mubr.f32.gmra.mxu0 %v1599
    %v1670 = vpop.f32.mrf.mxu0
    %v1671 = vadd.f32 %v1591, %v1670
    %v1672 = vpop.f32.mrf.mxu0
    %v1673 = vadd.f32 %v1595, %v1672
    %1674 = vmatprep.mubr.f32.mxu0 0.0
    %1675 = vmatmul.mubr.f32.gmra.mxu0 %v1602
    %v1676 = vpop.f32.mrf.mxu0
    %v1677 = vadd.f32 %v1591, %v1676
    %v1678 = vpop.f32.mrf.mxu0
    %v1679 = vadd.f32 %v1595, %v1678
    %1680 = vdwg.mxu0
    %v1685 = vrot.slane %v1677, 7
    %v1686 = vsel %vm359, %v1685, %v1671
    %v1687 = vrot.slane %v1679, 7
    %v1688 = vsel %vm359, %v1687, %v1673
    %v1691 = vrot.slane %v1671, 7
    %v1692 = vrot.slane %v1677, 6
    %v1693 = vsel %vm359, %v1692, %v1691
    %v1694 = vrot.slane %v1673, 7
    %v1695 = vrot.slane %v1679, 6
    %v1696 = vsel %vm359, %v1695, %v1694
    %v1699 = vsel %vm352, %v1686, %v1693
    %v1700 = vsel %vm353, %v1688, %v1696
    %1701 = vmatprep.subr.mxu0 0.0
    %1702 = vmatpush1.msra.mxu0 0.0
    %1703 = vmatprep.subr.mxu0 0.0
    %1704 = vmatpush1.msra.mxu0 0.0
    %1705 = vmatprep.subr.mxu0 0.0
    %1706 = vmatpush1.msra.mxu0 0.0
    %1707 = vmatprep.subr.mxu0 0.0
    %1708 = vmatpush1.msra.mxu0 0.0
    %1709 = vmatprep.subr.mxu0 0.0
    %1710 = vmatpush1.msra.mxu0 0.0
    %1711 = vmatprep.subr.mxu0 0.0
    %1712 = vmatpush1.msra.mxu0 0.0
    %1713 = vmatprep.subr.mxu0 0.0
    %1714 = vmatpush1.msra.mxu0 0.0
    %1715 = vmatprep.subr.mxu0 0.0
    %1716 = vmatpush1.msra.mxu0 0.0
    %1717 = vmatprep.subr.mxu0 %v1584
    %1718 = vmatpush1.msra.mxu0 %v1583
    %1719 = vmatprep.subr.mxu0 %v1582
    %1720 = vmatpush1.msra.mxu0 %v1581
    %1721 = vmatprep.subr.mxu0 %v1580
    %1722 = vmatpush1.msra.mxu0 %v1579
    %1723 = vmatprep.subr.mxu0 %v1578
    %1724 = vmatpush1.msra.mxu0 %v1577
    %1725 = vmatprep.subr.mxu0 %v1576
    %1726 = vmatpush1.msra.mxu0 %v1575
    %1727 = vmatprep.subr.mxu0 %v1574
    %1728 = vmatpush1.msra.mxu0 %v1573
    %1729 = vmatprep.subr.mxu0 %v1572
    %1730 = vmatpush1.msra.mxu0 %v1571
    %1731 = vmatprep.subr.mxu0 %v1570
    %1732 = vmatpush1.msra.mxu0 %v1569
    %1733 = vmatprep.subr.mxu0 0.0
    %1734 = vmatpush2.msra.mxu0 0.0
    %1735 = vmatprep.subr.mxu0 0.0
    %1736 = vmatpush2.msra.mxu0 0.0
    %1737 = vmatprep.subr.mxu0 0.0
    %1738 = vmatpush2.msra.mxu0 0.0
    %1739 = vmatprep.subr.mxu0 0.0
    %1740 = vmatpush2.msra.mxu0 0.0
    %1741 = vmatprep.subr.mxu0 0.0
    %1742 = vmatpush2.msra.mxu0 0.0
    %1743 = vmatprep.subr.mxu0 0.0
    %1744 = vmatpush2.msra.mxu0 0.0
    %1745 = vmatprep.subr.mxu0 0.0
    %1746 = vmatpush2.msra.mxu0 0.0
    %1747 = vmatprep.subr.mxu0 0.0
    %1748 = vmatpush2.msra.mxu0 0.0
    %1749 = vmatprep.subr.mxu0 0.0
    %1750 = vmatpush2.msra.mxu0 0.0
    %1751 = vmatprep.subr.mxu0 0.0
    %1752 = vmatpush2.msra.mxu0 0.0
    %1753 = vmatprep.subr.mxu0 0.0
    %1754 = vmatpush2.msra.mxu0 0.0
    %1755 = vmatprep.subr.mxu0 0.0
    %1756 = vmatpush2.msra.mxu0 0.0
    %1757 = vmatprep.subr.mxu0 0.0
    %1758 = vmatpush2.msra.mxu0 0.0
    %1759 = vmatprep.subr.mxu0 0.0
    %1760 = vmatpush2.msra.mxu0 0.0
    %1761 = vmatprep.subr.mxu0 0.0
    %1762 = vmatpush2.msra.mxu0 0.0
    %1763 = vmatprep.subr.mxu0 0.0
    %1764 = vmatpush2.msra.mxu0 0.0
    %1765 = vmatprep.mubr.f32.mxu0 0.0
    %1766 = vmatmul.mubr.f32.gmra.mxu0 %v377
    %v1767 = vpop.f32.mrf.mxu0
    %v1768 = vadd.f32 0.0, %v1767
    %v1769 = vpop.f32.mrf.mxu0
    %v1770 = vadd.f32 0.0, %v1769
    %1771 = vdwg.mxu0
    %v1772 = vadd.f32 %v1699, %v1768
    %v1773 = vadd.f32 %v1700, %v1770
    %v1774 = vxor.u32 %v1772, 2147483648
    %v1775 = vmul.f32 %v1774, 1.442695
    %v1776 = vpow.pop %v1775
    %v1777 = vadd.f32 %v1776, 1.0
    %v1778 = vrcp.pop %v1777
    %v1779 = vmul.f32 1.0, %v1778
    %v1780 = vtanh.pop %v1773
    %v1781 = vxor.u32 %v1773, 2147483648
    %v1782 = vmul.f32 %v1781, 1.442695
    %v1783 = vpow.pop %v1782
    %v1784 = vadd.f32 %v1783, 1.0
    %v1785 = vrcp.pop %v1784
    %v1786 = vmul.f32 1.0, %v1785
    %v1787 = vmul.f32 %v1779, 0.0
    %v1788 = vmul.f32 %v1779, %v1780
    %1790 = vrot.lane.b32.xlu0 %v1788, 64
    %v1791 = vpop.permute.xlu0 %1790
    %v1793 = vadd.f32 %v1787, %v1791
    %v1794 = vtanh.pop %v1793
    %v1795 = vmul.f32 %v1786, %v1794
    %v1796 = vrot.slane %v1671, 1
    %v1797 = vsel %vm359, %v1677, %v1796
    %v1798 = vrot.slane %v1673, 1
    %v1799 = vsel %vm359, %v1679, %v1798
    %v1802 = vrot.slane %v1671, 6
    %v1803 = vrot.slane %v1677, 5
    %v1804 = vsel %vm359, %v1803, %v1802
    %v1805 = vrot.slane %v1673, 6
    %v1806 = vrot.slane %v1679, 5
    %v1807 = vsel %vm359, %v1806, %v1805
    %v1810 = vsel %vm352, %v1797, %v1804
    %v1811 = vsel %vm353, %v1799, %v1807
    %1813 = vrot.lane.b32.xlu0 %v1795, 64
    %v1814 = vpop.permute.xlu0 %1813
    %v1815 = vsel %vm375, %v1814, 0
    %1817 = vmatprep.subr.mxu0 0.0
    %1818 = vmatpush1.msra.mxu0 0.0
    %1819 = vmatprep.subr.mxu0 0.0
    %1820 = vmatpush1.msra.mxu0 0.0
    %1821 = vmatprep.subr.mxu0 0.0
    %1822 = vmatpush1.msra.mxu0 0.0
    %1823 = vmatprep.subr.mxu0 0.0
    %1824 = vmatpush1.msra.mxu0 0.0
    %1825 = vmatprep.subr.mxu0 0.0
    %1826 = vmatpush1.msra.mxu0 0.0
    %1827 = vmatprep.subr.mxu0 0.0
    %1828 = vmatpush1.msra.mxu0 0.0
    %1829 = vmatprep.subr.mxu0 0.0
    %1830 = vmatpush1.msra.mxu0 0.0
    %1831 = vmatprep.subr.mxu0 0.0
    %1832 = vmatpush1.msra.mxu0 0.0
    %1833 = vmatprep.subr.mxu0 %v1584
    %1834 = vmatpush1.msra.mxu0 %v1583
    %1835 = vmatprep.subr.mxu0 %v1582
    %1836 = vmatpush1.msra.mxu0 %v1581
    %1837 = vmatprep.subr.mxu0 %v1580
    %1838 = vmatpush1.msra.mxu0 %v1579
    %1839 = vmatprep.subr.mxu0 %v1578
    %1840 = vmatpush1.msra.mxu0 %v1577
    %1841 = vmatprep.subr.mxu0 %v1576
    %1842 = vmatpush1.msra.mxu0 %v1575
    %1843 = vmatprep.subr.mxu0 %v1574
    %1844 = vmatpush1.msra.mxu0 %v1573
    %1845 = vmatprep.subr.mxu0 %v1572
    %1846 = vmatpush1.msra.mxu0 %v1571
    %1847 = vmatprep.subr.mxu0 %v1570
    %1848 = vmatpush1.msra.mxu0 %v1569
    %1849 = vmatprep.subr.mxu0 0.0
    %1850 = vmatpush2.msra.mxu0 0.0
    %1851 = vmatprep.subr.mxu0 0.0
    %1852 = vmatpush2.msra.mxu0 0.0
    %1853 = vmatprep.subr.mxu0 0.0
    %1854 = vmatpush2.msra.mxu0 0.0
    %1855 = vmatprep.subr.mxu0 0.0
    %1856 = vmatpush2.msra.mxu0 0.0
    %1857 = vmatprep.subr.mxu0 0.0
    %1858 = vmatpush2.msra.mxu0 0.0
    %1859 = vmatprep.subr.mxu0 0.0
    %1860 = vmatpush2.msra.mxu0 0.0
    %1861 = vmatprep.subr.mxu0 0.0
    %1862 = vmatpush2.msra.mxu0 0.0
    %1863 = vmatprep.subr.mxu0 0.0
    %1864 = vmatpush2.msra.mxu0 0.0
    %1865 = vmatprep.subr.mxu0 0.0
    %1866 = vmatpush2.msra.mxu0 0.0
    %1867 = vmatprep.subr.mxu0 0.0
    %1868 = vmatpush2.msra.mxu0 0.0
    %1869 = vmatprep.subr.mxu0 0.0
    %1870 = vmatpush2.msra.mxu0 0.0
    %1871 = vmatprep.subr.mxu0 0.0
    %1872 = vmatpush2.msra.mxu0 0.0
    %1873 = vmatprep.subr.mxu0 0.0
    %1874 = vmatpush2.msra.mxu0 0.0
    %1875 = vmatprep.subr.mxu0 0.0
    %1876 = vmatpush2.msra.mxu0 0.0
    %1877 = vmatprep.subr.mxu0 0.0
    %1878 = vmatpush2.msra.mxu0 0.0
    %1879 = vmatprep.subr.mxu0 0.0
    %1880 = vmatpush2.msra.mxu0 0.0
    %1881 = vmatprep.mubr.f32.mxu0 0.0
    %1882 = vmatmul.mubr.f32.gmra.mxu0 %v1815
    %v1883 = vpop.f32.mrf.mxu0
    %v1884 = vadd.f32 0.0, %v1883
    %v1885 = vpop.f32.mrf.mxu0
    %v1886 = vadd.f32 0.0, %v1885
    %1887 = vdwg.mxu0
    %v1888 = vadd.f32 %v1810, %v1884
    %v1889 = vadd.f32 %v1811, %v1886
    %v1890 = vxor.u32 %v1888, 2147483648
    %v1891 = vmul.f32 %v1890, 1.442695
    %v1892 = vpow.pop %v1891
    %v1893 = vadd.f32 %v1892, 1.0
    %v1894 = vrcp.pop %v1893
    %v1895 = vmul.f32 1.0, %v1894
    %v1896 = vtanh.pop %v1889
    %v1897 = vxor.u32 %v1889, 2147483648
    %v1898 = vmul.f32 %v1897, 1.442695
    %v1899 = vpow.pop %v1898
    %v1900 = vadd.f32 %v1899, 1.0
    %v1901 = vrcp.pop %v1900
    %v1902 = vmul.f32 1.0, %v1901
    %v1903 = vmul.f32 %v1895, %v1793
    %v1904 = vmul.f32 %v1895, %v1896
    %1906 = vrot.lane.b32.xlu0 %v1904, 64
    %v1907 = vpop.permute.xlu0 %1906
    %v1909 = vadd.f32 %v1903, %v1907
    %v1910 = vtanh.pop %v1909
    %v1911 = vmul.f32 %v1902, %v1910
    %v1912 = vrot.slane %v1671, 2
    %v1913 = vrot.slane %v1677, 1
    %v1914 = vsel %vm359, %v1913, %v1912
    %v1915 = vrot.slane %v1673, 2
    %v1916 = vrot.slane %v1679, 1
    %v1917 = vsel %vm359, %v1916, %v1915
    %v1920 = vrot.slane %v1671, 5
    %v1921 = vrot.slane %v1677, 4
    %v1922 = vsel %vm359, %v1921, %v1920
    %v1923 = vrot.slane %v1673, 5
    %v1924 = vrot.slane %v1679, 4
    %v1925 = vsel %vm359, %v1924, %v1923
    %v1928 = vsel %vm352, %v1914, %v1922
    %v1929 = vsel %vm353, %v1917, %v1925
    %1931 = vrot.lane.b32.xlu0 %v1911, 64
    %v1932 = vpop.permute.xlu0 %1931
    %v1933 = vsel %vm375, %v1932, 0
    %1935 = vmatprep.subr.mxu0 0.0
    %1936 = vmatpush1.msra.mxu0 0.0
    %1937 = vmatprep.subr.mxu0 0.0
    %1938 = vmatpush1.msra.mxu0 0.0
    %1939 = vmatprep.subr.mxu0 0.0
    %1940 = vmatpush1.msra.mxu0 0.0
    %1941 = vmatprep.subr.mxu0 0.0
    %1942 = vmatpush1.msra.mxu0 0.0
    %1943 = vmatprep.subr.mxu0 0.0
    %1944 = vmatpush1.msra.mxu0 0.0
    %1945 = vmatprep.subr.mxu0 0.0
    %1946 = vmatpush1.msra.mxu0 0.0
    %1947 = vmatprep.subr.mxu0 0.0
    %1948 = vmatpush1.msra.mxu0 0.0
    %1949 = vmatprep.subr.mxu0 0.0
    %1950 = vmatpush1.msra.mxu0 0.0
    %1951 = vmatprep.subr.mxu0 %v1584
    %1952 = vmatpush1.msra.mxu0 %v1583
    %1953 = vmatprep.subr.mxu0 %v1582
    %1954 = vmatpush1.msra.mxu0 %v1581
    %1955 = vmatprep.subr.mxu0 %v1580
    %1956 = vmatpush1.msra.mxu0 %v1579
    %1957 = vmatprep.subr.mxu0 %v1578
    %1958 = vmatpush1.msra.mxu0 %v1577
    %1959 = vmatprep.subr.mxu0 %v1576
    %1960 = vmatpush1.msra.mxu0 %v1575
    %1961 = vmatprep.subr.mxu0 %v1574
    %1962 = vmatpush1.msra.mxu0 %v1573
    %1963 = vmatprep.subr.mxu0 %v1572
    %1964 = vmatpush1.msra.mxu0 %v1571
    %1965 = vmatprep.subr.mxu0 %v1570
    %1966 = vmatpush1.msra.mxu0 %v1569
    %1967 = vmatprep.subr.mxu0 0.0
    %1968 = vmatpush2.msra.mxu0 0.0
    %1969 = vmatprep.subr.mxu0 0.0
    %1970 = vmatpush2.msra.mxu0 0.0
    %1971 = vmatprep.subr.mxu0 0.0
    %1972 = vmatpush2.msra.mxu0 0.0
    %1973 = vmatprep.subr.mxu0 0.0
    %1974 = vmatpush2.msra.mxu0 0.0
    %1975 = vmatprep.subr.mxu0 0.0
    %1976 = vmatpush2.msra.mxu0 0.0
    %1977 = vmatprep.subr.mxu0 0.0
    %1978 = vmatpush2.msra.mxu0 0.0
    %1979 = vmatprep.subr.mxu0 0.0
    %1980 = vmatpush2.msra.mxu0 0.0
    %1981 = vmatprep.subr.mxu0 0.0
    %1982 = vmatpush2.msra.mxu0 0.0
    %1983 = vmatprep.subr.mxu0 0.0
    %1984 = vmatpush2.msra.mxu0 0.0
    %1985 = vmatprep.subr.mxu0 0.0
    %1986 = vmatpush2.msra.mxu0 0.0
    %1987 = vmatprep.subr.mxu0 0.0
    %1988 = vmatpush2.msra.mxu0 0.0
    %1989 = vmatprep.subr.mxu0 0.0
    %1990 = vmatpush2.msra.mxu0 0.0
    %1991 = vmatprep.subr.mxu0 0.0
    %1992 = vmatpush2.msra.mxu0 0.0
    %1993 = vmatprep.subr.mxu0 0.0
    %1994 = vmatpush2.msra.mxu0 0.0
    %1995 = vmatprep.subr.mxu0 0.0
    %1996 = vmatpush2.msra.mxu0 0.0
    %1997 = vmatprep.subr.mxu0 0.0
    %1998 = vmatpush2.msra.mxu0 0.0
    %1999 = vmatprep.mubr.f32.mxu0 0.0
    %2000 = vmatmul.mubr.f32.gmra.mxu0 %v1933
    %v2001 = vpop.f32.mrf.mxu0
    %v2002 = vadd.f32 0.0, %v2001
    %v2003 = vpop.f32.mrf.mxu0
    %v2004 = vadd.f32 0.0, %v2003
    %2005 = vdwg.mxu0
    %v2006 = vadd.f32 %v1928, %v2002
    %v2007 = vadd.f32 %v1929, %v2004
    %v2008 = vxor.u32 %v2006, 2147483648
    %v2009 = vmul.f32 %v2008, 1.442695
    %v2010 = vpow.pop %v2009
    %v2011 = vadd.f32 %v2010, 1.0
    %v2012 = vrcp.pop %v2011
    %v2013 = vmul.f32 1.0, %v2012
    %v2014 = vtanh.pop %v2007
    %v2015 = vxor.u32 %v2007, 2147483648
    %v2016 = vmul.f32 %v2015, 1.442695
    %v2017 = vpow.pop %v2016
    %v2018 = vadd.f32 %v2017, 1.0
    %v2019 = vrcp.pop %v2018
    %v2020 = vmul.f32 1.0, %v2019
    %v2021 = vmul.f32 %v2013, %v1909
    %v2022 = vmul.f32 %v2013, %v2014
    %2024 = vrot.lane.b32.xlu0 %v2022, 64
    %v2025 = vpop.permute.xlu0 %2024
    %v2027 = vadd.f32 %v2021, %v2025
    %v2028 = vtanh.pop %v2027
    %v2029 = vmul.f32 %v2020, %v2028
    %v2030 = vrot.slane %v1671, 3
    %v2031 = vrot.slane %v1677, 2
    %v2032 = vsel %vm359, %v2031, %v2030
    %v2033 = vrot.slane %v1673, 3
    %v2034 = vrot.slane %v1679, 2
    %v2035 = vsel %vm359, %v2034, %v2033
    %v2038 = vrot.slane %v1671, 4
    %v2039 = vrot.slane %v1677, 3
    %v2040 = vsel %vm359, %v2039, %v2038
    %v2041 = vrot.slane %v1673, 4
    %v2042 = vrot.slane %v1679, 3
    %v2043 = vsel %vm359, %v2042, %v2041
    %v2046 = vsel %vm352, %v2032, %v2040
    %v2047 = vsel %vm353, %v2035, %v2043
    %2049 = vrot.lane.b32.xlu0 %v2029, 64
    %v2050 = vpop.permute.xlu0 %2049
    %v2051 = vsel %vm375, %v2050, 0
    %2053 = vmatprep.subr.mxu0 0.0
    %2054 = vmatpush1.msra.mxu0 0.0
    %2055 = vmatprep.subr.mxu0 0.0
    %2056 = vmatpush1.msra.mxu0 0.0
    %2057 = vmatprep.subr.mxu0 0.0
    %2058 = vmatpush1.msra.mxu0 0.0
    %2059 = vmatprep.subr.mxu0 0.0
    %2060 = vmatpush1.msra.mxu0 0.0
    %2061 = vmatprep.subr.mxu0 0.0
    %2062 = vmatpush1.msra.mxu0 0.0
    %2063 = vmatprep.subr.mxu0 0.0
    %2064 = vmatpush1.msra.mxu0 0.0
    %2065 = vmatprep.subr.mxu0 0.0
    %2066 = vmatpush1.msra.mxu0 0.0
    %2067 = vmatprep.subr.mxu0 0.0
    %2068 = vmatpush1.msra.mxu0 0.0
    %2069 = vmatprep.subr.mxu0 %v1584
    %2070 = vmatpush1.msra.mxu0 %v1583
    %2071 = vmatprep.subr.mxu0 %v1582
    %2072 = vmatpush1.msra.mxu0 %v1581
    %2073 = vmatprep.subr.mxu0 %v1580
    %2074 = vmatpush1.msra.mxu0 %v1579
    %2075 = vmatprep.subr.mxu0 %v1578
    %2076 = vmatpush1.msra.mxu0 %v1577
    %2077 = vmatprep.subr.mxu0 %v1576
    %2078 = vmatpush1.msra.mxu0 %v1575
    %2079 = vmatprep.subr.mxu0 %v1574
    %2080 = vmatpush1.msra.mxu0 %v1573
    %2081 = vmatprep.subr.mxu0 %v1572
    %2082 = vmatpush1.msra.mxu0 %v1571
    %2083 = vmatprep.subr.mxu0 %v1570
    %2084 = vmatpush1.msra.mxu0 %v1569
    %2085 = vmatprep.subr.mxu0 0.0
    %2086 = vmatpush2.msra.mxu0 0.0
    %2087 = vmatprep.subr.mxu0 0.0
    %2088 = vmatpush2.msra.mxu0 0.0
    %2089 = vmatprep.subr.mxu0 0.0
    %2090 = vmatpush2.msra.mxu0 0.0
    %2091 = vmatprep.subr.mxu0 0.0
    %2092 = vmatpush2.msra.mxu0 0.0
    %2093 = vmatprep.subr.mxu0 0.0
    %2094 = vmatpush2.msra.mxu0 0.0
    %2095 = vmatprep.subr.mxu0 0.0
    %2096 = vmatpush2.msra.mxu0 0.0
    %2097 = vmatprep.subr.mxu0 0.0
    %2098 = vmatpush2.msra.mxu0 0.0
    %2099 = vmatprep.subr.mxu0 0.0
    %2100 = vmatpush2.msra.mxu0 0.0
    %2101 = vmatprep.subr.mxu0 0.0
    %2102 = vmatpush2.msra.mxu0 0.0
    %2103 = vmatprep.subr.mxu0 0.0
    %2104 = vmatpush2.msra.mxu0 0.0
    %2105 = vmatprep.subr.mxu0 0.0
    %2106 = vmatpush2.msra.mxu0 0.0
    %2107 = vmatprep.subr.mxu0 0.0
    %2108 = vmatpush2.msra.mxu0 0.0
    %2109 = vmatprep.subr.mxu0 0.0
    %2110 = vmatpush2.msra.mxu0 0.0
    %2111 = vmatprep.subr.mxu0 0.0
    %2112 = vmatpush2.msra.mxu0 0.0
    %2113 = vmatprep.subr.mxu0 0.0
    %2114 = vmatpush2.msra.mxu0 0.0
    %2115 = vmatprep.subr.mxu0 0.0
    %2116 = vmatpush2.msra.mxu0 0.0
    %2117 = vmatprep.mubr.f32.mxu0 0.0
    %2118 = vmatmul.mubr.f32.gmra.mxu0 %v2051
    %v2119 = vpop.f32.mrf.mxu0
    %v2120 = vadd.f32 0.0, %v2119
    %v2121 = vpop.f32.mrf.mxu0
    %v2122 = vadd.f32 0.0, %v2121
    %2123 = vdwg.mxu0
    %v2124 = vadd.f32 %v2046, %v2120
    %v2125 = vadd.f32 %v2047, %v2122
    %v2126 = vxor.u32 %v2124, 2147483648
    %v2127 = vmul.f32 %v2126, 1.442695
    %v2128 = vpow.pop %v2127
    %v2129 = vadd.f32 %v2128, 1.0
    %v2130 = vrcp.pop %v2129
    %v2131 = vmul.f32 1.0, %v2130
    %v2132 = vtanh.pop %v2125
    %v2133 = vxor.u32 %v2125, 2147483648
    %v2134 = vmul.f32 %v2133, 1.442695
    %v2135 = vpow.pop %v2134
    %v2136 = vadd.f32 %v2135, 1.0
    %v2137 = vrcp.pop %v2136
    %v2138 = vmul.f32 1.0, %v2137
    %v2139 = vmul.f32 %v2131, %v2027
    %v2140 = vmul.f32 %v2131, %v2132
    %2142 = vrot.lane.b32.xlu0 %v2140, 64
    %v2143 = vpop.permute.xlu0 %2142
    %v2145 = vadd.f32 %v2139, %v2143
    %v2146 = vtanh.pop %v2145
    %v2147 = vmul.f32 %v2138, %v2146
    %v2148 = vsel %vm352, %v2040, %v2032
    %v2149 = vsel %vm353, %v2043, %v2035
    %2151 = vrot.lane.b32.xlu0 %v2147, 64
    %v2152 = vpop.permute.xlu0 %2151
    %v2153 = vsel %vm375, %v2152, 0
    %2155 = vmatprep.subr.mxu0 0.0
    %2156 = vmatpush1.msra.mxu0 0.0
    %2157 = vmatprep.subr.mxu0 0.0
    %2158 = vmatpush1.msra.mxu0 0.0
    %2159 = vmatprep.subr.mxu0 0.0
    %2160 = vmatpush1.msra.mxu0 0.0
    %2161 = vmatprep.subr.mxu0 0.0
    %2162 = vmatpush1.msra.mxu0 0.0
    %2163 = vmatprep.subr.mxu0 0.0
    %2164 = vmatpush1.msra.mxu0 0.0
    %2165 = vmatprep.subr.mxu0 0.0
    %2166 = vmatpush1.msra.mxu0 0.0
    %2167 = vmatprep.subr.mxu0 0.0
    %2168 = vmatpush1.msra.mxu0 0.0
    %2169 = vmatprep.subr.mxu0 0.0
    %2170 = vmatpush1.msra.mxu0 0.0
    %2171 = vmatprep.subr.mxu0 %v1584
    %2172 = vmatpush1.msra.mxu0 %v1583
    %2173 = vmatprep.subr.mxu0 %v1582
    %2174 = vmatpush1.msra.mxu0 %v1581
    %2175 = vmatprep.subr.mxu0 %v1580
    %2176 = vmatpush1.msra.mxu0 %v1579
    %2177 = vmatprep.subr.mxu0 %v1578
    %2178 = vmatpush1.msra.mxu0 %v1577
    %2179 = vmatprep.subr.mxu0 %v1576
    %2180 = vmatpush1.msra.mxu0 %v1575
    %2181 = vmatprep.subr.mxu0 %v1574
    %2182 = vmatpush1.msra.mxu0 %v1573
    %2183 = vmatprep.subr.mxu0 %v1572
    %2184 = vmatpush1.msra.mxu0 %v1571
    %2185 = vmatprep.subr.mxu0 %v1570
    %2186 = vmatpush1.msra.mxu0 %v1569
    %2187 = vmatprep.subr.mxu0 0.0
    %2188 = vmatpush2.msra.mxu0 0.0
    %2189 = vmatprep.subr.mxu0 0.0
    %2190 = vmatpush2.msra.mxu0 0.0
    %2191 = vmatprep.subr.mxu0 0.0
    %2192 = vmatpush2.msra.mxu0 0.0
    %2193 = vmatprep.subr.mxu0 0.0
    %2194 = vmatpush2.msra.mxu0 0.0
    %2195 = vmatprep.subr.mxu0 0.0
    %2196 = vmatpush2.msra.mxu0 0.0
    %2197 = vmatprep.subr.mxu0 0.0
    %2198 = vmatpush2.msra.mxu0 0.0
    %2199 = vmatprep.subr.mxu0 0.0
    %2200 = vmatpush2.msra.mxu0 0.0
    %2201 = vmatprep.subr.mxu0 0.0
    %2202 = vmatpush2.msra.mxu0 0.0
    %2203 = vmatprep.subr.mxu0 0.0
    %2204 = vmatpush2.msra.mxu0 0.0
    %2205 = vmatprep.subr.mxu0 0.0
    %2206 = vmatpush2.msra.mxu0 0.0
    %2207 = vmatprep.subr.mxu0 0.0
    %2208 = vmatpush2.msra.mxu0 0.0
    %2209 = vmatprep.subr.mxu0 0.0
    %2210 = vmatpush2.msra.mxu0 0.0
    %2211 = vmatprep.subr.mxu0 0.0
    %2212 = vmatpush2.msra.mxu0 0.0
    %2213 = vmatprep.subr.mxu0 0.0
    %2214 = vmatpush2.msra.mxu0 0.0
    %2215 = vmatprep.subr.mxu0 0.0
    %2216 = vmatpush2.msra.mxu0 0.0
    %2217 = vmatprep.subr.mxu0 0.0
    %2218 = vmatpush2.msra.mxu0 0.0
    %2219 = vmatprep.mubr.f32.mxu0 0.0
    %2220 = vmatmul.mubr.f32.gmra.mxu0 %v2153
    %v2221 = vpop.f32.mrf.mxu0
    %v2222 = vadd.f32 0.0, %v2221
    %v2223 = vpop.f32.mrf.mxu0
    %v2224 = vadd.f32 0.0, %v2223
    %2225 = vdwg.mxu0
    %v2226 = vadd.f32 %v2148, %v2222
    %v2227 = vadd.f32 %v2149, %v2224
    %v2228 = vxor.u32 %v2226, 2147483648
    %v2229 = vmul.f32 %v2228, 1.442695
    %v2230 = vpow.pop %v2229
    %v2231 = vadd.f32 %v2230, 1.0
    %v2232 = vrcp.pop %v2231
    %v2233 = vmul.f32 1.0, %v2232
    %v2234 = vtanh.pop %v2227
    %v2235 = vxor.u32 %v2227, 2147483648
    %v2236 = vmul.f32 %v2235, 1.442695
    %v2237 = vpow.pop %v2236
    %v2238 = vadd.f32 %v2237, 1.0
    %v2239 = vrcp.pop %v2238
    %v2240 = vmul.f32 1.0, %v2239
    %v2241 = vmul.f32 %v2233, %v2145
    %v2242 = vmul.f32 %v2233, %v2234
    %2244 = vrot.lane.b32.xlu0 %v2242, 64
    %v2245 = vpop.permute.xlu0 %2244
    %v2247 = vadd.f32 %v2241, %v2245
    %v2248 = vtanh.pop %v2247
    %v2249 = vmul.f32 %v2240, %v2248
    %v2250 = vsel %vm352, %v1922, %v1914
    %v2251 = vsel %vm353, %v1925, %v1917
    %2253 = vrot.lane.b32.xlu0 %v2249, 64
    %v2254 = vpop.permute.xlu0 %2253
    %v2255 = vsel %vm375, %v2254, 0
    %2257 = vmatprep.subr.mxu0 0.0
    %2258 = vmatpush1.msra.mxu0 0.0
    %2259 = vmatprep.subr.mxu0 0.0
    %2260 = vmatpush1.msra.mxu0 0.0
    %2261 = vmatprep.subr.mxu0 0.0
    %2262 = vmatpush1.msra.mxu0 0.0
    %2263 = vmatprep.subr.mxu0 0.0
    %2264 = vmatpush1.msra.mxu0 0.0
    %2265 = vmatprep.subr.mxu0 0.0
    %2266 = vmatpush1.msra.mxu0 0.0
    %2267 = vmatprep.subr.mxu0 0.0
    %2268 = vmatpush1.msra.mxu0 0.0
    %2269 = vmatprep.subr.mxu0 0.0
    %2270 = vmatpush1.msra.mxu0 0.0
    %2271 = vmatprep.subr.mxu0 0.0
    %2272 = vmatpush1.msra.mxu0 0.0
    %2273 = vmatprep.subr.mxu0 %v1584
    %2274 = vmatpush1.msra.mxu0 %v1583
    %2275 = vmatprep.subr.mxu0 %v1582
    %2276 = vmatpush1.msra.mxu0 %v1581
    %2277 = vmatprep.subr.mxu0 %v1580
    %2278 = vmatpush1.msra.mxu0 %v1579
    %2279 = vmatprep.subr.mxu0 %v1578
    %2280 = vmatpush1.msra.mxu0 %v1577
    %2281 = vmatprep.subr.mxu0 %v1576
    %2282 = vmatpush1.msra.mxu0 %v1575
    %2283 = vmatprep.subr.mxu0 %v1574
    %2284 = vmatpush1.msra.mxu0 %v1573
    %2285 = vmatprep.subr.mxu0 %v1572
    %2286 = vmatpush1.msra.mxu0 %v1571
    %2287 = vmatprep.subr.mxu0 %v1570
    %2288 = vmatpush1.msra.mxu0 %v1569
    %2289 = vmatprep.subr.mxu0 0.0
    %2290 = vmatpush2.msra.mxu0 0.0
    %2291 = vmatprep.subr.mxu0 0.0
    %2292 = vmatpush2.msra.mxu0 0.0
    %2293 = vmatprep.subr.mxu0 0.0
    %2294 = vmatpush2.msra.mxu0 0.0
    %2295 = vmatprep.subr.mxu0 0.0
    %2296 = vmatpush2.msra.mxu0 0.0
    %2297 = vmatprep.subr.mxu0 0.0
    %2298 = vmatpush2.msra.mxu0 0.0
    %2299 = vmatprep.subr.mxu0 0.0
    %2300 = vmatpush2.msra.mxu0 0.0
    %2301 = vmatprep.subr.mxu0 0.0
    %2302 = vmatpush2.msra.mxu0 0.0
    %2303 = vmatprep.subr.mxu0 0.0
    %2304 = vmatpush2.msra.mxu0 0.0
    %2305 = vmatprep.subr.mxu0 0.0
    %2306 = vmatpush2.msra.mxu0 0.0
    %2307 = vmatprep.subr.mxu0 0.0
    %2308 = vmatpush2.msra.mxu0 0.0
    %2309 = vmatprep.subr.mxu0 0.0
    %2310 = vmatpush2.msra.mxu0 0.0
    %2311 = vmatprep.subr.mxu0 0.0
    %2312 = vmatpush2.msra.mxu0 0.0
    %2313 = vmatprep.subr.mxu0 0.0
    %2314 = vmatpush2.msra.mxu0 0.0
    %2315 = vmatprep.subr.mxu0 0.0
    %2316 = vmatpush2.msra.mxu0 0.0
    %2317 = vmatprep.subr.mxu0 0.0
    %2318 = vmatpush2.msra.mxu0 0.0
    %2319 = vmatprep.subr.mxu0 0.0
    %2320 = vmatpush2.msra.mxu0 0.0
    %2321 = vmatprep.mubr.f32.mxu0 0.0
    %2322 = vmatmul.mubr.f32.gmra.mxu0 %v2255
    %v2323 = vpop.f32.mrf.mxu0
    %v2324 = vadd.f32 0.0, %v2323
    %v2325 = vpop.f32.mrf.mxu0
    %v2326 = vadd.f32 0.0, %v2325
    %2327 = vdwg.mxu0
    %v2328 = vadd.f32 %v2250, %v2324
    %v2329 = vadd.f32 %v2251, %v2326
    %v2330 = vxor.u32 %v2328, 2147483648
    %v2331 = vmul.f32 %v2330, 1.442695
    %v2332 = vpow.pop %v2331
    %v2333 = vadd.f32 %v2332, 1.0
    %v2334 = vrcp.pop %v2333
    %v2335 = vmul.f32 1.0, %v2334
    %v2336 = vtanh.pop %v2329
    %v2337 = vxor.u32 %v2329, 2147483648
    %v2338 = vmul.f32 %v2337, 1.442695
    %v2339 = vpow.pop %v2338
    %v2340 = vadd.f32 %v2339, 1.0
    %v2341 = vrcp.pop %v2340
    %v2342 = vmul.f32 1.0, %v2341
    %v2343 = vmul.f32 %v2335, %v2247
    %v2344 = vmul.f32 %v2335, %v2336
    %2346 = vrot.lane.b32.xlu0 %v2344, 64
    %v2347 = vpop.permute.xlu0 %2346
    %v2349 = vadd.f32 %v2343, %v2347
    %v2350 = vtanh.pop %v2349
    %v2351 = vmul.f32 %v2342, %v2350
    %v2352 = vsel %vm352, %v1804, %v1797
    %v2353 = vsel %vm353, %v1807, %v1799
    %2355 = vrot.lane.b32.xlu0 %v2351, 64
    %v2356 = vpop.permute.xlu0 %2355
    %v2357 = vsel %vm375, %v2356, 0
    %2359 = vmatprep.subr.mxu0 0.0
    %2360 = vmatpush1.msra.mxu0 0.0
    %2361 = vmatprep.subr.mxu0 0.0
    %2362 = vmatpush1.msra.mxu0 0.0
    %2363 = vmatprep.subr.mxu0 0.0
    %2364 = vmatpush1.msra.mxu0 0.0
    %2365 = vmatprep.subr.mxu0 0.0
    %2366 = vmatpush1.msra.mxu0 0.0
    %2367 = vmatprep.subr.mxu0 0.0
    %2368 = vmatpush1.msra.mxu0 0.0
    %2369 = vmatprep.subr.mxu0 0.0
    %2370 = vmatpush1.msra.mxu0 0.0
    %2371 = vmatprep.subr.mxu0 0.0
    %2372 = vmatpush1.msra.mxu0 0.0
    %2373 = vmatprep.subr.mxu0 0.0
    %2374 = vmatpush1.msra.mxu0 0.0
    %2375 = vmatprep.subr.mxu0 %v1584
    %2376 = vmatpush1.msra.mxu0 %v1583
    %2377 = vmatprep.subr.mxu0 %v1582
    %2378 = vmatpush1.msra.mxu0 %v1581
    %2379 = vmatprep.subr.mxu0 %v1580
    %2380 = vmatpush1.msra.mxu0 %v1579
    %2381 = vmatprep.subr.mxu0 %v1578
    %2382 = vmatpush1.msra.mxu0 %v1577
    %2383 = vmatprep.subr.mxu0 %v1576
    %2384 = vmatpush1.msra.mxu0 %v1575
    %2385 = vmatprep.subr.mxu0 %v1574
    %2386 = vmatpush1.msra.mxu0 %v1573
    %2387 = vmatprep.subr.mxu0 %v1572
    %2388 = vmatpush1.msra.mxu0 %v1571
    %2389 = vmatprep.subr.mxu0 %v1570
    %2390 = vmatpush1.msra.mxu0 %v1569
    %2391 = vmatprep.subr.mxu0 0.0
    %2392 = vmatpush2.msra.mxu0 0.0
    %2393 = vmatprep.subr.mxu0 0.0
    %2394 = vmatpush2.msra.mxu0 0.0
    %2395 = vmatprep.subr.mxu0 0.0
    %2396 = vmatpush2.msra.mxu0 0.0
    %2397 = vmatprep.subr.mxu0 0.0
    %2398 = vmatpush2.msra.mxu0 0.0
    %2399 = vmatprep.subr.mxu0 0.0
    %2400 = vmatpush2.msra.mxu0 0.0
    %2401 = vmatprep.subr.mxu0 0.0
    %2402 = vmatpush2.msra.mxu0 0.0
    %2403 = vmatprep.subr.mxu0 0.0
    %2404 = vmatpush2.msra.mxu0 0.0
    %2405 = vmatprep.subr.mxu0 0.0
    %2406 = vmatpush2.msra.mxu0 0.0
    %2407 = vmatprep.subr.mxu0 0.0
    %2408 = vmatpush2.msra.mxu0 0.0
    %2409 = vmatprep.subr.mxu0 0.0
    %2410 = vmatpush2.msra.mxu0 0.0
    %2411 = vmatprep.subr.mxu0 0.0
    %2412 = vmatpush2.msra.mxu0 0.0
    %2413 = vmatprep.subr.mxu0 0.0
    %2414 = vmatpush2.msra.mxu0 0.0
    %2415 = vmatprep.subr.mxu0 0.0
    %2416 = vmatpush2.msra.mxu0 0.0
    %2417 = vmatprep.subr.mxu0 0.0
    %2418 = vmatpush2.msra.mxu0 0.0
    %2419 = vmatprep.subr.mxu0 0.0
    %2420 = vmatpush2.msra.mxu0 0.0
    %2421 = vmatprep.subr.mxu0 0.0
    %2422 = vmatpush2.msra.mxu0 0.0
    %2423 = vmatprep.mubr.f32.mxu0 0.0
    %2424 = vmatmul.mubr.f32.gmra.mxu0 %v2357
    %v2425 = vpop.f32.mrf.mxu0
    %v2426 = vadd.f32 0.0, %v2425
    %v2427 = vpop.f32.mrf.mxu0
    %v2428 = vadd.f32 0.0, %v2427
    %2429 = vdwg.mxu0
    %v2430 = vadd.f32 %v2352, %v2426
    %v2431 = vadd.f32 %v2353, %v2428
    %v2432 = vxor.u32 %v2430, 2147483648
    %v2433 = vmul.f32 %v2432, 1.442695
    %v2434 = vpow.pop %v2433
    %v2435 = vadd.f32 %v2434, 1.0
    %v2436 = vrcp.pop %v2435
    %v2437 = vmul.f32 1.0, %v2436
    %v2438 = vtanh.pop %v2431
    %v2439 = vxor.u32 %v2431, 2147483648
    %v2440 = vmul.f32 %v2439, 1.442695
    %v2441 = vpow.pop %v2440
    %v2442 = vadd.f32 %v2441, 1.0
    %v2443 = vrcp.pop %v2442
    %v2444 = vmul.f32 1.0, %v2443
    %v2445 = vmul.f32 %v2437, %v2349
    %v2446 = vmul.f32 %v2437, %v2438
    %2448 = vrot.lane.b32.xlu0 %v2446, 64
    %v2449 = vpop.permute.xlu0 %2448
    %v2451 = vadd.f32 %v2445, %v2449
    %v2452 = vtanh.pop %v2451
    %v2453 = vmul.f32 %v2444, %v2452
    %v2454 = vsel %vm352, %v1693, %v1686
    %v2455 = vsel %vm353, %v1696, %v1688
    %2457 = vrot.lane.b32.xlu0 %v2453, 64
    %v2458 = vpop.permute.xlu0 %2457
    %v2459 = vsel %vm375, %v2458, 0
    %2461 = vmatprep.subr.mxu0 0.0
    %2462 = vmatpush1.msra.mxu0 0.0
    %2463 = vmatprep.subr.mxu0 0.0
    %2464 = vmatpush1.msra.mxu0 0.0
    %2465 = vmatprep.subr.mxu0 0.0
    %2466 = vmatpush1.msra.mxu0 0.0
    %2467 = vmatprep.subr.mxu0 0.0
    %2468 = vmatpush1.msra.mxu0 0.0
    %2469 = vmatprep.subr.mxu0 0.0
    %2470 = vmatpush1.msra.mxu0 0.0
    %2471 = vmatprep.subr.mxu0 0.0
    %2472 = vmatpush1.msra.mxu0 0.0
    %2473 = vmatprep.subr.mxu0 0.0
    %2474 = vmatpush1.msra.mxu0 0.0
    %2475 = vmatprep.subr.mxu0 0.0
    %2476 = vmatpush1.msra.mxu0 0.0
    %2477 = vmatprep.subr.mxu0 %v1584
    %2478 = vmatpush1.msra.mxu0 %v1583
    %2479 = vmatprep.subr.mxu0 %v1582
    %2480 = vmatpush1.msra.mxu0 %v1581
    %2481 = vmatprep.subr.mxu0 %v1580
    %2482 = vmatpush1.msra.mxu0 %v1579
    %2483 = vmatprep.subr.mxu0 %v1578
    %2484 = vmatpush1.msra.mxu0 %v1577
    %2485 = vmatprep.subr.mxu0 %v1576
    %2486 = vmatpush1.msra.mxu0 %v1575
    %2487 = vmatprep.subr.mxu0 %v1574
    %2488 = vmatpush1.msra.mxu0 %v1573
    %2489 = vmatprep.subr.mxu0 %v1572
    %2490 = vmatpush1.msra.mxu0 %v1571
    %2491 = vmatprep.subr.mxu0 %v1570
    %2492 = vmatpush1.msra.mxu0 %v1569
    %2493 = vmatprep.subr.mxu0 0.0
    %2494 = vmatpush2.msra.mxu0 0.0
    %2495 = vmatprep.subr.mxu0 0.0
    %2496 = vmatpush2.msra.mxu0 0.0
    %2497 = vmatprep.subr.mxu0 0.0
    %2498 = vmatpush2.msra.mxu0 0.0
    %2499 = vmatprep.subr.mxu0 0.0
    %2500 = vmatpush2.msra.mxu0 0.0
    %2501 = vmatprep.subr.mxu0 0.0
    %2502 = vmatpush2.msra.mxu0 0.0
    %2503 = vmatprep.subr.mxu0 0.0
    %2504 = vmatpush2.msra.mxu0 0.0
    %2505 = vmatprep.subr.mxu0 0.0
    %2506 = vmatpush2.msra.mxu0 0.0
    %2507 = vmatprep.subr.mxu0 0.0
    %2508 = vmatpush2.msra.mxu0 0.0
    %2509 = vmatprep.subr.mxu0 0.0
    %2510 = vmatpush2.msra.mxu0 0.0
    %2511 = vmatprep.subr.mxu0 0.0
    %2512 = vmatpush2.msra.mxu0 0.0
    %2513 = vmatprep.subr.mxu0 0.0
    %2514 = vmatpush2.msra.mxu0 0.0
    %2515 = vmatprep.subr.mxu0 0.0
    %2516 = vmatpush2.msra.mxu0 0.0
    %2517 = vmatprep.subr.mxu0 0.0
    %2518 = vmatpush2.msra.mxu0 0.0
    %2519 = vmatprep.subr.mxu0 0.0
    %2520 = vmatpush2.msra.mxu0 0.0
    %2521 = vmatprep.subr.mxu0 0.0
    %2522 = vmatpush2.msra.mxu0 0.0
    %2523 = vmatprep.subr.mxu0 0.0
    %2524 = vmatpush2.msra.mxu0 0.0
    %2525 = vmatprep.mubr.f32.mxu0 0.0
    %2526 = vmatmul.mubr.f32.gmra.mxu0 %v2459
    %v2527 = vpop.f32.mrf.mxu0
    %v2528 = vadd.f32 0.0, %v2527
    %v2529 = vpop.f32.mrf.mxu0
    %v2530 = vadd.f32 0.0, %v2529
    %2531 = vdwg.mxu0
    %v2532 = vadd.f32 %v2454, %v2528
    %v2533 = vadd.f32 %v2455, %v2530
    %v2534 = vxor.u32 %v2532, 2147483648
    %v2535 = vmul.f32 %v2534, 1.442695
    %v2536 = vpow.pop %v2535
    %v2537 = vadd.f32 %v2536, 1.0
    %v2538 = vrcp.pop %v2537
    %v2539 = vmul.f32 1.0, %v2538
    %v2540 = vtanh.pop %v2533
    %v2541 = vxor.u32 %v2533, 2147483648
    %v2542 = vmul.f32 %v2541, 1.442695
    %v2543 = vpow.pop %v2542
    %v2544 = vadd.f32 %v2543, 1.0
    %v2545 = vrcp.pop %v2544
    %v2546 = vmul.f32 1.0, %v2545
    %v2547 = vmul.f32 %v2539, %v2451
    %v2548 = vmul.f32 %v2539, %v2540
    %2550 = vrot.lane.b32.xlu0 %v2548, 64
    %v2551 = vpop.permute.xlu0 %2550
    %v2553 = vadd.f32 %v2547, %v2551
    %v2554 = vtanh.pop %v2553
    %v2555 = vmul.f32 %v2546, %v2554
    %v2557 = vunpack.c.l.s4 1966171168
    %v2558 = vunpack.c.0.s8 %v2557
    %v2559 = vlaneseq
    %v2560 = vshrl.u32 %v2559, 7
    %v2561 = vsub.s32 %v2558, %v2560
    %v2562 = vrot.slane %v1795, %v2561
    %v2563 = vcombine.high %v2562, %v2562
    %v2565 = vunpack.c.l.s4 1966171168
    %v2566 = vunpack.c.0.s8 %v2565
    %v2567 = vlaneseq
    %v2568 = vshrl.u32 %v2567, 7
    %v2569 = vsub.s32 %v2566, %v2568
    %v2570 = vrot.slane %v2562, %v2569
    %v2572 = vunpack.c.l.s4 1966171168
    %v2573 = vunpack.c.0.s8 %v2572
    %v2574 = vlaneseq
    %v2575 = vshrl.u32 %v2574, 7
    %v2576 = vsub.s32 %v2573, %v2575
    %v2577 = vrot.slane %v2563, %v2576
    %v2581 = vunpack.c.l.s4 1966171168
    %v2582 = vunpack.c.0.s8 %v2581
    %v2583 = vlaneseq
    %v2584 = vshrl.u32 %v2583, 7
    %v2585 = vsub.s32 %v2582, %v2584
    %v2586 = vrot.slane %v1911, %v2585
    %v2587 = vcombine.high %v2586, %v2586
    %v2589 = vunpack.c.l.s4 1966171168
    %v2590 = vunpack.c.0.s8 %v2589
    %v2591 = vlaneseq
    %v2592 = vshrl.u32 %v2591, 7
    %v2593 = vsub.s32 %v2590, %v2592
    %v2594 = vrot.slane %v2586, %v2593
    %v2596 = vunpack.c.l.s4 1966171168
    %v2597 = vunpack.c.0.s8 %v2596
    %v2598 = vlaneseq
    %v2599 = vshrl.u32 %v2598, 7
    %v2600 = vsub.s32 %v2597, %v2599
    %v2601 = vrot.slane %v2587, %v2600
    %v2603 = vunpack.c.l.s4 1966171168
    %v2604 = vunpack.c.0.s8 %v2603
    %v2605 = vlaneseq
    %v2606 = vshrl.u32 %v2605, 7
    %v2607 = vsub.s32 %v2604, %v2606
    %v2608 = vrot.slane %v2029, %v2607
    %v2609 = vcombine.high %v2608, %v2608
    %v2611 = vunpack.c.l.s4 1966171168
    %v2612 = vunpack.c.0.s8 %v2611
    %v2613 = vlaneseq
    %v2614 = vshrl.u32 %v2613, 7
    %v2615 = vsub.s32 %v2612, %v2614
    %v2616 = vrot.slane %v2608, %v2615
    %v2618 = vunpack.c.l.s4 1966171168
    %v2619 = vunpack.c.0.s8 %v2618
    %v2620 = vlaneseq
    %v2621 = vshrl.u32 %v2620, 7
    %v2622 = vsub.s32 %v2619, %v2621
    %v2623 = vrot.slane %v2609, %v2622
    %v2625 = vunpack.c.l.s4 1966171168
    %v2626 = vunpack.c.0.s8 %v2625
    %v2627 = vlaneseq
    %v2628 = vshrl.u32 %v2627, 7
    %v2629 = vsub.s32 %v2626, %v2628
    %v2630 = vrot.slane %v2147, %v2629
    %v2631 = vcombine.high %v2630, %v2630
    %v2633 = vunpack.c.l.s4 1966171168
    %v2634 = vunpack.c.0.s8 %v2633
    %v2635 = vlaneseq
    %v2636 = vshrl.u32 %v2635, 7
    %v2637 = vsub.s32 %v2634, %v2636
    %v2638 = vrot.slane %v2630, %v2637
    %v2640 = vunpack.c.l.s4 1966171168
    %v2641 = vunpack.c.0.s8 %v2640
    %v2642 = vlaneseq
    %v2643 = vshrl.u32 %v2642, 7
    %v2644 = vsub.s32 %v2641, %v2643
    %v2645 = vrot.slane %v2631, %v2644
    %v2647 = vunpack.c.l.s4 1966171168
    %v2648 = vunpack.c.0.s8 %v2647
    %v2649 = vlaneseq
    %v2650 = vshrl.u32 %v2649, 7
    %v2651 = vsub.s32 %v2648, %v2650
    %v2652 = vrot.slane %v2249, %v2651
    %v2653 = vcombine.high %v2652, %v2652
    %v2655 = vunpack.c.l.s4 1966171168
    %v2656 = vunpack.c.0.s8 %v2655
    %v2657 = vlaneseq
    %v2658 = vshrl.u32 %v2657, 7
    %v2659 = vsub.s32 %v2656, %v2658
    %v2660 = vrot.slane %v2652, %v2659
    %v2662 = vunpack.c.l.s4 1966171168
    %v2663 = vunpack.c.0.s8 %v2662
    %v2664 = vlaneseq
    %v2665 = vshrl.u32 %v2664, 7
    %v2666 = vsub.s32 %v2663, %v2665
    %v2667 = vrot.slane %v2653, %v2666
    %v2669 = vunpack.c.l.s4 1966171168
    %v2670 = vunpack.c.0.s8 %v2669
    %v2671 = vlaneseq
    %v2672 = vshrl.u32 %v2671, 7
    %v2673 = vsub.s32 %v2670, %v2672
    %v2674 = vrot.slane %v2351, %v2673
    %v2675 = vcombine.high %v2674, %v2674
    %v2677 = vunpack.c.l.s4 1966171168
    %v2678 = vunpack.c.0.s8 %v2677
    %v2679 = vlaneseq
    %v2680 = vshrl.u32 %v2679, 7
    %v2681 = vsub.s32 %v2678, %v2680
    %v2682 = vrot.slane %v2674, %v2681
    %v2684 = vunpack.c.l.s4 1966171168
    %v2685 = vunpack.c.0.s8 %v2684
    %v2686 = vlaneseq
    %v2687 = vshrl.u32 %v2686, 7
    %v2688 = vsub.s32 %v2685, %v2687
    %v2689 = vrot.slane %v2675, %v2688
    %v2691 = vunpack.c.l.s4 1966171168
    %v2692 = vunpack.c.0.s8 %v2691
    %v2693 = vlaneseq
    %v2694 = vshrl.u32 %v2693, 7
    %v2695 = vsub.s32 %v2692, %v2694
    %v2696 = vrot.slane %v2453, %v2695
    %v2697 = vcombine.high %v2696, %v2696
    %v2699 = vunpack.c.l.s4 1966171168
    %v2700 = vunpack.c.0.s8 %v2699
    %v2701 = vlaneseq
    %v2702 = vshrl.u32 %v2701, 7
    %v2703 = vsub.s32 %v2700, %v2702
    %v2704 = vrot.slane %v2696, %v2703
    %v2706 = vunpack.c.l.s4 1966171168
    %v2707 = vunpack.c.0.s8 %v2706
    %v2708 = vlaneseq
    %v2709 = vshrl.u32 %v2708, 7
    %v2710 = vsub.s32 %v2707, %v2709
    %v2711 = vrot.slane %v2697, %v2710
    %v2714 = vunpack.c.l.s4 1966171168
    %v2715 = vunpack.c.0.s8 %v2714
    %v2716 = vlaneseq
    %v2717 = vshrl.u32 %v2716, 7
    %v2718 = vsub.s32 %v2715, %v2717
    %v2719 = vrot.slane %v2555, %v2718
    %v2720 = vcombine.high %v2719, %v2719
    %v2722 = vunpack.c.l.s4 1966171168
    %v2723 = vunpack.c.0.s8 %v2722
    %v2724 = vlaneseq
    %v2725 = vshrl.u32 %v2724, 7
    %v2726 = vsub.s32 %v2723, %v2725
    %v2727 = vrot.slane %v2719, %v2726
    %v2729 = vunpack.c.l.s4 1966171168
    %v2730 = vunpack.c.0.s8 %v2729
    %v2731 = vlaneseq
    %v2732 = vshrl.u32 %v2731, 7
    %v2733 = vsub.s32 %v2730, %v2732
    %v2734 = vrot.slane %v2720, %v2733
    %v2735 = vlaneseq
    %v2736 = vshrl.u32 %v2735, 7
    %v2737 = vsub.s32 0, %v2736
    %v2738 = vrot.slane %v2594, %v2737
    %v2739 = vlaneseq
    %v2740 = vshrl.u32 %v2739, 7
    %v2741 = vsub.s32 0, %v2740
    %v2742 = vrot.slane %v2601, %v2741
    %v2745 = vlaneseq
    %v2746 = vshrl.u32 %v2745, 7
    %v2747 = vsub.s32 0, %v2746
    %v2748 = vrot.slane %v2616, %v2747
    %v2749 = vlaneseq
    %v2750 = vshrl.u32 %v2749, 7
    %v2751 = vsub.s32 0, %v2750
    %v2752 = vrot.slane %v2623, %v2751
    %v2755 = vlaneseq
    %v2756 = vshrl.u32 %v2755, 7
    %v2757 = vsub.s32 0, %v2756
    %v2758 = vrot.slane %v2638, %v2757
    %v2759 = vlaneseq
    %v2760 = vshrl.u32 %v2759, 7
    %v2761 = vsub.s32 0, %v2760
    %v2762 = vrot.slane %v2645, %v2761
    %v2765 = vlaneseq
    %v2766 = vshrl.u32 %v2765, 7
    %v2767 = vsub.s32 0, %v2766
    %v2768 = vrot.slane %v2660, %v2767
    %v2769 = vlaneseq
    %v2770 = vshrl.u32 %v2769, 7
    %v2771 = vsub.s32 0, %v2770
    %v2772 = vrot.slane %v2667, %v2771
    %v2775 = vlaneseq
    %v2776 = vshrl.u32 %v2775, 7
    %v2777 = vsub.s32 0, %v2776
    %v2778 = vrot.slane %v2682, %v2777
    %v2779 = vlaneseq
    %v2780 = vshrl.u32 %v2779, 7
    %v2781 = vsub.s32 0, %v2780
    %v2782 = vrot.slane %v2689, %v2781
    %v2785 = vlaneseq
    %v2786 = vshrl.u32 %v2785, 7
    %v2787 = vsub.s32 0, %v2786
    %v2788 = vrot.slane %v2704, %v2787
    %v2789 = vlaneseq
    %v2790 = vshrl.u32 %v2789, 7
    %v2791 = vsub.s32 0, %v2790
    %v2792 = vrot.slane %v2711, %v2791
    %v2795 = vlaneseq
    %v2796 = vshrl.u32 %v2795, 7
    %v2797 = vsub.s32 0, %v2796
    %v2798 = vrot.slane %v2727, %v2797
    %v2799 = vlaneseq
    %v2800 = vshrl.u32 %v2799, 7
    %v2801 = vsub.s32 0, %v2800
    %v2802 = vrot.slane %v2734, %v2801
    %v2805 = vsel %vm1483, %v2570, %v2738
    %v2806 = vsel %vm1483, %v2577, %v2742
    %v2807 = vsel %vm1486, %v2805, %v2748
    %v2808 = vsel %vm1486, %v2806, %v2752
    %v2809 = vsel %vm1489, %v2807, %v2758
    %v2810 = vsel %vm1489, %v2808, %v2762
    %v2811 = vsel %vm1492, %v2809, %v2768
    %v2812 = vsel %vm1492, %v2810, %v2772
    %v2813 = vsel %vm1495, %v2811, %v2778
    %v2814 = vsel %vm1495, %v2812, %v2782
    %v2815 = vsel %vm1498, %v2813, %v2788
    %v2816 = vsel %vm1498, %v2814, %v2792
    %v2817 = vsel %vm1501, %v2815, %v2798
    %v2818 = vsel %vm1501, %v2816, %v2802
    %v2821 = vlaneseq
    %v2822 = vshrl.u32 %v2821, 7
    %v2823 = vsub.s32 0, %v2822
    %v2824 = vrot.slane %v2570, %v2823
    %v2825 = vlaneseq
    %v2826 = vshrl.u32 %v2825, 7
    %v2827 = vsub.s32 0, %v2826
    %v2828 = vrot.slane %v2577, %v2827
    %v2831 = vsel %vm1483, %v2727, %v2788
    %v2832 = vsel %vm1483, %v2734, %v2792
    %v2833 = vsel %vm1486, %v2831, %v2778
    %v2834 = vsel %vm1486, %v2832, %v2782
    %v2835 = vsel %vm1489, %v2833, %v2768
    %v2836 = vsel %vm1489, %v2834, %v2772
    %v2837 = vsel %vm1492, %v2835, %v2758
    %v2838 = vsel %vm1492, %v2836, %v2762
    %v2839 = vsel %vm1495, %v2837, %v2748
    %v2840 = vsel %vm1495, %v2838, %v2752
    %v2841 = vsel %vm1498, %v2839, %v2738
    %v2842 = vsel %vm1498, %v2840, %v2742
    %v2843 = vsel %vm1501, %v2841, %v2824
    %v2844 = vsel %vm1501, %v2842, %v2828
    %2847 = vrot.lane.b32.xlu0 %v2817, 64
    %v2848 = vpop.permute.xlu0 %2847
    %2849 = vrot.lane.b32.xlu0 %v2818, 64
    %v2850 = vpop.permute.xlu0 %2849
    %2855 = vrot.lane.b32.xlu0 %v2843, 64
    %v2856 = vpop.permute.xlu0 %2855
    %2857 = vrot.lane.b32.xlu0 %v2844, 64
    %v2858 = vpop.permute.xlu0 %2857
    %v2861 = vsel %vm1546, %v2848, %v2856
    %v2862 = vsel %vm1546, %v2850, %v2858
    %s2863 = smul.u32 104, 1
    %s2864 = sshll.u32 %s2863, 4
    %2865 = dma.done %s39, %s2864
    %v2866 = vld [vmem:[#allocation3] sm:$0xff]
    %v2867 = vld [vmem:[#allocation3 + $0x8] sm:$0xff]
    %v2868 = vld [vmem:[#allocation3 + $0x10] sm:$0xff]
    %v2869 = vld [vmem:[#allocation3 + $0x18] sm:$0xff]
    %v2870 = vld [vmem:[#allocation3 + $0x20] sm:$0xff]
    %v2871 = vld [vmem:[#allocation3 + $0x28] sm:$0xff]
    %v2872 = vld [vmem:[#allocation3 + $0x30] sm:$0xff]
    %v2873 = vld [vmem:[#allocation3 + $0x38] sm:$0xff]
    %v2874 = vld [vmem:[#allocation3 + $0x40] sm:$0x7f]
    %v2875 = vld [vmem:[#allocation3 + $0x48] sm:$0x1]
    %v2876 = vld [vmem:[#allocation3 + $0x49] sm:$0x1]
    %v2877 = vlaneseq
    %v2878 = vshrl.u32 %v2877, 7
    %v2879 = vsub.s32 0, %v2878
    %v2880 = vrot.slane %v2875, %v2879
    %v2882 = vsel %vm375, %v2861, 0
    %v2885 = vsel %vm375, %v2862, 0
    %2887 = vmatprep.subr.mxu0 0.0
    %2888 = vmatpush1.msra.mxu0 0.0
    %2889 = vmatprep.subr.mxu0 0.0
    %2890 = vmatpush1.msra.mxu0 0.0
    %2891 = vmatprep.subr.mxu0 0.0
    %2892 = vmatpush1.msra.mxu0 0.0
    %2893 = vmatprep.subr.mxu0 0.0
    %2894 = vmatpush1.msra.mxu0 0.0
    %2895 = vmatprep.subr.mxu0 0.0
    %2896 = vmatpush1.msra.mxu0 0.0
    %2897 = vmatprep.subr.mxu0 0.0
    %2898 = vmatpush1.msra.mxu0 0.0
    %2899 = vmatprep.subr.mxu0 0.0
    %2900 = vmatpush1.msra.mxu0 0.0
    %2901 = vmatprep.subr.mxu0 0.0
    %2902 = vmatpush1.msra.mxu0 0.0
    %2903 = vmatprep.subr.mxu0 0.0
    %2904 = vmatpush1.msra.mxu0 %v2873
    %2905 = vmatprep.subr.mxu0 0.0
    %2906 = vmatpush1.msra.mxu0 %v2872
    %2907 = vmatprep.subr.mxu0 0.0
    %2908 = vmatpush1.msra.mxu0 %v2871
    %2909 = vmatprep.subr.mxu0 0.0
    %2910 = vmatpush1.msra.mxu0 %v2870
    %2911 = vmatprep.subr.mxu0 0.0
    %2912 = vmatpush1.msra.mxu0 %v2869
    %2913 = vmatprep.subr.mxu0 0.0
    %2914 = vmatpush1.msra.mxu0 %v2868
    %2915 = vmatprep.subr.mxu0 0.0
    %2916 = vmatpush1.msra.mxu0 %v2867
    %2917 = vmatprep.subr.mxu0 0.0
    %2918 = vmatpush1.msra.mxu0 %v2866
    %2919 = vmatprep.subr.mxu0 0.0
    %2920 = vmatpush2.msra.mxu0 0.0
    %2921 = vmatprep.subr.mxu0 0.0
    %2922 = vmatpush2.msra.mxu0 0.0
    %2923 = vmatprep.subr.mxu0 0.0
    %2924 = vmatpush2.msra.mxu0 0.0
    %2925 = vmatprep.subr.mxu0 0.0
    %2926 = vmatpush2.msra.mxu0 0.0
    %2927 = vmatprep.subr.mxu0 0.0
    %2928 = vmatpush2.msra.mxu0 0.0
    %2929 = vmatprep.subr.mxu0 0.0
    %2930 = vmatpush2.msra.mxu0 0.0
    %2931 = vmatprep.subr.mxu0 0.0
    %2932 = vmatpush2.msra.mxu0 0.0
    %2933 = vmatprep.subr.mxu0 0.0
    %2934 = vmatpush2.msra.mxu0 0.0
    %2935 = vmatprep.subr.mxu0 0.0
    %2936 = vmatpush2.msra.mxu0 0.0
    %2937 = vmatprep.subr.mxu0 0.0
    %2938 = vmatpush2.msra.mxu0 0.0
    %2939 = vmatprep.subr.mxu0 0.0
    %2940 = vmatpush2.msra.mxu0 0.0
    %2941 = vmatprep.subr.mxu0 0.0
    %2942 = vmatpush2.msra.mxu0 0.0
    %2943 = vmatprep.subr.mxu0 0.0
    %2944 = vmatpush2.msra.mxu0 0.0
    %2945 = vmatprep.subr.mxu0 0.0
    %2946 = vmatpush2.msra.mxu0 0.0
    %2947 = vmatprep.subr.mxu0 0.0
    %2948 = vmatpush2.msra.mxu0 0.0
    %2949 = vmatprep.subr.mxu0 0.0
    %2950 = vmatpush2.msra.mxu0 0.0
    %2951 = vmatprep.mubr.f32.mxu0 0.0
    %2952 = vmatmul.mubr.f32.gmra.mxu0 %v2882
    %v2953 = vpop.f32.mrf.mxu0
    %v2954 = vadd.f32 %v2880, %v2953
    %v2955 = vpop.f32.mrf.mxu0
    %2956 = vmatprep.mubr.f32.mxu0 0.0
    %2957 = vmatmul.mubr.f32.gmra.mxu0 %v2885
    %v2958 = vpop.f32.mrf.mxu0
    %v2959 = vadd.f32 %v2880, %v2958
    %v2960 = vpop.f32.mrf.mxu0
    %2961 = vdwg.mxu0
    %v2962 = vlaneseq
    %v2963 = vshrl.u32 %v2962, 7
    %v2964 = vsub.s32 0, %v2963
    %v2965 = vrot.slane %v2876, %v2964
    %vm2966 = vcmask 56320
    %v2967 = vsel %vm2966, 0.0, 0
    %v2970 = vsel %vm1501, %v2874, 0
    %2972 = vmatprep.subr.mxu0 0.0
    %2973 = vmatpush1.msra.mxu0 0.0
    %2974 = vmatprep.subr.mxu0 0.0
    %2975 = vmatpush1.msra.mxu0 0.0
    %2976 = vmatprep.subr.mxu0 0.0
    %2977 = vmatpush1.msra.mxu0 0.0
    %2978 = vmatprep.subr.mxu0 0.0
    %2979 = vmatpush1.msra.mxu0 0.0
    %2980 = vmatprep.subr.mxu0 0.0
    %2981 = vmatpush1.msra.mxu0 0.0
    %2982 = vmatprep.subr.mxu0 0.0
    %2983 = vmatpush1.msra.mxu0 0.0
    %2984 = vmatprep.subr.mxu0 0.0
    %2985 = vmatpush1.msra.mxu0 0.0
    %2986 = vmatprep.subr.mxu0 0.0
    %2987 = vmatpush1.msra.mxu0 0.0
    %2988 = vmatprep.subr.mxu0 0.0
    %2989 = vmatpush1.msra.mxu0 0.0
    %2990 = vmatprep.subr.mxu0 0.0
    %2991 = vmatpush1.msra.mxu0 0.0
    %2992 = vmatprep.subr.mxu0 0.0
    %2993 = vmatpush1.msra.mxu0 0.0
    %2994 = vmatprep.subr.mxu0 0.0
    %2995 = vmatpush1.msra.mxu0 0.0
    %2996 = vmatprep.subr.mxu0 0.0
    %2997 = vmatpush1.msra.mxu0 0.0
    %2998 = vmatprep.subr.mxu0 0.0
    %2999 = vmatpush1.msra.mxu0 0.0
    %3000 = vmatprep.subr.mxu0 0.0
    %3001 = vmatpush1.msra.mxu0 0.0
    %3002 = vmatprep.subr.mxu0 0.0
    %3003 = vmatpush1.msra.mxu0 %v2970
    %3004 = vmatprep.subr.mxu0 0.0
    %3005 = vmatpush2.msra.mxu0 0.0
    %3006 = vmatprep.subr.mxu0 0.0
    %3007 = vmatpush2.msra.mxu0 0.0
    %3008 = vmatprep.subr.mxu0 0.0
    %3009 = vmatpush2.msra.mxu0 0.0
    %3010 = vmatprep.subr.mxu0 0.0
    %3011 = vmatpush2.msra.mxu0 0.0
    %3012 = vmatprep.subr.mxu0 0.0
    %3013 = vmatpush2.msra.mxu0 0.0
    %3014 = vmatprep.subr.mxu0 0.0
    %3015 = vmatpush2.msra.mxu0 0.0
    %3016 = vmatprep.subr.mxu0 0.0
    %3017 = vmatpush2.msra.mxu0 0.0
    %3018 = vmatprep.subr.mxu0 0.0
    %3019 = vmatpush2.msra.mxu0 0.0
    %3020 = vmatprep.subr.mxu0 0.0
    %3021 = vmatpush2.msra.mxu0 0.0
    %3022 = vmatprep.subr.mxu0 0.0
    %3023 = vmatpush2.msra.mxu0 0.0
    %3024 = vmatprep.subr.mxu0 0.0
    %3025 = vmatpush2.msra.mxu0 0.0
    %3026 = vmatprep.subr.mxu0 0.0
    %3027 = vmatpush2.msra.mxu0 0.0
    %3028 = vmatprep.subr.mxu0 0.0
    %3029 = vmatpush2.msra.mxu0 0.0
    %3030 = vmatprep.subr.mxu0 0.0
    %3031 = vmatpush2.msra.mxu0 0.0
    %3032 = vmatprep.subr.mxu0 0.0
    %3033 = vmatpush2.msra.mxu0 0.0
    %3034 = vmatprep.subr.mxu0 0.0
    %3035 = vmatpush2.msra.mxu0 0.0
    %3036 = vmatprep.mubr.f32.mxu0 0.0
    %3037 = vmatmul.mubr.f32.gmra.mxu0 %v2967
    %v3038 = vpop.f32.mrf.mxu0
    %v3039 = vadd.f32 %v2965, %v3038
    %v3040 = vpop.f32.mrf.mxu0
    %3041 = vdwg.mxu0
    %v3043 = vrot.slane %v3039, 1
    %v3046 = vadd.f32 %v2954, %v3039
    %v3047 = vadd.f32 %v2959, %v3043
    %v3048 = vxor.u32 %v3046, 2147483648
    %v3049 = vxor.u32 %v3047, 2147483648
    %v3050 = vmul.f32 %v3048, 1.442695
    %v3051 = vpow.pop %v3050
    %v3052 = vmul.f32 %v3049, 1.442695
    %v3053 = vpow.pop %v3052
    %v3054 = vadd.f32 %v3051, 1.0
    %v3055 = vadd.f32 %v3053, 1.0
    %v3056 = vrcp.pop %v3054
    %v3057 = vmul.f32 1.0, %v3056
    %v3058 = vrcp.pop %v3055
    %v3059 = vmul.f32 1.0, %v3058
    %3060 = vrot.lane.b32.xlu0 %v3039, 114
    %v3061 = vpop.permute.xlu0 %3060
    %3062 = vrot.lane.b32.xlu0 %v3043, 114
    %v3063 = vpop.permute.xlu0 %3062
    %v3066 = vmul.f32 %v3057, %v3061
    %v3067 = vmul.f32 %v3059, %v3063
    %3070 = vrot.lane.b32.xlu0 %v3066, 14
    %v3071 = vpop.permute.xlu0 %3070
    %3072 = vrot.lane.b32.xlu0 %v3067, 14
    %v3073 = vpop.permute.xlu0 %3072
    %v3076 = vadd.f32 %v2954, %v3071
    %v3077 = vadd.f32 %v2959, %v3073
    %v3078 = vtanh.pop %v3076
    %v3079 = vtanh.pop %v3077
    %v3080 = vsub.f32 1.0, %v3057
    %v3081 = vsub.f32 1.0, %v3059
    %3084 = vrot.lane.b32.xlu0 %v3078, 121
    %v3085 = vpop.permute.xlu0 %3084
    %3086 = vrot.lane.b32.xlu0 %v3079, 121
    %v3087 = vpop.permute.xlu0 %3086
    %v3090 = vmul.f32 %v3080, %v3085
    %v3091 = vmul.f32 %v3081, %v3087
    %v3092 = vmul.f32 %v3057, 0.0
    %v3093 = vmul.f32 %v3059, 0.0
    %v3094 = vadd.f32 %v3090, %v3092
    %v3095 = vadd.f32 %v3091, %v3093
    %v3098 = vrot.slane %v3095, 7
    %v3099 = vsel %vm359, %v3098, %v3094
    %3100 = vrot.lane.b32.xlu0 %v3099, 121
    %v3101 = vpop.permute.xlu0 %3100
    %v3102 = vsel %vm2966, %v3101, 0
    %3104 = vmatprep.subr.mxu0 0.0
    %3105 = vmatpush1.msra.mxu0 0.0
    %3106 = vmatprep.subr.mxu0 0.0
    %3107 = vmatpush1.msra.mxu0 0.0
    %3108 = vmatprep.subr.mxu0 0.0
    %3109 = vmatpush1.msra.mxu0 0.0
    %3110 = vmatprep.subr.mxu0 0.0
    %3111 = vmatpush1.msra.mxu0 0.0
    %3112 = vmatprep.subr.mxu0 0.0
    %3113 = vmatpush1.msra.mxu0 0.0
    %3114 = vmatprep.subr.mxu0 0.0
    %3115 = vmatpush1.msra.mxu0 0.0
    %3116 = vmatprep.subr.mxu0 0.0
    %3117 = vmatpush1.msra.mxu0 0.0
    %3118 = vmatprep.subr.mxu0 0.0
    %3119 = vmatpush1.msra.mxu0 0.0
    %3120 = vmatprep.subr.mxu0 0.0
    %3121 = vmatpush1.msra.mxu0 0.0
    %3122 = vmatprep.subr.mxu0 0.0
    %3123 = vmatpush1.msra.mxu0 0.0
    %3124 = vmatprep.subr.mxu0 0.0
    %3125 = vmatpush1.msra.mxu0 0.0
    %3126 = vmatprep.subr.mxu0 0.0
    %3127 = vmatpush1.msra.mxu0 0.0
    %3128 = vmatprep.subr.mxu0 0.0
    %3129 = vmatpush1.msra.mxu0 0.0
    %3130 = vmatprep.subr.mxu0 0.0
    %3131 = vmatpush1.msra.mxu0 0.0
    %3132 = vmatprep.subr.mxu0 0.0
    %3133 = vmatpush1.msra.mxu0 0.0
    %3134 = vmatprep.subr.mxu0 0.0
    %3135 = vmatpush1.msra.mxu0 %v2970
    %3136 = vmatprep.subr.mxu0 0.0
    %3137 = vmatpush2.msra.mxu0 0.0
    %3138 = vmatprep.subr.mxu0 0.0
    %3139 = vmatpush2.msra.mxu0 0.0
    %3140 = vmatprep.subr.mxu0 0.0
    %3141 = vmatpush2.msra.mxu0 0.0
    %3142 = vmatprep.subr.mxu0 0.0
    %3143 = vmatpush2.msra.mxu0 0.0
    %3144 = vmatprep.subr.mxu0 0.0
    %3145 = vmatpush2.msra.mxu0 0.0
    %3146 = vmatprep.subr.mxu0 0.0
    %3147 = vmatpush2.msra.mxu0 0.0
    %3148 = vmatprep.subr.mxu0 0.0
    %3149 = vmatpush2.msra.mxu0 0.0
    %3150 = vmatprep.subr.mxu0 0.0
    %3151 = vmatpush2.msra.mxu0 0.0
    %3152 = vmatprep.subr.mxu0 0.0
    %3153 = vmatpush2.msra.mxu0 0.0
    %3154 = vmatprep.subr.mxu0 0.0
    %3155 = vmatpush2.msra.mxu0 0.0
    %3156 = vmatprep.subr.mxu0 0.0
    %3157 = vmatpush2.msra.mxu0 0.0
    %3158 = vmatprep.subr.mxu0 0.0
    %3159 = vmatpush2.msra.mxu0 0.0
    %3160 = vmatprep.subr.mxu0 0.0
    %3161 = vmatpush2.msra.mxu0 0.0
    %3162 = vmatprep.subr.mxu0 0.0
    %3163 = vmatpush2.msra.mxu0 0.0
    %3164 = vmatprep.subr.mxu0 0.0
    %3165 = vmatpush2.msra.mxu0 0.0
    %3166 = vmatprep.subr.mxu0 0.0
    %3167 = vmatpush2.msra.mxu0 0.0
    %3168 = vmatprep.mubr.f32.mxu0 0.0
    %3169 = vmatmul.mubr.f32.gmra.mxu0 %v3102
    %v3170 = vpop.f32.mrf.mxu0
    %v3171 = vadd.f32 %v2965, %v3170
    %v3172 = vpop.f32.mrf.mxu0
    %3173 = vdwg.mxu0
    %v3175 = vrot.slane %v3171, 7
    %v3178 = vadd.f32 %v2954, %v3175
    %v3179 = vadd.f32 %v2959, %v3171
    %v3180 = vxor.u32 %v3178, 2147483648
    %v3181 = vxor.u32 %v3179, 2147483648
    %v3182 = vmul.f32 %v3180, 1.442695
    %v3183 = vpow.pop %v3182
    %v3184 = vmul.f32 %v3181, 1.442695
    %v3185 = vpow.pop %v3184
    %v3186 = vadd.f32 %v3183, 1.0
    %v3187 = vadd.f32 %v3185, 1.0
    %v3188 = vrcp.pop %v3186
    %v3189 = vmul.f32 1.0, %v3188
    %v3190 = vrcp.pop %v3187
    %v3191 = vmul.f32 1.0, %v3190
    %3192 = vrot.lane.b32.xlu0 %v3175, 114
    %v3193 = vpop.permute.xlu0 %3192
    %3194 = vrot.lane.b32.xlu0 %v3171, 114
    %v3195 = vpop.permute.xlu0 %3194
    %v3198 = vmul.f32 %v3189, %v3193
    %v3199 = vmul.f32 %v3191, %v3195
    %3202 = vrot.lane.b32.xlu0 %v3198, 14
    %v3203 = vpop.permute.xlu0 %3202
    %3204 = vrot.lane.b32.xlu0 %v3199, 14
    %v3205 = vpop.permute.xlu0 %3204
    %v3208 = vadd.f32 %v2954, %v3203
    %v3209 = vadd.f32 %v2959, %v3205
    %v3210 = vtanh.pop %v3208
    %v3211 = vtanh.pop %v3209
    %v3212 = vsub.f32 1.0, %v3189
    %v3213 = vsub.f32 1.0, %v3191
    %3216 = vrot.lane.b32.xlu0 %v3210, 121
    %v3217 = vpop.permute.xlu0 %3216
    %3218 = vrot.lane.b32.xlu0 %v3211, 121
    %v3219 = vpop.permute.xlu0 %3218
    %v3222 = vmul.f32 %v3212, %v3217
    %v3223 = vmul.f32 %v3213, %v3219
    %v3224 = vrot.slane %v3094, 7
    %v3227 = vmul.f32 %v3189, %v3224
    %v3228 = vmul.f32 %v3191, %v3098
    %v3229 = vadd.f32 %v3222, %v3227
    %v3230 = vadd.f32 %v3223, %v3228
    %v3233 = vrot.slane %v3229, 1
    %v3234 = vsel %vm359, %v3230, %v3233
    %3235 = vrot.lane.b32.xlu0 %v3234, 121
    %v3236 = vpop.permute.xlu0 %3235
    %v3237 = vsel %vm2966, %v3236, 0
    %3239 = vmatprep.subr.mxu0 0.0
    %3240 = vmatpush1.msra.mxu0 0.0
    %3241 = vmatprep.subr.mxu0 0.0
    %3242 = vmatpush1.msra.mxu0 0.0
    %3243 = vmatprep.subr.mxu0 0.0
    %3244 = vmatpush1.msra.mxu0 0.0
    %3245 = vmatprep.subr.mxu0 0.0
    %3246 = vmatpush1.msra.mxu0 0.0
    %3247 = vmatprep.subr.mxu0 0.0
    %3248 = vmatpush1.msra.mxu0 0.0
    %3249 = vmatprep.subr.mxu0 0.0
    %3250 = vmatpush1.msra.mxu0 0.0
    %3251 = vmatprep.subr.mxu0 0.0
    %3252 = vmatpush1.msra.mxu0 0.0
    %3253 = vmatprep.subr.mxu0 0.0
    %3254 = vmatpush1.msra.mxu0 0.0
    %3255 = vmatprep.subr.mxu0 0.0
    %3256 = vmatpush1.msra.mxu0 0.0
    %3257 = vmatprep.subr.mxu0 0.0
    %3258 = vmatpush1.msra.mxu0 0.0
    %3259 = vmatprep.subr.mxu0 0.0
    %3260 = vmatpush1.msra.mxu0 0.0
    %3261 = vmatprep.subr.mxu0 0.0
    %3262 = vmatpush1.msra.mxu0 0.0
    %3263 = vmatprep.subr.mxu0 0.0
    %3264 = vmatpush1.msra.mxu0 0.0
    %3265 = vmatprep.subr.mxu0 0.0
    %3266 = vmatpush1.msra.mxu0 0.0
    %3267 = vmatprep.subr.mxu0 0.0
    %3268 = vmatpush1.msra.mxu0 0.0
    %3269 = vmatprep.subr.mxu0 0.0
    %3270 = vmatpush1.msra.mxu0 %v2970
    %3271 = vmatprep.subr.mxu0 0.0
    %3272 = vmatpush2.msra.mxu0 0.0
    %3273 = vmatprep.subr.mxu0 0.0
    %3274 = vmatpush2.msra.mxu0 0.0
    %3275 = vmatprep.subr.mxu0 0.0
    %3276 = vmatpush2.msra.mxu0 0.0
    %3277 = vmatprep.subr.mxu0 0.0
    %3278 = vmatpush2.msra.mxu0 0.0
    %3279 = vmatprep.subr.mxu0 0.0
    %3280 = vmatpush2.msra.mxu0 0.0
    %3281 = vmatprep.subr.mxu0 0.0
    %3282 = vmatpush2.msra.mxu0 0.0
    %3283 = vmatprep.subr.mxu0 0.0
    %3284 = vmatpush2.msra.mxu0 0.0
    %3285 = vmatprep.subr.mxu0 0.0
    %3286 = vmatpush2.msra.mxu0 0.0
    %3287 = vmatprep.subr.mxu0 0.0
    %3288 = vmatpush2.msra.mxu0 0.0
    %3289 = vmatprep.subr.mxu0 0.0
    %3290 = vmatpush2.msra.mxu0 0.0
    %3291 = vmatprep.subr.mxu0 0.0
    %3292 = vmatpush2.msra.mxu0 0.0
    %3293 = vmatprep.subr.mxu0 0.0
    %3294 = vmatpush2.msra.mxu0 0.0
    %3295 = vmatprep.subr.mxu0 0.0
    %3296 = vmatpush2.msra.mxu0 0.0
    %3297 = vmatprep.subr.mxu0 0.0
    %3298 = vmatpush2.msra.mxu0 0.0
    %3299 = vmatprep.subr.mxu0 0.0
    %3300 = vmatpush2.msra.mxu0 0.0
    %3301 = vmatprep.subr.mxu0 0.0
    %3302 = vmatpush2.msra.mxu0 0.0
    %3303 = vmatprep.mubr.f32.mxu0 0.0
    %3304 = vmatmul.mubr.f32.gmra.mxu0 %v3237
    %v3305 = vpop.f32.mrf.mxu0
    %v3306 = vadd.f32 %v2965, %v3305
    %v3307 = vpop.f32.mrf.mxu0
    %3308 = vdwg.mxu0
    %v3310 = vrot.slane %v3306, 6
    %v3311 = vrot.slane %v3306, 7
    %v3314 = vadd.f32 %v2954, %v3310
    %v3315 = vadd.f32 %v2959, %v3311
    %v3316 = vxor.u32 %v3314, 2147483648
    %v3317 = vxor.u32 %v3315, 2147483648
    %v3318 = vmul.f32 %v3316, 1.442695
    %v3319 = vpow.pop %v3318
    %v3320 = vmul.f32 %v3317, 1.442695
    %v3321 = vpow.pop %v3320
    %v3322 = vadd.f32 %v3319, 1.0
    %v3323 = vadd.f32 %v3321, 1.0
    %v3324 = vrcp.pop %v3322
    %v3325 = vmul.f32 1.0, %v3324
    %v3326 = vrcp.pop %v3323
    %v3327 = vmul.f32 1.0, %v3326
    %3328 = vrot.lane.b32.xlu0 %v3310, 114
    %v3329 = vpop.permute.xlu0 %3328
    %3330 = vrot.lane.b32.xlu0 %v3311, 114
    %v3331 = vpop.permute.xlu0 %3330
    %v3334 = vmul.f32 %v3325, %v3329
    %v3335 = vmul.f32 %v3327, %v3331
    %3338 = vrot.lane.b32.xlu0 %v3334, 14
    %v3339 = vpop.permute.xlu0 %3338
    %3340 = vrot.lane.b32.xlu0 %v3335, 14
    %v3341 = vpop.permute.xlu0 %3340
    %v3344 = vadd.f32 %v2954, %v3339
    %v3345 = vadd.f32 %v2959, %v3341
    %v3346 = vtanh.pop %v3344
    %v3347 = vtanh.pop %v3345
    %v3348 = vsub.f32 1.0, %v3325
    %v3349 = vsub.f32 1.0, %v3327
    %3352 = vrot.lane.b32.xlu0 %v3346, 121
    %v3353 = vpop.permute.xlu0 %3352
    %3354 = vrot.lane.b32.xlu0 %v3347, 121
    %v3355 = vpop.permute.xlu0 %3354
    %v3358 = vmul.f32 %v3348, %v3353
    %v3359 = vmul.f32 %v3349, %v3355
    %v3360 = vrot.slane %v3229, 7
    %v3361 = vrot.slane %v3230, 7
    %v3364 = vmul.f32 %v3325, %v3360
    %v3365 = vmul.f32 %v3327, %v3361
    %v3366 = vadd.f32 %v3358, %v3364
    %v3367 = vadd.f32 %v3359, %v3365
    %v3370 = vrot.slane %v3366, 2
    %v3371 = vrot.slane %v3367, 1
    %v3372 = vsel %vm359, %v3371, %v3370
    %3373 = vrot.lane.b32.xlu0 %v3372, 121
    %v3374 = vpop.permute.xlu0 %3373
    %v3375 = vsel %vm2966, %v3374, 0
    %3377 = vmatprep.subr.mxu0 0.0
    %3378 = vmatpush1.msra.mxu0 0.0
    %3379 = vmatprep.subr.mxu0 0.0
    %3380 = vmatpush1.msra.mxu0 0.0
    %3381 = vmatprep.subr.mxu0 0.0
    %3382 = vmatpush1.msra.mxu0 0.0
    %3383 = vmatprep.subr.mxu0 0.0
    %3384 = vmatpush1.msra.mxu0 0.0
    %3385 = vmatprep.subr.mxu0 0.0
    %3386 = vmatpush1.msra.mxu0 0.0
    %3387 = vmatprep.subr.mxu0 0.0
    %3388 = vmatpush1.msra.mxu0 0.0
    %3389 = vmatprep.subr.mxu0 0.0
    %3390 = vmatpush1.msra.mxu0 0.0
    %3391 = vmatprep.subr.mxu0 0.0
    %3392 = vmatpush1.msra.mxu0 0.0
    %3393 = vmatprep.subr.mxu0 0.0
    %3394 = vmatpush1.msra.mxu0 0.0
    %3395 = vmatprep.subr.mxu0 0.0
    %3396 = vmatpush1.msra.mxu0 0.0
    %3397 = vmatprep.subr.mxu0 0.0
    %3398 = vmatpush1.msra.mxu0 0.0
    %3399 = vmatprep.subr.mxu0 0.0
    %3400 = vmatpush1.msra.mxu0 0.0
    %3401 = vmatprep.subr.mxu0 0.0
    %3402 = vmatpush1.msra.mxu0 0.0
    %3403 = vmatprep.subr.mxu0 0.0
    %3404 = vmatpush1.msra.mxu0 0.0
    %3405 = vmatprep.subr.mxu0 0.0
    %3406 = vmatpush1.msra.mxu0 0.0
    %3407 = vmatprep.subr.mxu0 0.0
    %3408 = vmatpush1.msra.mxu0 %v2970
    %3409 = vmatprep.subr.mxu0 0.0
    %3410 = vmatpush2.msra.mxu0 0.0
    %3411 = vmatprep.subr.mxu0 0.0
    %3412 = vmatpush2.msra.mxu0 0.0
    %3413 = vmatprep.subr.mxu0 0.0
    %3414 = vmatpush2.msra.mxu0 0.0
    %3415 = vmatprep.subr.mxu0 0.0
    %3416 = vmatpush2.msra.mxu0 0.0
    %3417 = vmatprep.subr.mxu0 0.0
    %3418 = vmatpush2.msra.mxu0 0.0
    %3419 = vmatprep.subr.mxu0 0.0
    %3420 = vmatpush2.msra.mxu0 0.0
    %3421 = vmatprep.subr.mxu0 0.0
    %3422 = vmatpush2.msra.mxu0 0.0
    %3423 = vmatprep.subr.mxu0 0.0
    %3424 = vmatpush2.msra.mxu0 0.0
    %3425 = vmatprep.subr.mxu0 0.0
    %3426 = vmatpush2.msra.mxu0 0.0
    %3427 = vmatprep.subr.mxu0 0.0
    %3428 = vmatpush2.msra.mxu0 0.0
    %3429 = vmatprep.subr.mxu0 0.0
    %3430 = vmatpush2.msra.mxu0 0.0
    %3431 = vmatprep.subr.mxu0 0.0
    %3432 = vmatpush2.msra.mxu0 0.0
    %3433 = vmatprep.subr.mxu0 0.0
    %3434 = vmatpush2.msra.mxu0 0.0
    %3435 = vmatprep.subr.mxu0 0.0
    %3436 = vmatpush2.msra.mxu0 0.0
    %3437 = vmatprep.subr.mxu0 0.0
    %3438 = vmatpush2.msra.mxu0 0.0
    %3439 = vmatprep.subr.mxu0 0.0
    %3440 = vmatpush2.msra.mxu0 0.0
    %3441 = vmatprep.mubr.f32.mxu0 0.0
    %3442 = vmatmul.mubr.f32.gmra.mxu0 %v3375
    %v3443 = vpop.f32.mrf.mxu0
    %v3444 = vadd.f32 %v2965, %v3443
    %v3445 = vpop.f32.mrf.mxu0
    %3446 = vdwg.mxu0
    %v3448 = vrot.slane %v3444, 5
    %v3449 = vrot.slane %v3444, 6
    %v3452 = vadd.f32 %v2954, %v3448
    %v3453 = vadd.f32 %v2959, %v3449
    %v3454 = vxor.u32 %v3452, 2147483648
    %v3455 = vxor.u32 %v3453, 2147483648
    %v3456 = vmul.f32 %v3454, 1.442695
    %v3457 = vpow.pop %v3456
    %v3458 = vmul.f32 %v3455, 1.442695
    %v3459 = vpow.pop %v3458
    %v3460 = vadd.f32 %v3457, 1.0
    %v3461 = vadd.f32 %v3459, 1.0
    %v3462 = vrcp.pop %v3460
    %v3463 = vmul.f32 1.0, %v3462
    %v3464 = vrcp.pop %v3461
    %v3465 = vmul.f32 1.0, %v3464
    %3466 = vrot.lane.b32.xlu0 %v3448, 114
    %v3467 = vpop.permute.xlu0 %3466
    %3468 = vrot.lane.b32.xlu0 %v3449, 114
    %v3469 = vpop.permute.xlu0 %3468
    %v3472 = vmul.f32 %v3463, %v3467
    %v3473 = vmul.f32 %v3465, %v3469
    %3476 = vrot.lane.b32.xlu0 %v3472, 14
    %v3477 = vpop.permute.xlu0 %3476
    %3478 = vrot.lane.b32.xlu0 %v3473, 14
    %v3479 = vpop.permute.xlu0 %3478
    %v3482 = vadd.f32 %v2954, %v3477
    %v3483 = vadd.f32 %v2959, %v3479
    %v3484 = vtanh.pop %v3482
    %v3485 = vtanh.pop %v3483
    %v3486 = vsub.f32 1.0, %v3463
    %v3487 = vsub.f32 1.0, %v3465
    %3490 = vrot.lane.b32.xlu0 %v3484, 121
    %v3491 = vpop.permute.xlu0 %3490
    %3492 = vrot.lane.b32.xlu0 %v3485, 121
    %v3493 = vpop.permute.xlu0 %3492
    %v3496 = vmul.f32 %v3486, %v3491
    %v3497 = vmul.f32 %v3487, %v3493
    %v3498 = vrot.slane %v3366, 7
    %v3499 = vrot.slane %v3367, 7
    %v3502 = vmul.f32 %v3463, %v3498
    %v3503 = vmul.f32 %v3465, %v3499
    %v3504 = vadd.f32 %v3496, %v3502
    %v3505 = vadd.f32 %v3497, %v3503
    %v3508 = vrot.slane %v3504, 3
    %v3509 = vrot.slane %v3505, 2
    %v3510 = vsel %vm359, %v3509, %v3508
    %3511 = vrot.lane.b32.xlu0 %v3510, 121
    %v3512 = vpop.permute.xlu0 %3511
    %v3513 = vsel %vm2966, %v3512, 0
    %3515 = vmatprep.subr.mxu0 0.0
    %3516 = vmatpush1.msra.mxu0 0.0
    %3517 = vmatprep.subr.mxu0 0.0
    %3518 = vmatpush1.msra.mxu0 0.0
    %3519 = vmatprep.subr.mxu0 0.0
    %3520 = vmatpush1.msra.mxu0 0.0
    %3521 = vmatprep.subr.mxu0 0.0
    %3522 = vmatpush1.msra.mxu0 0.0
    %3523 = vmatprep.subr.mxu0 0.0
    %3524 = vmatpush1.msra.mxu0 0.0
    %3525 = vmatprep.subr.mxu0 0.0
    %3526 = vmatpush1.msra.mxu0 0.0
    %3527 = vmatprep.subr.mxu0 0.0
    %3528 = vmatpush1.msra.mxu0 0.0
    %3529 = vmatprep.subr.mxu0 0.0
    %3530 = vmatpush1.msra.mxu0 0.0
    %3531 = vmatprep.subr.mxu0 0.0
    %3532 = vmatpush1.msra.mxu0 0.0
    %3533 = vmatprep.subr.mxu0 0.0
    %3534 = vmatpush1.msra.mxu0 0.0
    %3535 = vmatprep.subr.mxu0 0.0
    %3536 = vmatpush1.msra.mxu0 0.0
    %3537 = vmatprep.subr.mxu0 0.0
    %3538 = vmatpush1.msra.mxu0 0.0
    %3539 = vmatprep.subr.mxu0 0.0
    %3540 = vmatpush1.msra.mxu0 0.0
    %3541 = vmatprep.subr.mxu0 0.0
    %3542 = vmatpush1.msra.mxu0 0.0
    %3543 = vmatprep.subr.mxu0 0.0
    %3544 = vmatpush1.msra.mxu0 0.0
    %3545 = vmatprep.subr.mxu0 0.0
    %3546 = vmatpush1.msra.mxu0 %v2970
    %3547 = vmatprep.subr.mxu0 0.0
    %3548 = vmatpush2.msra.mxu0 0.0
    %3549 = vmatprep.subr.mxu0 0.0
    %3550 = vmatpush2.msra.mxu0 0.0
    %3551 = vmatprep.subr.mxu0 0.0
    %3552 = vmatpush2.msra.mxu0 0.0
    %3553 = vmatprep.subr.mxu0 0.0
    %3554 = vmatpush2.msra.mxu0 0.0
    %3555 = vmatprep.subr.mxu0 0.0
    %3556 = vmatpush2.msra.mxu0 0.0
    %3557 = vmatprep.subr.mxu0 0.0
    %3558 = vmatpush2.msra.mxu0 0.0
    %3559 = vmatprep.subr.mxu0 0.0
    %3560 = vmatpush2.msra.mxu0 0.0
    %3561 = vmatprep.subr.mxu0 0.0
    %3562 = vmatpush2.msra.mxu0 0.0
    %3563 = vmatprep.subr.mxu0 0.0
    %3564 = vmatpush2.msra.mxu0 0.0
    %3565 = vmatprep.subr.mxu0 0.0
    %3566 = vmatpush2.msra.mxu0 0.0
    %3567 = vmatprep.subr.mxu0 0.0
    %3568 = vmatpush2.msra.mxu0 0.0
    %3569 = vmatprep.subr.mxu0 0.0
    %3570 = vmatpush2.msra.mxu0 0.0
    %3571 = vmatprep.subr.mxu0 0.0
    %3572 = vmatpush2.msra.mxu0 0.0
    %3573 = vmatprep.subr.mxu0 0.0
    %3574 = vmatpush2.msra.mxu0 0.0
    %3575 = vmatprep.subr.mxu0 0.0
    %3576 = vmatpush2.msra.mxu0 0.0
    %3577 = vmatprep.subr.mxu0 0.0
    %3578 = vmatpush2.msra.mxu0 0.0
    %3579 = vmatprep.mubr.f32.mxu0 0.0
    %3580 = vmatmul.mubr.f32.gmra.mxu0 %v3513
    %v3581 = vpop.f32.mrf.mxu0
    %v3582 = vadd.f32 %v2965, %v3581
    %v3583 = vpop.f32.mrf.mxu0
    %3584 = vdwg.mxu0
    %v3586 = vrot.slane %v3582, 4
    %v3587 = vrot.slane %v3582, 5
    %v3590 = vadd.f32 %v2954, %v3586
    %v3591 = vadd.f32 %v2959, %v3587
    %v3592 = vxor.u32 %v3590, 2147483648
    %v3593 = vxor.u32 %v3591, 2147483648
    %v3594 = vmul.f32 %v3592, 1.442695
    %v3595 = vpow.pop %v3594
    %v3596 = vmul.f32 %v3593, 1.442695
    %v3597 = vpow.pop %v3596
    %v3598 = vadd.f32 %v3595, 1.0
    %v3599 = vadd.f32 %v3597, 1.0
    %v3600 = vrcp.pop %v3598
    %v3601 = vmul.f32 1.0, %v3600
    %v3602 = vrcp.pop %v3599
    %v3603 = vmul.f32 1.0, %v3602
    %3604 = vrot.lane.b32.xlu0 %v3586, 114
    %v3605 = vpop.permute.xlu0 %3604
    %3606 = vrot.lane.b32.xlu0 %v3587, 114
    %v3607 = vpop.permute.xlu0 %3606
    %v3610 = vmul.f32 %v3601, %v3605
    %v3611 = vmul.f32 %v3603, %v3607
    %3614 = vrot.lane.b32.xlu0 %v3610, 14
    %v3615 = vpop.permute.xlu0 %3614
    %3616 = vrot.lane.b32.xlu0 %v3611, 14
    %v3617 = vpop.permute.xlu0 %3616
    %v3620 = vadd.f32 %v2954, %v3615
    %v3621 = vadd.f32 %v2959, %v3617
    %v3622 = vtanh.pop %v3620
    %v3623 = vtanh.pop %v3621
    %v3624 = vsub.f32 1.0, %v3601
    %v3625 = vsub.f32 1.0, %v3603
    %3628 = vrot.lane.b32.xlu0 %v3622, 121
    %v3629 = vpop.permute.xlu0 %3628
    %3630 = vrot.lane.b32.xlu0 %v3623, 121
    %v3631 = vpop.permute.xlu0 %3630
    %v3634 = vmul.f32 %v3624, %v3629
    %v3635 = vmul.f32 %v3625, %v3631
    %v3636 = vrot.slane %v3504, 7
    %v3637 = vrot.slane %v3505, 7
    %v3640 = vmul.f32 %v3601, %v3636
    %v3641 = vmul.f32 %v3603, %v3637
    %v3642 = vadd.f32 %v3634, %v3640
    %v3643 = vadd.f32 %v3635, %v3641
    %v3646 = vrot.slane %v3642, 4
    %v3647 = vrot.slane %v3643, 3
    %v3648 = vsel %vm359, %v3647, %v3646
    %3649 = vrot.lane.b32.xlu0 %v3648, 121
    %v3650 = vpop.permute.xlu0 %3649
    %v3651 = vsel %vm2966, %v3650, 0
    %3653 = vmatprep.subr.mxu0 0.0
    %3654 = vmatpush1.msra.mxu0 0.0
    %3655 = vmatprep.subr.mxu0 0.0
    %3656 = vmatpush1.msra.mxu0 0.0
    %3657 = vmatprep.subr.mxu0 0.0
    %3658 = vmatpush1.msra.mxu0 0.0
    %3659 = vmatprep.subr.mxu0 0.0
    %3660 = vmatpush1.msra.mxu0 0.0
    %3661 = vmatprep.subr.mxu0 0.0
    %3662 = vmatpush1.msra.mxu0 0.0
    %3663 = vmatprep.subr.mxu0 0.0
    %3664 = vmatpush1.msra.mxu0 0.0
    %3665 = vmatprep.subr.mxu0 0.0
    %3666 = vmatpush1.msra.mxu0 0.0
    %3667 = vmatprep.subr.mxu0 0.0
    %3668 = vmatpush1.msra.mxu0 0.0
    %3669 = vmatprep.subr.mxu0 0.0
    %3670 = vmatpush1.msra.mxu0 0.0
    %3671 = vmatprep.subr.mxu0 0.0
    %3672 = vmatpush1.msra.mxu0 0.0
    %3673 = vmatprep.subr.mxu0 0.0
    %3674 = vmatpush1.msra.mxu0 0.0
    %3675 = vmatprep.subr.mxu0 0.0
    %3676 = vmatpush1.msra.mxu0 0.0
    %3677 = vmatprep.subr.mxu0 0.0
    %3678 = vmatpush1.msra.mxu0 0.0
    %3679 = vmatprep.subr.mxu0 0.0
    %3680 = vmatpush1.msra.mxu0 0.0
    %3681 = vmatprep.subr.mxu0 0.0
    %3682 = vmatpush1.msra.mxu0 0.0
    %3683 = vmatprep.subr.mxu0 0.0
    %3684 = vmatpush1.msra.mxu0 %v2970
    %3685 = vmatprep.subr.mxu0 0.0
    %3686 = vmatpush2.msra.mxu0 0.0
    %3687 = vmatprep.subr.mxu0 0.0
    %3688 = vmatpush2.msra.mxu0 0.0
    %3689 = vmatprep.subr.mxu0 0.0
    %3690 = vmatpush2.msra.mxu0 0.0
    %3691 = vmatprep.subr.mxu0 0.0
    %3692 = vmatpush2.msra.mxu0 0.0
    %3693 = vmatprep.subr.mxu0 0.0
    %3694 = vmatpush2.msra.mxu0 0.0
    %3695 = vmatprep.subr.mxu0 0.0
    %3696 = vmatpush2.msra.mxu0 0.0
    %3697 = vmatprep.subr.mxu0 0.0
    %3698 = vmatpush2.msra.mxu0 0.0
    %3699 = vmatprep.subr.mxu0 0.0
    %3700 = vmatpush2.msra.mxu0 0.0
    %3701 = vmatprep.subr.mxu0 0.0
    %3702 = vmatpush2.msra.mxu0 0.0
    %3703 = vmatprep.subr.mxu0 0.0
    %3704 = vmatpush2.msra.mxu0 0.0
    %3705 = vmatprep.subr.mxu0 0.0
    %3706 = vmatpush2.msra.mxu0 0.0
    %3707 = vmatprep.subr.mxu0 0.0
    %3708 = vmatpush2.msra.mxu0 0.0
    %3709 = vmatprep.subr.mxu0 0.0
    %3710 = vmatpush2.msra.mxu0 0.0
    %3711 = vmatprep.subr.mxu0 0.0
    %3712 = vmatpush2.msra.mxu0 0.0
    %3713 = vmatprep.subr.mxu0 0.0
    %3714 = vmatpush2.msra.mxu0 0.0
    %3715 = vmatprep.subr.mxu0 0.0
    %3716 = vmatpush2.msra.mxu0 0.0
    %3717 = vmatprep.mubr.f32.mxu0 0.0
    %3718 = vmatmul.mubr.f32.gmra.mxu0 %v3651
    %v3719 = vpop.f32.mrf.mxu0
    %v3720 = vadd.f32 %v2965, %v3719
    %v3721 = vpop.f32.mrf.mxu0
    %3722 = vdwg.mxu0
    %v3724 = vrot.slane %v3720, 3
    %v3725 = vrot.slane %v3720, 4
    %v3728 = vadd.f32 %v2954, %v3724
    %v3729 = vadd.f32 %v2959, %v3725
    %v3730 = vxor.u32 %v3728, 2147483648
    %v3731 = vxor.u32 %v3729, 2147483648
    %v3732 = vmul.f32 %v3730, 1.442695
    %v3733 = vpow.pop %v3732
    %v3734 = vmul.f32 %v3731, 1.442695
    %v3735 = vpow.pop %v3734
    %v3736 = vadd.f32 %v3733, 1.0
    %v3737 = vadd.f32 %v3735, 1.0
    %v3738 = vrcp.pop %v3736
    %v3739 = vmul.f32 1.0, %v3738
    %v3740 = vrcp.pop %v3737
    %v3741 = vmul.f32 1.0, %v3740
    %3742 = vrot.lane.b32.xlu0 %v3724, 114
    %v3743 = vpop.permute.xlu0 %3742
    %3744 = vrot.lane.b32.xlu0 %v3725, 114
    %v3745 = vpop.permute.xlu0 %3744
    %v3748 = vmul.f32 %v3739, %v3743
    %v3749 = vmul.f32 %v3741, %v3745
    %3752 = vrot.lane.b32.xlu0 %v3748, 14
    %v3753 = vpop.permute.xlu0 %3752
    %3754 = vrot.lane.b32.xlu0 %v3749, 14
    %v3755 = vpop.permute.xlu0 %3754
    %v3758 = vadd.f32 %v2954, %v3753
    %v3759 = vadd.f32 %v2959, %v3755
    %v3760 = vtanh.pop %v3758
    %v3761 = vtanh.pop %v3759
    %v3762 = vsub.f32 1.0, %v3739
    %v3763 = vsub.f32 1.0, %v3741
    %3766 = vrot.lane.b32.xlu0 %v3760, 121
    %v3767 = vpop.permute.xlu0 %3766
    %3768 = vrot.lane.b32.xlu0 %v3761, 121
    %v3769 = vpop.permute.xlu0 %3768
    %v3772 = vmul.f32 %v3762, %v3767
    %v3773 = vmul.f32 %v3763, %v3769
    %v3774 = vrot.slane %v3642, 7
    %v3775 = vrot.slane %v3643, 7
    %v3778 = vmul.f32 %v3739, %v3774
    %v3779 = vmul.f32 %v3741, %v3775
    %v3780 = vadd.f32 %v3772, %v3778
    %v3781 = vadd.f32 %v3773, %v3779
    %v3784 = vrot.slane %v3780, 5
    %v3785 = vrot.slane %v3781, 4
    %v3786 = vsel %vm359, %v3785, %v3784
    %3787 = vrot.lane.b32.xlu0 %v3786, 121
    %v3788 = vpop.permute.xlu0 %3787
    %v3789 = vsel %vm2966, %v3788, 0
    %3791 = vmatprep.subr.mxu0 0.0
    %3792 = vmatpush1.msra.mxu0 0.0
    %3793 = vmatprep.subr.mxu0 0.0
    %3794 = vmatpush1.msra.mxu0 0.0
    %3795 = vmatprep.subr.mxu0 0.0
    %3796 = vmatpush1.msra.mxu0 0.0
    %3797 = vmatprep.subr.mxu0 0.0
    %3798 = vmatpush1.msra.mxu0 0.0
    %3799 = vmatprep.subr.mxu0 0.0
    %3800 = vmatpush1.msra.mxu0 0.0
    %3801 = vmatprep.subr.mxu0 0.0
    %3802 = vmatpush1.msra.mxu0 0.0
    %3803 = vmatprep.subr.mxu0 0.0
    %3804 = vmatpush1.msra.mxu0 0.0
    %3805 = vmatprep.subr.mxu0 0.0
    %3806 = vmatpush1.msra.mxu0 0.0
    %3807 = vmatprep.subr.mxu0 0.0
    %3808 = vmatpush1.msra.mxu0 0.0
    %3809 = vmatprep.subr.mxu0 0.0
    %3810 = vmatpush1.msra.mxu0 0.0
    %3811 = vmatprep.subr.mxu0 0.0
    %3812 = vmatpush1.msra.mxu0 0.0
    %3813 = vmatprep.subr.mxu0 0.0
    %3814 = vmatpush1.msra.mxu0 0.0
    %3815 = vmatprep.subr.mxu0 0.0
    %3816 = vmatpush1.msra.mxu0 0.0
    %3817 = vmatprep.subr.mxu0 0.0
    %3818 = vmatpush1.msra.mxu0 0.0
    %3819 = vmatprep.subr.mxu0 0.0
    %3820 = vmatpush1.msra.mxu0 0.0
    %3821 = vmatprep.subr.mxu0 0.0
    %3822 = vmatpush1.msra.mxu0 %v2970
    %3823 = vmatprep.subr.mxu0 0.0
    %3824 = vmatpush2.msra.mxu0 0.0
    %3825 = vmatprep.subr.mxu0 0.0
    %3826 = vmatpush2.msra.mxu0 0.0
    %3827 = vmatprep.subr.mxu0 0.0
    %3828 = vmatpush2.msra.mxu0 0.0
    %3829 = vmatprep.subr.mxu0 0.0
    %3830 = vmatpush2.msra.mxu0 0.0
    %3831 = vmatprep.subr.mxu0 0.0
    %3832 = vmatpush2.msra.mxu0 0.0
    %3833 = vmatprep.subr.mxu0 0.0
    %3834 = vmatpush2.msra.mxu0 0.0
    %3835 = vmatprep.subr.mxu0 0.0
    %3836 = vmatpush2.msra.mxu0 0.0
    %3837 = vmatprep.subr.mxu0 0.0
    %3838 = vmatpush2.msra.mxu0 0.0
    %3839 = vmatprep.subr.mxu0 0.0
    %3840 = vmatpush2.msra.mxu0 0.0
    %3841 = vmatprep.subr.mxu0 0.0
    %3842 = vmatpush2.msra.mxu0 0.0
    %3843 = vmatprep.subr.mxu0 0.0
    %3844 = vmatpush2.msra.mxu0 0.0
    %3845 = vmatprep.subr.mxu0 0.0
    %3846 = vmatpush2.msra.mxu0 0.0
    %3847 = vmatprep.subr.mxu0 0.0
    %3848 = vmatpush2.msra.mxu0 0.0
    %3849 = vmatprep.subr.mxu0 0.0
    %3850 = vmatpush2.msra.mxu0 0.0
    %3851 = vmatprep.subr.mxu0 0.0
    %3852 = vmatpush2.msra.mxu0 0.0
    %3853 = vmatprep.subr.mxu0 0.0
    %3854 = vmatpush2.msra.mxu0 0.0
    %3855 = vmatprep.mubr.f32.mxu0 0.0
    %3856 = vmatmul.mubr.f32.gmra.mxu0 %v3789
    %v3857 = vpop.f32.mrf.mxu0
    %v3858 = vadd.f32 %v2965, %v3857
    %v3859 = vpop.f32.mrf.mxu0
    %3860 = vdwg.mxu0
    %v3862 = vrot.slane %v3858, 2
    %v3863 = vrot.slane %v3858, 3
    %v3866 = vadd.f32 %v2954, %v3862
    %v3867 = vadd.f32 %v2959, %v3863
    %v3868 = vxor.u32 %v3866, 2147483648
    %v3869 = vxor.u32 %v3867, 2147483648
    %v3870 = vmul.f32 %v3868, 1.442695
    %v3871 = vpow.pop %v3870
    %v3872 = vmul.f32 %v3869, 1.442695
    %v3873 = vpow.pop %v3872
    %v3874 = vadd.f32 %v3871, 1.0
    %v3875 = vadd.f32 %v3873, 1.0
    %v3876 = vrcp.pop %v3874
    %v3877 = vmul.f32 1.0, %v3876
    %v3878 = vrcp.pop %v3875
    %v3879 = vmul.f32 1.0, %v3878
    %3880 = vrot.lane.b32.xlu0 %v3862, 114
    %v3881 = vpop.permute.xlu0 %3880
    %3882 = vrot.lane.b32.xlu0 %v3863, 114
    %v3883 = vpop.permute.xlu0 %3882
    %v3886 = vmul.f32 %v3877, %v3881
    %v3887 = vmul.f32 %v3879, %v3883
    %3890 = vrot.lane.b32.xlu0 %v3886, 14
    %v3891 = vpop.permute.xlu0 %3890
    %3892 = vrot.lane.b32.xlu0 %v3887, 14
    %v3893 = vpop.permute.xlu0 %3892
    %v3896 = vadd.f32 %v2954, %v3891
    %v3897 = vadd.f32 %v2959, %v3893
    %v3898 = vtanh.pop %v3896
    %v3899 = vtanh.pop %v3897
    %v3900 = vsub.f32 1.0, %v3877
    %v3901 = vsub.f32 1.0, %v3879
    %3904 = vrot.lane.b32.xlu0 %v3898, 121
    %v3905 = vpop.permute.xlu0 %3904
    %3906 = vrot.lane.b32.xlu0 %v3899, 121
    %v3907 = vpop.permute.xlu0 %3906
    %v3910 = vmul.f32 %v3900, %v3905
    %v3911 = vmul.f32 %v3901, %v3907
    %v3912 = vrot.slane %v3780, 7
    %v3913 = vrot.slane %v3781, 7
    %v3916 = vmul.f32 %v3877, %v3912
    %v3917 = vmul.f32 %v3879, %v3913
    %v3918 = vadd.f32 %v3910, %v3916
    %v3919 = vadd.f32 %v3911, %v3917
    %v3922 = vrot.slane %v3918, 6
    %v3923 = vrot.slane %v3919, 5
    %v3924 = vsel %vm359, %v3923, %v3922
    %3925 = vrot.lane.b32.xlu0 %v3924, 121
    %v3926 = vpop.permute.xlu0 %3925
    %v3927 = vsel %vm2966, %v3926, 0
    %3929 = vmatprep.subr.mxu0 0.0
    %3930 = vmatpush1.msra.mxu0 0.0
    %3931 = vmatprep.subr.mxu0 0.0
    %3932 = vmatpush1.msra.mxu0 0.0
    %3933 = vmatprep.subr.mxu0 0.0
    %3934 = vmatpush1.msra.mxu0 0.0
    %3935 = vmatprep.subr.mxu0 0.0
    %3936 = vmatpush1.msra.mxu0 0.0
    %3937 = vmatprep.subr.mxu0 0.0
    %3938 = vmatpush1.msra.mxu0 0.0
    %3939 = vmatprep.subr.mxu0 0.0
    %3940 = vmatpush1.msra.mxu0 0.0
    %3941 = vmatprep.subr.mxu0 0.0
    %3942 = vmatpush1.msra.mxu0 0.0
    %3943 = vmatprep.subr.mxu0 0.0
    %3944 = vmatpush1.msra.mxu0 0.0
    %3945 = vmatprep.subr.mxu0 0.0
    %3946 = vmatpush1.msra.mxu0 0.0
    %3947 = vmatprep.subr.mxu0 0.0
    %3948 = vmatpush1.msra.mxu0 0.0
    %3949 = vmatprep.subr.mxu0 0.0
    %3950 = vmatpush1.msra.mxu0 0.0
    %3951 = vmatprep.subr.mxu0 0.0
    %3952 = vmatpush1.msra.mxu0 0.0
    %3953 = vmatprep.subr.mxu0 0.0
    %3954 = vmatpush1.msra.mxu0 0.0
    %3955 = vmatprep.subr.mxu0 0.0
    %3956 = vmatpush1.msra.mxu0 0.0
    %3957 = vmatprep.subr.mxu0 0.0
    %3958 = vmatpush1.msra.mxu0 0.0
    %3959 = vmatprep.subr.mxu0 0.0
    %3960 = vmatpush1.msra.mxu0 %v2970
    %3961 = vmatprep.subr.mxu0 0.0
    %3962 = vmatpush2.msra.mxu0 0.0
    %3963 = vmatprep.subr.mxu0 0.0
    %3964 = vmatpush2.msra.mxu0 0.0
    %3965 = vmatprep.subr.mxu0 0.0
    %3966 = vmatpush2.msra.mxu0 0.0
    %3967 = vmatprep.subr.mxu0 0.0
    %3968 = vmatpush2.msra.mxu0 0.0
    %3969 = vmatprep.subr.mxu0 0.0
    %3970 = vmatpush2.msra.mxu0 0.0
    %3971 = vmatprep.subr.mxu0 0.0
    %3972 = vmatpush2.msra.mxu0 0.0
    %3973 = vmatprep.subr.mxu0 0.0
    %3974 = vmatpush2.msra.mxu0 0.0
    %3975 = vmatprep.subr.mxu0 0.0
    %3976 = vmatpush2.msra.mxu0 0.0
    %3977 = vmatprep.subr.mxu0 0.0
    %3978 = vmatpush2.msra.mxu0 0.0
    %3979 = vmatprep.subr.mxu0 0.0
    %3980 = vmatpush2.msra.mxu0 0.0
    %3981 = vmatprep.subr.mxu0 0.0
    %3982 = vmatpush2.msra.mxu0 0.0
    %3983 = vmatprep.subr.mxu0 0.0
    %3984 = vmatpush2.msra.mxu0 0.0
    %3985 = vmatprep.subr.mxu0 0.0
    %3986 = vmatpush2.msra.mxu0 0.0
    %3987 = vmatprep.subr.mxu0 0.0
    %3988 = vmatpush2.msra.mxu0 0.0
    %3989 = vmatprep.subr.mxu0 0.0
    %3990 = vmatpush2.msra.mxu0 0.0
    %3991 = vmatprep.subr.mxu0 0.0
    %3992 = vmatpush2.msra.mxu0 0.0
    %3993 = vmatprep.mubr.f32.mxu0 0.0
    %3994 = vmatmul.mubr.f32.gmra.mxu0 %v3927
    %v3995 = vpop.f32.mrf.mxu0
    %v3996 = vadd.f32 %v2965, %v3995
    %v3997 = vpop.f32.mrf.mxu0
    %3998 = vdwg.mxu0
    %v4000 = vrot.slane %v3996, 1
    %v4001 = vrot.slane %v3996, 2
    %v4004 = vadd.f32 %v2954, %v4000
    %v4005 = vadd.f32 %v2959, %v4001
    %v4006 = vxor.u32 %v4004, 2147483648
    %v4007 = vxor.u32 %v4005, 2147483648
    %v4008 = vmul.f32 %v4006, 1.442695
    %v4009 = vpow.pop %v4008
    %v4010 = vmul.f32 %v4007, 1.442695
    %v4011 = vpow.pop %v4010
    %v4012 = vadd.f32 %v4009, 1.0
    %v4013 = vadd.f32 %v4011, 1.0
    %v4014 = vrcp.pop %v4012
    %v4015 = vmul.f32 1.0, %v4014
    %v4016 = vrcp.pop %v4013
    %v4017 = vmul.f32 1.0, %v4016
    %4018 = vrot.lane.b32.xlu0 %v4000, 114
    %v4019 = vpop.permute.xlu0 %4018
    %4020 = vrot.lane.b32.xlu0 %v4001, 114
    %v4021 = vpop.permute.xlu0 %4020
    %v4024 = vmul.f32 %v4015, %v4019
    %v4025 = vmul.f32 %v4017, %v4021
    %4028 = vrot.lane.b32.xlu0 %v4024, 14
    %v4029 = vpop.permute.xlu0 %4028
    %4030 = vrot.lane.b32.xlu0 %v4025, 14
    %v4031 = vpop.permute.xlu0 %4030
    %v4034 = vadd.f32 %v2954, %v4029
    %v4035 = vadd.f32 %v2959, %v4031
    %v4036 = vtanh.pop %v4034
    %v4037 = vtanh.pop %v4035
    %v4038 = vsub.f32 1.0, %v4015
    %v4039 = vsub.f32 1.0, %v4017
    %4042 = vrot.lane.b32.xlu0 %v4036, 121
    %v4043 = vpop.permute.xlu0 %4042
    %4044 = vrot.lane.b32.xlu0 %v4037, 121
    %v4045 = vpop.permute.xlu0 %4044
    %v4048 = vmul.f32 %v4038, %v4043
    %v4049 = vmul.f32 %v4039, %v4045
    %v4050 = vrot.slane %v3918, 7
    %v4051 = vrot.slane %v3919, 7
    %v4054 = vmul.f32 %v4015, %v4050
    %v4055 = vmul.f32 %v4017, %v4051
    %v4056 = vadd.f32 %v4048, %v4054
    %v4057 = vadd.f32 %v4049, %v4055
    %v4058 = vsel %vm1483, %v3094, %v3229
    %v4059 = vsel %vm1483, %v3095, %v3230
    %v4060 = vsel %vm1486, %v4058, %v3366
    %v4061 = vsel %vm1486, %v4059, %v3367
    %v4062 = vsel %vm1489, %v4060, %v3504
    %v4063 = vsel %vm1489, %v4061, %v3505
    %v4064 = vsel %vm1492, %v4062, %v3642
    %v4065 = vsel %vm1492, %v4063, %v3643
    %v4066 = vsel %vm1495, %v4064, %v3780
    %v4067 = vsel %vm1495, %v4065, %v3781
    %v4068 = vsel %vm1498, %v4066, %v3918
    %v4069 = vsel %vm1498, %v4067, %v3919
    %v4070 = vsel %vm1501, %v4068, %v4056
    %v4071 = vsel %vm1501, %v4069, %v4057
    %v4072 = vld [vmem:[#allocation3 + $0x50] sm:$0x7f]
    %v4073 = vld [vmem:[#allocation3 + $0x58] sm:$0x7f]
    %v4074 = vld [vmem:[#allocation3 + $0x60] sm:$0x1]
    %v4075 = vld [vmem:[#allocation3 + $0x61] sm:$0x1]
    %v4076 = vlaneseq
    %v4077 = vshrl.u32 %v4076, 7
    %v4078 = vsub.s32 0, %v4077
    %v4079 = vrot.slane %v4074, %v4078
    %4082 = vrot.lane.b32.xlu0 %v4070, 121
    %v4083 = vpop.permute.xlu0 %4082
    %4084 = vrot.lane.b32.xlu0 %v4071, 121
    %v4085 = vpop.permute.xlu0 %4084
    %v4086 = vsel %vm2966, %v4083, 0
    %v4088 = vsel %vm2966, %v4085, 0
    %v4091 = vsel %vm1501, %v4072, 0
    %4093 = vmatprep.subr.mxu0 0.0
    %4094 = vmatpush1.msra.mxu0 0.0
    %4095 = vmatprep.subr.mxu0 0.0
    %4096 = vmatpush1.msra.mxu0 0.0
    %4097 = vmatprep.subr.mxu0 0.0
    %4098 = vmatpush1.msra.mxu0 0.0
    %4099 = vmatprep.subr.mxu0 0.0
    %4100 = vmatpush1.msra.mxu0 0.0
    %4101 = vmatprep.subr.mxu0 0.0
    %4102 = vmatpush1.msra.mxu0 0.0
    %4103 = vmatprep.subr.mxu0 0.0
    %4104 = vmatpush1.msra.mxu0 0.0
    %4105 = vmatprep.subr.mxu0 0.0
    %4106 = vmatpush1.msra.mxu0 0.0
    %4107 = vmatprep.subr.mxu0 0.0
    %4108 = vmatpush1.msra.mxu0 0.0
    %4109 = vmatprep.subr.mxu0 0.0
    %4110 = vmatpush1.msra.mxu0 0.0
    %4111 = vmatprep.subr.mxu0 0.0
    %4112 = vmatpush1.msra.mxu0 0.0
    %4113 = vmatprep.subr.mxu0 0.0
    %4114 = vmatpush1.msra.mxu0 0.0
    %4115 = vmatprep.subr.mxu0 0.0
    %4116 = vmatpush1.msra.mxu0 0.0
    %4117 = vmatprep.subr.mxu0 0.0
    %4118 = vmatpush1.msra.mxu0 0.0
    %4119 = vmatprep.subr.mxu0 0.0
    %4120 = vmatpush1.msra.mxu0 0.0
    %4121 = vmatprep.subr.mxu0 0.0
    %4122 = vmatpush1.msra.mxu0 0.0
    %4123 = vmatprep.subr.mxu0 0.0
    %4124 = vmatpush1.msra.mxu0 %v4091
    %4125 = vmatprep.subr.mxu0 0.0
    %4126 = vmatpush2.msra.mxu0 0.0
    %4127 = vmatprep.subr.mxu0 0.0
    %4128 = vmatpush2.msra.mxu0 0.0
    %4129 = vmatprep.subr.mxu0 0.0
    %4130 = vmatpush2.msra.mxu0 0.0
    %4131 = vmatprep.subr.mxu0 0.0
    %4132 = vmatpush2.msra.mxu0 0.0
    %4133 = vmatprep.subr.mxu0 0.0
    %4134 = vmatpush2.msra.mxu0 0.0
    %4135 = vmatprep.subr.mxu0 0.0
    %4136 = vmatpush2.msra.mxu0 0.0
    %4137 = vmatprep.subr.mxu0 0.0
    %4138 = vmatpush2.msra.mxu0 0.0
    %4139 = vmatprep.subr.mxu0 0.0
    %4140 = vmatpush2.msra.mxu0 0.0
    %4141 = vmatprep.subr.mxu0 0.0
    %4142 = vmatpush2.msra.mxu0 0.0
    %4143 = vmatprep.subr.mxu0 0.0
    %4144 = vmatpush2.msra.mxu0 0.0
    %4145 = vmatprep.subr.mxu0 0.0
    %4146 = vmatpush2.msra.mxu0 0.0
    %4147 = vmatprep.subr.mxu0 0.0
    %4148 = vmatpush2.msra.mxu0 0.0
    %4149 = vmatprep.subr.mxu0 0.0
    %4150 = vmatpush2.msra.mxu0 0.0
    %4151 = vmatprep.subr.mxu0 0.0
    %4152 = vmatpush2.msra.mxu0 0.0
    %4153 = vmatprep.subr.mxu0 0.0
    %4154 = vmatpush2.msra.mxu0 0.0
    %4155 = vmatprep.subr.mxu0 0.0
    %4156 = vmatpush2.msra.mxu0 0.0
    %4157 = vmatprep.mubr.f32.mxu0 0.0
    %4158 = vmatmul.mubr.f32.gmra.mxu0 %v4086
    %v4159 = vpop.f32.mrf.mxu0
    %v4160 = vadd.f32 %v4079, %v4159
    %v4161 = vpop.f32.mrf.mxu0
    %4162 = vmatprep.mubr.f32.mxu0 0.0
    %4163 = vmatmul.mubr.f32.gmra.mxu0 %v4088
    %v4164 = vpop.f32.mrf.mxu0
    %v4165 = vadd.f32 %v4079, %v4164
    %v4166 = vpop.f32.mrf.mxu0
    %4167 = vdwg.mxu0
    %v4168 = vlaneseq
    %v4169 = vshrl.u32 %v4168, 7
    %v4170 = vsub.s32 0, %v4169
    %v4171 = vrot.slane %v4075, %v4170
    %v4173 = vsel %vm1501, %v4073, 0
    %4175 = vmatprep.subr.mxu0 0.0
    %4176 = vmatpush1.msra.mxu0 0.0
    %4177 = vmatprep.subr.mxu0 0.0
    %4178 = vmatpush1.msra.mxu0 0.0
    %4179 = vmatprep.subr.mxu0 0.0
    %4180 = vmatpush1.msra.mxu0 0.0
    %4181 = vmatprep.subr.mxu0 0.0
    %4182 = vmatpush1.msra.mxu0 0.0
    %4183 = vmatprep.subr.mxu0 0.0
    %4184 = vmatpush1.msra.mxu0 0.0
    %4185 = vmatprep.subr.mxu0 0.0
    %4186 = vmatpush1.msra.mxu0 0.0
    %4187 = vmatprep.subr.mxu0 0.0
    %4188 = vmatpush1.msra.mxu0 0.0
    %4189 = vmatprep.subr.mxu0 0.0
    %4190 = vmatpush1.msra.mxu0 0.0
    %4191 = vmatprep.subr.mxu0 0.0
    %4192 = vmatpush1.msra.mxu0 0.0
    %4193 = vmatprep.subr.mxu0 0.0
    %4194 = vmatpush1.msra.mxu0 0.0
    %4195 = vmatprep.subr.mxu0 0.0
    %4196 = vmatpush1.msra.mxu0 0.0
    %4197 = vmatprep.subr.mxu0 0.0
    %4198 = vmatpush1.msra.mxu0 0.0
    %4199 = vmatprep.subr.mxu0 0.0
    %4200 = vmatpush1.msra.mxu0 0.0
    %4201 = vmatprep.subr.mxu0 0.0
    %4202 = vmatpush1.msra.mxu0 0.0
    %4203 = vmatprep.subr.mxu0 0.0
    %4204 = vmatpush1.msra.mxu0 0.0
    %4205 = vmatprep.subr.mxu0 0.0
    %4206 = vmatpush1.msra.mxu0 %v4173
    %4207 = vmatprep.subr.mxu0 0.0
    %4208 = vmatpush2.msra.mxu0 0.0
    %4209 = vmatprep.subr.mxu0 0.0
    %4210 = vmatpush2.msra.mxu0 0.0
    %4211 = vmatprep.subr.mxu0 0.0
    %4212 = vmatpush2.msra.mxu0 0.0
    %4213 = vmatprep.subr.mxu0 0.0
    %4214 = vmatpush2.msra.mxu0 0.0
    %4215 = vmatprep.subr.mxu0 0.0
    %4216 = vmatpush2.msra.mxu0 0.0
    %4217 = vmatprep.subr.mxu0 0.0
    %4218 = vmatpush2.msra.mxu0 0.0
    %4219 = vmatprep.subr.mxu0 0.0
    %4220 = vmatpush2.msra.mxu0 0.0
    %4221 = vmatprep.subr.mxu0 0.0
    %4222 = vmatpush2.msra.mxu0 0.0
    %4223 = vmatprep.subr.mxu0 0.0
    %4224 = vmatpush2.msra.mxu0 0.0
    %4225 = vmatprep.subr.mxu0 0.0
    %4226 = vmatpush2.msra.mxu0 0.0
    %4227 = vmatprep.subr.mxu0 0.0
    %4228 = vmatpush2.msra.mxu0 0.0
    %4229 = vmatprep.subr.mxu0 0.0
    %4230 = vmatpush2.msra.mxu0 0.0
    %4231 = vmatprep.subr.mxu0 0.0
    %4232 = vmatpush2.msra.mxu0 0.0
    %4233 = vmatprep.subr.mxu0 0.0
    %4234 = vmatpush2.msra.mxu0 0.0
    %4235 = vmatprep.subr.mxu0 0.0
    %4236 = vmatpush2.msra.mxu0 0.0
    %4237 = vmatprep.subr.mxu0 0.0
    %4238 = vmatpush2.msra.mxu0 0.0
    %4239 = vmatprep.mubr.f32.mxu0 0.0
    %4240 = vmatmul.mubr.f32.gmra.mxu0 %v2967
    %v4241 = vpop.f32.mrf.mxu0
    %v4242 = vadd.f32 %v4171, %v4241
    %v4243 = vpop.f32.mrf.mxu0
    %4244 = vdwg.mxu0
    %v4246 = vrot.slane %v4242, 1
    %v4249 = vadd.f32 %v4160, %v4242
    %v4250 = vadd.f32 %v4165, %v4246
    %v4251 = vxor.u32 %v4249, 2147483648
    %v4252 = vxor.u32 %v4250, 2147483648
    %v4253 = vmul.f32 %v4251, 1.442695
    %v4254 = vpow.pop %v4253
    %v4255 = vmul.f32 %v4252, 1.442695
    %v4256 = vpow.pop %v4255
    %v4257 = vadd.f32 %v4254, 1.0
    %v4258 = vadd.f32 %v4256, 1.0
    %v4259 = vrcp.pop %v4257
    %v4260 = vmul.f32 1.0, %v4259
    %v4261 = vrcp.pop %v4258
    %v4262 = vmul.f32 1.0, %v4261
    %4263 = vrot.lane.b32.xlu0 %v4242, 114
    %v4264 = vpop.permute.xlu0 %4263
    %4265 = vrot.lane.b32.xlu0 %v4246, 114
    %v4266 = vpop.permute.xlu0 %4265
    %v4269 = vmul.f32 %v4260, %v4264
    %v4270 = vmul.f32 %v4262, %v4266
    %4273 = vrot.lane.b32.xlu0 %v4269, 14
    %v4274 = vpop.permute.xlu0 %4273
    %4275 = vrot.lane.b32.xlu0 %v4270, 14
    %v4276 = vpop.permute.xlu0 %4275
    %v4279 = vadd.f32 %v4160, %v4274
    %v4280 = vadd.f32 %v4165, %v4276
    %v4281 = vtanh.pop %v4279
    %v4282 = vtanh.pop %v4280
    %v4283 = vsub.f32 1.0, %v4260
    %v4284 = vsub.f32 1.0, %v4262
    %4287 = vrot.lane.b32.xlu0 %v4281, 121
    %v4288 = vpop.permute.xlu0 %4287
    %4289 = vrot.lane.b32.xlu0 %v4282, 121
    %v4290 = vpop.permute.xlu0 %4289
    %v4293 = vmul.f32 %v4283, %v4288
    %v4294 = vmul.f32 %v4284, %v4290
    %v4295 = vmul.f32 %v4260, 0.0
    %v4296 = vmul.f32 %v4262, 0.0
    %v4297 = vadd.f32 %v4293, %v4295
    %v4298 = vadd.f32 %v4294, %v4296
    %v4301 = vrot.slane %v4298, 7
    %v4302 = vsel %vm359, %v4301, %v4297
    %4303 = vrot.lane.b32.xlu0 %v4302, 121
    %v4304 = vpop.permute.xlu0 %4303
    %v4305 = vsel %vm2966, %v4304, 0
    %4307 = vmatprep.subr.mxu0 0.0
    %4308 = vmatpush1.msra.mxu0 0.0
    %4309 = vmatprep.subr.mxu0 0.0
    %4310 = vmatpush1.msra.mxu0 0.0
    %4311 = vmatprep.subr.mxu0 0.0
    %4312 = vmatpush1.msra.mxu0 0.0
    %4313 = vmatprep.subr.mxu0 0.0
    %4314 = vmatpush1.msra.mxu0 0.0
    %4315 = vmatprep.subr.mxu0 0.0
    %4316 = vmatpush1.msra.mxu0 0.0
    %4317 = vmatprep.subr.mxu0 0.0
    %4318 = vmatpush1.msra.mxu0 0.0
    %4319 = vmatprep.subr.mxu0 0.0
    %4320 = vmatpush1.msra.mxu0 0.0
    %4321 = vmatprep.subr.mxu0 0.0
    %4322 = vmatpush1.msra.mxu0 0.0
    %4323 = vmatprep.subr.mxu0 0.0
    %4324 = vmatpush1.msra.mxu0 0.0
    %4325 = vmatprep.subr.mxu0 0.0
    %4326 = vmatpush1.msra.mxu0 0.0
    %4327 = vmatprep.subr.mxu0 0.0
    %4328 = vmatpush1.msra.mxu0 0.0
    %4329 = vmatprep.subr.mxu0 0.0
    %4330 = vmatpush1.msra.mxu0 0.0
    %4331 = vmatprep.subr.mxu0 0.0
    %4332 = vmatpush1.msra.mxu0 0.0
    %4333 = vmatprep.subr.mxu0 0.0
    %4334 = vmatpush1.msra.mxu0 0.0
    %4335 = vmatprep.subr.mxu0 0.0
    %4336 = vmatpush1.msra.mxu0 0.0
    %4337 = vmatprep.subr.mxu0 0.0
    %4338 = vmatpush1.msra.mxu0 %v4173
    %4339 = vmatprep.subr.mxu0 0.0
    %4340 = vmatpush2.msra.mxu0 0.0
    %4341 = vmatprep.subr.mxu0 0.0
    %4342 = vmatpush2.msra.mxu0 0.0
    %4343 = vmatprep.subr.mxu0 0.0
    %4344 = vmatpush2.msra.mxu0 0.0
    %4345 = vmatprep.subr.mxu0 0.0
    %4346 = vmatpush2.msra.mxu0 0.0
    %4347 = vmatprep.subr.mxu0 0.0
    %4348 = vmatpush2.msra.mxu0 0.0
    %4349 = vmatprep.subr.mxu0 0.0
    %4350 = vmatpush2.msra.mxu0 0.0
    %4351 = vmatprep.subr.mxu0 0.0
    %4352 = vmatpush2.msra.mxu0 0.0
    %4353 = vmatprep.subr.mxu0 0.0
    %4354 = vmatpush2.msra.mxu0 0.0
    %4355 = vmatprep.subr.mxu0 0.0
    %4356 = vmatpush2.msra.mxu0 0.0
    %4357 = vmatprep.subr.mxu0 0.0
    %4358 = vmatpush2.msra.mxu0 0.0
    %4359 = vmatprep.subr.mxu0 0.0
    %4360 = vmatpush2.msra.mxu0 0.0
    %4361 = vmatprep.subr.mxu0 0.0
    %4362 = vmatpush2.msra.mxu0 0.0
    %4363 = vmatprep.subr.mxu0 0.0
    %4364 = vmatpush2.msra.mxu0 0.0
    %4365 = vmatprep.subr.mxu0 0.0
    %4366 = vmatpush2.msra.mxu0 0.0
    %4367 = vmatprep.subr.mxu0 0.0
    %4368 = vmatpush2.msra.mxu0 0.0
    %4369 = vmatprep.subr.mxu0 0.0
    %4370 = vmatpush2.msra.mxu0 0.0
    %4371 = vmatprep.mubr.f32.mxu0 0.0
    %4372 = vmatmul.mubr.f32.gmra.mxu0 %v4305
    %v4373 = vpop.f32.mrf.mxu0
    %v4374 = vadd.f32 %v4171, %v4373
    %v4375 = vpop.f32.mrf.mxu0
    %4376 = vdwg.mxu0
    %v4378 = vrot.slane %v4374, 7
    %v4381 = vadd.f32 %v4160, %v4378
    %v4382 = vadd.f32 %v4165, %v4374
    %v4383 = vxor.u32 %v4381, 2147483648
    %v4384 = vxor.u32 %v4382, 2147483648
    %v4385 = vmul.f32 %v4383, 1.442695
    %v4386 = vpow.pop %v4385
    %v4387 = vmul.f32 %v4384, 1.442695
    %v4388 = vpow.pop %v4387
    %v4389 = vadd.f32 %v4386, 1.0
    %v4390 = vadd.f32 %v4388, 1.0
    %v4391 = vrcp.pop %v4389
    %v4392 = vmul.f32 1.0, %v4391
    %v4393 = vrcp.pop %v4390
    %v4394 = vmul.f32 1.0, %v4393
    %4395 = vrot.lane.b32.xlu0 %v4378, 114
    %v4396 = vpop.permute.xlu0 %4395
    %4397 = vrot.lane.b32.xlu0 %v4374, 114
    %v4398 = vpop.permute.xlu0 %4397
    %v4401 = vmul.f32 %v4392, %v4396
    %v4402 = vmul.f32 %v4394, %v4398
    %4405 = vrot.lane.b32.xlu0 %v4401, 14
    %v4406 = vpop.permute.xlu0 %4405
    %4407 = vrot.lane.b32.xlu0 %v4402, 14
    %v4408 = vpop.permute.xlu0 %4407
    %v4411 = vadd.f32 %v4160, %v4406
    %v4412 = vadd.f32 %v4165, %v4408
    %v4413 = vtanh.pop %v4411
    %v4414 = vtanh.pop %v4412
    %v4415 = vsub.f32 1.0, %v4392
    %v4416 = vsub.f32 1.0, %v4394
    %4419 = vrot.lane.b32.xlu0 %v4413, 121
    %v4420 = vpop.permute.xlu0 %4419
    %4421 = vrot.lane.b32.xlu0 %v4414, 121
    %v4422 = vpop.permute.xlu0 %4421
    %v4425 = vmul.f32 %v4415, %v4420
    %v4426 = vmul.f32 %v4416, %v4422
    %v4427 = vrot.slane %v4297, 7
    %v4430 = vmul.f32 %v4392, %v4427
    %v4431 = vmul.f32 %v4394, %v4301
    %v4432 = vadd.f32 %v4425, %v4430
    %v4433 = vadd.f32 %v4426, %v4431
    %v4436 = vrot.slane %v4432, 1
    %v4437 = vsel %vm359, %v4433, %v4436
    %4438 = vrot.lane.b32.xlu0 %v4437, 121
    %v4439 = vpop.permute.xlu0 %4438
    %v4440 = vsel %vm2966, %v4439, 0
    %4442 = vmatprep.subr.mxu0 0.0
    %4443 = vmatpush1.msra.mxu0 0.0
    %4444 = vmatprep.subr.mxu0 0.0
    %4445 = vmatpush1.msra.mxu0 0.0
    %4446 = vmatprep.subr.mxu0 0.0
    %4447 = vmatpush1.msra.mxu0 0.0
    %4448 = vmatprep.subr.mxu0 0.0
    %4449 = vmatpush1.msra.mxu0 0.0
    %4450 = vmatprep.subr.mxu0 0.0
    %4451 = vmatpush1.msra.mxu0 0.0
    %4452 = vmatprep.subr.mxu0 0.0
    %4453 = vmatpush1.msra.mxu0 0.0
    %4454 = vmatprep.subr.mxu0 0.0
    %4455 = vmatpush1.msra.mxu0 0.0
    %4456 = vmatprep.subr.mxu0 0.0
    %4457 = vmatpush1.msra.mxu0 0.0
    %4458 = vmatprep.subr.mxu0 0.0
    %4459 = vmatpush1.msra.mxu0 0.0
    %4460 = vmatprep.subr.mxu0 0.0
    %4461 = vmatpush1.msra.mxu0 0.0
    %4462 = vmatprep.subr.mxu0 0.0
    %4463 = vmatpush1.msra.mxu0 0.0
    %4464 = vmatprep.subr.mxu0 0.0
    %4465 = vmatpush1.msra.mxu0 0.0
    %4466 = vmatprep.subr.mxu0 0.0
    %4467 = vmatpush1.msra.mxu0 0.0
    %4468 = vmatprep.subr.mxu0 0.0
    %4469 = vmatpush1.msra.mxu0 0.0
    %4470 = vmatprep.subr.mxu0 0.0
    %4471 = vmatpush1.msra.mxu0 0.0
    %4472 = vmatprep.subr.mxu0 0.0
    %4473 = vmatpush1.msra.mxu0 %v4173
    %4474 = vmatprep.subr.mxu0 0.0
    %4475 = vmatpush2.msra.mxu0 0.0
    %4476 = vmatprep.subr.mxu0 0.0
    %4477 = vmatpush2.msra.mxu0 0.0
    %4478 = vmatprep.subr.mxu0 0.0
    %4479 = vmatpush2.msra.mxu0 0.0
    %4480 = vmatprep.subr.mxu0 0.0
    %4481 = vmatpush2.msra.mxu0 0.0
    %4482 = vmatprep.subr.mxu0 0.0
    %4483 = vmatpush2.msra.mxu0 0.0
    %4484 = vmatprep.subr.mxu0 0.0
    %4485 = vmatpush2.msra.mxu0 0.0
    %4486 = vmatprep.subr.mxu0 0.0
    %4487 = vmatpush2.msra.mxu0 0.0
    %4488 = vmatprep.subr.mxu0 0.0
    %4489 = vmatpush2.msra.mxu0 0.0
    %4490 = vmatprep.subr.mxu0 0.0
    %4491 = vmatpush2.msra.mxu0 0.0
    %4492 = vmatprep.subr.mxu0 0.0
    %4493 = vmatpush2.msra.mxu0 0.0
    %4494 = vmatprep.subr.mxu0 0.0
    %4495 = vmatpush2.msra.mxu0 0.0
    %4496 = vmatprep.subr.mxu0 0.0
    %4497 = vmatpush2.msra.mxu0 0.0
    %4498 = vmatprep.subr.mxu0 0.0
    %4499 = vmatpush2.msra.mxu0 0.0
    %4500 = vmatprep.subr.mxu0 0.0
    %4501 = vmatpush2.msra.mxu0 0.0
    %4502 = vmatprep.subr.mxu0 0.0
    %4503 = vmatpush2.msra.mxu0 0.0
    %4504 = vmatprep.subr.mxu0 0.0
    %4505 = vmatpush2.msra.mxu0 0.0
    %4506 = vmatprep.mubr.f32.mxu0 0.0
    %4507 = vmatmul.mubr.f32.gmra.mxu0 %v4440
    %v4508 = vpop.f32.mrf.mxu0
    %v4509 = vadd.f32 %v4171, %v4508
    %v4510 = vpop.f32.mrf.mxu0
    %4511 = vdwg.mxu0
    %v4513 = vrot.slane %v4509, 6
    %v4514 = vrot.slane %v4509, 7
    %v4517 = vadd.f32 %v4160, %v4513
    %v4518 = vadd.f32 %v4165, %v4514
    %v4519 = vxor.u32 %v4517, 2147483648
    %v4520 = vxor.u32 %v4518, 2147483648
    %v4521 = vmul.f32 %v4519, 1.442695
    %v4522 = vpow.pop %v4521
    %v4523 = vmul.f32 %v4520, 1.442695
    %v4524 = vpow.pop %v4523
    %v4525 = vadd.f32 %v4522, 1.0
    %v4526 = vadd.f32 %v4524, 1.0
    %v4527 = vrcp.pop %v4525
    %v4528 = vmul.f32 1.0, %v4527
    %v4529 = vrcp.pop %v4526
    %v4530 = vmul.f32 1.0, %v4529
    %4531 = vrot.lane.b32.xlu0 %v4513, 114
    %v4532 = vpop.permute.xlu0 %4531
    %4533 = vrot.lane.b32.xlu0 %v4514, 114
    %v4534 = vpop.permute.xlu0 %4533
    %v4537 = vmul.f32 %v4528, %v4532
    %v4538 = vmul.f32 %v4530, %v4534
    %4541 = vrot.lane.b32.xlu0 %v4537, 14
    %v4542 = vpop.permute.xlu0 %4541
    %4543 = vrot.lane.b32.xlu0 %v4538, 14
    %v4544 = vpop.permute.xlu0 %4543
    %v4547 = vadd.f32 %v4160, %v4542
    %v4548 = vadd.f32 %v4165, %v4544
    %v4549 = vtanh.pop %v4547
    %v4550 = vtanh.pop %v4548
    %v4551 = vsub.f32 1.0, %v4528
    %v4552 = vsub.f32 1.0, %v4530
    %4555 = vrot.lane.b32.xlu0 %v4549, 121
    %v4556 = vpop.permute.xlu0 %4555
    %4557 = vrot.lane.b32.xlu0 %v4550, 121
    %v4558 = vpop.permute.xlu0 %4557
    %v4561 = vmul.f32 %v4551, %v4556
    %v4562 = vmul.f32 %v4552, %v4558
    %v4563 = vrot.slane %v4432, 7
    %v4564 = vrot.slane %v4433, 7
    %v4567 = vmul.f32 %v4528, %v4563
    %v4568 = vmul.f32 %v4530, %v4564
    %v4569 = vadd.f32 %v4561, %v4567
    %v4570 = vadd.f32 %v4562, %v4568
    %v4573 = vrot.slane %v4569, 2
    %v4574 = vrot.slane %v4570, 1
    %v4575 = vsel %vm359, %v4574, %v4573
    %4576 = vrot.lane.b32.xlu0 %v4575, 121
    %v4577 = vpop.permute.xlu0 %4576
    %v4578 = vsel %vm2966, %v4577, 0
    %4580 = vmatprep.subr.mxu0 0.0
    %4581 = vmatpush1.msra.mxu0 0.0
    %4582 = vmatprep.subr.mxu0 0.0
    %4583 = vmatpush1.msra.mxu0 0.0
    %4584 = vmatprep.subr.mxu0 0.0
    %4585 = vmatpush1.msra.mxu0 0.0
    %4586 = vmatprep.subr.mxu0 0.0
    %4587 = vmatpush1.msra.mxu0 0.0
    %4588 = vmatprep.subr.mxu0 0.0
    %4589 = vmatpush1.msra.mxu0 0.0
    %4590 = vmatprep.subr.mxu0 0.0
    %4591 = vmatpush1.msra.mxu0 0.0
    %4592 = vmatprep.subr.mxu0 0.0
    %4593 = vmatpush1.msra.mxu0 0.0
    %4594 = vmatprep.subr.mxu0 0.0
    %4595 = vmatpush1.msra.mxu0 0.0
    %4596 = vmatprep.subr.mxu0 0.0
    %4597 = vmatpush1.msra.mxu0 0.0
    %4598 = vmatprep.subr.mxu0 0.0
    %4599 = vmatpush1.msra.mxu0 0.0
    %4600 = vmatprep.subr.mxu0 0.0
    %4601 = vmatpush1.msra.mxu0 0.0
    %4602 = vmatprep.subr.mxu0 0.0
    %4603 = vmatpush1.msra.mxu0 0.0
    %4604 = vmatprep.subr.mxu0 0.0
    %4605 = vmatpush1.msra.mxu0 0.0
    %4606 = vmatprep.subr.mxu0 0.0
    %4607 = vmatpush1.msra.mxu0 0.0
    %4608 = vmatprep.subr.mxu0 0.0
    %4609 = vmatpush1.msra.mxu0 0.0
    %4610 = vmatprep.subr.mxu0 0.0
    %4611 = vmatpush1.msra.mxu0 %v4173
    %4612 = vmatprep.subr.mxu0 0.0
    %4613 = vmatpush2.msra.mxu0 0.0
    %4614 = vmatprep.subr.mxu0 0.0
    %4615 = vmatpush2.msra.mxu0 0.0
    %4616 = vmatprep.subr.mxu0 0.0
    %4617 = vmatpush2.msra.mxu0 0.0
    %4618 = vmatprep.subr.mxu0 0.0
    %4619 = vmatpush2.msra.mxu0 0.0
    %4620 = vmatprep.subr.mxu0 0.0
    %4621 = vmatpush2.msra.mxu0 0.0
    %4622 = vmatprep.subr.mxu0 0.0
    %4623 = vmatpush2.msra.mxu0 0.0
    %4624 = vmatprep.subr.mxu0 0.0
    %4625 = vmatpush2.msra.mxu0 0.0
    %4626 = vmatprep.subr.mxu0 0.0
    %4627 = vmatpush2.msra.mxu0 0.0
    %4628 = vmatprep.subr.mxu0 0.0
    %4629 = vmatpush2.msra.mxu0 0.0
    %4630 = vmatprep.subr.mxu0 0.0
    %4631 = vmatpush2.msra.mxu0 0.0
    %4632 = vmatprep.subr.mxu0 0.0
    %4633 = vmatpush2.msra.mxu0 0.0
    %4634 = vmatprep.subr.mxu0 0.0
    %4635 = vmatpush2.msra.mxu0 0.0
    %4636 = vmatprep.subr.mxu0 0.0
    %4637 = vmatpush2.msra.mxu0 0.0
    %4638 = vmatprep.subr.mxu0 0.0
    %4639 = vmatpush2.msra.mxu0 0.0
    %4640 = vmatprep.subr.mxu0 0.0
    %4641 = vmatpush2.msra.mxu0 0.0
    %4642 = vmatprep.subr.mxu0 0.0
    %4643 = vmatpush2.msra.mxu0 0.0
    %4644 = vmatprep.mubr.f32.mxu0 0.0
    %4645 = vmatmul.mubr.f32.gmra.mxu0 %v4578
    %v4646 = vpop.f32.mrf.mxu0
    %v4647 = vadd.f32 %v4171, %v4646
    %v4648 = vpop.f32.mrf.mxu0
    %4649 = vdwg.mxu0
    %v4651 = vrot.slane %v4647, 5
    %v4652 = vrot.slane %v4647, 6
    %v4655 = vadd.f32 %v4160, %v4651
    %v4656 = vadd.f32 %v4165, %v4652
    %v4657 = vxor.u32 %v4655, 2147483648
    %v4658 = vxor.u32 %v4656, 2147483648
    %v4659 = vmul.f32 %v4657, 1.442695
    %v4660 = vpow.pop %v4659
    %v4661 = vmul.f32 %v4658, 1.442695
    %v4662 = vpow.pop %v4661
    %v4663 = vadd.f32 %v4660, 1.0
    %v4664 = vadd.f32 %v4662, 1.0
    %v4665 = vrcp.pop %v4663
    %v4666 = vmul.f32 1.0, %v4665
    %v4667 = vrcp.pop %v4664
    %v4668 = vmul.f32 1.0, %v4667
    %4669 = vrot.lane.b32.xlu0 %v4651, 114
    %v4670 = vpop.permute.xlu0 %4669
    %4671 = vrot.lane.b32.xlu0 %v4652, 114
    %v4672 = vpop.permute.xlu0 %4671
    %v4675 = vmul.f32 %v4666, %v4670
    %v4676 = vmul.f32 %v4668, %v4672
    %4679 = vrot.lane.b32.xlu0 %v4675, 14
    %v4680 = vpop.permute.xlu0 %4679
    %4681 = vrot.lane.b32.xlu0 %v4676, 14
    %v4682 = vpop.permute.xlu0 %4681
    %v4685 = vadd.f32 %v4160, %v4680
    %v4686 = vadd.f32 %v4165, %v4682
    %v4687 = vtanh.pop %v4685
    %v4688 = vtanh.pop %v4686
    %v4689 = vsub.f32 1.0, %v4666
    %v4690 = vsub.f32 1.0, %v4668
    %4693 = vrot.lane.b32.xlu0 %v4687, 121
    %v4694 = vpop.permute.xlu0 %4693
    %4695 = vrot.lane.b32.xlu0 %v4688, 121
    %v4696 = vpop.permute.xlu0 %4695
    %v4699 = vmul.f32 %v4689, %v4694
    %v4700 = vmul.f32 %v4690, %v4696
    %v4701 = vrot.slane %v4569, 7
    %v4702 = vrot.slane %v4570, 7
    %v4705 = vmul.f32 %v4666, %v4701
    %v4706 = vmul.f32 %v4668, %v4702
    %v4707 = vadd.f32 %v4699, %v4705
    %v4708 = vadd.f32 %v4700, %v4706
    %v4711 = vrot.slane %v4707, 3
    %v4712 = vrot.slane %v4708, 2
    %v4713 = vsel %vm359, %v4712, %v4711
    %4714 = vrot.lane.b32.xlu0 %v4713, 121
    %v4715 = vpop.permute.xlu0 %4714
    %v4716 = vsel %vm2966, %v4715, 0
    %4718 = vmatprep.subr.mxu0 0.0
    %4719 = vmatpush1.msra.mxu0 0.0
    %4720 = vmatprep.subr.mxu0 0.0
    %4721 = vmatpush1.msra.mxu0 0.0
    %4722 = vmatprep.subr.mxu0 0.0
    %4723 = vmatpush1.msra.mxu0 0.0
    %4724 = vmatprep.subr.mxu0 0.0
    %4725 = vmatpush1.msra.mxu0 0.0
    %4726 = vmatprep.subr.mxu0 0.0
    %4727 = vmatpush1.msra.mxu0 0.0
    %4728 = vmatprep.subr.mxu0 0.0
    %4729 = vmatpush1.msra.mxu0 0.0
    %4730 = vmatprep.subr.mxu0 0.0
    %4731 = vmatpush1.msra.mxu0 0.0
    %4732 = vmatprep.subr.mxu0 0.0
    %4733 = vmatpush1.msra.mxu0 0.0
    %4734 = vmatprep.subr.mxu0 0.0
    %4735 = vmatpush1.msra.mxu0 0.0
    %4736 = vmatprep.subr.mxu0 0.0
    %4737 = vmatpush1.msra.mxu0 0.0
    %4738 = vmatprep.subr.mxu0 0.0
    %4739 = vmatpush1.msra.mxu0 0.0
    %4740 = vmatprep.subr.mxu0 0.0
    %4741 = vmatpush1.msra.mxu0 0.0
    %4742 = vmatprep.subr.mxu0 0.0
    %4743 = vmatpush1.msra.mxu0 0.0
    %4744 = vmatprep.subr.mxu0 0.0
    %4745 = vmatpush1.msra.mxu0 0.0
    %4746 = vmatprep.subr.mxu0 0.0
    %4747 = vmatpush1.msra.mxu0 0.0
    %4748 = vmatprep.subr.mxu0 0.0
    %4749 = vmatpush1.msra.mxu0 %v4173
    %4750 = vmatprep.subr.mxu0 0.0
    %4751 = vmatpush2.msra.mxu0 0.0
    %4752 = vmatprep.subr.mxu0 0.0
    %4753 = vmatpush2.msra.mxu0 0.0
    %4754 = vmatprep.subr.mxu0 0.0
    %4755 = vmatpush2.msra.mxu0 0.0
    %4756 = vmatprep.subr.mxu0 0.0
    %4757 = vmatpush2.msra.mxu0 0.0
    %4758 = vmatprep.subr.mxu0 0.0
    %4759 = vmatpush2.msra.mxu0 0.0
    %4760 = vmatprep.subr.mxu0 0.0
    %4761 = vmatpush2.msra.mxu0 0.0
    %4762 = vmatprep.subr.mxu0 0.0
    %4763 = vmatpush2.msra.mxu0 0.0
    %4764 = vmatprep.subr.mxu0 0.0
    %4765 = vmatpush2.msra.mxu0 0.0
    %4766 = vmatprep.subr.mxu0 0.0
    %4767 = vmatpush2.msra.mxu0 0.0
    %4768 = vmatprep.subr.mxu0 0.0
    %4769 = vmatpush2.msra.mxu0 0.0
    %4770 = vmatprep.subr.mxu0 0.0
    %4771 = vmatpush2.msra.mxu0 0.0
    %4772 = vmatprep.subr.mxu0 0.0
    %4773 = vmatpush2.msra.mxu0 0.0
    %4774 = vmatprep.subr.mxu0 0.0
    %4775 = vmatpush2.msra.mxu0 0.0
    %4776 = vmatprep.subr.mxu0 0.0
    %4777 = vmatpush2.msra.mxu0 0.0
    %4778 = vmatprep.subr.mxu0 0.0
    %4779 = vmatpush2.msra.mxu0 0.0
    %4780 = vmatprep.subr.mxu0 0.0
    %4781 = vmatpush2.msra.mxu0 0.0
    %4782 = vmatprep.mubr.f32.mxu0 0.0
    %4783 = vmatmul.mubr.f32.gmra.mxu0 %v4716
    %v4784 = vpop.f32.mrf.mxu0
    %v4785 = vadd.f32 %v4171, %v4784
    %v4786 = vpop.f32.mrf.mxu0
    %4787 = vdwg.mxu0
    %v4789 = vrot.slane %v4785, 4
    %v4790 = vrot.slane %v4785, 5
    %v4793 = vadd.f32 %v4160, %v4789
    %v4794 = vadd.f32 %v4165, %v4790
    %v4795 = vxor.u32 %v4793, 2147483648
    %v4796 = vxor.u32 %v4794, 2147483648
    %v4797 = vmul.f32 %v4795, 1.442695
    %v4798 = vpow.pop %v4797
    %v4799 = vmul.f32 %v4796, 1.442695
    %v4800 = vpow.pop %v4799
    %v4801 = vadd.f32 %v4798, 1.0
    %v4802 = vadd.f32 %v4800, 1.0
    %v4803 = vrcp.pop %v4801
    %v4804 = vmul.f32 1.0, %v4803
    %v4805 = vrcp.pop %v4802
    %v4806 = vmul.f32 1.0, %v4805
    %4807 = vrot.lane.b32.xlu0 %v4789, 114
    %v4808 = vpop.permute.xlu0 %4807
    %4809 = vrot.lane.b32.xlu0 %v4790, 114
    %v4810 = vpop.permute.xlu0 %4809
    %v4813 = vmul.f32 %v4804, %v4808
    %v4814 = vmul.f32 %v4806, %v4810
    %4817 = vrot.lane.b32.xlu0 %v4813, 14
    %v4818 = vpop.permute.xlu0 %4817
    %4819 = vrot.lane.b32.xlu0 %v4814, 14
    %v4820 = vpop.permute.xlu0 %4819
    %v4823 = vadd.f32 %v4160, %v4818
    %v4824 = vadd.f32 %v4165, %v4820
    %v4825 = vtanh.pop %v4823
    %v4826 = vtanh.pop %v4824
    %v4827 = vsub.f32 1.0, %v4804
    %v4828 = vsub.f32 1.0, %v4806
    %4831 = vrot.lane.b32.xlu0 %v4825, 121
    %v4832 = vpop.permute.xlu0 %4831
    %4833 = vrot.lane.b32.xlu0 %v4826, 121
    %v4834 = vpop.permute.xlu0 %4833
    %v4837 = vmul.f32 %v4827, %v4832
    %v4838 = vmul.f32 %v4828, %v4834
    %v4839 = vrot.slane %v4707, 7
    %v4840 = vrot.slane %v4708, 7
    %v4843 = vmul.f32 %v4804, %v4839
    %v4844 = vmul.f32 %v4806, %v4840
    %v4845 = vadd.f32 %v4837, %v4843
    %v4846 = vadd.f32 %v4838, %v4844
    %v4849 = vrot.slane %v4845, 4
    %v4850 = vrot.slane %v4846, 3
    %v4851 = vsel %vm359, %v4850, %v4849
    %4852 = vrot.lane.b32.xlu0 %v4851, 121
    %v4853 = vpop.permute.xlu0 %4852
    %v4854 = vsel %vm2966, %v4853, 0
    %4856 = vmatprep.subr.mxu0 0.0
    %4857 = vmatpush1.msra.mxu0 0.0
    %4858 = vmatprep.subr.mxu0 0.0
    %4859 = vmatpush1.msra.mxu0 0.0
    %4860 = vmatprep.subr.mxu0 0.0
    %4861 = vmatpush1.msra.mxu0 0.0
    %4862 = vmatprep.subr.mxu0 0.0
    %4863 = vmatpush1.msra.mxu0 0.0
    %4864 = vmatprep.subr.mxu0 0.0
    %4865 = vmatpush1.msra.mxu0 0.0
    %4866 = vmatprep.subr.mxu0 0.0
    %4867 = vmatpush1.msra.mxu0 0.0
    %4868 = vmatprep.subr.mxu0 0.0
    %4869 = vmatpush1.msra.mxu0 0.0
    %4870 = vmatprep.subr.mxu0 0.0
    %4871 = vmatpush1.msra.mxu0 0.0
    %4872 = vmatprep.subr.mxu0 0.0
    %4873 = vmatpush1.msra.mxu0 0.0
    %4874 = vmatprep.subr.mxu0 0.0
    %4875 = vmatpush1.msra.mxu0 0.0
    %4876 = vmatprep.subr.mxu0 0.0
    %4877 = vmatpush1.msra.mxu0 0.0
    %4878 = vmatprep.subr.mxu0 0.0
    %4879 = vmatpush1.msra.mxu0 0.0
    %4880 = vmatprep.subr.mxu0 0.0
    %4881 = vmatpush1.msra.mxu0 0.0
    %4882 = vmatprep.subr.mxu0 0.0
    %4883 = vmatpush1.msra.mxu0 0.0
    %4884 = vmatprep.subr.mxu0 0.0
    %4885 = vmatpush1.msra.mxu0 0.0
    %4886 = vmatprep.subr.mxu0 0.0
    %4887 = vmatpush1.msra.mxu0 %v4173
    %4888 = vmatprep.subr.mxu0 0.0
    %4889 = vmatpush2.msra.mxu0 0.0
    %4890 = vmatprep.subr.mxu0 0.0
    %4891 = vmatpush2.msra.mxu0 0.0
    %4892 = vmatprep.subr.mxu0 0.0
    %4893 = vmatpush2.msra.mxu0 0.0
    %4894 = vmatprep.subr.mxu0 0.0
    %4895 = vmatpush2.msra.mxu0 0.0
    %4896 = vmatprep.subr.mxu0 0.0
    %4897 = vmatpush2.msra.mxu0 0.0
    %4898 = vmatprep.subr.mxu0 0.0
    %4899 = vmatpush2.msra.mxu0 0.0
    %4900 = vmatprep.subr.mxu0 0.0
    %4901 = vmatpush2.msra.mxu0 0.0
    %4902 = vmatprep.subr.mxu0 0.0
    %4903 = vmatpush2.msra.mxu0 0.0
    %4904 = vmatprep.subr.mxu0 0.0
    %4905 = vmatpush2.msra.mxu0 0.0
    %4906 = vmatprep.subr.mxu0 0.0
    %4907 = vmatpush2.msra.mxu0 0.0
    %4908 = vmatprep.subr.mxu0 0.0
    %4909 = vmatpush2.msra.mxu0 0.0
    %4910 = vmatprep.subr.mxu0 0.0
    %4911 = vmatpush2.msra.mxu0 0.0
    %4912 = vmatprep.subr.mxu0 0.0
    %4913 = vmatpush2.msra.mxu0 0.0
    %4914 = vmatprep.subr.mxu0 0.0
    %4915 = vmatpush2.msra.mxu0 0.0
    %4916 = vmatprep.subr.mxu0 0.0
    %4917 = vmatpush2.msra.mxu0 0.0
    %4918 = vmatprep.subr.mxu0 0.0
    %4919 = vmatpush2.msra.mxu0 0.0
    %4920 = vmatprep.mubr.f32.mxu0 0.0
    %4921 = vmatmul.mubr.f32.gmra.mxu0 %v4854
    %v4922 = vpop.f32.mrf.mxu0
    %v4923 = vadd.f32 %v4171, %v4922
    %v4924 = vpop.f32.mrf.mxu0
    %4925 = vdwg.mxu0
    %v4927 = vrot.slane %v4923, 3
    %v4928 = vrot.slane %v4923, 4
    %v4931 = vadd.f32 %v4160, %v4927
    %v4932 = vadd.f32 %v4165, %v4928
    %v4933 = vxor.u32 %v4931, 2147483648
    %v4934 = vxor.u32 %v4932, 2147483648
    %v4935 = vmul.f32 %v4933, 1.442695
    %v4936 = vpow.pop %v4935
    %v4937 = vmul.f32 %v4934, 1.442695
    %v4938 = vpow.pop %v4937
    %v4939 = vadd.f32 %v4936, 1.0
    %v4940 = vadd.f32 %v4938, 1.0
    %v4941 = vrcp.pop %v4939
    %v4942 = vmul.f32 1.0, %v4941
    %v4943 = vrcp.pop %v4940
    %v4944 = vmul.f32 1.0, %v4943
    %4945 = vrot.lane.b32.xlu0 %v4927, 114
    %v4946 = vpop.permute.xlu0 %4945
    %4947 = vrot.lane.b32.xlu0 %v4928, 114
    %v4948 = vpop.permute.xlu0 %4947
    %v4951 = vmul.f32 %v4942, %v4946
    %v4952 = vmul.f32 %v4944, %v4948
    %4955 = vrot.lane.b32.xlu0 %v4951, 14
    %v4956 = vpop.permute.xlu0 %4955
    %4957 = vrot.lane.b32.xlu0 %v4952, 14
    %v4958 = vpop.permute.xlu0 %4957
    %v4961 = vadd.f32 %v4160, %v4956
    %v4962 = vadd.f32 %v4165, %v4958
    %v4963 = vtanh.pop %v4961
    %v4964 = vtanh.pop %v4962
    %v4965 = vsub.f32 1.0, %v4942
    %v4966 = vsub.f32 1.0, %v4944
    %4969 = vrot.lane.b32.xlu0 %v4963, 121
    %v4970 = vpop.permute.xlu0 %4969
    %4971 = vrot.lane.b32.xlu0 %v4964, 121
    %v4972 = vpop.permute.xlu0 %4971
    %v4975 = vmul.f32 %v4965, %v4970
    %v4976 = vmul.f32 %v4966, %v4972
    %v4977 = vrot.slane %v4845, 7
    %v4978 = vrot.slane %v4846, 7
    %v4981 = vmul.f32 %v4942, %v4977
    %v4982 = vmul.f32 %v4944, %v4978
    %v4983 = vadd.f32 %v4975, %v4981
    %v4984 = vadd.f32 %v4976, %v4982
    %v4987 = vrot.slane %v4983, 5
    %v4988 = vrot.slane %v4984, 4
    %v4989 = vsel %vm359, %v4988, %v4987
    %4990 = vrot.lane.b32.xlu0 %v4989, 121
    %v4991 = vpop.permute.xlu0 %4990
    %v4992 = vsel %vm2966, %v4991, 0
    %4994 = vmatprep.subr.mxu0 0.0
    %4995 = vmatpush1.msra.mxu0 0.0
    %4996 = vmatprep.subr.mxu0 0.0
    %4997 = vmatpush1.msra.mxu0 0.0
    %4998 = vmatprep.subr.mxu0 0.0
    %4999 = vmatpush1.msra.mxu0 0.0
    %5000 = vmatprep.subr.mxu0 0.0
    %5001 = vmatpush1.msra.mxu0 0.0
    %5002 = vmatprep.subr.mxu0 0.0
    %5003 = vmatpush1.msra.mxu0 0.0
    %5004 = vmatprep.subr.mxu0 0.0
    %5005 = vmatpush1.msra.mxu0 0.0
    %5006 = vmatprep.subr.mxu0 0.0
    %5007 = vmatpush1.msra.mxu0 0.0
    %5008 = vmatprep.subr.mxu0 0.0
    %5009 = vmatpush1.msra.mxu0 0.0
    %5010 = vmatprep.subr.mxu0 0.0
    %5011 = vmatpush1.msra.mxu0 0.0
    %5012 = vmatprep.subr.mxu0 0.0
    %5013 = vmatpush1.msra.mxu0 0.0
    %5014 = vmatprep.subr.mxu0 0.0
    %5015 = vmatpush1.msra.mxu0 0.0
    %5016 = vmatprep.subr.mxu0 0.0
    %5017 = vmatpush1.msra.mxu0 0.0
    %5018 = vmatprep.subr.mxu0 0.0
    %5019 = vmatpush1.msra.mxu0 0.0
    %5020 = vmatprep.subr.mxu0 0.0
    %5021 = vmatpush1.msra.mxu0 0.0
    %5022 = vmatprep.subr.mxu0 0.0
    %5023 = vmatpush1.msra.mxu0 0.0
    %5024 = vmatprep.subr.mxu0 0.0
    %5025 = vmatpush1.msra.mxu0 %v4173
    %5026 = vmatprep.subr.mxu0 0.0
    %5027 = vmatpush2.msra.mxu0 0.0
    %5028 = vmatprep.subr.mxu0 0.0
    %5029 = vmatpush2.msra.mxu0 0.0
    %5030 = vmatprep.subr.mxu0 0.0
    %5031 = vmatpush2.msra.mxu0 0.0
    %5032 = vmatprep.subr.mxu0 0.0
    %5033 = vmatpush2.msra.mxu0 0.0
    %5034 = vmatprep.subr.mxu0 0.0
    %5035 = vmatpush2.msra.mxu0 0.0
    %5036 = vmatprep.subr.mxu0 0.0
    %5037 = vmatpush2.msra.mxu0 0.0
    %5038 = vmatprep.subr.mxu0 0.0
    %5039 = vmatpush2.msra.mxu0 0.0
    %5040 = vmatprep.subr.mxu0 0.0
    %5041 = vmatpush2.msra.mxu0 0.0
    %5042 = vmatprep.subr.mxu0 0.0
    %5043 = vmatpush2.msra.mxu0 0.0
    %5044 = vmatprep.subr.mxu0 0.0
    %5045 = vmatpush2.msra.mxu0 0.0
    %5046 = vmatprep.subr.mxu0 0.0
    %5047 = vmatpush2.msra.mxu0 0.0
    %5048 = vmatprep.subr.mxu0 0.0
    %5049 = vmatpush2.msra.mxu0 0.0
    %5050 = vmatprep.subr.mxu0 0.0
    %5051 = vmatpush2.msra.mxu0 0.0
    %5052 = vmatprep.subr.mxu0 0.0
    %5053 = vmatpush2.msra.mxu0 0.0
    %5054 = vmatprep.subr.mxu0 0.0
    %5055 = vmatpush2.msra.mxu0 0.0
    %5056 = vmatprep.subr.mxu0 0.0
    %5057 = vmatpush2.msra.mxu0 0.0
    %5058 = vmatprep.mubr.f32.mxu0 0.0
    %5059 = vmatmul.mubr.f32.gmra.mxu0 %v4992
    %v5060 = vpop.f32.mrf.mxu0
    %v5061 = vadd.f32 %v4171, %v5060
    %v5062 = vpop.f32.mrf.mxu0
    %5063 = vdwg.mxu0
    %v5065 = vrot.slane %v5061, 2
    %v5066 = vrot.slane %v5061, 3
    %v5069 = vadd.f32 %v4160, %v5065
    %v5070 = vadd.f32 %v4165, %v5066
    %v5071 = vxor.u32 %v5069, 2147483648
    %v5072 = vxor.u32 %v5070, 2147483648
    %v5073 = vmul.f32 %v5071, 1.442695
    %v5074 = vpow.pop %v5073
    %v5075 = vmul.f32 %v5072, 1.442695
    %v5076 = vpow.pop %v5075
    %v5077 = vadd.f32 %v5074, 1.0
    %v5078 = vadd.f32 %v5076, 1.0
    %v5079 = vrcp.pop %v5077
    %v5080 = vmul.f32 1.0, %v5079
    %v5081 = vrcp.pop %v5078
    %v5082 = vmul.f32 1.0, %v5081
    %5083 = vrot.lane.b32.xlu0 %v5065, 114
    %v5084 = vpop.permute.xlu0 %5083
    %5085 = vrot.lane.b32.xlu0 %v5066, 114
    %v5086 = vpop.permute.xlu0 %5085
    %v5089 = vmul.f32 %v5080, %v5084
    %v5090 = vmul.f32 %v5082, %v5086
    %5093 = vrot.lane.b32.xlu0 %v5089, 14
    %v5094 = vpop.permute.xlu0 %5093
    %5095 = vrot.lane.b32.xlu0 %v5090, 14
    %v5096 = vpop.permute.xlu0 %5095
    %v5099 = vadd.f32 %v4160, %v5094
    %v5100 = vadd.f32 %v4165, %v5096
    %v5101 = vtanh.pop %v5099
    %v5102 = vtanh.pop %v5100
    %v5103 = vsub.f32 1.0, %v5080
    %v5104 = vsub.f32 1.0, %v5082
    %5107 = vrot.lane.b32.xlu0 %v5101, 121
    %v5108 = vpop.permute.xlu0 %5107
    %5109 = vrot.lane.b32.xlu0 %v5102, 121
    %v5110 = vpop.permute.xlu0 %5109
    %v5113 = vmul.f32 %v5103, %v5108
    %v5114 = vmul.f32 %v5104, %v5110
    %v5115 = vrot.slane %v4983, 7
    %v5116 = vrot.slane %v4984, 7
    %v5119 = vmul.f32 %v5080, %v5115
    %v5120 = vmul.f32 %v5082, %v5116
    %v5121 = vadd.f32 %v5113, %v5119
    %v5122 = vadd.f32 %v5114, %v5120
    %v5125 = vrot.slane %v5121, 6
    %v5126 = vrot.slane %v5122, 5
    %v5127 = vsel %vm359, %v5126, %v5125
    %5128 = vrot.lane.b32.xlu0 %v5127, 121
    %v5129 = vpop.permute.xlu0 %5128
    %v5130 = vsel %vm2966, %v5129, 0
    %5132 = vmatprep.subr.mxu0 0.0
    %5133 = vmatpush1.msra.mxu0 0.0
    %5134 = vmatprep.subr.mxu0 0.0
    %5135 = vmatpush1.msra.mxu0 0.0
    %5136 = vmatprep.subr.mxu0 0.0
    %5137 = vmatpush1.msra.mxu0 0.0
    %5138 = vmatprep.subr.mxu0 0.0
    %5139 = vmatpush1.msra.mxu0 0.0
    %5140 = vmatprep.subr.mxu0 0.0
    %5141 = vmatpush1.msra.mxu0 0.0
    %5142 = vmatprep.subr.mxu0 0.0
    %5143 = vmatpush1.msra.mxu0 0.0
    %5144 = vmatprep.subr.mxu0 0.0
    %5145 = vmatpush1.msra.mxu0 0.0
    %5146 = vmatprep.subr.mxu0 0.0
    %5147 = vmatpush1.msra.mxu0 0.0
    %5148 = vmatprep.subr.mxu0 0.0
    %5149 = vmatpush1.msra.mxu0 0.0
    %5150 = vmatprep.subr.mxu0 0.0
    %5151 = vmatpush1.msra.mxu0 0.0
    %5152 = vmatprep.subr.mxu0 0.0
    %5153 = vmatpush1.msra.mxu0 0.0
    %5154 = vmatprep.subr.mxu0 0.0
    %5155 = vmatpush1.msra.mxu0 0.0
    %5156 = vmatprep.subr.mxu0 0.0
    %5157 = vmatpush1.msra.mxu0 0.0
    %5158 = vmatprep.subr.mxu0 0.0
    %5159 = vmatpush1.msra.mxu0 0.0
    %5160 = vmatprep.subr.mxu0 0.0
    %5161 = vmatpush1.msra.mxu0 0.0
    %5162 = vmatprep.subr.mxu0 0.0
    %5163 = vmatpush1.msra.mxu0 %v4173
    %5164 = vmatprep.subr.mxu0 0.0
    %5165 = vmatpush2.msra.mxu0 0.0
    %5166 = vmatprep.subr.mxu0 0.0
    %5167 = vmatpush2.msra.mxu0 0.0
    %5168 = vmatprep.subr.mxu0 0.0
    %5169 = vmatpush2.msra.mxu0 0.0
    %5170 = vmatprep.subr.mxu0 0.0
    %5171 = vmatpush2.msra.mxu0 0.0
    %5172 = vmatprep.subr.mxu0 0.0
    %5173 = vmatpush2.msra.mxu0 0.0
    %5174 = vmatprep.subr.mxu0 0.0
    %5175 = vmatpush2.msra.mxu0 0.0
    %5176 = vmatprep.subr.mxu0 0.0
    %5177 = vmatpush2.msra.mxu0 0.0
    %5178 = vmatprep.subr.mxu0 0.0
    %5179 = vmatpush2.msra.mxu0 0.0
    %5180 = vmatprep.subr.mxu0 0.0
    %5181 = vmatpush2.msra.mxu0 0.0
    %5182 = vmatprep.subr.mxu0 0.0
    %5183 = vmatpush2.msra.mxu0 0.0
    %5184 = vmatprep.subr.mxu0 0.0
    %5185 = vmatpush2.msra.mxu0 0.0
    %5186 = vmatprep.subr.mxu0 0.0
    %5187 = vmatpush2.msra.mxu0 0.0
    %5188 = vmatprep.subr.mxu0 0.0
    %5189 = vmatpush2.msra.mxu0 0.0
    %5190 = vmatprep.subr.mxu0 0.0
    %5191 = vmatpush2.msra.mxu0 0.0
    %5192 = vmatprep.subr.mxu0 0.0
    %5193 = vmatpush2.msra.mxu0 0.0
    %5194 = vmatprep.subr.mxu0 0.0
    %5195 = vmatpush2.msra.mxu0 0.0
    %5196 = vmatprep.mubr.f32.mxu0 0.0
    %5197 = vmatmul.mubr.f32.gmra.mxu0 %v5130
    %v5198 = vpop.f32.mrf.mxu0
    %v5199 = vadd.f32 %v4171, %v5198
    %v5200 = vpop.f32.mrf.mxu0
    %5201 = vdwg.mxu0
    %v5203 = vrot.slane %v5199, 1
    %v5204 = vrot.slane %v5199, 2
    %v5207 = vadd.f32 %v4160, %v5203
    %v5208 = vadd.f32 %v4165, %v5204
    %v5209 = vxor.u32 %v5207, 2147483648
    %v5210 = vxor.u32 %v5208, 2147483648
    %v5211 = vmul.f32 %v5209, 1.442695
    %v5212 = vpow.pop %v5211
    %v5213 = vmul.f32 %v5210, 1.442695
    %v5214 = vpow.pop %v5213
    %v5215 = vadd.f32 %v5212, 1.0
    %v5216 = vadd.f32 %v5214, 1.0
    %v5217 = vrcp.pop %v5215
    %v5218 = vmul.f32 1.0, %v5217
    %v5219 = vrcp.pop %v5216
    %v5220 = vmul.f32 1.0, %v5219
    %5221 = vrot.lane.b32.xlu0 %v5203, 114
    %v5222 = vpop.permute.xlu0 %5221
    %5223 = vrot.lane.b32.xlu0 %v5204, 114
    %v5224 = vpop.permute.xlu0 %5223
    %v5227 = vmul.f32 %v5218, %v5222
    %v5228 = vmul.f32 %v5220, %v5224
    %5231 = vrot.lane.b32.xlu0 %v5227, 14
    %v5232 = vpop.permute.xlu0 %5231
    %5233 = vrot.lane.b32.xlu0 %v5228, 14
    %v5234 = vpop.permute.xlu0 %5233
    %v5237 = vadd.f32 %v4160, %v5232
    %v5238 = vadd.f32 %v4165, %v5234
    %v5239 = vtanh.pop %v5237
    %v5240 = vtanh.pop %v5238
    %v5241 = vsub.f32 1.0, %v5218
    %v5242 = vsub.f32 1.0, %v5220
    %5245 = vrot.lane.b32.xlu0 %v5239, 121
    %v5246 = vpop.permute.xlu0 %5245
    %5247 = vrot.lane.b32.xlu0 %v5240, 121
    %v5248 = vpop.permute.xlu0 %5247
    %v5251 = vmul.f32 %v5241, %v5246
    %v5252 = vmul.f32 %v5242, %v5248
    %v5253 = vrot.slane %v5121, 7
    %v5254 = vrot.slane %v5122, 7
    %v5257 = vmul.f32 %v5218, %v5253
    %v5258 = vmul.f32 %v5220, %v5254
    %v5259 = vadd.f32 %v5251, %v5257
    %v5260 = vadd.f32 %v5252, %v5258
    %v5261 = vsel %vm1483, %v4297, %v4432
    %v5262 = vsel %vm1483, %v4298, %v4433
    %v5263 = vsel %vm1486, %v5261, %v4569
    %v5264 = vsel %vm1486, %v5262, %v4570
    %v5265 = vsel %vm1489, %v5263, %v4707
    %v5266 = vsel %vm1489, %v5264, %v4708
    %v5267 = vsel %vm1492, %v5265, %v4845
    %v5268 = vsel %vm1492, %v5266, %v4846
    %v5269 = vsel %vm1495, %v5267, %v4983
    %v5270 = vsel %vm1495, %v5268, %v4984
    %v5271 = vsel %vm1498, %v5269, %v5121
    %v5272 = vsel %vm1498, %v5270, %v5122
    %v5273 = vsel %vm1501, %v5271, %v5259
    %v5274 = vsel %vm1501, %v5272, %v5260
    %s5275 = smul.u32 8, 1
    %s5276 = sshll.u32 %s5275, 4
    %5277 = dma.done %s107, %s5276
    %v5278 = vld [vmem:[#allocation4] sm:$0x7f]
    %v5279 = vld [vmem:[#allocation4 + $0x7] sm:$0x1]
    %v5280 = vlaneseq
    %v5281 = vshrl.u32 %v5280, 7
    %v5282 = vsub.s32 0, %v5281
    %v5283 = vrot.slane %v5279, %v5282
    %5286 = vrot.lane.b32.xlu0 %v5273, 121
    %v5287 = vpop.permute.xlu0 %5286
    %5288 = vrot.lane.b32.xlu0 %v5274, 121
    %v5289 = vpop.permute.xlu0 %5288
    %v5290 = vsel %vm2966, %v5287, 0
    %v5292 = vsel %vm2966, %v5289, 0
    %v5295 = vsel %vm1501, %v5278, 0
    %5297 = vmatprep.subr.mxu0 0.0
    %5298 = vmatpush1.msra.mxu0 0.0
    %5299 = vmatprep.subr.mxu0 0.0
    %5300 = vmatpush1.msra.mxu0 0.0
    %5301 = vmatprep.subr.mxu0 0.0
    %5302 = vmatpush1.msra.mxu0 0.0
    %5303 = vmatprep.subr.mxu0 0.0
    %5304 = vmatpush1.msra.mxu0 0.0
    %5305 = vmatprep.subr.mxu0 0.0
    %5306 = vmatpush1.msra.mxu0 0.0
    %5307 = vmatprep.subr.mxu0 0.0
    %5308 = vmatpush1.msra.mxu0 0.0
    %5309 = vmatprep.subr.mxu0 0.0
    %5310 = vmatpush1.msra.mxu0 0.0
    %5311 = vmatprep.subr.mxu0 0.0
    %5312 = vmatpush1.msra.mxu0 0.0
    %5313 = vmatprep.subr.mxu0 0.0
    %5314 = vmatpush1.msra.mxu0 0.0
    %5315 = vmatprep.subr.mxu0 0.0
    %5316 = vmatpush1.msra.mxu0 0.0
    %5317 = vmatprep.subr.mxu0 0.0
    %5318 = vmatpush1.msra.mxu0 0.0
    %5319 = vmatprep.subr.mxu0 0.0
    %5320 = vmatpush1.msra.mxu0 0.0
    %5321 = vmatprep.subr.mxu0 0.0
    %5322 = vmatpush1.msra.mxu0 0.0
    %5323 = vmatprep.subr.mxu0 0.0
    %5324 = vmatpush1.msra.mxu0 0.0
    %5325 = vmatprep.subr.mxu0 0.0
    %5326 = vmatpush1.msra.mxu0 0.0
    %5327 = vmatprep.subr.mxu0 0.0
    %5328 = vmatpush1.msra.mxu0 %v5295
    %5329 = vmatprep.subr.mxu0 0.0
    %5330 = vmatpush2.msra.mxu0 0.0
    %5331 = vmatprep.subr.mxu0 0.0
    %5332 = vmatpush2.msra.mxu0 0.0
    %5333 = vmatprep.subr.mxu0 0.0
    %5334 = vmatpush2.msra.mxu0 0.0
    %5335 = vmatprep.subr.mxu0 0.0
    %5336 = vmatpush2.msra.mxu0 0.0
    %5337 = vmatprep.subr.mxu0 0.0
    %5338 = vmatpush2.msra.mxu0 0.0
    %5339 = vmatprep.subr.mxu0 0.0
    %5340 = vmatpush2.msra.mxu0 0.0
    %5341 = vmatprep.subr.mxu0 0.0
    %5342 = vmatpush2.msra.mxu0 0.0
    %5343 = vmatprep.subr.mxu0 0.0
    %5344 = vmatpush2.msra.mxu0 0.0
    %5345 = vmatprep.subr.mxu0 0.0
    %5346 = vmatpush2.msra.mxu0 0.0
    %5347 = vmatprep.subr.mxu0 0.0
    %5348 = vmatpush2.msra.mxu0 0.0
    %5349 = vmatprep.subr.mxu0 0.0
    %5350 = vmatpush2.msra.mxu0 0.0
    %5351 = vmatprep.subr.mxu0 0.0
    %5352 = vmatpush2.msra.mxu0 0.0
    %5353 = vmatprep.subr.mxu0 0.0
    %5354 = vmatpush2.msra.mxu0 0.0
    %5355 = vmatprep.subr.mxu0 0.0
    %5356 = vmatpush2.msra.mxu0 0.0
    %5357 = vmatprep.subr.mxu0 0.0
    %5358 = vmatpush2.msra.mxu0 0.0
    %5359 = vmatprep.subr.mxu0 0.0
    %5360 = vmatpush2.msra.mxu0 0.0
    %5361 = vmatprep.mubr.f32.mxu0 0.0
    %5362 = vmatmul.mubr.f32.gmra.mxu0 %v5290
    %v5363 = vpop.f32.mrf.mxu0
    %v5364 = vadd.f32 %v5283, %v5363
    %v5365 = vpop.f32.mrf.mxu0
    %5366 = vmatprep.mubr.f32.mxu0 0.0
    %5367 = vmatmul.mubr.f32.gmra.mxu0 %v5292
    %v5368 = vpop.f32.mrf.mxu0
    %v5369 = vadd.f32 %v5283, %v5368
    %v5370 = vpop.f32.mrf.mxu0
    %5371 = vdwg.mxu0
    %v5372 = vsel %vm2966, %v5364, -inf
    %v5373 = vrot.slane %v5372, 4
    %v5374 = vmax.f32 %v5372, %v5373
    %v5375 = vrot.slane %v5374, 2
    %v5376 = vmax.f32 %v5374, %v5375
    %v5377 = vrot.slane %v5376, 1
    %v5378 = vmax.f32 %v5376, %v5377
    %v5379 = vsel %vm2966, %v5369, -inf
    %v5380 = vrot.slane %v5379, 4
    %v5381 = vmax.f32 %v5379, %v5380
    %v5382 = vrot.slane %v5381, 2
    %v5383 = vmax.f32 %v5381, %v5382
    %v5384 = vrot.slane %v5383, 1
    %v5385 = vmax.f32 %v5383, %v5384
    %v5386 = vsub.f32 %v5364, %v5378
    %v5387 = vsub.f32 %v5369, %v5385
    %v5388 = vmul.f32 %v5386, 1.442695
    %v5389 = vpow.pop %v5388
    %v5390 = vmul.f32 %v5387, 1.442695
    %v5391 = vpow.pop %v5390
    %v5392 = vsel %vm2966, %v5389, 0.0
    %v5393 = vrot.slane %v5392, 4
    %v5394 = vadd.f32 %v5392, %v5393
    %v5395 = vrot.slane %v5394, 2
    %v5396 = vadd.f32 %v5394, %v5395
    %v5397 = vrot.slane %v5396, 1
    %v5398 = vadd.f32 %v5396, %v5397
    %v5399 = vsel %vm2966, %v5391, 0.0
    %v5400 = vrot.slane %v5399, 4
    %v5401 = vadd.f32 %v5399, %v5400
    %v5402 = vrot.slane %v5401, 2
    %v5403 = vadd.f32 %v5401, %v5402
    %v5404 = vrot.slane %v5403, 1
    %v5405 = vadd.f32 %v5403, %v5404
    %v5406 = vrcp.pop %v5398
    %v5407 = vrcp.pop %v5405
    %v5408 = vmul.f32 %v5389, %v5406
    %v5409 = vmul.f32 %v5391, %v5407
    %5410 = vst.msk [vmem:[%s5] sm:$0xff] %vm2966, %v5408
    %5411 = vst.msk [vmem:[%s5 + $0x8] sm:$0xff] %vm2966, %v5409
    // Predicated region
    $region86: #{seq_model_forward.1} parent=1 // pred_check
      _
    $region87: #{seq_model_forward.1} parent=1 // pred_check_branch
      %5413 = sbr.rel (0) target = $region89
    $region88: #{seq_model_forward.1} parent=1 // pred_region
      _
    $region89: #{seq_model_forward.1} parent=1 // pred_fallthru
      _
    // Predicated region
    $region90: #{seq_model_forward.1} parent=1 // pred_check
      _
    $region91: #{seq_model_forward.1} parent=1 // pred_check_branch
      %5415 = sbr.rel (0) target = $region93
    $region92: #{seq_model_forward.1} parent=1 // pred_region
      _
    $region93: #{seq_model_forward.1} parent=1 // pred_fallthru
      _
    %5416 = vsyncpa [#allocation7], 1
  %5417 = vsyncmov [#allocation5]
  %s5418 = vpop.sfrf %5417
  %p5419 = scmp.eq.s32.totalorder %s5418, 0
  %p5420 = pneg %p5419
  %5422 = shalt.err (%p5420)
  %s5423 = scalar_lea.sflag [#allocation5], 1
  %5424 = vsyncmov %s5423
  %s5425 = vpop.sfrf %5424
  %p5426 = scmp.eq.s32.totalorder %s5425, 0
  %p5427 = pneg %p5426
  %5429 = shalt.err (%p5427)
  %s5430 = scalar_lea.sflag [#allocation5], 2
  %5431 = vsyncmov %s5430
  %s5432 = vpop.sfrf %5431
  %p5433 = scmp.eq.s32.totalorder %s5432, 0
  %p5434 = pneg %p5433
  %5436 = shalt.err (%p5434)

</llo_original>
